<compile_context>
chip_gen: v7x
topology: tpu7x:2x2x1
jax: 0.10.0
libtpu: 0.0.40
codegen_flags: <defaults>
</compile_context>

<pallas_src>
import functools

import jax
import jax.numpy as jnp
from jax.experimental import pallas as pl
from jax.experimental.pallas import tpu as pltpu


NF = 64        # num_filters (conv output channels, fc3 input = fc_size // 2)
C_PAD = 64     # on-chip conv input-channel width (input channels zero-padded)
FC1 = 128      # fc_size
FC2 = 64       # fc_size // 2


# ----------------------------------------------------------------------------
# Kernel 1: fused conv1/bn1/relu -> conv2/bn2/relu -> conv3/bn3/relu
# ----------------------------------------------------------------------------
def _conv_stack_kernel(x_ref, w_ref, shift_ref, o_ref, pad_ref, *, tile_b):
    # x_ref:     (tile_b, 8, 8, 64)   f32  NHWC input (channels zero-padded)
    # w_ref:     (27, 64, 64)         bf16 3 layers x 9 taps, BN scale folded in
    # shift_ref: (3, 1, 64)           f32  folded BN shift per layer
    # o_ref:     (tile_b, 64, 64)     bf16 NHWC features (positions, channels)
    # pad_ref:   (tile_b, 10, 10, 64) f32  scratch: zero-padded activations
    pad_ref[...] = jnp.zeros_like(pad_ref)          # border stays zero
    cur = x_ref[...]                                # (tile_b, 8, 8, 64) f32
    for layer in range(3):
        pad_ref[:, 1:9, 1:9, :] = cur               # write interior
        acc = jnp.zeros((tile_b * 64, NF), jnp.float32)
        for k in range(9):                          # 3x3 taps: k = dy*3 + dx
            dy, dx = k // 3, k % 3
            xs = pad_ref[:, dy:dy + 8, dx:dx + 8, :]          # (tile_b, 8, 8, 64)
            xs = xs.reshape(tile_b * 64, C_PAD).astype(jnp.bfloat16)
            acc = acc + jnp.dot(xs, w_ref[layer * 9 + k],
                                preferred_element_type=jnp.float32)
        y = jnp.maximum(acc + shift_ref[layer], 0.0)          # BN shift + ReLU
        cur = y.reshape(tile_b, 8, 8, NF)
    o_ref[...] = cur.reshape(tile_b, 64, NF).astype(o_ref.dtype)


def conv_stack(x_nhwc, wconv, shifts, *, tile_b):
    b_pad = x_nhwc.shape[0]
    grid = (b_pad // tile_b,)
    return pl.pallas_call(
        functools.partial(_conv_stack_kernel, tile_b=tile_b),
        out_shape=jax.ShapeDtypeStruct((b_pad, 64, NF), jnp.bfloat16),
        grid_spec=pltpu.PrefetchScalarGridSpec(
            num_scalar_prefetch=0,
            grid=grid,
            in_specs=[
                pl.BlockSpec((tile_b, 8, 8, C_PAD), lambda i: (i, 0, 0, 0)),
                pl.BlockSpec((27, C_PAD, NF), lambda i: (0, 0, 0)),   # resident
                pl.BlockSpec((3, 1, NF), lambda i: (0, 0, 0)),        # resident
            ],
            out_specs=pl.BlockSpec((tile_b, 64, NF), lambda i: (i, 0, 0)),
            scratch_shapes=[pltpu.VMEM((tile_b, 10, 10, C_PAD), jnp.float32)],
        ),
        compiler_params=pltpu.CompilerParams(dimension_semantics=("parallel",)),
    )(x_nhwc, wconv, shifts)


# ----------------------------------------------------------------------------
# Kernel 2: fused fc1/relu -> fc2/relu -> fc3/tanh
# ----------------------------------------------------------------------------
def _fc_stack_kernel(x_ref, w1_ref, b1_ref, w2_ref, b2_ref, w3_ref, b3_ref, o_ref):
    h = jnp.dot(x_ref[...], w1_ref[...], preferred_element_type=jnp.float32)
    h = jnp.maximum(h + b1_ref[...], 0.0)
    h = jnp.dot(h.astype(jnp.bfloat16), w2_ref[...],
                preferred_element_type=jnp.float32)
    h = jnp.maximum(h + b2_ref[...], 0.0)
    # fc3: N=1 -> row reduction on the VPU/XLU instead of a degenerate matmul.
    v = jnp.sum(h * w3_ref[...], axis=-1, keepdims=True) + b3_ref[...]
    o_ref[...] = jnp.tanh(v)


def fc_stack(xflat, w1, b1, w2, b2, w3, b3, *, tile_b):
    b_pad, k1 = xflat.shape
    grid = (b_pad // tile_b,)
    return pl.pallas_call(
        _fc_stack_kernel,
        out_shape=jax.ShapeDtypeStruct((b_pad, 1), jnp.float32),
        grid_spec=pltpu.PrefetchScalarGridSpec(
            num_scalar_prefetch=0,
            grid=grid,
            in_specs=[
                pl.BlockSpec((tile_b, k1), lambda i: (i, 0)),
                pl.BlockSpec((k1, FC1), lambda i: (0, 0)),     # resident
                pl.BlockSpec((1, FC1), lambda i: (0, 0)),
                pl.BlockSpec((FC1, FC2), lambda i: (0, 0)),
                pl.BlockSpec((1, FC2), lambda i: (0, 0)),
                pl.BlockSpec((1, FC2), lambda i: (0, 0)),
                pl.BlockSpec((1, 1), lambda i: (0, 0)),
            ],
            out_specs=pl.BlockSpec((tile_b, 1), lambda i: (i, 0)),
        ),
        compiler_params=pltpu.CompilerParams(dimension_semantics=("parallel",)),
    )(xflat, w1, b1, w2, b2, w3, b3)


# ----------------------------------------------------------------------------
# Parameters (deterministic, PyTorch-layout) and one-time kernel-ready prep
# ----------------------------------------------------------------------------
def init_params(key, input_channels=14, num_filters=64, fc_size=128):
    ks = jax.random.split(key, 16)
    s = 0.05

    def conv(k, c_out, c_in):
        return s * jax.random.normal(k, (c_out, c_in, 3, 3), jnp.float32)

    def lin(k, n_out, n_in):
        return s * jax.random.normal(k, (n_out, n_in), jnp.float32)

    def bn(k, c):
        k1, k2, k3, k4 = jax.random.split(k, 4)
        return dict(
            gamma=1.0 + 0.1 * jax.random.normal(k1, (c,), jnp.float32),
            beta=0.1 * jax.random.normal(k2, (c,), jnp.float32),
            mean=0.1 * jax.random.normal(k3, (c,), jnp.float32),
            var=0.5 + 0.1 * jnp.abs(jax.random.normal(k4, (c,), jnp.float32)),
        )

    return dict(
        conv1_w=conv(ks[0], num_filters, input_channels),
        conv1_b=s * jax.random.normal(ks[1], (num_filters,), jnp.float32),
        bn1=bn(ks[2], num_filters),
        conv2_w=conv(ks[3], num_filters, num_filters),
        conv2_b=s * jax.random.normal(ks[4], (num_filters,), jnp.float32),
        bn2=bn(ks[5], num_filters),
        conv3_w=conv(ks[6], num_filters, num_filters),
        conv3_b=s * jax.random.normal(ks[7], (num_filters,), jnp.float32),
        bn3=bn(ks[8], num_filters),
        fc1_w=lin(ks[9], fc_size, num_filters * 8 * 8),
        fc1_b=s * jax.random.normal(ks[10], (fc_size,), jnp.float32),
        fc2_w=lin(ks[11], fc_size // 2, fc_size),
        fc2_b=s * jax.random.normal(ks[12], (fc_size // 2,), jnp.float32),
        fc3_w=lin(ks[13], 1, fc_size // 2),
        fc3_b=s * jax.random.normal(ks[14], (1,), jnp.float32),
    )


def prepare_params(p, eps=1e-5):
    """One-time prep: fold BN into weights, permute/transpose fc weights, cast bf16."""
    wconv_list, shift_list = [], []
    for i in (1, 2, 3):
        w, b, bn = p[f"conv{i}_w"], p[f"conv{i}_b"], p[f"bn{i}"]
        scale = bn["gamma"] / jnp.sqrt(bn["var"] + eps)
        shift = scale * (b - bn["mean"]) + bn["beta"]
        wt = jnp.transpose(w, (2, 3, 1, 0))            # (3, 3, C_in, C_out)
        c_in = wt.shape[2]
        if c_in < C_PAD:
            wt = jnp.pad(wt, ((0, 0), (0, 0), (0, C_PAD - c_in), (0, 0)))
        wt = wt * scale[None, None, None, :]           # fold BN scale into weights
        wconv_list.append(wt.reshape(9, C_PAD, NF))
        shift_list.append(shift.reshape(1, NF))
    wconv = jnp.concatenate(wconv_list, axis=0).astype(jnp.bfloat16)   # (27, 64, 64)
    shifts = jnp.stack(shift_list, axis=0).astype(jnp.float32)         # (3, 1, 64)

    # fc1: remap input features from PyTorch NCHW flatten (c*64 + p) to the NHWC
    # flatten (p*64 + c) produced by the conv kernel, then pre-transpose.
    j = jnp.arange(64 * NF)
    perm = (j % NF) * 64 + (j // NF)
    w1 = p["fc1_w"][:, perm].T.astype(jnp.bfloat16)    # (4096, 128)
    return dict(
        wconv=wconv, shifts=shifts,
        w1=w1, b1=p["fc1_b"].reshape(1, FC1).astype(jnp.float32),
        w2=p["fc2_w"].T.astype(jnp.bfloat16),          # (128, 64)
        b2=p["fc2_b"].reshape(1, FC2).astype(jnp.float32),
        w3=p["fc3_w"].reshape(1, FC2).astype(jnp.float32),
        b3=p["fc3_b"].reshape(1, 1).astype(jnp.float32),
    )


# ----------------------------------------------------------------------------
# Forward pass
# ----------------------------------------------------------------------------
def chess_value_forward(prep, x_nchw, *, tile_b=8):
    """x_nchw: (B, C_in, 8, 8) f32 -> (B, 1) f32 in [-1, 1]."""
    B = x_nchw.shape[0]
    x = jnp.transpose(x_nchw, (0, 2, 3, 1)).astype(jnp.float32)   # NHWC
    c_in = x.shape[-1]
    if c_in < C_PAD:
        x = jnp.pad(x, ((0, 0), (0, 0), (0, 0), (0, C_PAD - c_in)))
    tb = min(tile_b, B)
    b_pad = pl.cdiv(B, tb) * tb
    if b_pad != B:
        x = jnp.pad(x, ((0, b_pad - B), (0, 0), (0, 0), (0, 0)))

    feats = conv_stack(x, prep["wconv"], prep["shifts"], tile_b=tb)
    feats = feats.reshape(b_pad, 64 * NF)                         # free reshape
    out = fc_stack(feats, prep["w1"], prep["b1"], prep["w2"], prep["b2"],
                   prep["w3"], prep["b3"], tile_b=tb)
    return out[:B]


# ----------------------------------------------------------------------------
# Pure-JAX references for correctness checks
# ----------------------------------------------------------------------------
def _ref_prepped(prep, x_nchw):
    """Replicates the kernel math exactly (bf16 MXU inputs, f32 accumulation)."""
    B = x_nchw.shape[0]
    x = jnp.transpose(x_nchw, (0, 2, 3, 1)).astype(jnp.float32)
    x = jnp.pad(x, ((0, 0), (0, 0), (0, 0), (0, C_PAD - x.shape[-1])))
    act = x
    for layer in range(3):
        xp = jnp.pad(act, ((0, 0), (1, 1), (1, 1), (0, 0)))
        acc = jnp.zeros((B * 64, NF), jnp.float32)
        for k in range(9):
            dy, dx = k // 3, k % 3
            xs = xp[:, dy:dy + 8, dx:dx + 8, :].reshape(B * 64, C_PAD)
            acc = acc + jnp.dot(xs.astype(jnp.bfloat16), prep["wconv"][layer * 9 + k],
                                preferred_element_type=jnp.float32)
        act = jnp.maximum(acc + prep["shifts"][layer], 0.0).reshape(B, 8, 8, NF)
    feats = act.reshape(B, 64 * NF).astype(jnp.bfloat16)
    h = jnp.maximum(jnp.dot(feats, prep["w1"],
                            preferred_element_type=jnp.float32) + prep["b1"], 0.0)
    h = jnp.maximum(jnp.dot(h.astype(jnp.bfloat16), prep["w2"],
                            preferred_element_type=jnp.float32) + prep["b2"], 0.0)
    v = jnp.sum(h * prep["w3"], axis=-1, keepdims=True) + prep["b3"]
    return jnp.tanh(v)


def _ref_f32(params, x_nchw, eps=1e-5):
    """Full-f32 reference with original PyTorch (eval-mode BN) semantics."""
    hp = jax.lax.Precision.HIGHEST
    B = x_nchw.shape[0]
    x = jnp.transpose(x_nchw, (0, 2, 3, 1))

    def conv_block(x, w, b, bn):
        scale = bn["gamma"] / jnp.sqrt(bn["var"] + eps)
        shift = scale * (b - bn["mean"]) + bn["beta"]
        xp = jnp.pad(x, ((0, 0), (1, 1), (1, 1), (0, 0)))
        cols = [xp[:, dy:dy + 8, dx:dx + 8, :] for dy in range(3) for dx in range(3)]
        patches = jnp.stack(cols, axis=3).reshape(B * 64, -1)
        wm = jnp.transpose(w, (2, 3, 1, 0)).reshape(-1, w.shape[0])
        y = jnp.dot(patches, wm, precision=hp) * scale + shift
        return jnp.maximum(y, 0.0).reshape(B, 8, 8, -1)

    x = conv_block(x, params["conv1_w"], params["conv1_b"], params["bn1"])
    x = conv_block(x, params["conv2_w"], params["conv2_b"], params["bn2"])
    x = conv_block(x, params["conv3_w"], params["conv3_b"], params["bn3"])
    x = jnp.transpose(x, (0, 3, 1, 2)).reshape(B, -1)   # NCHW flatten like PyTorch
    x = jnp.maximum(jnp.dot(x, params["fc1_w"].T, precision=hp) + params["fc1_b"], 0.0)
    x = jnp.maximum(jnp.dot(x, params["fc2_w"].T, precision=hp) + params["fc2_b"], 0.0)
    return jnp.tanh(jnp.dot(x, params["fc3_w"].T, precision=hp) + params["fc3_b"])


if __name__ == "__main__":
    key = jax.random.PRNGKey(0)
    k_params, k_x = jax.random.split(key)
    params = init_params(k_params, input_channels=14, num_filters=64, fc_size=128)
    prep = prepare_params(params)      # one-time: BN fold, bf16 cast, layout permute

    B = 2
    x = jax.random.normal(k_x, (B, 14, 8, 8), jnp.float32)   # NCHW like PyTorch

    fwd = jax.jit(functools.partial(chess_value_forward, tile_b=8))
    out = jax.block_until_ready(fwd(prep, x))

    ref_exact = jax.block_until_ready(_ref_prepped(prep, x))   # same math as kernels
    ref_f32 = jax.block_until_ready(_ref_f32(params, x))       # original f32 semantics

    assert out.shape == (B, 1), out.shape
    assert bool(jnp.all(jnp.isfinite(out)))
    assert bool(jnp.all(jnp.abs(out) <= 1.0))
    assert bool(jnp.allclose(out, ref_exact, atol=2e-3, rtol=2e-3)), (out, ref_exact)
    assert bool(jnp.allclose(out, ref_f32, atol=5e-2, rtol=5e-2)), (out, ref_f32)

    print("KERNEL_OK")
</pallas_src>

<mosaic_0001>
module attributes {stable_mosaic.version = 11 : i64} {
  func.func @_conv_stack_kernel(%arg0: i32, %arg1: memref<2x8x8x64xf32, #tpu.memory_space<vmem>>, %arg2: memref<27x64x64xbf16, #tpu.memory_space<vmem>>, %arg3: memref<3x1x64xf32, #tpu.memory_space<vmem>>, %arg4: memref<2x64x64xbf16, #tpu.memory_space<vmem>>, %arg5: memref<2x10x10x64xf32, #tpu.memory_space<vmem>>) attributes {dimension_semantics = [#tpu.dimension_semantics<parallel>], iteration_bounds = array<i64: 1>, scalar_prefetch = 0 : i64, scratch_operands = 1 : i64, tpu.core_type = #tpu.core_type<tc>, window_params = [{transform_indices = @transform_0, window_bounds = array<i64: 2, 8, 8, 64>}, {pipeline_mode = #tpu.pipeline_mode<synchronous>, transform_indices = @transform_1, window_bounds = array<i64: 27, 64, 64>}, {pipeline_mode = #tpu.pipeline_mode<synchronous>, transform_indices = @transform_2, window_bounds = array<i64: 3, 1, 64>}, {transform_indices = @transform_3, window_bounds = array<i64: 2, 64, 64>}]} {
    %cst = arith.constant 0.000000e+00 : f32
    %0 = vector.broadcast %cst : f32 to vector<2x10x10x64xf32>
    %c0 = arith.constant 0 : index
    %c0_0 = arith.constant 0 : index
    %c0_1 = arith.constant 0 : index
    %c0_2 = arith.constant 0 : index
    %1 = vector.load %arg5[%c0, %c0_0, %c0_1, %c0_2] : memref<2x10x10x64xf32, #tpu.memory_space<vmem>>, vector<2x10x10x64xf32>
    tpu.vector_store %arg5[%c0, %c0_0, %c0_1, %c0_2], %0 {strides = array<i32>} : memref<2x10x10x64xf32, #tpu.memory_space<vmem>>, vector<2x10x10x64xf32>,
    %c0_3 = arith.constant 0 : index
    %c0_4 = arith.constant 0 : index
    %c0_5 = arith.constant 0 : index
    %c0_6 = arith.constant 0 : index
    %2 = vector.load %arg1[%c0_3, %c0_4, %c0_5, %c0_6] : memref<2x8x8x64xf32, #tpu.memory_space<vmem>>, vector<2x8x8x64xf32>
    %c0_7 = arith.constant 0 : index
    %c1 = arith.constant 1 : index
    %c1_8 = arith.constant 1 : index
    %c0_9 = arith.constant 0 : index
    %3 = vector.load %arg5[%c0_7, %c1, %c1_8, %c0_9] : memref<2x10x10x64xf32, #tpu.memory_space<vmem>>, vector<2x8x8x64xf32>
    tpu.vector_store %arg5[%c0_7, %c1, %c1_8, %c0_9], %2 {strides = array<i32>} : memref<2x10x10x64xf32, #tpu.memory_space<vmem>>, vector<2x8x8x64xf32>,
    %cst_10 = arith.constant 0.000000e+00 : f32
    %4 = vector.broadcast %cst_10 : f32 to vector<128x64xf32>
    %c0_11 = arith.constant 0 : index
    %c0_12 = arith.constant 0 : index
    %c0_13 = arith.constant 0 : index
    %c0_14 = arith.constant 0 : index
    %5 = vector.load %arg5[%c0_11, %c0_12, %c0_13, %c0_14] : memref<2x10x10x64xf32, #tpu.memory_space<vmem>>, vector<2x8x8x64xf32>
    %6 = vector.shape_cast %5 : vector<2x8x8x64xf32> to vector<128x64xf32>
    %7 = arith.truncf %6 : vector<128x64xf32> to vector<128x64xbf16>
    %c0_15 = arith.constant 0 : index
    %c0_16 = arith.constant 0 : index
    %c0_17 = arith.constant 0 : index
    %8 = vector.load %arg2[%c0_15, %c0_16, %c0_17] : memref<27x64x64xbf16, #tpu.memory_space<vmem>>, vector<1x64x64xbf16>
    %9 = vector.shape_cast %8 : vector<1x64x64xbf16> to vector<64x64xbf16>
    %cst_18 = arith.constant dense<0.000000e+00> : vector<128x64xf32>
    %10 = tpu.matmul %7, %9, %cst_18 {dimension_numbers = #tpu.dot_dimension_numbers<[1], [0], [0], [1], [0, 0, 1, 1], [], []>} : vector<128x64xbf16>, vector<64x64xbf16>, vector<128x64xf32> -> vector<128x64xf32>
    %11 = arith.addf %4, %10 : vector<128x64xf32>
    %c0_19 = arith.constant 0 : index
    %c0_20 = arith.constant 0 : index
    %c1_21 = arith.constant 1 : index
    %c0_22 = arith.constant 0 : index
    %12 = vector.load %arg5[%c0_19, %c0_20, %c1_21, %c0_22] : memref<2x10x10x64xf32, #tpu.memory_space<vmem>>, vector<2x8x8x64xf32>
    %13 = vector.shape_cast %12 : vector<2x8x8x64xf32> to vector<128x64xf32>
    %14 = arith.truncf %13 : vector<128x64xf32> to vector<128x64xbf16>
    %c1_23 = arith.constant 1 : index
    %c0_24 = arith.constant 0 : index
    %c0_25 = arith.constant 0 : index
    %15 = vector.load %arg2[%c1_23, %c0_24, %c0_25] : memref<27x64x64xbf16, #tpu.memory_space<vmem>>, vector<1x64x64xbf16>
    %16 = vector.shape_cast %15 : vector<1x64x64xbf16> to vector<64x64xbf16>
    %cst_26 = arith.constant dense<0.000000e+00> : vector<128x64xf32>
    %17 = tpu.matmul %14, %16, %cst_26 {dimension_numbers = #tpu.dot_dimension_numbers<[1], [0], [0], [1], [0, 0, 1, 1], [], []>} : vector<128x64xbf16>, vector<64x64xbf16>, vector<128x64xf32> -> vector<128x64xf32>
    %18 = arith.addf %11, %17 : vector<128x64xf32>
    %c0_27 = arith.constant 0 : index
    %c0_28 = arith.constant 0 : index
    %c2 = arith.constant 2 : index
    %c0_29 = arith.constant 0 : index
    %19 = vector.load %arg5[%c0_27, %c0_28, %c2, %c0_29] : memref<2x10x10x64xf32, #tpu.memory_space<vmem>>, vector<2x8x8x64xf32>
    %20 = vector.shape_cast %19 : vector<2x8x8x64xf32> to vector<128x64xf32>
    %21 = arith.truncf %20 : vector<128x64xf32> to vector<128x64xbf16>
    %c2_30 = arith.constant 2 : index
    %c0_31 = arith.constant 0 : index
    %c0_32 = arith.constant 0 : index
    %22 = vector.load %arg2[%c2_30, %c0_31, %c0_32] : memref<27x64x64xbf16, #tpu.memory_space<vmem>>, vector<1x64x64xbf16>
    %23 = vector.shape_cast %22 : vector<1x64x64xbf16> to vector<64x64xbf16>
    %cst_33 = arith.constant dense<0.000000e+00> : vector<128x64xf32>
    %24 = tpu.matmul %21, %23, %cst_33 {dimension_numbers = #tpu.dot_dimension_numbers<[1], [0], [0], [1], [0, 0, 1, 1], [], []>} : vector<128x64xbf16>, vector<64x64xbf16>, vector<128x64xf32> -> vector<128x64xf32>
    %25 = arith.addf %18, %24 : vector<128x64xf32>
    %c0_34 = arith.constant 0 : index
    %c1_35 = arith.constant 1 : index
    %c0_36 = arith.constant 0 : index
    %c0_37 = arith.constant 0 : index
    %26 = vector.load %arg5[%c0_34, %c1_35, %c0_36, %c0_37] : memref<2x10x10x64xf32, #tpu.memory_space<vmem>>, vector<2x8x8x64xf32>
    %27 = vector.shape_cast %26 : vector<2x8x8x64xf32> to vector<128x64xf32>
    %28 = arith.truncf %27 : vector<128x64xf32> to vector<128x64xbf16>
    %c3 = arith.constant 3 : index
    %c0_38 = arith.constant 0 : index
    %c0_39 = arith.constant 0 : index
    %29 = vector.load %arg2[%c3, %c0_38, %c0_39] : memref<27x64x64xbf16, #tpu.memory_space<vmem>>, vector<1x64x64xbf16>
    %30 = vector.shape_cast %29 : vector<1x64x64xbf16> to vector<64x64xbf16>
    %cst_40 = arith.constant dense<0.000000e+00> : vector<128x64xf32>
    %31 = tpu.matmul %28, %30, %cst_40 {dimension_numbers = #tpu.dot_dimension_numbers<[1], [0], [0], [1], [0, 0, 1, 1], [], []>} : vector<128x64xbf16>, vector<64x64xbf16>, vector<128x64xf32> -> vector<128x64xf32>
    %32 = arith.addf %25, %31 : vector<128x64xf32>
    %c0_41 = arith.constant 0 : index
    %c1_42 = arith.constant 1 : index
    %c1_43 = arith.constant 1 : index
    %c0_44 = arith.constant 0 : index
    %33 = vector.load %arg5[%c0_41, %c1_42, %c1_43, %c0_44] : memref<2x10x10x64xf32, #tpu.memory_space<vmem>>, vector<2x8x8x64xf32>
    %34 = vector.shape_cast %33 : vector<2x8x8x64xf32> to vector<128x64xf32>
    %35 = arith.truncf %34 : vector<128x64xf32> to vector<128x64xbf16>
    %c4 = arith.constant 4 : index
    %c0_45 = arith.constant 0 : index
    %c0_46 = arith.constant 0 : index
    %36 = vector.load %arg2[%c4, %c0_45, %c0_46] : memref<27x64x64xbf16, #tpu.memory_space<vmem>>, vector<1x64x64xbf16>
    %37 = vector.shape_cast %36 : vector<1x64x64xbf16> to vector<64x64xbf16>
    %cst_47 = arith.constant dense<0.000000e+00> : vector<128x64xf32>
    %38 = tpu.matmul %35, %37, %cst_47 {dimension_numbers = #tpu.dot_dimension_numbers<[1], [0], [0], [1], [0, 0, 1, 1], [], []>} : vector<128x64xbf16>, vector<64x64xbf16>, vector<128x64xf32> -> vector<128x64xf32>
    %39 = arith.addf %32, %38 : vector<128x64xf32>
    %c0_48 = arith.constant 0 : index
    %c1_49 = arith.constant 1 : index
    %c2_50 = arith.constant 2 : index
    %c0_51 = arith.constant 0 : index
    %40 = vector.load %arg5[%c0_48, %c1_49, %c2_50, %c0_51] : memref<2x10x10x64xf32, #tpu.memory_space<vmem>>, vector<2x8x8x64xf32>
    %41 = vector.shape_cast %40 : vector<2x8x8x64xf32> to vector<128x64xf32>
    %42 = arith.truncf %41 : vector<128x64xf32> to vector<128x64xbf16>
    %c5 = arith.constant 5 : index
    %c0_52 = arith.constant 0 : index
    %c0_53 = arith.constant 0 : index
    %43 = vector.load %arg2[%c5, %c0_52, %c0_53] : memref<27x64x64xbf16, #tpu.memory_space<vmem>>, vector<1x64x64xbf16>
    %44 = vector.shape_cast %43 : vector<1x64x64xbf16> to vector<64x64xbf16>
    %cst_54 = arith.constant dense<0.000000e+00> : vector<128x64xf32>
    %45 = tpu.matmul %42, %44, %cst_54 {dimension_numbers = #tpu.dot_dimension_numbers<[1], [0], [0], [1], [0, 0, 1, 1], [], []>} : vector<128x64xbf16>, vector<64x64xbf16>, vector<128x64xf32> -> vector<128x64xf32>
    %46 = arith.addf %39, %45 : vector<128x64xf32>
    %c0_55 = arith.constant 0 : index
    %c2_56 = arith.constant 2 : index
    %c0_57 = arith.constant 0 : index
    %c0_58 = arith.constant 0 : index
    %47 = vector.load %arg5[%c0_55, %c2_56, %c0_57, %c0_58] : memref<2x10x10x64xf32, #tpu.memory_space<vmem>>, vector<2x8x8x64xf32>
    %48 = vector.shape_cast %47 : vector<2x8x8x64xf32> to vector<128x64xf32>
    %49 = arith.truncf %48 : vector<128x64xf32> to vector<128x64xbf16>
    %c6 = arith.constant 6 : index
    %c0_59 = arith.constant 0 : index
    %c0_60 = arith.constant 0 : index
    %50 = vector.load %arg2[%c6, %c0_59, %c0_60] : memref<27x64x64xbf16, #tpu.memory_space<vmem>>, vector<1x64x64xbf16>
    %51 = vector.shape_cast %50 : vector<1x64x64xbf16> to vector<64x64xbf16>
    %cst_61 = arith.constant dense<0.000000e+00> : vector<128x64xf32>
    %52 = tpu.matmul %49, %51, %cst_61 {dimension_numbers = #tpu.dot_dimension_numbers<[1], [0], [0], [1], [0, 0, 1, 1], [], []>} : vector<128x64xbf16>, vector<64x64xbf16>, vector<128x64xf32> -> vector<128x64xf32>
    %53 = arith.addf %46, %52 : vector<128x64xf32>
    %c0_62 = arith.constant 0 : index
    %c2_63 = arith.constant 2 : index
    %c1_64 = arith.constant 1 : index
    %c0_65 = arith.constant 0 : index
    %54 = vector.load %arg5[%c0_62, %c2_63, %c1_64, %c0_65] : memref<2x10x10x64xf32, #tpu.memory_space<vmem>>, vector<2x8x8x64xf32>
    %55 = vector.shape_cast %54 : vector<2x8x8x64xf32> to vector<128x64xf32>
    %56 = arith.truncf %55 : vector<128x64xf32> to vector<128x64xbf16>
    %c7 = arith.constant 7 : index
    %c0_66 = arith.constant 0 : index
    %c0_67 = arith.constant 0 : index
    %57 = vector.load %arg2[%c7, %c0_66, %c0_67] : memref<27x64x64xbf16, #tpu.memory_space<vmem>>, vector<1x64x64xbf16>
    %58 = vector.shape_cast %57 : vector<1x64x64xbf16> to vector<64x64xbf16>
    %cst_68 = arith.constant dense<0.000000e+00> : vector<128x64xf32>
    %59 = tpu.matmul %56, %58, %cst_68 {dimension_numbers = #tpu.dot_dimension_numbers<[1], [0], [0], [1], [0, 0, 1, 1], [], []>} : vector<128x64xbf16>, vector<64x64xbf16>, vector<128x64xf32> -> vector<128x64xf32>
    %60 = arith.addf %53, %59 : vector<128x64xf32>
    %c0_69 = arith.constant 0 : index
    %c2_70 = arith.constant 2 : index
    %c2_71 = arith.constant 2 : index
    %c0_72 = arith.constant 0 : index
    %61 = vector.load %arg5[%c0_69, %c2_70, %c2_71, %c0_72] : memref<2x10x10x64xf32, #tpu.memory_space<vmem>>, vector<2x8x8x64xf32>
    %62 = vector.shape_cast %61 : vector<2x8x8x64xf32> to vector<128x64xf32>
    %63 = arith.truncf %62 : vector<128x64xf32> to vector<128x64xbf16>
    %c8 = arith.constant 8 : index
    %c0_73 = arith.constant 0 : index
    %c0_74 = arith.constant 0 : index
    %64 = vector.load %arg2[%c8, %c0_73, %c0_74] : memref<27x64x64xbf16, #tpu.memory_space<vmem>>, vector<1x64x64xbf16>
    %65 = vector.shape_cast %64 : vector<1x64x64xbf16> to vector<64x64xbf16>
    %cst_75 = arith.constant dense<0.000000e+00> : vector<128x64xf32>
    %66 = tpu.matmul %63, %65, %cst_75 {dimension_numbers = #tpu.dot_dimension_numbers<[1], [0], [0], [1], [0, 0, 1, 1], [], []>} : vector<128x64xbf16>, vector<64x64xbf16>, vector<128x64xf32> -> vector<128x64xf32>
    %67 = arith.addf %60, %66 : vector<128x64xf32>
    %c0_76 = arith.constant 0 : index
    %c0_77 = arith.constant 0 : index
    %c0_78 = arith.constant 0 : index
    %68 = vector.load %arg3[%c0_76, %c0_77, %c0_78] : memref<3x1x64xf32, #tpu.memory_space<vmem>>, vector<1x1x64xf32>
    %69 = vector.shape_cast %68 : vector<1x1x64xf32> to vector<1x64xf32>
    %70 = vector.broadcast %69 : vector<1x64xf32> to vector<128x64xf32>
    %71 = arith.addf %67, %70 : vector<128x64xf32>
    %cst_79 = arith.constant 0.000000e+00 : f32
    %72 = vector.broadcast %cst_79 : f32 to vector<128x64xf32>
    %73 = arith.maximumf %71, %72 : vector<128x64xf32>
    %74 = vector.shape_cast %73 : vector<128x64xf32> to vector<2x8x8x64xf32>
    %c0_80 = arith.constant 0 : index
    %c1_81 = arith.constant 1 : index
    %c1_82 = arith.constant 1 : index
    %c0_83 = arith.constant 0 : index
    %75 = vector.load %arg5[%c0_80, %c1_81, %c1_82, %c0_83] : memref<2x10x10x64xf32, #tpu.memory_space<vmem>>, vector<2x8x8x64xf32>
    tpu.vector_store %arg5[%c0_80, %c1_81, %c1_82, %c0_83], %74 {strides = array<i32>} : memref<2x10x10x64xf32, #tpu.memory_space<vmem>>, vector<2x8x8x64xf32>,
    %cst_84 = arith.constant 0.000000e+00 : f32
    %76 = vector.broadcast %cst_84 : f32 to vector<128x64xf32>
    %c0_85 = arith.constant 0 : index
    %c0_86 = arith.constant 0 : index
    %c0_87 = arith.constant 0 : index
    %c0_88 = arith.constant 0 : index
    %77 = vector.load %arg5[%c0_85, %c0_86, %c0_87, %c0_88] : memref<2x10x10x64xf32, #tpu.memory_space<vmem>>, vector<2x8x8x64xf32>
    %78 = vector.shape_cast %77 : vector<2x8x8x64xf32> to vector<128x64xf32>
    %79 = arith.truncf %78 : vector<128x64xf32> to vector<128x64xbf16>
    %c9 = arith.constant 9 : index
    %c0_89 = arith.constant 0 : index
    %c0_90 = arith.constant 0 : index
    %80 = vector.load %arg2[%c9, %c0_89, %c0_90] : memref<27x64x64xbf16, #tpu.memory_space<vmem>>, vector<1x64x64xbf16>
    %81 = vector.shape_cast %80 : vector<1x64x64xbf16> to vector<64x64xbf16>
    %cst_91 = arith.constant dense<0.000000e+00> : vector<128x64xf32>
    %82 = tpu.matmul %79, %81, %cst_91 {dimension_numbers = #tpu.dot_dimension_numbers<[1], [0], [0], [1], [0, 0, 1, 1], [], []>} : vector<128x64xbf16>, vector<64x64xbf16>, vector<128x64xf32> -> vector<128x64xf32>
    %83 = arith.addf %76, %82 : vector<128x64xf32>
    %c0_92 = arith.constant 0 : index
    %c0_93 = arith.constant 0 : index
    %c1_94 = arith.constant 1 : index
    %c0_95 = arith.constant 0 : index
    %84 = vector.load %arg5[%c0_92, %c0_93, %c1_94, %c0_95] : memref<2x10x10x64xf32, #tpu.memory_space<vmem>>, vector<2x8x8x64xf32>
    %85 = vector.shape_cast %84 : vector<2x8x8x64xf32> to vector<128x64xf32>
    %86 = arith.truncf %85 : vector<128x64xf32> to vector<128x64xbf16>
    %c10 = arith.constant 10 : index
    %c0_96 = arith.constant 0 : index
    %c0_97 = arith.constant 0 : index
    %87 = vector.load %arg2[%c10, %c0_96, %c0_97] : memref<27x64x64xbf16, #tpu.memory_space<vmem>>, vector<1x64x64xbf16>
    %88 = vector.shape_cast %87 : vector<1x64x64xbf16> to vector<64x64xbf16>
    %cst_98 = arith.constant dense<0.000000e+00> : vector<128x64xf32>
    %89 = tpu.matmul %86, %88, %cst_98 {dimension_numbers = #tpu.dot_dimension_numbers<[1], [0], [0], [1], [0, 0, 1, 1], [], []>} : vector<128x64xbf16>, vector<64x64xbf16>, vector<128x64xf32> -> vector<128x64xf32>
    %90 = arith.addf %83, %89 : vector<128x64xf32>
    %c0_99 = arith.constant 0 : index
    %c0_100 = arith.constant 0 : index
    %c2_101 = arith.constant 2 : index
    %c0_102 = arith.constant 0 : index
    %91 = vector.load %arg5[%c0_99, %c0_100, %c2_101, %c0_102] : memref<2x10x10x64xf32, #tpu.memory_space<vmem>>, vector<2x8x8x64xf32>
    %92 = vector.shape_cast %91 : vector<2x8x8x64xf32> to vector<128x64xf32>
    %93 = arith.truncf %92 : vector<128x64xf32> to vector<128x64xbf16>
    %c11 = arith.constant 11 : index
    %c0_103 = arith.constant 0 : index
    %c0_104 = arith.constant 0 : index
    %94 = vector.load %arg2[%c11, %c0_103, %c0_104] : memref<27x64x64xbf16, #tpu.memory_space<vmem>>, vector<1x64x64xbf16>
    %95 = vector.shape_cast %94 : vector<1x64x64xbf16> to vector<64x64xbf16>
    %cst_105 = arith.constant dense<0.000000e+00> : vector<128x64xf32>
    %96 = tpu.matmul %93, %95, %cst_105 {dimension_numbers = #tpu.dot_dimension_numbers<[1], [0], [0], [1], [0, 0, 1, 1], [], []>} : vector<128x64xbf16>, vector<64x64xbf16>, vector<128x64xf32> -> vector<128x64xf32>
    %97 = arith.addf %90, %96 : vector<128x64xf32>
    %c0_106 = arith.constant 0 : index
    %c1_107 = arith.constant 1 : index
    %c0_108 = arith.constant 0 : index
    %c0_109 = arith.constant 0 : index
    %98 = vector.load %arg5[%c0_106, %c1_107, %c0_108, %c0_109] : memref<2x10x10x64xf32, #tpu.memory_space<vmem>>, vector<2x8x8x64xf32>
    %99 = vector.shape_cast %98 : vector<2x8x8x64xf32> to vector<128x64xf32>
    %100 = arith.truncf %99 : vector<128x64xf32> to vector<128x64xbf16>
    %c12 = arith.constant 12 : index
    %c0_110 = arith.constant 0 : index
    %c0_111 = arith.constant 0 : index
    %101 = vector.load %arg2[%c12, %c0_110, %c0_111] : memref<27x64x64xbf16, #tpu.memory_space<vmem>>, vector<1x64x64xbf16>
    %102 = vector.shape_cast %101 : vector<1x64x64xbf16> to vector<64x64xbf16>
    %cst_112 = arith.constant dense<0.000000e+00> : vector<128x64xf32>
    %103 = tpu.matmul %100, %102, %cst_112 {dimension_numbers = #tpu.dot_dimension_numbers<[1], [0], [0], [1], [0, 0, 1, 1], [], []>} : vector<128x64xbf16>, vector<64x64xbf16>, vector<128x64xf32> -> vector<128x64xf32>
    %104 = arith.addf %97, %103 : vector<128x64xf32>
    %c0_113 = arith.constant 0 : index
    %c1_114 = arith.constant 1 : index
    %c1_115 = arith.constant 1 : index
    %c0_116 = arith.constant 0 : index
    %105 = vector.load %arg5[%c0_113, %c1_114, %c1_115, %c0_116] : memref<2x10x10x64xf32, #tpu.memory_space<vmem>>, vector<2x8x8x64xf32>
    %106 = vector.shape_cast %105 : vector<2x8x8x64xf32> to vector<128x64xf32>
    %107 = arith.truncf %106 : vector<128x64xf32> to vector<128x64xbf16>
    %c13 = arith.constant 13 : index
    %c0_117 = arith.constant 0 : index
    %c0_118 = arith.constant 0 : index
    %108 = vector.load %arg2[%c13, %c0_117, %c0_118] : memref<27x64x64xbf16, #tpu.memory_space<vmem>>, vector<1x64x64xbf16>
    %109 = vector.shape_cast %108 : vector<1x64x64xbf16> to vector<64x64xbf16>
    %cst_119 = arith.constant dense<0.000000e+00> : vector<128x64xf32>
    %110 = tpu.matmul %107, %109, %cst_119 {dimension_numbers = #tpu.dot_dimension_numbers<[1], [0], [0], [1], [0, 0, 1, 1], [], []>} : vector<128x64xbf16>, vector<64x64xbf16>, vector<128x64xf32> -> vector<128x64xf32>
    %111 = arith.addf %104, %110 : vector<128x64xf32>
    %c0_120 = arith.constant 0 : index
    %c1_121 = arith.constant 1 : index
    %c2_122 = arith.constant 2 : index
    %c0_123 = arith.constant 0 : index
    %112 = vector.load %arg5[%c0_120, %c1_121, %c2_122, %c0_123] : memref<2x10x10x64xf32, #tpu.memory_space<vmem>>, vector<2x8x8x64xf32>
    %113 = vector.shape_cast %112 : vector<2x8x8x64xf32> to vector<128x64xf32>
    %114 = arith.truncf %113 : vector<128x64xf32> to vector<128x64xbf16>
    %c14 = arith.constant 14 : index
    %c0_124 = arith.constant 0 : index
    %c0_125 = arith.constant 0 : index
    %115 = vector.load %arg2[%c14, %c0_124, %c0_125] : memref<27x64x64xbf16, #tpu.memory_space<vmem>>, vector<1x64x64xbf16>
    %116 = vector.shape_cast %115 : vector<1x64x64xbf16> to vector<64x64xbf16>
    %cst_126 = arith.constant dense<0.000000e+00> : vector<128x64xf32>
    %117 = tpu.matmul %114, %116, %cst_126 {dimension_numbers = #tpu.dot_dimension_numbers<[1], [0], [0], [1], [0, 0, 1, 1], [], []>} : vector<128x64xbf16>, vector<64x64xbf16>, vector<128x64xf32> -> vector<128x64xf32>
    %118 = arith.addf %111, %117 : vector<128x64xf32>
    %c0_127 = arith.constant 0 : index
    %c2_128 = arith.constant 2 : index
    %c0_129 = arith.constant 0 : index
    %c0_130 = arith.constant 0 : index
    %119 = vector.load %arg5[%c0_127, %c2_128, %c0_129, %c0_130] : memref<2x10x10x64xf32, #tpu.memory_space<vmem>>, vector<2x8x8x64xf32>
    %120 = vector.shape_cast %119 : vector<2x8x8x64xf32> to vector<128x64xf32>
    %121 = arith.truncf %120 : vector<128x64xf32> to vector<128x64xbf16>
    %c15 = arith.constant 15 : index
    %c0_131 = arith.constant 0 : index
    %c0_132 = arith.constant 0 : index
    %122 = vector.load %arg2[%c15, %c0_131, %c0_132] : memref<27x64x64xbf16, #tpu.memory_space<vmem>>, vector<1x64x64xbf16>
    %123 = vector.shape_cast %122 : vector<1x64x64xbf16> to vector<64x64xbf16>
    %cst_133 = arith.constant dense<0.000000e+00> : vector<128x64xf32>
    %124 = tpu.matmul %121, %123, %cst_133 {dimension_numbers = #tpu.dot_dimension_numbers<[1], [0], [0], [1], [0, 0, 1, 1], [], []>} : vector<128x64xbf16>, vector<64x64xbf16>, vector<128x64xf32> -> vector<128x64xf32>
    %125 = arith.addf %118, %124 : vector<128x64xf32>
    %c0_134 = arith.constant 0 : index
    %c2_135 = arith.constant 2 : index
    %c1_136 = arith.constant 1 : index
    %c0_137 = arith.constant 0 : index
    %126 = vector.load %arg5[%c0_134, %c2_135, %c1_136, %c0_137] : memref<2x10x10x64xf32, #tpu.memory_space<vmem>>, vector<2x8x8x64xf32>
    %127 = vector.shape_cast %126 : vector<2x8x8x64xf32> to vector<128x64xf32>
    %128 = arith.truncf %127 : vector<128x64xf32> to vector<128x64xbf16>
    %c16 = arith.constant 16 : index
    %c0_138 = arith.constant 0 : index
    %c0_139 = arith.constant 0 : index
    %129 = vector.load %arg2[%c16, %c0_138, %c0_139] : memref<27x64x64xbf16, #tpu.memory_space<vmem>>, vector<1x64x64xbf16>
    %130 = vector.shape_cast %129 : vector<1x64x64xbf16> to vector<64x64xbf16>
    %cst_140 = arith.constant dense<0.000000e+00> : vector<128x64xf32>
    %131 = tpu.matmul %128, %130, %cst_140 {dimension_numbers = #tpu.dot_dimension_numbers<[1], [0], [0], [1], [0, 0, 1, 1], [], []>} : vector<128x64xbf16>, vector<64x64xbf16>, vector<128x64xf32> -> vector<128x64xf32>
    %132 = arith.addf %125, %131 : vector<128x64xf32>
    %c0_141 = arith.constant 0 : index
    %c2_142 = arith.constant 2 : index
    %c2_143 = arith.constant 2 : index
    %c0_144 = arith.constant 0 : index
    %133 = vector.load %arg5[%c0_141, %c2_142, %c2_143, %c0_144] : memref<2x10x10x64xf32, #tpu.memory_space<vmem>>, vector<2x8x8x64xf32>
    %134 = vector.shape_cast %133 : vector<2x8x8x64xf32> to vector<128x64xf32>
    %135 = arith.truncf %134 : vector<128x64xf32> to vector<128x64xbf16>
    %c17 = arith.constant 17 : index
    %c0_145 = arith.constant 0 : index
    %c0_146 = arith.constant 0 : index
    %136 = vector.load %arg2[%c17, %c0_145, %c0_146] : memref<27x64x64xbf16, #tpu.memory_space<vmem>>, vector<1x64x64xbf16>
    %137 = vector.shape_cast %136 : vector<1x64x64xbf16> to vector<64x64xbf16>
    %cst_147 = arith.constant dense<0.000000e+00> : vector<128x64xf32>
    %138 = tpu.matmul %135, %137, %cst_147 {dimension_numbers = #tpu.dot_dimension_numbers<[1], [0], [0], [1], [0, 0, 1, 1], [], []>} : vector<128x64xbf16>, vector<64x64xbf16>, vector<128x64xf32> -> vector<128x64xf32>
    %139 = arith.addf %132, %138 : vector<128x64xf32>
    %c1_148 = arith.constant 1 : index
    %c0_149 = arith.constant 0 : index
    %c0_150 = arith.constant 0 : index
    %140 = vector.load %arg3[%c1_148, %c0_149, %c0_150] : memref<3x1x64xf32, #tpu.memory_space<vmem>>, vector<1x1x64xf32>
    %141 = vector.shape_cast %140 : vector<1x1x64xf32> to vector<1x64xf32>
    %142 = vector.broadcast %141 : vector<1x64xf32> to vector<128x64xf32>
    %143 = arith.addf %139, %142 : vector<128x64xf32>
    %cst_151 = arith.constant 0.000000e+00 : f32
    %144 = vector.broadcast %cst_151 : f32 to vector<128x64xf32>
    %145 = arith.maximumf %143, %144 : vector<128x64xf32>
    %146 = vector.shape_cast %145 : vector<128x64xf32> to vector<2x8x8x64xf32>
    %c0_152 = arith.constant 0 : index
    %c1_153 = arith.constant 1 : index
    %c1_154 = arith.constant 1 : index
    %c0_155 = arith.constant 0 : index
    %147 = vector.load %arg5[%c0_152, %c1_153, %c1_154, %c0_155] : memref<2x10x10x64xf32, #tpu.memory_space<vmem>>, vector<2x8x8x64xf32>
    tpu.vector_store %arg5[%c0_152, %c1_153, %c1_154, %c0_155], %146 {strides = array<i32>} : memref<2x10x10x64xf32, #tpu.memory_space<vmem>>, vector<2x8x8x64xf32>,
    %cst_156 = arith.constant 0.000000e+00 : f32
    %148 = vector.broadcast %cst_156 : f32 to vector<128x64xf32>
    %c0_157 = arith.constant 0 : index
    %c0_158 = arith.constant 0 : index
    %c0_159 = arith.constant 0 : index
    %c0_160 = arith.constant 0 : index
    %149 = vector.load %arg5[%c0_157, %c0_158, %c0_159, %c0_160] : memref<2x10x10x64xf32, #tpu.memory_space<vmem>>, vector<2x8x8x64xf32>
    %150 = vector.shape_cast %149 : vector<2x8x8x64xf32> to vector<128x64xf32>
    %151 = arith.truncf %150 : vector<128x64xf32> to vector<128x64xbf16>
    %c18 = arith.constant 18 : index
    %c0_161 = arith.constant 0 : index
    %c0_162 = arith.constant 0 : index
    %152 = vector.load %arg2[%c18, %c0_161, %c0_162] : memref<27x64x64xbf16, #tpu.memory_space<vmem>>, vector<1x64x64xbf16>
    %153 = vector.shape_cast %152 : vector<1x64x64xbf16> to vector<64x64xbf16>
    %cst_163 = arith.constant dense<0.000000e+00> : vector<128x64xf32>
    %154 = tpu.matmul %151, %153, %cst_163 {dimension_numbers = #tpu.dot_dimension_numbers<[1], [0], [0], [1], [0, 0, 1, 1], [], []>} : vector<128x64xbf16>, vector<64x64xbf16>, vector<128x64xf32> -> vector<128x64xf32>
    %155 = arith.addf %148, %154 : vector<128x64xf32>
    %c0_164 = arith.constant 0 : index
    %c0_165 = arith.constant 0 : index
    %c1_166 = arith.constant 1 : index
    %c0_167 = arith.constant 0 : index
    %156 = vector.load %arg5[%c0_164, %c0_165, %c1_166, %c0_167] : memref<2x10x10x64xf32, #tpu.memory_space<vmem>>, vector<2x8x8x64xf32>
    %157 = vector.shape_cast %156 : vector<2x8x8x64xf32> to vector<128x64xf32>
    %158 = arith.truncf %157 : vector<128x64xf32> to vector<128x64xbf16>
    %c19 = arith.constant 19 : index
    %c0_168 = arith.constant 0 : index
    %c0_169 = arith.constant 0 : index
    %159 = vector.load %arg2[%c19, %c0_168, %c0_169] : memref<27x64x64xbf16, #tpu.memory_space<vmem>>, vector<1x64x64xbf16>
    %160 = vector.shape_cast %159 : vector<1x64x64xbf16> to vector<64x64xbf16>
    %cst_170 = arith.constant dense<0.000000e+00> : vector<128x64xf32>
    %161 = tpu.matmul %158, %160, %cst_170 {dimension_numbers = #tpu.dot_dimension_numbers<[1], [0], [0], [1], [0, 0, 1, 1], [], []>} : vector<128x64xbf16>, vector<64x64xbf16>, vector<128x64xf32> -> vector<128x64xf32>
    %162 = arith.addf %155, %161 : vector<128x64xf32>
    %c0_171 = arith.constant 0 : index
    %c0_172 = arith.constant 0 : index
    %c2_173 = arith.constant 2 : index
    %c0_174 = arith.constant 0 : index
    %163 = vector.load %arg5[%c0_171, %c0_172, %c2_173, %c0_174] : memref<2x10x10x64xf32, #tpu.memory_space<vmem>>, vector<2x8x8x64xf32>
    %164 = vector.shape_cast %163 : vector<2x8x8x64xf32> to vector<128x64xf32>
    %165 = arith.truncf %164 : vector<128x64xf32> to vector<128x64xbf16>
    %c20 = arith.constant 20 : index
    %c0_175 = arith.constant 0 : index
    %c0_176 = arith.constant 0 : index
    %166 = vector.load %arg2[%c20, %c0_175, %c0_176] : memref<27x64x64xbf16, #tpu.memory_space<vmem>>, vector<1x64x64xbf16>
    %167 = vector.shape_cast %166 : vector<1x64x64xbf16> to vector<64x64xbf16>
    %cst_177 = arith.constant dense<0.000000e+00> : vector<128x64xf32>
    %168 = tpu.matmul %165, %167, %cst_177 {dimension_numbers = #tpu.dot_dimension_numbers<[1], [0], [0], [1], [0, 0, 1, 1], [], []>} : vector<128x64xbf16>, vector<64x64xbf16>, vector<128x64xf32> -> vector<128x64xf32>
    %169 = arith.addf %162, %168 : vector<128x64xf32>
    %c0_178 = arith.constant 0 : index
    %c1_179 = arith.constant 1 : index
    %c0_180 = arith.constant 0 : index
    %c0_181 = arith.constant 0 : index
    %170 = vector.load %arg5[%c0_178, %c1_179, %c0_180, %c0_181] : memref<2x10x10x64xf32, #tpu.memory_space<vmem>>, vector<2x8x8x64xf32>
    %171 = vector.shape_cast %170 : vector<2x8x8x64xf32> to vector<128x64xf32>
    %172 = arith.truncf %171 : vector<128x64xf32> to vector<128x64xbf16>
    %c21 = arith.constant 21 : index
    %c0_182 = arith.constant 0 : index
    %c0_183 = arith.constant 0 : index
    %173 = vector.load %arg2[%c21, %c0_182, %c0_183] : memref<27x64x64xbf16, #tpu.memory_space<vmem>>, vector<1x64x64xbf16>
    %174 = vector.shape_cast %173 : vector<1x64x64xbf16> to vector<64x64xbf16>
    %cst_184 = arith.constant dense<0.000000e+00> : vector<128x64xf32>
    %175 = tpu.matmul %172, %174, %cst_184 {dimension_numbers = #tpu.dot_dimension_numbers<[1], [0], [0], [1], [0, 0, 1, 1], [], []>} : vector<128x64xbf16>, vector<64x64xbf16>, vector<128x64xf32> -> vector<128x64xf32>
    %176 = arith.addf %169, %175 : vector<128x64xf32>
    %c0_185 = arith.constant 0 : index
    %c1_186 = arith.constant 1 : index
    %c1_187 = arith.constant 1 : index
    %c0_188 = arith.constant 0 : index
    %177 = vector.load %arg5[%c0_185, %c1_186, %c1_187, %c0_188] : memref<2x10x10x64xf32, #tpu.memory_space<vmem>>, vector<2x8x8x64xf32>
    %178 = vector.shape_cast %177 : vector<2x8x8x64xf32> to vector<128x64xf32>
    %179 = arith.truncf %178 : vector<128x64xf32> to vector<128x64xbf16>
    %c22 = arith.constant 22 : index
    %c0_189 = arith.constant 0 : index
    %c0_190 = arith.constant 0 : index
    %180 = vector.load %arg2[%c22, %c0_189, %c0_190] : memref<27x64x64xbf16, #tpu.memory_space<vmem>>, vector<1x64x64xbf16>
    %181 = vector.shape_cast %180 : vector<1x64x64xbf16> to vector<64x64xbf16>
    %cst_191 = arith.constant dense<0.000000e+00> : vector<128x64xf32>
    %182 = tpu.matmul %179, %181, %cst_191 {dimension_numbers = #tpu.dot_dimension_numbers<[1], [0], [0], [1], [0, 0, 1, 1], [], []>} : vector<128x64xbf16>, vector<64x64xbf16>, vector<128x64xf32> -> vector<128x64xf32>
    %183 = arith.addf %176, %182 : vector<128x64xf32>
    %c0_192 = arith.constant 0 : index
    %c1_193 = arith.constant 1 : index
    %c2_194 = arith.constant 2 : index
    %c0_195 = arith.constant 0 : index
    %184 = vector.load %arg5[%c0_192, %c1_193, %c2_194, %c0_195] : memref<2x10x10x64xf32, #tpu.memory_space<vmem>>, vector<2x8x8x64xf32>
    %185 = vector.shape_cast %184 : vector<2x8x8x64xf32> to vector<128x64xf32>
    %186 = arith.truncf %185 : vector<128x64xf32> to vector<128x64xbf16>
    %c23 = arith.constant 23 : index
    %c0_196 = arith.constant 0 : index
    %c0_197 = arith.constant 0 : index
    %187 = vector.load %arg2[%c23, %c0_196, %c0_197] : memref<27x64x64xbf16, #tpu.memory_space<vmem>>, vector<1x64x64xbf16>
    %188 = vector.shape_cast %187 : vector<1x64x64xbf16> to vector<64x64xbf16>
    %cst_198 = arith.constant dense<0.000000e+00> : vector<128x64xf32>
    %189 = tpu.matmul %186, %188, %cst_198 {dimension_numbers = #tpu.dot_dimension_numbers<[1], [0], [0], [1], [0, 0, 1, 1], [], []>} : vector<128x64xbf16>, vector<64x64xbf16>, vector<128x64xf32> -> vector<128x64xf32>
    %190 = arith.addf %183, %189 : vector<128x64xf32>
    %c0_199 = arith.constant 0 : index
    %c2_200 = arith.constant 2 : index
    %c0_201 = arith.constant 0 : index
    %c0_202 = arith.constant 0 : index
    %191 = vector.load %arg5[%c0_199, %c2_200, %c0_201, %c0_202] : memref<2x10x10x64xf32, #tpu.memory_space<vmem>>, vector<2x8x8x64xf32>
    %192 = vector.shape_cast %191 : vector<2x8x8x64xf32> to vector<128x64xf32>
    %193 = arith.truncf %192 : vector<128x64xf32> to vector<128x64xbf16>
    %c24 = arith.constant 24 : index
    %c0_203 = arith.constant 0 : index
    %c0_204 = arith.constant 0 : index
    %194 = vector.load %arg2[%c24, %c0_203, %c0_204] : memref<27x64x64xbf16, #tpu.memory_space<vmem>>, vector<1x64x64xbf16>
    %195 = vector.shape_cast %194 : vector<1x64x64xbf16> to vector<64x64xbf16>
    %cst_205 = arith.constant dense<0.000000e+00> : vector<128x64xf32>
    %196 = tpu.matmul %193, %195, %cst_205 {dimension_numbers = #tpu.dot_dimension_numbers<[1], [0], [0], [1], [0, 0, 1, 1], [], []>} : vector<128x64xbf16>, vector<64x64xbf16>, vector<128x64xf32> -> vector<128x64xf32>
    %197 = arith.addf %190, %196 : vector<128x64xf32>
    %c0_206 = arith.constant 0 : index
    %c2_207 = arith.constant 2 : index
    %c1_208 = arith.constant 1 : index
    %c0_209 = arith.constant 0 : index
    %198 = vector.load %arg5[%c0_206, %c2_207, %c1_208, %c0_209] : memref<2x10x10x64xf32, #tpu.memory_space<vmem>>, vector<2x8x8x64xf32>
    %199 = vector.shape_cast %198 : vector<2x8x8x64xf32> to vector<128x64xf32>
    %200 = arith.truncf %199 : vector<128x64xf32> to vector<128x64xbf16>
    %c25 = arith.constant 25 : index
    %c0_210 = arith.constant 0 : index
    %c0_211 = arith.constant 0 : index
    %201 = vector.load %arg2[%c25, %c0_210, %c0_211] : memref<27x64x64xbf16, #tpu.memory_space<vmem>>, vector<1x64x64xbf16>
    %202 = vector.shape_cast %201 : vector<1x64x64xbf16> to vector<64x64xbf16>
    %cst_212 = arith.constant dense<0.000000e+00> : vector<128x64xf32>
    %203 = tpu.matmul %200, %202, %cst_212 {dimension_numbers = #tpu.dot_dimension_numbers<[1], [0], [0], [1], [0, 0, 1, 1], [], []>} : vector<128x64xbf16>, vector<64x64xbf16>, vector<128x64xf32> -> vector<128x64xf32>
    %204 = arith.addf %197, %203 : vector<128x64xf32>
    %c0_213 = arith.constant 0 : index
    %c2_214 = arith.constant 2 : index
    %c2_215 = arith.constant 2 : index
    %c0_216 = arith.constant 0 : index
    %205 = vector.load %arg5[%c0_213, %c2_214, %c2_215, %c0_216] : memref<2x10x10x64xf32, #tpu.memory_space<vmem>>, vector<2x8x8x64xf32>
    %206 = vector.shape_cast %205 : vector<2x8x8x64xf32> to vector<128x64xf32>
    %207 = arith.truncf %206 : vector<128x64xf32> to vector<128x64xbf16>
    %c26 = arith.constant 26 : index
    %c0_217 = arith.constant 0 : index
    %c0_218 = arith.constant 0 : index
    %208 = vector.load %arg2[%c26, %c0_217, %c0_218] : memref<27x64x64xbf16, #tpu.memory_space<vmem>>, vector<1x64x64xbf16>
    %209 = vector.shape_cast %208 : vector<1x64x64xbf16> to vector<64x64xbf16>
    %cst_219 = arith.constant dense<0.000000e+00> : vector<128x64xf32>
    %210 = tpu.matmul %207, %209, %cst_219 {dimension_numbers = #tpu.dot_dimension_numbers<[1], [0], [0], [1], [0, 0, 1, 1], [], []>} : vector<128x64xbf16>, vector<64x64xbf16>, vector<128x64xf32> -> vector<128x64xf32>
    %211 = arith.addf %204, %210 : vector<128x64xf32>
    %c2_220 = arith.constant 2 : index
    %c0_221 = arith.constant 0 : index
    %c0_222 = arith.constant 0 : index
    %212 = vector.load %arg3[%c2_220, %c0_221, %c0_222] : memref<3x1x64xf32, #tpu.memory_space<vmem>>, vector<1x1x64xf32>
    %213 = vector.shape_cast %212 : vector<1x1x64xf32> to vector<1x64xf32>
    %214 = vector.broadcast %213 : vector<1x64xf32> to vector<128x64xf32>
    %215 = arith.addf %211, %214 : vector<128x64xf32>
    %cst_223 = arith.constant 0.000000e+00 : f32
    %216 = vector.broadcast %cst_223 : f32 to vector<128x64xf32>
    %217 = arith.maximumf %215, %216 : vector<128x64xf32>
    %218 = vector.shape_cast %217 : vector<128x64xf32> to vector<2x8x8x64xf32>
    %219 = vector.shape_cast %218 : vector<2x8x8x64xf32> to vector<2x64x64xf32>
    %220 = arith.truncf %219 : vector<2x64x64xf32> to vector<2x64x64xbf16>
    %c0_224 = arith.constant 0 : index
    %c0_225 = arith.constant 0 : index
    %c0_226 = arith.constant 0 : index
    %221 = vector.load %arg4[%c0_224, %c0_225, %c0_226] : memref<2x64x64xbf16, #tpu.memory_space<vmem>>, vector<2x64x64xbf16>
    tpu.vector_store %arg4[%c0_224, %c0_225, %c0_226], %220 {strides = array<i32>} : memref<2x64x64xbf16, #tpu.memory_space<vmem>>, vector<2x64x64xbf16>,
    return
  }
  func.func @transform_0(%arg0: i32) -> (i32, i32, i32, i32) {
    %c0_i32 = arith.constant 0 : i32
    %c0_i32_0 = arith.constant 0 : i32
    %c0_i32_1 = arith.constant 0 : i32
    %c0_i32_2 = arith.constant 0 : i32
    return %arg0, %c0_i32, %c0_i32_0, %c0_i32_1 : i32, i32, i32, i32
  }
  func.func @transform_1(%arg0: i32) -> (i32, i32, i32) {
    %c0_i32 = arith.constant 0 : i32
    %c0_i32_0 = arith.constant 0 : i32
    %c0_i32_1 = arith.constant 0 : i32
    %c0_i32_2 = arith.constant 0 : i32
    return %c0_i32, %c0_i32_0, %c0_i32_1 : i32, i32, i32
  }
  func.func @transform_2(%arg0: i32) -> (i32, i32, i32) {
    %c0_i32 = arith.constant 0 : i32
    %c0_i32_0 = arith.constant 0 : i32
    %c0_i32_1 = arith.constant 0 : i32
    %c0_i32_2 = arith.constant 0 : i32
    return %c0_i32, %c0_i32_0, %c0_i32_1 : i32, i32, i32
  }
  func.func @transform_3(%arg0: i32) -> (i32, i32, i32) {
    %c0_i32 = arith.constant 0 : i32
    %c0_i32_0 = arith.constant 0 : i32
    %c0_i32_1 = arith.constant 0 : i32
    return %arg0, %c0_i32, %c0_i32_0 : i32, i32, i32
  }
}

module attributes {stable_mosaic.version = 11 : i64} {
  func.func @_fc_stack_kernel(%arg0: i32, %arg1: memref<2x4096xbf16, #tpu.memory_space<vmem>>, %arg2: memref<4096x128xbf16, #tpu.memory_space<vmem>>, %arg3: memref<1x128xf32, #tpu.memory_space<vmem>>, %arg4: memref<128x64xbf16, #tpu.memory_space<vmem>>, %arg5: memref<1x64xf32, #tpu.memory_space<vmem>>, %arg6: memref<1x64xf32, #tpu.memory_space<vmem>>, %arg7: memref<1x1xf32, #tpu.memory_space<vmem>>, %arg8: memref<2x1xf32, #tpu.memory_space<vmem>>) attributes {dimension_semantics = [#tpu.dimension_semantics<parallel>], iteration_bounds = array<i64: 1>, scalar_prefetch = 0 : i64, scratch_operands = 0 : i64, tpu.core_type = #tpu.core_type<tc>, window_params = [{transform_indices = @transform_0, window_bounds = array<i64: 2, 4096>}, {pipeline_mode = #tpu.pipeline_mode<synchronous>, transform_indices = @transform_1, window_bounds = array<i64: 4096, 128>}, {pipeline_mode = #tpu.pipeline_mode<synchronous>, transform_indices = @transform_2, window_bounds = array<i64: 1, 128>}, {pipeline_mode = #tpu.pipeline_mode<synchronous>, transform_indices = @transform_3, window_bounds = array<i64: 128, 64>}, {pipeline_mode = #tpu.pipeline_mode<synchronous>, transform_indices = @transform_4, window_bounds = array<i64: 1, 64>}, {pipeline_mode = #tpu.pipeline_mode<synchronous>, transform_indices = @transform_5, window_bounds = array<i64: 1, 64>}, {pipeline_mode = #tpu.pipeline_mode<synchronous>, transform_indices = @transform_6, window_bounds = array<i64: 1, 1>}, {transform_indices = @transform_7, window_bounds = array<i64: 2, 1>}]} {
    %c0 = arith.constant 0 : index
    %c0_0 = arith.constant 0 : index
    %0 = vector.load %arg1[%c0, %c0_0] : memref<2x4096xbf16, #tpu.memory_space<vmem>>, vector<2x4096xbf16>
    %c0_1 = arith.constant 0 : index
    %c0_2 = arith.constant 0 : index
    %1 = vector.load %arg2[%c0_1, %c0_2] : memref<4096x128xbf16, #tpu.memory_space<vmem>>, vector<4096x128xbf16>
    %cst = arith.constant dense<0.000000e+00> : vector<2x128xf32>
    %2 = tpu.matmul %0, %1, %cst {dimension_numbers = #tpu.dot_dimension_numbers<[1], [0], [0], [1], [0, 0, 1, 1], [], []>} : vector<2x4096xbf16>, vector<4096x128xbf16>, vector<2x128xf32> -> vector<2x128xf32>
    %c0_3 = arith.constant 0 : index
    %c0_4 = arith.constant 0 : index
    %3 = vector.load %arg3[%c0_3, %c0_4] : memref<1x128xf32, #tpu.memory_space<vmem>>, vector<1x128xf32>
    %4 = vector.broadcast %3 : vector<1x128xf32> to vector<2x128xf32>
    %5 = arith.addf %2, %4 : vector<2x128xf32>
    %cst_5 = arith.constant 0.000000e+00 : f32
    %6 = vector.broadcast %cst_5 : f32 to vector<2x128xf32>
    %7 = arith.maximumf %5, %6 : vector<2x128xf32>
    %8 = arith.truncf %7 : vector<2x128xf32> to vector<2x128xbf16>
    %c0_6 = arith.constant 0 : index
    %c0_7 = arith.constant 0 : index
    %9 = vector.load %arg4[%c0_6, %c0_7] : memref<128x64xbf16, #tpu.memory_space<vmem>>, vector<128x64xbf16>
    %cst_8 = arith.constant dense<0.000000e+00> : vector<2x64xf32>
    %10 = tpu.matmul %8, %9, %cst_8 {dimension_numbers = #tpu.dot_dimension_numbers<[1], [0], [0], [1], [0, 0, 1, 1], [], []>} : vector<2x128xbf16>, vector<128x64xbf16>, vector<2x64xf32> -> vector<2x64xf32>
    %c0_9 = arith.constant 0 : index
    %c0_10 = arith.constant 0 : index
    %11 = vector.load %arg5[%c0_9, %c0_10] : memref<1x64xf32, #tpu.memory_space<vmem>>, vector<1x64xf32>
    %12 = vector.broadcast %11 : vector<1x64xf32> to vector<2x64xf32>
    %13 = arith.addf %10, %12 : vector<2x64xf32>
    %cst_11 = arith.constant 0.000000e+00 : f32
    %14 = vector.broadcast %cst_11 : f32 to vector<2x64xf32>
    %15 = arith.maximumf %13, %14 : vector<2x64xf32>
    %c0_12 = arith.constant 0 : index
    %c0_13 = arith.constant 0 : index
    %16 = vector.load %arg6[%c0_12, %c0_13] : memref<1x64xf32, #tpu.memory_space<vmem>>, vector<1x64xf32>
    %17 = vector.broadcast %16 : vector<1x64xf32> to vector<2x64xf32>
    %18 = arith.mulf %15, %17 : vector<2x64xf32>
    %cst_14 = arith.constant dense<0.000000e+00> : vector<2xf32>
    %19 = vector.multi_reduction <add>, %18, %cst_14 [1] : vector<2x64xf32> to vector<2xf32>
    %20 = vector.shape_cast %19 : vector<2xf32> to vector<2x1xf32>
    %c0_15 = arith.constant 0 : index
    %c0_16 = arith.constant 0 : index
    %21 = vector.load %arg7[%c0_15, %c0_16] : memref<1x1xf32, #tpu.memory_space<vmem>>, vector<1x1xf32>
    %22 = vector.broadcast %21 : vector<1x1xf32> to vector<2x1xf32>
    %23 = arith.addf %20, %22 : vector<2x1xf32>
    %24 = math.tanh %23 : vector<2x1xf32>
    %c0_17 = arith.constant 0 : index
    %c0_18 = arith.constant 0 : index
    %25 = vector.load %arg8[%c0_17, %c0_18] : memref<2x1xf32, #tpu.memory_space<vmem>>, vector<2x1xf32>
    tpu.vector_store %arg8[%c0_17, %c0_18], %24 {strides = array<i32>} : memref<2x1xf32, #tpu.memory_space<vmem>>, vector<2x1xf32>,
    return
  }
  func.func @transform_0(%arg0: i32) -> (i32, i32) {
    %c0_i32 = arith.constant 0 : i32
    %c0_i32_0 = arith.constant 0 : i32
    return %arg0, %c0_i32 : i32, i32
  }
  func.func @transform_1(%arg0: i32) -> (i32, i32) {
    %c0_i32 = arith.constant 0 : i32
    %c0_i32_0 = arith.constant 0 : i32
    %c0_i32_1 = arith.constant 0 : i32
    return %c0_i32, %c0_i32_0 : i32, i32
  }
  func.func @transform_2(%arg0: i32) -> (i32, i32) {
    %c0_i32 = arith.constant 0 : i32
    %c0_i32_0 = arith.constant 0 : i32
    %c0_i32_1 = arith.constant 0 : i32
    return %c0_i32, %c0_i32_0 : i32, i32
  }
  func.func @transform_3(%arg0: i32) -> (i32, i32) {
    %c0_i32 = arith.constant 0 : i32
    %c0_i32_0 = arith.constant 0 : i32
    %c0_i32_1 = arith.constant 0 : i32
    return %c0_i32, %c0_i32_0 : i32, i32
  }
  func.func @transform_4(%arg0: i32) -> (i32, i32) {
    %c0_i32 = arith.constant 0 : i32
    %c0_i32_0 = arith.constant 0 : i32
    %c0_i32_1 = arith.constant 0 : i32
    return %c0_i32, %c0_i32_0 : i32, i32
  }
  func.func @transform_5(%arg0: i32) -> (i32, i32) {
    %c0_i32 = arith.constant 0 : i32
    %c0_i32_0 = arith.constant 0 : i32
    %c0_i32_1 = arith.constant 0 : i32
    return %c0_i32, %c0_i32_0 : i32, i32
  }
  func.func @transform_6(%arg0: i32) -> (i32, i32) {
    %c0_i32 = arith.constant 0 : i32
    %c0_i32_0 = arith.constant 0 : i32
    %c0_i32_1 = arith.constant 0 : i32
    return %c0_i32, %c0_i32_0 : i32, i32
  }
  func.func @transform_7(%arg0: i32) -> (i32, i32) {
    %c0_i32 = arith.constant 0 : i32
    %c0_i32_0 = arith.constant 0 : i32
    return %arg0, %c0_i32 : i32, i32
  }
}

</mosaic_0001>

<llo_original>
// kernel: chess_value_forward.3
$region0: #{chess_value_forward.3}
  #allocation0 [shape = 'u32[]', space=smem, size = 0x4, offset = 0x4, fixed_abs, tag = 'smem constant byte address 0x4 - core index']
  #allocation1 [shape = 'u32[144,128]{1,0:T(1,128)}', space=vmem, size = 0x12000, scoped, tag = 'internal scratch']
  #allocation2 [shape = 'f32[1,1]{1,0:T(1,128)S(1)}', space=vmem, size = 0x200, scoped, tag = 'scoped memory for chess_value_forward.3']
  %s0 = inlined_call_operand.vmem [shape: bf16[2,4096], index: 0, kind: input, shape index: {}]
  %s1 = inlined_call_operand.hbm [shape: bf16[4096,128], index: 1, kind: input, shape index: {}]
  %s2 = inlined_call_operand.vmem [shape: f32[1,128], index: 2, kind: input, shape index: {}]
  %s3 = inlined_call_operand.vmem [shape: bf16[128,64], index: 3, kind: input, shape index: {}]
  %s4 = inlined_call_operand.vmem [shape: f32[1,64], index: 4, kind: input, shape index: {}]
  %s5 = inlined_call_operand.vmem [shape: f32[1,64], index: 5, kind: input, shape index: {}]
  %s6 = inlined_call_operand.<no memory space> [shape: f32[1,1], index: 6, kind: input, shape index: {}]
  %s7 = inlined_call_operand.vmem [shape: f32[2,1], index: 7, kind: output, shape index: {}]
  %s8 = sld [smem:[#allocation0]]
  $region42: #{chess_value_forward.3} parent=0
    _
  %s10 = ssub.s32 1, %s8
  %s11 = scalar_select 0, %s10, %s8
  %v12 = vstv %s6
  %13 = vst [vmem:[#allocation2] sm:$0x1] %v12
  $region1: #{chess_value_forward.3} parent=0
    #allocation3 [shape = 'u8[1048576]{0}', space=vmem, size = 0x100000, scoped, tag = 'input window, operand 1, single buffered']
    #allocation4 [shape = 's32[1]{0}', space=sflag, size = 0x4, scoped, tag = 'scoped memory for chess_value_forward.3']
    %14 = vsyncpa [#allocation4], 0
    // Predicated region
    $region2: #{chess_value_forward.3} parent=1 // pred_check
      _
    $region3: #{chess_value_forward.3} parent=1 // pred_check_branch
      %16 = sbr.rel (0) target = $region5
    $region4: #{chess_value_forward.3} parent=1 // pred_region
      _
    $region5: #{chess_value_forward.3} parent=1 // pred_fallthru
      _
    // Predicated region
    $region6: #{chess_value_forward.3} parent=1 // pred_check
      _
    $region7: #{chess_value_forward.3} parent=1 // pred_check_branch
      %18 = sbr.rel (0) target = $region9
    $region8: #{chess_value_forward.3} parent=1 // pred_region
      %s20 = ssub.s32 32768, 32768
      %21 = vsyncadd [#allocation4], %s20
      %s22 = sshll.u32 [#allocation3], 4
      %s23 = int_to_ptr.vmem [resolvable:$true] %s22
      %28 = dma.hbm_to_vmem [thread:$0]  %s1, 32768, %s23, [#allocation4], 64, 64, 4
    $region9: #{chess_value_forward.3} parent=1 // pred_fallthru
      _
    // Predicated region
    $region10: #{chess_value_forward.3} parent=1 // pred_check
      _
    $region11: #{chess_value_forward.3} parent=1 // pred_check_branch
      %30 = sbr.rel (0) target = $region13
    $region12: #{chess_value_forward.3} parent=1 // pred_region
      _
    $region13: #{chess_value_forward.3} parent=1 // pred_fallthru
      _
    // Predicated region
    $region14: #{chess_value_forward.3} parent=1 // pred_check
      _
    $region15: #{chess_value_forward.3} parent=1 // pred_check_branch
      %32 = sbr.rel (0) target = $region17
    $region16: #{chess_value_forward.3} parent=1 // pred_region
      _
    $region17: #{chess_value_forward.3} parent=1 // pred_fallthru
      _
    // Predicated region
    $region18: #{chess_value_forward.3} parent=1 // pred_check
      _
    $region19: #{chess_value_forward.3} parent=1 // pred_check_branch
      %34 = sbr.rel (0) target = $region21
    $region20: #{chess_value_forward.3} parent=1 // pred_region
      _
    $region21: #{chess_value_forward.3} parent=1 // pred_fallthru
      _
    // Predicated region
    $region22: #{chess_value_forward.3} parent=1 // pred_check
      _
    $region23: #{chess_value_forward.3} parent=1 // pred_check_branch
      %36 = sbr.rel (0) target = $region25
    $region24: #{chess_value_forward.3} parent=1 // pred_region
      _
    $region25: #{chess_value_forward.3} parent=1 // pred_fallthru
      _
    // Predicated region
    $region26: #{chess_value_forward.3} parent=1 // pred_check
      _
    $region27: #{chess_value_forward.3} parent=1 // pred_check_branch
      %38 = sbr.rel (0) target = $region29
    $region28: #{chess_value_forward.3} parent=1 // pred_region
      _
    $region29: #{chess_value_forward.3} parent=1 // pred_fallthru
      _
    // Predicated region
    $region30: #{chess_value_forward.3} parent=1 // pred_check
      _
    $region31: #{chess_value_forward.3} parent=1 // pred_check_branch
      %40 = sbr.rel (0) target = $region33
    $region32: #{chess_value_forward.3} parent=1 // pred_region
      %41 = dma.done [#allocation4], 32768
    $region33: #{chess_value_forward.3} parent=1 // pred_fallthru
      _
    %v43 = vld [vmem:[%s0] sm:$0xff]
    %v44 = vld [vmem:[%s0 + $0x8] sm:$0xff]
    %v45 = vld [vmem:[%s0 + $0x10] sm:$0xff]
    %v46 = vld [vmem:[%s0 + $0x18] sm:$0xff]
    %v47 = vld [vmem:[#allocation3] sm:$0xf]
    %v48 = vld [vmem:[#allocation3 + $0x4] sm:$0xf]
    %v49 = vld [vmem:[#allocation3 + $0x8] sm:$0xf]
    %v50 = vld [vmem:[#allocation3 + $0xc] sm:$0xf]
    %v51 = vld [vmem:[#allocation3 + $0x10] sm:$0xf]
    %v52 = vld [vmem:[#allocation3 + $0x14] sm:$0xf]
    %v53 = vld [vmem:[#allocation3 + $0x18] sm:$0xf]
    %v54 = vld [vmem:[#allocation3 + $0x1c] sm:$0xf]
    %v55 = vld [vmem:[#allocation3 + $0x20] sm:$0xf]
    %v56 = vld [vmem:[#allocation3 + $0x24] sm:$0xf]
    %v57 = vld [vmem:[#allocation3 + $0x28] sm:$0xf]
    %v58 = vld [vmem:[#allocation3 + $0x2c] sm:$0xf]
    %v59 = vld [vmem:[#allocation3 + $0x30] sm:$0xf]
    %v60 = vld [vmem:[#allocation3 + $0x34] sm:$0xf]
    %v61 = vld [vmem:[#allocation3 + $0x38] sm:$0xf]
    %v62 = vld [vmem:[#allocation3 + $0x3c] sm:$0xf]
    %v63 = vld [vmem:[#allocation3 + $0x40] sm:$0xf]
    %v64 = vld [vmem:[#allocation3 + $0x44] sm:$0xf]
    %v65 = vld [vmem:[#allocation3 + $0x48] sm:$0xf]
    %v66 = vld [vmem:[#allocation3 + $0x4c] sm:$0xf]
    %v67 = vld [vmem:[#allocation3 + $0x50] sm:$0xf]
    %v68 = vld [vmem:[#allocation3 + $0x54] sm:$0xf]
    %v69 = vld [vmem:[#allocation3 + $0x58] sm:$0xf]
    %v70 = vld [vmem:[#allocation3 + $0x5c] sm:$0xf]
    %v71 = vld [vmem:[#allocation3 + $0x60] sm:$0xf]
    %v72 = vld [vmem:[#allocation3 + $0x64] sm:$0xf]
    %v73 = vld [vmem:[#allocation3 + $0x68] sm:$0xf]
    %v74 = vld [vmem:[#allocation3 + $0x6c] sm:$0xf]
    %v75 = vld [vmem:[#allocation3 + $0x70] sm:$0xf]
    %v76 = vld [vmem:[#allocation3 + $0x74] sm:$0xf]
    %v77 = vld [vmem:[#allocation3 + $0x78] sm:$0xf]
    %v78 = vld [vmem:[#allocation3 + $0x7c] sm:$0xf]
    %v79 = vld [vmem:[#allocation3 + $0x80] sm:$0xf]
    %v80 = vld [vmem:[#allocation3 + $0x84] sm:$0xf]
    %v81 = vld [vmem:[#allocation3 + $0x88] sm:$0xf]
    %v82 = vld [vmem:[#allocation3 + $0x8c] sm:$0xf]
    %v83 = vld [vmem:[#allocation3 + $0x90] sm:$0xf]
    %v84 = vld [vmem:[#allocation3 + $0x94] sm:$0xf]
    %v85 = vld [vmem:[#allocation3 + $0x98] sm:$0xf]
    %v86 = vld [vmem:[#allocation3 + $0x9c] sm:$0xf]
    %v87 = vld [vmem:[#allocation3 + $0xa0] sm:$0xf]
    %v88 = vld [vmem:[#allocation3 + $0xa4] sm:$0xf]
    %v89 = vld [vmem:[#allocation3 + $0xa8] sm:$0xf]
    %v90 = vld [vmem:[#allocation3 + $0xac] sm:$0xf]
    %v91 = vld [vmem:[#allocation3 + $0xb0] sm:$0xf]
    %v92 = vld [vmem:[#allocation3 + $0xb4] sm:$0xf]
    %v93 = vld [vmem:[#allocation3 + $0xb8] sm:$0xf]
    %v94 = vld [vmem:[#allocation3 + $0xbc] sm:$0xf]
    %v95 = vld [vmem:[#allocation3 + $0xc0] sm:$0xf]
    %v96 = vld [vmem:[#allocation3 + $0xc4] sm:$0xf]
    %v97 = vld [vmem:[#allocation3 + $0xc8] sm:$0xf]
    %v98 = vld [vmem:[#allocation3 + $0xcc] sm:$0xf]
    %v99 = vld [vmem:[#allocation3 + $0xd0] sm:$0xf]
    %v100 = vld [vmem:[#allocation3 + $0xd4] sm:$0xf]
    %v101 = vld [vmem:[#allocation3 + $0xd8] sm:$0xf]
    %v102 = vld [vmem:[#allocation3 + $0xdc] sm:$0xf]
    %v103 = vld [vmem:[#allocation3 + $0xe0] sm:$0xf]
    %v104 = vld [vmem:[#allocation3 + $0xe4] sm:$0xf]
    %v105 = vld [vmem:[#allocation3 + $0xe8] sm:$0xf]
    %v106 = vld [vmem:[#allocation3 + $0xec] sm:$0xf]
    %v107 = vld [vmem:[#allocation3 + $0xf0] sm:$0xf]
    %v108 = vld [vmem:[#allocation3 + $0xf4] sm:$0xf]
    %v109 = vld [vmem:[#allocation3 + $0xf8] sm:$0xf]
    %v110 = vld [vmem:[#allocation3 + $0xfc] sm:$0xf]
    %v111 = vld [vmem:[#allocation3 + $0x100] sm:$0xf]
    %v112 = vld [vmem:[#allocation3 + $0x104] sm:$0xf]
    %v113 = vld [vmem:[#allocation3 + $0x108] sm:$0xf]
    %v114 = vld [vmem:[#allocation3 + $0x10c] sm:$0xf]
    %v115 = vld [vmem:[#allocation3 + $0x110] sm:$0xf]
    %v116 = vld [vmem:[#allocation3 + $0x114] sm:$0xf]
    %v117 = vld [vmem:[#allocation3 + $0x118] sm:$0xf]
    %v118 = vld [vmem:[#allocation3 + $0x11c] sm:$0xf]
    %v119 = vld [vmem:[#allocation3 + $0x120] sm:$0xf]
    %v120 = vld [vmem:[#allocation3 + $0x124] sm:$0xf]
    %v121 = vld [vmem:[#allocation3 + $0x128] sm:$0xf]
    %v122 = vld [vmem:[#allocation3 + $0x12c] sm:$0xf]
    %v123 = vld [vmem:[#allocation3 + $0x130] sm:$0xf]
    %v124 = vld [vmem:[#allocation3 + $0x134] sm:$0xf]
    %v125 = vld [vmem:[#allocation3 + $0x138] sm:$0xf]
    %v126 = vld [vmem:[#allocation3 + $0x13c] sm:$0xf]
    %v127 = vld [vmem:[#allocation3 + $0x140] sm:$0xf]
    %v128 = vld [vmem:[#allocation3 + $0x144] sm:$0xf]
    %v129 = vld [vmem:[#allocation3 + $0x148] sm:$0xf]
    %v130 = vld [vmem:[#allocation3 + $0x14c] sm:$0xf]
    %v131 = vld [vmem:[#allocation3 + $0x150] sm:$0xf]
    %v132 = vld [vmem:[#allocation3 + $0x154] sm:$0xf]
    %v133 = vld [vmem:[#allocation3 + $0x158] sm:$0xf]
    %v134 = vld [vmem:[#allocation3 + $0x15c] sm:$0xf]
    %v135 = vld [vmem:[#allocation3 + $0x160] sm:$0xf]
    %v136 = vld [vmem:[#allocation3 + $0x164] sm:$0xf]
    %v137 = vld [vmem:[#allocation3 + $0x168] sm:$0xf]
    %v138 = vld [vmem:[#allocation3 + $0x16c] sm:$0xf]
    %v139 = vld [vmem:[#allocation3 + $0x170] sm:$0xf]
    %v140 = vld [vmem:[#allocation3 + $0x174] sm:$0xf]
    %v141 = vld [vmem:[#allocation3 + $0x178] sm:$0xf]
    %v142 = vld [vmem:[#allocation3 + $0x17c] sm:$0xf]
    %v143 = vld [vmem:[#allocation3 + $0x180] sm:$0xf]
    %v144 = vld [vmem:[#allocation3 + $0x184] sm:$0xf]
    %v145 = vld [vmem:[#allocation3 + $0x188] sm:$0xf]
    %v146 = vld [vmem:[#allocation3 + $0x18c] sm:$0xf]
    %v147 = vld [vmem:[#allocation3 + $0x190] sm:$0xf]
    %v148 = vld [vmem:[#allocation3 + $0x194] sm:$0xf]
    %v149 = vld [vmem:[#allocation3 + $0x198] sm:$0xf]
    %v150 = vld [vmem:[#allocation3 + $0x19c] sm:$0xf]
    %v151 = vld [vmem:[#allocation3 + $0x1a0] sm:$0xf]
    %v152 = vld [vmem:[#allocation3 + $0x1a4] sm:$0xf]
    %v153 = vld [vmem:[#allocation3 + $0x1a8] sm:$0xf]
    %v154 = vld [vmem:[#allocation3 + $0x1ac] sm:$0xf]
    %v155 = vld [vmem:[#allocation3 + $0x1b0] sm:$0xf]
    %v156 = vld [vmem:[#allocation3 + $0x1b4] sm:$0xf]
    %v157 = vld [vmem:[#allocation3 + $0x1b8] sm:$0xf]
    %v158 = vld [vmem:[#allocation3 + $0x1bc] sm:$0xf]
    %v159 = vld [vmem:[#allocation3 + $0x1c0] sm:$0xf]
    %v160 = vld [vmem:[#allocation3 + $0x1c4] sm:$0xf]
    %v161 = vld [vmem:[#allocation3 + $0x1c8] sm:$0xf]
    %v162 = vld [vmem:[#allocation3 + $0x1cc] sm:$0xf]
    %v163 = vld [vmem:[#allocation3 + $0x1d0] sm:$0xf]
    %v164 = vld [vmem:[#allocation3 + $0x1d4] sm:$0xf]
    %v165 = vld [vmem:[#allocation3 + $0x1d8] sm:$0xf]
    %v166 = vld [vmem:[#allocation3 + $0x1dc] sm:$0xf]
    %v167 = vld [vmem:[#allocation3 + $0x1e0] sm:$0xf]
    %v168 = vld [vmem:[#allocation3 + $0x1e4] sm:$0xf]
    %v169 = vld [vmem:[#allocation3 + $0x1e8] sm:$0xf]
    %v170 = vld [vmem:[#allocation3 + $0x1ec] sm:$0xf]
    %v171 = vld [vmem:[#allocation3 + $0x1f0] sm:$0xf]
    %v172 = vld [vmem:[#allocation3 + $0x1f4] sm:$0xf]
    %v173 = vld [vmem:[#allocation3 + $0x1f8] sm:$0xf]
    %v174 = vld [vmem:[#allocation3 + $0x1fc] sm:$0xf]
    %v175 = vld [vmem:[#allocation3 + $0x200] sm:$0xf]
    %v176 = vld [vmem:[#allocation3 + $0x204] sm:$0xf]
    %v177 = vld [vmem:[#allocation3 + $0x208] sm:$0xf]
    %v178 = vld [vmem:[#allocation3 + $0x20c] sm:$0xf]
    %v179 = vld [vmem:[#allocation3 + $0x210] sm:$0xf]
    %v180 = vld [vmem:[#allocation3 + $0x214] sm:$0xf]
    %v181 = vld [vmem:[#allocation3 + $0x218] sm:$0xf]
    %v182 = vld [vmem:[#allocation3 + $0x21c] sm:$0xf]
    %v183 = vld [vmem:[#allocation3 + $0x220] sm:$0xf]
    %v184 = vld [vmem:[#allocation3 + $0x224] sm:$0xf]
    %v185 = vld [vmem:[#allocation3 + $0x228] sm:$0xf]
    %v186 = vld [vmem:[#allocation3 + $0x22c] sm:$0xf]
    %v187 = vld [vmem:[#allocation3 + $0x230] sm:$0xf]
    %v188 = vld [vmem:[#allocation3 + $0x234] sm:$0xf]
    %v189 = vld [vmem:[#allocation3 + $0x238] sm:$0xf]
    %v190 = vld [vmem:[#allocation3 + $0x23c] sm:$0xf]
    %v191 = vld [vmem:[#allocation3 + $0x240] sm:$0xf]
    %v192 = vld [vmem:[#allocation3 + $0x244] sm:$0xf]
    %v193 = vld [vmem:[#allocation3 + $0x248] sm:$0xf]
    %v194 = vld [vmem:[#allocation3 + $0x24c] sm:$0xf]
    %v195 = vld [vmem:[#allocation3 + $0x250] sm:$0xf]
    %v196 = vld [vmem:[#allocation3 + $0x254] sm:$0xf]
    %v197 = vld [vmem:[#allocation3 + $0x258] sm:$0xf]
    %v198 = vld [vmem:[#allocation3 + $0x25c] sm:$0xf]
    %v199 = vld [vmem:[#allocation3 + $0x260] sm:$0xf]
    %v200 = vld [vmem:[#allocation3 + $0x264] sm:$0xf]
    %v201 = vld [vmem:[#allocation3 + $0x268] sm:$0xf]
    %v202 = vld [vmem:[#allocation3 + $0x26c] sm:$0xf]
    %v203 = vld [vmem:[#allocation3 + $0x270] sm:$0xf]
    %v204 = vld [vmem:[#allocation3 + $0x274] sm:$0xf]
    %v205 = vld [vmem:[#allocation3 + $0x278] sm:$0xf]
    %v206 = vld [vmem:[#allocation3 + $0x27c] sm:$0xf]
    %v207 = vld [vmem:[#allocation3 + $0x280] sm:$0xf]
    %v208 = vld [vmem:[#allocation3 + $0x284] sm:$0xf]
    %v209 = vld [vmem:[#allocation3 + $0x288] sm:$0xf]
    %v210 = vld [vmem:[#allocation3 + $0x28c] sm:$0xf]
    %v211 = vld [vmem:[#allocation3 + $0x290] sm:$0xf]
    %v212 = vld [vmem:[#allocation3 + $0x294] sm:$0xf]
    %v213 = vld [vmem:[#allocation3 + $0x298] sm:$0xf]
    %v214 = vld [vmem:[#allocation3 + $0x29c] sm:$0xf]
    %v215 = vld [vmem:[#allocation3 + $0x2a0] sm:$0xf]
    %v216 = vld [vmem:[#allocation3 + $0x2a4] sm:$0xf]
    %v217 = vld [vmem:[#allocation3 + $0x2a8] sm:$0xf]
    %v218 = vld [vmem:[#allocation3 + $0x2ac] sm:$0xf]
    %v219 = vld [vmem:[#allocation3 + $0x2b0] sm:$0xf]
    %v220 = vld [vmem:[#allocation3 + $0x2b4] sm:$0xf]
    %v221 = vld [vmem:[#allocation3 + $0x2b8] sm:$0xf]
    %v222 = vld [vmem:[#allocation3 + $0x2bc] sm:$0xf]
    %v223 = vld [vmem:[#allocation3 + $0x2c0] sm:$0xf]
    %v224 = vld [vmem:[#allocation3 + $0x2c4] sm:$0xf]
    %v225 = vld [vmem:[#allocation3 + $0x2c8] sm:$0xf]
    %v226 = vld [vmem:[#allocation3 + $0x2cc] sm:$0xf]
    %v227 = vld [vmem:[#allocation3 + $0x2d0] sm:$0xf]
    %v228 = vld [vmem:[#allocation3 + $0x2d4] sm:$0xf]
    %v229 = vld [vmem:[#allocation3 + $0x2d8] sm:$0xf]
    %v230 = vld [vmem:[#allocation3 + $0x2dc] sm:$0xf]
    %v231 = vld [vmem:[#allocation3 + $0x2e0] sm:$0xf]
    %v232 = vld [vmem:[#allocation3 + $0x2e4] sm:$0xf]
    %v233 = vld [vmem:[#allocation3 + $0x2e8] sm:$0xf]
    %v234 = vld [vmem:[#allocation3 + $0x2ec] sm:$0xf]
    %v235 = vld [vmem:[#allocation3 + $0x2f0] sm:$0xf]
    %v236 = vld [vmem:[#allocation3 + $0x2f4] sm:$0xf]
    %v237 = vld [vmem:[#allocation3 + $0x2f8] sm:$0xf]
    %v238 = vld [vmem:[#allocation3 + $0x2fc] sm:$0xf]
    %v239 = vld [vmem:[#allocation3 + $0x300] sm:$0xf]
    %v240 = vld [vmem:[#allocation3 + $0x304] sm:$0xf]
    %v241 = vld [vmem:[#allocation3 + $0x308] sm:$0xf]
    %v242 = vld [vmem:[#allocation3 + $0x30c] sm:$0xf]
    %v243 = vld [vmem:[#allocation3 + $0x310] sm:$0xf]
    %v244 = vld [vmem:[#allocation3 + $0x314] sm:$0xf]
    %v245 = vld [vmem:[#allocation3 + $0x318] sm:$0xf]
    %v246 = vld [vmem:[#allocation3 + $0x31c] sm:$0xf]
    %v247 = vld [vmem:[#allocation3 + $0x320] sm:$0xf]
    %v248 = vld [vmem:[#allocation3 + $0x324] sm:$0xf]
    %v249 = vld [vmem:[#allocation3 + $0x328] sm:$0xf]
    %v250 = vld [vmem:[#allocation3 + $0x32c] sm:$0xf]
    %v251 = vld [vmem:[#allocation3 + $0x330] sm:$0xf]
    %v252 = vld [vmem:[#allocation3 + $0x334] sm:$0xf]
    %v253 = vld [vmem:[#allocation3 + $0x338] sm:$0xf]
    %v254 = vld [vmem:[#allocation3 + $0x33c] sm:$0xf]
    %v255 = vld [vmem:[#allocation3 + $0x340] sm:$0xf]
    %v256 = vld [vmem:[#allocation3 + $0x344] sm:$0xf]
    %v257 = vld [vmem:[#allocation3 + $0x348] sm:$0xf]
    %v258 = vld [vmem:[#allocation3 + $0x34c] sm:$0xf]
    %v259 = vld [vmem:[#allocation3 + $0x350] sm:$0xf]
    %v260 = vld [vmem:[#allocation3 + $0x354] sm:$0xf]
    %v261 = vld [vmem:[#allocation3 + $0x358] sm:$0xf]
    %v262 = vld [vmem:[#allocation3 + $0x35c] sm:$0xf]
    %v263 = vld [vmem:[#allocation3 + $0x360] sm:$0xf]
    %v264 = vld [vmem:[#allocation3 + $0x364] sm:$0xf]
    %v265 = vld [vmem:[#allocation3 + $0x368] sm:$0xf]
    %v266 = vld [vmem:[#allocation3 + $0x36c] sm:$0xf]
    %v267 = vld [vmem:[#allocation3 + $0x370] sm:$0xf]
    %v268 = vld [vmem:[#allocation3 + $0x374] sm:$0xf]
    %v269 = vld [vmem:[#allocation3 + $0x378] sm:$0xf]
    %v270 = vld [vmem:[#allocation3 + $0x37c] sm:$0xf]
    %v271 = vld [vmem:[#allocation3 + $0x380] sm:$0xf]
    %v272 = vld [vmem:[#allocation3 + $0x384] sm:$0xf]
    %v273 = vld [vmem:[#allocation3 + $0x388] sm:$0xf]
    %v274 = vld [vmem:[#allocation3 + $0x38c] sm:$0xf]
    %v275 = vld [vmem:[#allocation3 + $0x390] sm:$0xf]
    %v276 = vld [vmem:[#allocation3 + $0x394] sm:$0xf]
    %v277 = vld [vmem:[#allocation3 + $0x398] sm:$0xf]
    %v278 = vld [vmem:[#allocation3 + $0x39c] sm:$0xf]
    %v279 = vld [vmem:[#allocation3 + $0x3a0] sm:$0xf]
    %v280 = vld [vmem:[#allocation3 + $0x3a4] sm:$0xf]
    %v281 = vld [vmem:[#allocation3 + $0x3a8] sm:$0xf]
    %v282 = vld [vmem:[#allocation3 + $0x3ac] sm:$0xf]
    %v283 = vld [vmem:[#allocation3 + $0x3b0] sm:$0xf]
    %v284 = vld [vmem:[#allocation3 + $0x3b4] sm:$0xf]
    %v285 = vld [vmem:[#allocation3 + $0x3b8] sm:$0xf]
    %v286 = vld [vmem:[#allocation3 + $0x3bc] sm:$0xf]
    %v287 = vld [vmem:[#allocation3 + $0x3c0] sm:$0xf]
    %v288 = vld [vmem:[#allocation3 + $0x3c4] sm:$0xf]
    %v289 = vld [vmem:[#allocation3 + $0x3c8] sm:$0xf]
    %v290 = vld [vmem:[#allocation3 + $0x3cc] sm:$0xf]
    %v291 = vld [vmem:[#allocation3 + $0x3d0] sm:$0xf]
    %v292 = vld [vmem:[#allocation3 + $0x3d4] sm:$0xf]
    %v293 = vld [vmem:[#allocation3 + $0x3d8] sm:$0xf]
    %v294 = vld [vmem:[#allocation3 + $0x3dc] sm:$0xf]
    %v295 = vld [vmem:[#allocation3 + $0x3e0] sm:$0xf]
    %v296 = vld [vmem:[#allocation3 + $0x3e4] sm:$0xf]
    %v297 = vld [vmem:[#allocation3 + $0x3e8] sm:$0xf]
    %v298 = vld [vmem:[#allocation3 + $0x3ec] sm:$0xf]
    %v299 = vld [vmem:[#allocation3 + $0x3f0] sm:$0xf]
    %v300 = vld [vmem:[#allocation3 + $0x3f4] sm:$0xf]
    %v301 = vld [vmem:[#allocation3 + $0x3f8] sm:$0xf]
    %v302 = vld [vmem:[#allocation3 + $0x3fc] sm:$0xf]
    %v303 = vld [vmem:[#allocation3 + $0x400] sm:$0xf]
    %v304 = vld [vmem:[#allocation3 + $0x404] sm:$0xf]
    %v305 = vld [vmem:[#allocation3 + $0x408] sm:$0xf]
    %v306 = vld [vmem:[#allocation3 + $0x40c] sm:$0xf]
    %v307 = vld [vmem:[#allocation3 + $0x410] sm:$0xf]
    %v308 = vld [vmem:[#allocation3 + $0x414] sm:$0xf]
    %v309 = vld [vmem:[#allocation3 + $0x418] sm:$0xf]
    %v310 = vld [vmem:[#allocation3 + $0x41c] sm:$0xf]
    %v311 = vld [vmem:[#allocation3 + $0x420] sm:$0xf]
    %v312 = vld [vmem:[#allocation3 + $0x424] sm:$0xf]
    %v313 = vld [vmem:[#allocation3 + $0x428] sm:$0xf]
    %v314 = vld [vmem:[#allocation3 + $0x42c] sm:$0xf]
    %v315 = vld [vmem:[#allocation3 + $0x430] sm:$0xf]
    %v316 = vld [vmem:[#allocation3 + $0x434] sm:$0xf]
    %v317 = vld [vmem:[#allocation3 + $0x438] sm:$0xf]
    %v318 = vld [vmem:[#allocation3 + $0x43c] sm:$0xf]
    %v319 = vld [vmem:[#allocation3 + $0x440] sm:$0xf]
    %v320 = vld [vmem:[#allocation3 + $0x444] sm:$0xf]
    %v321 = vld [vmem:[#allocation3 + $0x448] sm:$0xf]
    %v322 = vld [vmem:[#allocation3 + $0x44c] sm:$0xf]
    %v323 = vld [vmem:[#allocation3 + $0x450] sm:$0xf]
    %v324 = vld [vmem:[#allocation3 + $0x454] sm:$0xf]
    %v325 = vld [vmem:[#allocation3 + $0x458] sm:$0xf]
    %v326 = vld [vmem:[#allocation3 + $0x45c] sm:$0xf]
    %v327 = vld [vmem:[#allocation3 + $0x460] sm:$0xf]
    %v328 = vld [vmem:[#allocation3 + $0x464] sm:$0xf]
    %v329 = vld [vmem:[#allocation3 + $0x468] sm:$0xf]
    %v330 = vld [vmem:[#allocation3 + $0x46c] sm:$0xf]
    %v331 = vld [vmem:[#allocation3 + $0x470] sm:$0xf]
    %v332 = vld [vmem:[#allocation3 + $0x474] sm:$0xf]
    %v333 = vld [vmem:[#allocation3 + $0x478] sm:$0xf]
    %v334 = vld [vmem:[#allocation3 + $0x47c] sm:$0xf]
    %v335 = vld [vmem:[#allocation3 + $0x480] sm:$0xf]
    %v336 = vld [vmem:[#allocation3 + $0x484] sm:$0xf]
    %v337 = vld [vmem:[#allocation3 + $0x488] sm:$0xf]
    %v338 = vld [vmem:[#allocation3 + $0x48c] sm:$0xf]
    %v339 = vld [vmem:[#allocation3 + $0x490] sm:$0xf]
    %v340 = vld [vmem:[#allocation3 + $0x494] sm:$0xf]
    %v341 = vld [vmem:[#allocation3 + $0x498] sm:$0xf]
    %v342 = vld [vmem:[#allocation3 + $0x49c] sm:$0xf]
    %v343 = vld [vmem:[#allocation3 + $0x4a0] sm:$0xf]
    %v344 = vld [vmem:[#allocation3 + $0x4a4] sm:$0xf]
    %v345 = vld [vmem:[#allocation3 + $0x4a8] sm:$0xf]
    %v346 = vld [vmem:[#allocation3 + $0x4ac] sm:$0xf]
    %v347 = vld [vmem:[#allocation3 + $0x4b0] sm:$0xf]
    %v348 = vld [vmem:[#allocation3 + $0x4b4] sm:$0xf]
    %v349 = vld [vmem:[#allocation3 + $0x4b8] sm:$0xf]
    %v350 = vld [vmem:[#allocation3 + $0x4bc] sm:$0xf]
    %v351 = vld [vmem:[#allocation3 + $0x4c0] sm:$0xf]
    %v352 = vld [vmem:[#allocation3 + $0x4c4] sm:$0xf]
    %v353 = vld [vmem:[#allocation3 + $0x4c8] sm:$0xf]
    %v354 = vld [vmem:[#allocation3 + $0x4cc] sm:$0xf]
    %v355 = vld [vmem:[#allocation3 + $0x4d0] sm:$0xf]
    %v356 = vld [vmem:[#allocation3 + $0x4d4] sm:$0xf]
    %v357 = vld [vmem:[#allocation3 + $0x4d8] sm:$0xf]
    %v358 = vld [vmem:[#allocation3 + $0x4dc] sm:$0xf]
    %v359 = vld [vmem:[#allocation3 + $0x4e0] sm:$0xf]
    %v360 = vld [vmem:[#allocation3 + $0x4e4] sm:$0xf]
    %v361 = vld [vmem:[#allocation3 + $0x4e8] sm:$0xf]
    %v362 = vld [vmem:[#allocation3 + $0x4ec] sm:$0xf]
    %v363 = vld [vmem:[#allocation3 + $0x4f0] sm:$0xf]
    %v364 = vld [vmem:[#allocation3 + $0x4f4] sm:$0xf]
    %v365 = vld [vmem:[#allocation3 + $0x4f8] sm:$0xf]
    %v366 = vld [vmem:[#allocation3 + $0x4fc] sm:$0xf]
    %v367 = vld [vmem:[#allocation3 + $0x500] sm:$0xf]
    %v368 = vld [vmem:[#allocation3 + $0x504] sm:$0xf]
    %v369 = vld [vmem:[#allocation3 + $0x508] sm:$0xf]
    %v370 = vld [vmem:[#allocation3 + $0x50c] sm:$0xf]
    %v371 = vld [vmem:[#allocation3 + $0x510] sm:$0xf]
    %v372 = vld [vmem:[#allocation3 + $0x514] sm:$0xf]
    %v373 = vld [vmem:[#allocation3 + $0x518] sm:$0xf]
    %v374 = vld [vmem:[#allocation3 + $0x51c] sm:$0xf]
    %v375 = vld [vmem:[#allocation3 + $0x520] sm:$0xf]
    %v376 = vld [vmem:[#allocation3 + $0x524] sm:$0xf]
    %v377 = vld [vmem:[#allocation3 + $0x528] sm:$0xf]
    %v378 = vld [vmem:[#allocation3 + $0x52c] sm:$0xf]
    %v379 = vld [vmem:[#allocation3 + $0x530] sm:$0xf]
    %v380 = vld [vmem:[#allocation3 + $0x534] sm:$0xf]
    %v381 = vld [vmem:[#allocation3 + $0x538] sm:$0xf]
    %v382 = vld [vmem:[#allocation3 + $0x53c] sm:$0xf]
    %v383 = vld [vmem:[#allocation3 + $0x540] sm:$0xf]
    %v384 = vld [vmem:[#allocation3 + $0x544] sm:$0xf]
    %v385 = vld [vmem:[#allocation3 + $0x548] sm:$0xf]
    %v386 = vld [vmem:[#allocation3 + $0x54c] sm:$0xf]
    %v387 = vld [vmem:[#allocation3 + $0x550] sm:$0xf]
    %v388 = vld [vmem:[#allocation3 + $0x554] sm:$0xf]
    %v389 = vld [vmem:[#allocation3 + $0x558] sm:$0xf]
    %v390 = vld [vmem:[#allocation3 + $0x55c] sm:$0xf]
    %v391 = vld [vmem:[#allocation3 + $0x560] sm:$0xf]
    %v392 = vld [vmem:[#allocation3 + $0x564] sm:$0xf]
    %v393 = vld [vmem:[#allocation3 + $0x568] sm:$0xf]
    %v394 = vld [vmem:[#allocation3 + $0x56c] sm:$0xf]
    %v395 = vld [vmem:[#allocation3 + $0x570] sm:$0xf]
    %v396 = vld [vmem:[#allocation3 + $0x574] sm:$0xf]
    %v397 = vld [vmem:[#allocation3 + $0x578] sm:$0xf]
    %v398 = vld [vmem:[#allocation3 + $0x57c] sm:$0xf]
    %v399 = vld [vmem:[#allocation3 + $0x580] sm:$0xf]
    %v400 = vld [vmem:[#allocation3 + $0x584] sm:$0xf]
    %v401 = vld [vmem:[#allocation3 + $0x588] sm:$0xf]
    %v402 = vld [vmem:[#allocation3 + $0x58c] sm:$0xf]
    %v403 = vld [vmem:[#allocation3 + $0x590] sm:$0xf]
    %v404 = vld [vmem:[#allocation3 + $0x594] sm:$0xf]
    %v405 = vld [vmem:[#allocation3 + $0x598] sm:$0xf]
    %v406 = vld [vmem:[#allocation3 + $0x59c] sm:$0xf]
    %v407 = vld [vmem:[#allocation3 + $0x5a0] sm:$0xf]
    %v408 = vld [vmem:[#allocation3 + $0x5a4] sm:$0xf]
    %v409 = vld [vmem:[#allocation3 + $0x5a8] sm:$0xf]
    %v410 = vld [vmem:[#allocation3 + $0x5ac] sm:$0xf]
    %v411 = vld [vmem:[#allocation3 + $0x5b0] sm:$0xf]
    %v412 = vld [vmem:[#allocation3 + $0x5b4] sm:$0xf]
    %v413 = vld [vmem:[#allocation3 + $0x5b8] sm:$0xf]
    %v414 = vld [vmem:[#allocation3 + $0x5bc] sm:$0xf]
    %v415 = vld [vmem:[#allocation3 + $0x5c0] sm:$0xf]
    %v416 = vld [vmem:[#allocation3 + $0x5c4] sm:$0xf]
    %v417 = vld [vmem:[#allocation3 + $0x5c8] sm:$0xf]
    %v418 = vld [vmem:[#allocation3 + $0x5cc] sm:$0xf]
    %v419 = vld [vmem:[#allocation3 + $0x5d0] sm:$0xf]
    %v420 = vld [vmem:[#allocation3 + $0x5d4] sm:$0xf]
    %v421 = vld [vmem:[#allocation3 + $0x5d8] sm:$0xf]
    %v422 = vld [vmem:[#allocation3 + $0x5dc] sm:$0xf]
    %v423 = vld [vmem:[#allocation3 + $0x5e0] sm:$0xf]
    %v424 = vld [vmem:[#allocation3 + $0x5e4] sm:$0xf]
    %v425 = vld [vmem:[#allocation3 + $0x5e8] sm:$0xf]
    %v426 = vld [vmem:[#allocation3 + $0x5ec] sm:$0xf]
    %v427 = vld [vmem:[#allocation3 + $0x5f0] sm:$0xf]
    %v428 = vld [vmem:[#allocation3 + $0x5f4] sm:$0xf]
    %v429 = vld [vmem:[#allocation3 + $0x5f8] sm:$0xf]
    %v430 = vld [vmem:[#allocation3 + $0x5fc] sm:$0xf]
    %v431 = vld [vmem:[#allocation3 + $0x600] sm:$0xf]
    %v432 = vld [vmem:[#allocation3 + $0x604] sm:$0xf]
    %v433 = vld [vmem:[#allocation3 + $0x608] sm:$0xf]
    %v434 = vld [vmem:[#allocation3 + $0x60c] sm:$0xf]
    %v435 = vld [vmem:[#allocation3 + $0x610] sm:$0xf]
    %v436 = vld [vmem:[#allocation3 + $0x614] sm:$0xf]
    %v437 = vld [vmem:[#allocation3 + $0x618] sm:$0xf]
    %v438 = vld [vmem:[#allocation3 + $0x61c] sm:$0xf]
    %v439 = vld [vmem:[#allocation3 + $0x620] sm:$0xf]
    %v440 = vld [vmem:[#allocation3 + $0x624] sm:$0xf]
    %v441 = vld [vmem:[#allocation3 + $0x628] sm:$0xf]
    %v442 = vld [vmem:[#allocation3 + $0x62c] sm:$0xf]
    %v443 = vld [vmem:[#allocation3 + $0x630] sm:$0xf]
    %v444 = vld [vmem:[#allocation3 + $0x634] sm:$0xf]
    %v445 = vld [vmem:[#allocation3 + $0x638] sm:$0xf]
    %v446 = vld [vmem:[#allocation3 + $0x63c] sm:$0xf]
    %v447 = vld [vmem:[#allocation3 + $0x640] sm:$0xf]
    %v448 = vld [vmem:[#allocation3 + $0x644] sm:$0xf]
    %v449 = vld [vmem:[#allocation3 + $0x648] sm:$0xf]
    %v450 = vld [vmem:[#allocation3 + $0x64c] sm:$0xf]
    %v451 = vld [vmem:[#allocation3 + $0x650] sm:$0xf]
    %v452 = vld [vmem:[#allocation3 + $0x654] sm:$0xf]
    %v453 = vld [vmem:[#allocation3 + $0x658] sm:$0xf]
    %v454 = vld [vmem:[#allocation3 + $0x65c] sm:$0xf]
    %v455 = vld [vmem:[#allocation3 + $0x660] sm:$0xf]
    %v456 = vld [vmem:[#allocation3 + $0x664] sm:$0xf]
    %v457 = vld [vmem:[#allocation3 + $0x668] sm:$0xf]
    %v458 = vld [vmem:[#allocation3 + $0x66c] sm:$0xf]
    %v459 = vld [vmem:[#allocation3 + $0x670] sm:$0xf]
    %v460 = vld [vmem:[#allocation3 + $0x674] sm:$0xf]
    %v461 = vld [vmem:[#allocation3 + $0x678] sm:$0xf]
    %v462 = vld [vmem:[#allocation3 + $0x67c] sm:$0xf]
    %v463 = vld [vmem:[#allocation3 + $0x680] sm:$0xf]
    %v464 = vld [vmem:[#allocation3 + $0x684] sm:$0xf]
    %v465 = vld [vmem:[#allocation3 + $0x688] sm:$0xf]
    %v466 = vld [vmem:[#allocation3 + $0x68c] sm:$0xf]
    %v467 = vld [vmem:[#allocation3 + $0x690] sm:$0xf]
    %v468 = vld [vmem:[#allocation3 + $0x694] sm:$0xf]
    %v469 = vld [vmem:[#allocation3 + $0x698] sm:$0xf]
    %v470 = vld [vmem:[#allocation3 + $0x69c] sm:$0xf]
    %v471 = vld [vmem:[#allocation3 + $0x6a0] sm:$0xf]
    %v472 = vld [vmem:[#allocation3 + $0x6a4] sm:$0xf]
    %v473 = vld [vmem:[#allocation3 + $0x6a8] sm:$0xf]
    %v474 = vld [vmem:[#allocation3 + $0x6ac] sm:$0xf]
    %v475 = vld [vmem:[#allocation3 + $0x6b0] sm:$0xf]
    %v476 = vld [vmem:[#allocation3 + $0x6b4] sm:$0xf]
    %v477 = vld [vmem:[#allocation3 + $0x6b8] sm:$0xf]
    %v478 = vld [vmem:[#allocation3 + $0x6bc] sm:$0xf]
    %v479 = vld [vmem:[#allocation3 + $0x6c0] sm:$0xf]
    %v480 = vld [vmem:[#allocation3 + $0x6c4] sm:$0xf]
    %v481 = vld [vmem:[#allocation3 + $0x6c8] sm:$0xf]
    %v482 = vld [vmem:[#allocation3 + $0x6cc] sm:$0xf]
    %v483 = vld [vmem:[#allocation3 + $0x6d0] sm:$0xf]
    %v484 = vld [vmem:[#allocation3 + $0x6d4] sm:$0xf]
    %v485 = vld [vmem:[#allocation3 + $0x6d8] sm:$0xf]
    %v486 = vld [vmem:[#allocation3 + $0x6dc] sm:$0xf]
    %v487 = vld [vmem:[#allocation3 + $0x6e0] sm:$0xf]
    %v488 = vld [vmem:[#allocation3 + $0x6e4] sm:$0xf]
    %v489 = vld [vmem:[#allocation3 + $0x6e8] sm:$0xf]
    %v490 = vld [vmem:[#allocation3 + $0x6ec] sm:$0xf]
    %v491 = vld [vmem:[#allocation3 + $0x6f0] sm:$0xf]
    %v492 = vld [vmem:[#allocation3 + $0x6f4] sm:$0xf]
    %v493 = vld [vmem:[#allocation3 + $0x6f8] sm:$0xf]
    %v494 = vld [vmem:[#allocation3 + $0x6fc] sm:$0xf]
    %v495 = vld [vmem:[#allocation3 + $0x700] sm:$0xf]
    %v496 = vld [vmem:[#allocation3 + $0x704] sm:$0xf]
    %v497 = vld [vmem:[#allocation3 + $0x708] sm:$0xf]
    %v498 = vld [vmem:[#allocation3 + $0x70c] sm:$0xf]
    %v499 = vld [vmem:[#allocation3 + $0x710] sm:$0xf]
    %v500 = vld [vmem:[#allocation3 + $0x714] sm:$0xf]
    %v501 = vld [vmem:[#allocation3 + $0x718] sm:$0xf]
    %v502 = vld [vmem:[#allocation3 + $0x71c] sm:$0xf]
    %v503 = vld [vmem:[#allocation3 + $0x720] sm:$0xf]
    %v504 = vld [vmem:[#allocation3 + $0x724] sm:$0xf]
    %v505 = vld [vmem:[#allocation3 + $0x728] sm:$0xf]
    %v506 = vld [vmem:[#allocation3 + $0x72c] sm:$0xf]
    %v507 = vld [vmem:[#allocation3 + $0x730] sm:$0xf]
    %v508 = vld [vmem:[#allocation3 + $0x734] sm:$0xf]
    %v509 = vld [vmem:[#allocation3 + $0x738] sm:$0xf]
    %v510 = vld [vmem:[#allocation3 + $0x73c] sm:$0xf]
    %v511 = vld [vmem:[#allocation3 + $0x740] sm:$0xf]
    %v512 = vld [vmem:[#allocation3 + $0x744] sm:$0xf]
    %v513 = vld [vmem:[#allocation3 + $0x748] sm:$0xf]
    %v514 = vld [vmem:[#allocation3 + $0x74c] sm:$0xf]
    %v515 = vld [vmem:[#allocation3 + $0x750] sm:$0xf]
    %v516 = vld [vmem:[#allocation3 + $0x754] sm:$0xf]
    %v517 = vld [vmem:[#allocation3 + $0x758] sm:$0xf]
    %v518 = vld [vmem:[#allocation3 + $0x75c] sm:$0xf]
    %v519 = vld [vmem:[#allocation3 + $0x760] sm:$0xf]
    %v520 = vld [vmem:[#allocation3 + $0x764] sm:$0xf]
    %v521 = vld [vmem:[#allocation3 + $0x768] sm:$0xf]
    %v522 = vld [vmem:[#allocation3 + $0x76c] sm:$0xf]
    %v523 = vld [vmem:[#allocation3 + $0x770] sm:$0xf]
    %v524 = vld [vmem:[#allocation3 + $0x774] sm:$0xf]
    %v525 = vld [vmem:[#allocation3 + $0x778] sm:$0xf]
    %v526 = vld [vmem:[#allocation3 + $0x77c] sm:$0xf]
    %v527 = vld [vmem:[#allocation3 + $0x780] sm:$0xf]
    %v528 = vld [vmem:[#allocation3 + $0x784] sm:$0xf]
    %v529 = vld [vmem:[#allocation3 + $0x788] sm:$0xf]
    %v530 = vld [vmem:[#allocation3 + $0x78c] sm:$0xf]
    %v531 = vld [vmem:[#allocation3 + $0x790] sm:$0xf]
    %v532 = vld [vmem:[#allocation3 + $0x794] sm:$0xf]
    %v533 = vld [vmem:[#allocation3 + $0x798] sm:$0xf]
    %v534 = vld [vmem:[#allocation3 + $0x79c] sm:$0xf]
    %v535 = vld [vmem:[#allocation3 + $0x7a0] sm:$0xf]
    %v536 = vld [vmem:[#allocation3 + $0x7a4] sm:$0xf]
    %v537 = vld [vmem:[#allocation3 + $0x7a8] sm:$0xf]
    %v538 = vld [vmem:[#allocation3 + $0x7ac] sm:$0xf]
    %v539 = vld [vmem:[#allocation3 + $0x7b0] sm:$0xf]
    %v540 = vld [vmem:[#allocation3 + $0x7b4] sm:$0xf]
    %v541 = vld [vmem:[#allocation3 + $0x7b8] sm:$0xf]
    %v542 = vld [vmem:[#allocation3 + $0x7bc] sm:$0xf]
    %v543 = vld [vmem:[#allocation3 + $0x7c0] sm:$0xf]
    %v544 = vld [vmem:[#allocation3 + $0x7c4] sm:$0xf]
    %v545 = vld [vmem:[#allocation3 + $0x7c8] sm:$0xf]
    %v546 = vld [vmem:[#allocation3 + $0x7cc] sm:$0xf]
    %v547 = vld [vmem:[#allocation3 + $0x7d0] sm:$0xf]
    %v548 = vld [vmem:[#allocation3 + $0x7d4] sm:$0xf]
    %v549 = vld [vmem:[#allocation3 + $0x7d8] sm:$0xf]
    %v550 = vld [vmem:[#allocation3 + $0x7dc] sm:$0xf]
    %v551 = vld [vmem:[#allocation3 + $0x7e0] sm:$0xf]
    %v552 = vld [vmem:[#allocation3 + $0x7e4] sm:$0xf]
    %v553 = vld [vmem:[#allocation3 + $0x7e8] sm:$0xf]
    %v554 = vld [vmem:[#allocation3 + $0x7ec] sm:$0xf]
    %v555 = vld [vmem:[#allocation3 + $0x7f0] sm:$0xf]
    %v556 = vld [vmem:[#allocation3 + $0x7f4] sm:$0xf]
    %v557 = vld [vmem:[#allocation3 + $0x7f8] sm:$0xf]
    %v558 = vld [vmem:[#allocation3 + $0x7fc] sm:$0xf]
    %v559 = vld [vmem:[%s2] sm:$0x1]
    %v561 = vlaneseq
    %v562 = vshrl.u32 %v561, 7
    %v563 = vsub.s32 0, %v562
    %v564 = vrot.slane %v559, %v563
    %v570 = vcombine.high %v43, %v43
    %v572 = vunpack.c.l.s4 1966171168
    %v573 = vunpack.c.0.s8 %v572
    %v574 = vlaneseq
    %v575 = vshrl.u32 %v574, 7
    %v576 = vsub.s32 %v573, %v575
    %v577 = vrot.slane %v43, %v576
    %v579 = vunpack.c.l.s4 1966171168
    %v580 = vunpack.c.0.s8 %v579
    %v581 = vlaneseq
    %v582 = vshrl.u32 %v581, 7
    %v583 = vsub.s32 %v580, %v582
    %v584 = vrot.slane %v570, %v583
    %v585 = vcombine.high %v577, %v577
    %v586 = vcombine.high %v584, %v584
    %v588 = vunpack.c.l.s4 1966171168
    %v589 = vunpack.c.0.s8 %v588
    %v590 = vlaneseq
    %v591 = vshrl.u32 %v590, 7
    %v592 = vsub.s32 %v589, %v591
    %v593 = vrot.slane %v577, %v592
    %v595 = vunpack.c.l.s4 1966171168
    %v596 = vunpack.c.0.s8 %v595
    %v597 = vlaneseq
    %v598 = vshrl.u32 %v597, 7
    %v599 = vsub.s32 %v596, %v598
    %v600 = vrot.slane %v584, %v599
    %v602 = vunpack.c.l.s4 1966171168
    %v603 = vunpack.c.0.s8 %v602
    %v604 = vlaneseq
    %v605 = vshrl.u32 %v604, 7
    %v606 = vsub.s32 %v603, %v605
    %v607 = vrot.slane %v585, %v606
    %v609 = vunpack.c.l.s4 1966171168
    %v610 = vunpack.c.0.s8 %v609
    %v611 = vlaneseq
    %v612 = vshrl.u32 %v611, 7
    %v613 = vsub.s32 %v610, %v612
    %v614 = vrot.slane %v586, %v613
    %v615 = vcombine.high %v593, %v593
    %v616 = vcombine.high %v600, %v600
    %v617 = vcombine.high %v607, %v607
    %v618 = vcombine.high %v614, %v614
    %v619 = vcombine.high %v44, %v44
    %v621 = vunpack.c.l.s4 1966171168
    %v622 = vunpack.c.0.s8 %v621
    %v623 = vlaneseq
    %v624 = vshrl.u32 %v623, 7
    %v625 = vsub.s32 %v622, %v624
    %v626 = vrot.slane %v44, %v625
    %v628 = vunpack.c.l.s4 1966171168
    %v629 = vunpack.c.0.s8 %v628
    %v630 = vlaneseq
    %v631 = vshrl.u32 %v630, 7
    %v632 = vsub.s32 %v629, %v631
    %v633 = vrot.slane %v619, %v632
    %v634 = vcombine.high %v626, %v626
    %v635 = vcombine.high %v633, %v633
    %v637 = vunpack.c.l.s4 1966171168
    %v638 = vunpack.c.0.s8 %v637
    %v639 = vlaneseq
    %v640 = vshrl.u32 %v639, 7
    %v641 = vsub.s32 %v638, %v640
    %v642 = vrot.slane %v626, %v641
    %v644 = vunpack.c.l.s4 1966171168
    %v645 = vunpack.c.0.s8 %v644
    %v646 = vlaneseq
    %v647 = vshrl.u32 %v646, 7
    %v648 = vsub.s32 %v645, %v647
    %v649 = vrot.slane %v633, %v648
    %v651 = vunpack.c.l.s4 1966171168
    %v652 = vunpack.c.0.s8 %v651
    %v653 = vlaneseq
    %v654 = vshrl.u32 %v653, 7
    %v655 = vsub.s32 %v652, %v654
    %v656 = vrot.slane %v634, %v655
    %v658 = vunpack.c.l.s4 1966171168
    %v659 = vunpack.c.0.s8 %v658
    %v660 = vlaneseq
    %v661 = vshrl.u32 %v660, 7
    %v662 = vsub.s32 %v659, %v661
    %v663 = vrot.slane %v635, %v662
    %v664 = vcombine.high %v642, %v642
    %v665 = vcombine.high %v649, %v649
    %v666 = vcombine.high %v656, %v656
    %v667 = vcombine.high %v663, %v663
    %v668 = vcombine.high %v45, %v45
    %v670 = vunpack.c.l.s4 1966171168
    %v671 = vunpack.c.0.s8 %v670
    %v672 = vlaneseq
    %v673 = vshrl.u32 %v672, 7
    %v674 = vsub.s32 %v671, %v673
    %v675 = vrot.slane %v45, %v674
    %v677 = vunpack.c.l.s4 1966171168
    %v678 = vunpack.c.0.s8 %v677
    %v679 = vlaneseq
    %v680 = vshrl.u32 %v679, 7
    %v681 = vsub.s32 %v678, %v680
    %v682 = vrot.slane %v668, %v681
    %v683 = vcombine.high %v675, %v675
    %v684 = vcombine.high %v682, %v682
    %v686 = vunpack.c.l.s4 1966171168
    %v687 = vunpack.c.0.s8 %v686
    %v688 = vlaneseq
    %v689 = vshrl.u32 %v688, 7
    %v690 = vsub.s32 %v687, %v689
    %v691 = vrot.slane %v675, %v690
    %v693 = vunpack.c.l.s4 1966171168
    %v694 = vunpack.c.0.s8 %v693
    %v695 = vlaneseq
    %v696 = vshrl.u32 %v695, 7
    %v697 = vsub.s32 %v694, %v696
    %v698 = vrot.slane %v682, %v697
    %v700 = vunpack.c.l.s4 1966171168
    %v701 = vunpack.c.0.s8 %v700
    %v702 = vlaneseq
    %v703 = vshrl.u32 %v702, 7
    %v704 = vsub.s32 %v701, %v703
    %v705 = vrot.slane %v683, %v704
    %v707 = vunpack.c.l.s4 1966171168
    %v708 = vunpack.c.0.s8 %v707
    %v709 = vlaneseq
    %v710 = vshrl.u32 %v709, 7
    %v711 = vsub.s32 %v708, %v710
    %v712 = vrot.slane %v684, %v711
    %v713 = vcombine.high %v691, %v691
    %v714 = vcombine.high %v698, %v698
    %v715 = vcombine.high %v705, %v705
    %v716 = vcombine.high %v712, %v712
    %v717 = vcombine.high %v46, %v46
    %v719 = vunpack.c.l.s4 1966171168
    %v720 = vunpack.c.0.s8 %v719
    %v721 = vlaneseq
    %v722 = vshrl.u32 %v721, 7
    %v723 = vsub.s32 %v720, %v722
    %v724 = vrot.slane %v46, %v723
    %v726 = vunpack.c.l.s4 1966171168
    %v727 = vunpack.c.0.s8 %v726
    %v728 = vlaneseq
    %v729 = vshrl.u32 %v728, 7
    %v730 = vsub.s32 %v727, %v729
    %v731 = vrot.slane %v717, %v730
    %v732 = vcombine.high %v724, %v724
    %v733 = vcombine.high %v731, %v731
    %v735 = vunpack.c.l.s4 1966171168
    %v736 = vunpack.c.0.s8 %v735
    %v737 = vlaneseq
    %v738 = vshrl.u32 %v737, 7
    %v739 = vsub.s32 %v736, %v738
    %v740 = vrot.slane %v724, %v739
    %v742 = vunpack.c.l.s4 1966171168
    %v743 = vunpack.c.0.s8 %v742
    %v744 = vlaneseq
    %v745 = vshrl.u32 %v744, 7
    %v746 = vsub.s32 %v743, %v745
    %v747 = vrot.slane %v731, %v746
    %v749 = vunpack.c.l.s4 1966171168
    %v750 = vunpack.c.0.s8 %v749
    %v751 = vlaneseq
    %v752 = vshrl.u32 %v751, 7
    %v753 = vsub.s32 %v750, %v752
    %v754 = vrot.slane %v732, %v753
    %v756 = vunpack.c.l.s4 1966171168
    %v757 = vunpack.c.0.s8 %v756
    %v758 = vlaneseq
    %v759 = vshrl.u32 %v758, 7
    %v760 = vsub.s32 %v757, %v759
    %v761 = vrot.slane %v733, %v760
    %v762 = vcombine.high %v740, %v740
    %v763 = vcombine.high %v747, %v747
    %v764 = vcombine.high %v754, %v754
    %v765 = vcombine.high %v761, %v761
    %v1310 = vunpack.c.l.b16 %v47
    %v1311 = vunpack.c.l.b16 %v48
    %v1312 = vunpack.c.l.b16 %v49
    %v1313 = vunpack.c.l.b16 %v50
    %v1314 = vunpack.c.l.b16 %v51
    %v1315 = vunpack.c.l.b16 %v52
    %v1316 = vunpack.c.l.b16 %v53
    %v1317 = vunpack.c.l.b16 %v54
    %v1318 = vunpack.c.l.b16 %v55
    %v1319 = vunpack.c.l.b16 %v56
    %v1320 = vunpack.c.l.b16 %v57
    %v1321 = vunpack.c.l.b16 %v58
    %v1322 = vunpack.c.l.b16 %v59
    %v1323 = vunpack.c.l.b16 %v60
    %v1324 = vunpack.c.l.b16 %v61
    %v1325 = vunpack.c.l.b16 %v62
    %v1326 = vunpack.c.l.b16 %v63
    %v1327 = vunpack.c.l.b16 %v64
    %v1328 = vunpack.c.l.b16 %v65
    %v1329 = vunpack.c.l.b16 %v66
    %v1330 = vunpack.c.l.b16 %v67
    %v1331 = vunpack.c.l.b16 %v68
    %v1332 = vunpack.c.l.b16 %v69
    %v1333 = vunpack.c.l.b16 %v70
    %v1334 = vunpack.c.l.b16 %v71
    %v1335 = vunpack.c.l.b16 %v72
    %v1336 = vunpack.c.l.b16 %v73
    %v1337 = vunpack.c.l.b16 %v74
    %v1338 = vunpack.c.l.b16 %v75
    %v1339 = vunpack.c.l.b16 %v76
    %v1340 = vunpack.c.l.b16 %v77
    %v1341 = vunpack.c.l.b16 %v78
    %v1342 = vunpack.c.l.b16 %v79
    %v1343 = vunpack.c.l.b16 %v80
    %v1344 = vunpack.c.l.b16 %v81
    %v1345 = vunpack.c.l.b16 %v82
    %v1346 = vunpack.c.l.b16 %v83
    %v1347 = vunpack.c.l.b16 %v84
    %v1348 = vunpack.c.l.b16 %v85
    %v1349 = vunpack.c.l.b16 %v86
    %v1350 = vunpack.c.l.b16 %v87
    %v1351 = vunpack.c.l.b16 %v88
    %v1352 = vunpack.c.l.b16 %v89
    %v1353 = vunpack.c.l.b16 %v90
    %v1354 = vunpack.c.l.b16 %v91
    %v1355 = vunpack.c.l.b16 %v92
    %v1356 = vunpack.c.l.b16 %v93
    %v1357 = vunpack.c.l.b16 %v94
    %v1358 = vunpack.c.l.b16 %v95
    %v1359 = vunpack.c.l.b16 %v96
    %v1360 = vunpack.c.l.b16 %v97
    %v1361 = vunpack.c.l.b16 %v98
    %v1362 = vunpack.c.l.b16 %v99
    %v1363 = vunpack.c.l.b16 %v100
    %v1364 = vunpack.c.l.b16 %v101
    %v1365 = vunpack.c.l.b16 %v102
    %v1366 = vunpack.c.l.b16 %v103
    %v1367 = vunpack.c.l.b16 %v104
    %v1368 = vunpack.c.l.b16 %v105
    %v1369 = vunpack.c.l.b16 %v106
    %v1370 = vunpack.c.l.b16 %v107
    %v1371 = vunpack.c.l.b16 %v108
    %v1372 = vunpack.c.l.b16 %v109
    %v1373 = vunpack.c.l.b16 %v110
    %v1374 = vunpack.c.l.b16 %v111
    %v1375 = vunpack.c.l.b16 %v112
    %v1376 = vunpack.c.l.b16 %v113
    %v1377 = vunpack.c.l.b16 %v114
    %v1378 = vunpack.c.l.b16 %v115
    %v1379 = vunpack.c.l.b16 %v116
    %v1380 = vunpack.c.l.b16 %v117
    %v1381 = vunpack.c.l.b16 %v118
    %v1382 = vunpack.c.l.b16 %v119
    %v1383 = vunpack.c.l.b16 %v120
    %v1384 = vunpack.c.l.b16 %v121
    %v1385 = vunpack.c.l.b16 %v122
    %v1386 = vunpack.c.l.b16 %v123
    %v1387 = vunpack.c.l.b16 %v124
    %v1388 = vunpack.c.l.b16 %v125
    %v1389 = vunpack.c.l.b16 %v126
    %v1390 = vunpack.c.l.b16 %v127
    %v1391 = vunpack.c.l.b16 %v128
    %v1392 = vunpack.c.l.b16 %v129
    %v1393 = vunpack.c.l.b16 %v130
    %v1394 = vunpack.c.l.b16 %v131
    %v1395 = vunpack.c.l.b16 %v132
    %v1396 = vunpack.c.l.b16 %v133
    %v1397 = vunpack.c.l.b16 %v134
    %v1398 = vunpack.c.l.b16 %v135
    %v1399 = vunpack.c.l.b16 %v136
    %v1400 = vunpack.c.l.b16 %v137
    %v1401 = vunpack.c.l.b16 %v138
    %v1402 = vunpack.c.l.b16 %v139
    %v1403 = vunpack.c.l.b16 %v140
    %v1404 = vunpack.c.l.b16 %v141
    %v1405 = vunpack.c.l.b16 %v142
    %v1406 = vunpack.c.l.b16 %v143
    %v1407 = vunpack.c.l.b16 %v144
    %v1408 = vunpack.c.l.b16 %v145
    %v1409 = vunpack.c.l.b16 %v146
    %v1410 = vunpack.c.l.b16 %v147
    %v1411 = vunpack.c.l.b16 %v148
    %v1412 = vunpack.c.l.b16 %v149
    %v1413 = vunpack.c.l.b16 %v150
    %v1414 = vunpack.c.l.b16 %v151
    %v1415 = vunpack.c.l.b16 %v152
    %v1416 = vunpack.c.l.b16 %v153
    %v1417 = vunpack.c.l.b16 %v154
    %v1418 = vunpack.c.l.b16 %v155
    %v1419 = vunpack.c.l.b16 %v156
    %v1420 = vunpack.c.l.b16 %v157
    %v1421 = vunpack.c.l.b16 %v158
    %v1422 = vunpack.c.l.b16 %v159
    %v1423 = vunpack.c.l.b16 %v160
    %v1424 = vunpack.c.l.b16 %v161
    %v1425 = vunpack.c.l.b16 %v162
    %v1426 = vunpack.c.l.b16 %v163
    %v1427 = vunpack.c.l.b16 %v164
    %v1428 = vunpack.c.l.b16 %v165
    %v1429 = vunpack.c.l.b16 %v166
    %v1430 = vunpack.c.l.b16 %v167
    %v1431 = vunpack.c.l.b16 %v168
    %v1432 = vunpack.c.l.b16 %v169
    %v1433 = vunpack.c.l.b16 %v170
    %v1434 = vunpack.c.l.b16 %v171
    %v1435 = vunpack.c.l.b16 %v172
    %v1436 = vunpack.c.l.b16 %v173
    %v1437 = vunpack.c.l.b16 %v174
    %v1438 = vunpack.c.l.b16 %v175
    %v1439 = vunpack.c.l.b16 %v176
    %v1440 = vunpack.c.l.b16 %v177
    %v1441 = vunpack.c.l.b16 %v178
    %v1442 = vunpack.c.l.b16 %v179
    %v1443 = vunpack.c.l.b16 %v180
    %v1444 = vunpack.c.l.b16 %v181
    %v1445 = vunpack.c.l.b16 %v182
    %v1446 = vunpack.c.l.b16 %v183
    %v1447 = vunpack.c.l.b16 %v184
    %v1448 = vunpack.c.l.b16 %v185
    %v1449 = vunpack.c.l.b16 %v186
    %v1450 = vunpack.c.l.b16 %v187
    %v1451 = vunpack.c.l.b16 %v188
    %v1452 = vunpack.c.l.b16 %v189
    %v1453 = vunpack.c.l.b16 %v190
    %v1454 = vunpack.c.l.b16 %v191
    %v1455 = vunpack.c.l.b16 %v192
    %v1456 = vunpack.c.l.b16 %v193
    %v1457 = vunpack.c.l.b16 %v194
    %v1458 = vunpack.c.l.b16 %v195
    %v1459 = vunpack.c.l.b16 %v196
    %v1460 = vunpack.c.l.b16 %v197
    %v1461 = vunpack.c.l.b16 %v198
    %v1462 = vunpack.c.l.b16 %v199
    %v1463 = vunpack.c.l.b16 %v200
    %v1464 = vunpack.c.l.b16 %v201
    %v1465 = vunpack.c.l.b16 %v202
    %v1466 = vunpack.c.l.b16 %v203
    %v1467 = vunpack.c.l.b16 %v204
    %v1468 = vunpack.c.l.b16 %v205
    %v1469 = vunpack.c.l.b16 %v206
    %v1470 = vunpack.c.l.b16 %v207
    %v1471 = vunpack.c.l.b16 %v208
    %v1472 = vunpack.c.l.b16 %v209
    %v1473 = vunpack.c.l.b16 %v210
    %v1474 = vunpack.c.l.b16 %v211
    %v1475 = vunpack.c.l.b16 %v212
    %v1476 = vunpack.c.l.b16 %v213
    %v1477 = vunpack.c.l.b16 %v214
    %v1478 = vunpack.c.l.b16 %v215
    %v1479 = vunpack.c.l.b16 %v216
    %v1480 = vunpack.c.l.b16 %v217
    %v1481 = vunpack.c.l.b16 %v218
    %v1482 = vunpack.c.l.b16 %v219
    %v1483 = vunpack.c.l.b16 %v220
    %v1484 = vunpack.c.l.b16 %v221
    %v1485 = vunpack.c.l.b16 %v222
    %v1486 = vunpack.c.l.b16 %v223
    %v1487 = vunpack.c.l.b16 %v224
    %v1488 = vunpack.c.l.b16 %v225
    %v1489 = vunpack.c.l.b16 %v226
    %v1490 = vunpack.c.l.b16 %v227
    %v1491 = vunpack.c.l.b16 %v228
    %v1492 = vunpack.c.l.b16 %v229
    %v1493 = vunpack.c.l.b16 %v230
    %v1494 = vunpack.c.l.b16 %v231
    %v1495 = vunpack.c.l.b16 %v232
    %v1496 = vunpack.c.l.b16 %v233
    %v1497 = vunpack.c.l.b16 %v234
    %v1498 = vunpack.c.l.b16 %v235
    %v1499 = vunpack.c.l.b16 %v236
    %v1500 = vunpack.c.l.b16 %v237
    %v1501 = vunpack.c.l.b16 %v238
    %v1502 = vunpack.c.l.b16 %v239
    %v1503 = vunpack.c.l.b16 %v240
    %v1504 = vunpack.c.l.b16 %v241
    %v1505 = vunpack.c.l.b16 %v242
    %v1506 = vunpack.c.l.b16 %v243
    %v1507 = vunpack.c.l.b16 %v244
    %v1508 = vunpack.c.l.b16 %v245
    %v1509 = vunpack.c.l.b16 %v246
    %v1510 = vunpack.c.l.b16 %v247
    %v1511 = vunpack.c.l.b16 %v248
    %v1512 = vunpack.c.l.b16 %v249
    %v1513 = vunpack.c.l.b16 %v250
    %v1514 = vunpack.c.l.b16 %v251
    %v1515 = vunpack.c.l.b16 %v252
    %v1516 = vunpack.c.l.b16 %v253
    %v1517 = vunpack.c.l.b16 %v254
    %v1518 = vunpack.c.l.b16 %v255
    %v1519 = vunpack.c.l.b16 %v256
    %v1520 = vunpack.c.l.b16 %v257
    %v1521 = vunpack.c.l.b16 %v258
    %v1522 = vunpack.c.l.b16 %v259
    %v1523 = vunpack.c.l.b16 %v260
    %v1524 = vunpack.c.l.b16 %v261
    %v1525 = vunpack.c.l.b16 %v262
    %v1526 = vunpack.c.l.b16 %v263
    %v1527 = vunpack.c.l.b16 %v264
    %v1528 = vunpack.c.l.b16 %v265
    %v1529 = vunpack.c.l.b16 %v266
    %v1530 = vunpack.c.l.b16 %v267
    %v1531 = vunpack.c.l.b16 %v268
    %v1532 = vunpack.c.l.b16 %v269
    %v1533 = vunpack.c.l.b16 %v270
    %v1534 = vunpack.c.l.b16 %v271
    %v1535 = vunpack.c.l.b16 %v272
    %v1536 = vunpack.c.l.b16 %v273
    %v1537 = vunpack.c.l.b16 %v274
    %v1538 = vunpack.c.l.b16 %v275
    %v1539 = vunpack.c.l.b16 %v276
    %v1540 = vunpack.c.l.b16 %v277
    %v1541 = vunpack.c.l.b16 %v278
    %v1542 = vunpack.c.l.b16 %v279
    %v1543 = vunpack.c.l.b16 %v280
    %v1544 = vunpack.c.l.b16 %v281
    %v1545 = vunpack.c.l.b16 %v282
    %v1546 = vunpack.c.l.b16 %v283
    %v1547 = vunpack.c.l.b16 %v284
    %v1548 = vunpack.c.l.b16 %v285
    %v1549 = vunpack.c.l.b16 %v286
    %v1550 = vunpack.c.l.b16 %v287
    %v1551 = vunpack.c.l.b16 %v288
    %v1552 = vunpack.c.l.b16 %v289
    %v1553 = vunpack.c.l.b16 %v290
    %v1554 = vunpack.c.l.b16 %v291
    %v1555 = vunpack.c.l.b16 %v292
    %v1556 = vunpack.c.l.b16 %v293
    %v1557 = vunpack.c.l.b16 %v294
    %v1558 = vunpack.c.l.b16 %v295
    %v1559 = vunpack.c.l.b16 %v296
    %v1560 = vunpack.c.l.b16 %v297
    %v1561 = vunpack.c.l.b16 %v298
    %v1562 = vunpack.c.l.b16 %v299
    %v1563 = vunpack.c.l.b16 %v300
    %v1564 = vunpack.c.l.b16 %v301
    %v1565 = vunpack.c.l.b16 %v302
    %v1566 = vunpack.c.l.b16 %v303
    %v1567 = vunpack.c.l.b16 %v304
    %v1568 = vunpack.c.l.b16 %v305
    %v1569 = vunpack.c.l.b16 %v306
    %v1570 = vunpack.c.l.b16 %v307
    %v1571 = vunpack.c.l.b16 %v308
    %v1572 = vunpack.c.l.b16 %v309
    %v1573 = vunpack.c.l.b16 %v310
    %v1574 = vunpack.c.l.b16 %v311
    %v1575 = vunpack.c.l.b16 %v312
    %v1576 = vunpack.c.l.b16 %v313
    %v1577 = vunpack.c.l.b16 %v314
    %v1578 = vunpack.c.l.b16 %v315
    %v1579 = vunpack.c.l.b16 %v316
    %v1580 = vunpack.c.l.b16 %v317
    %v1581 = vunpack.c.l.b16 %v318
    %v1582 = vunpack.c.l.b16 %v319
    %v1583 = vunpack.c.l.b16 %v320
    %v1584 = vunpack.c.l.b16 %v321
    %v1585 = vunpack.c.l.b16 %v322
    %v1586 = vunpack.c.l.b16 %v323
    %v1587 = vunpack.c.l.b16 %v324
    %v1588 = vunpack.c.l.b16 %v325
    %v1589 = vunpack.c.l.b16 %v326
    %v1590 = vunpack.c.l.b16 %v327
    %v1591 = vunpack.c.l.b16 %v328
    %v1592 = vunpack.c.l.b16 %v329
    %v1593 = vunpack.c.l.b16 %v330
    %v1594 = vunpack.c.l.b16 %v331
    %v1595 = vunpack.c.l.b16 %v332
    %v1596 = vunpack.c.l.b16 %v333
    %v1597 = vunpack.c.l.b16 %v334
    %v1598 = vunpack.c.l.b16 %v335
    %v1599 = vunpack.c.l.b16 %v336
    %v1600 = vunpack.c.l.b16 %v337
    %v1601 = vunpack.c.l.b16 %v338
    %v1602 = vunpack.c.l.b16 %v339
    %v1603 = vunpack.c.l.b16 %v340
    %v1604 = vunpack.c.l.b16 %v341
    %v1605 = vunpack.c.l.b16 %v342
    %v1606 = vunpack.c.l.b16 %v343
    %v1607 = vunpack.c.l.b16 %v344
    %v1608 = vunpack.c.l.b16 %v345
    %v1609 = vunpack.c.l.b16 %v346
    %v1610 = vunpack.c.l.b16 %v347
    %v1611 = vunpack.c.l.b16 %v348
    %v1612 = vunpack.c.l.b16 %v349
    %v1613 = vunpack.c.l.b16 %v350
    %v1614 = vunpack.c.l.b16 %v351
    %v1615 = vunpack.c.l.b16 %v352
    %v1616 = vunpack.c.l.b16 %v353
    %v1617 = vunpack.c.l.b16 %v354
    %v1618 = vunpack.c.l.b16 %v355
    %v1619 = vunpack.c.l.b16 %v356
    %v1620 = vunpack.c.l.b16 %v357
    %v1621 = vunpack.c.l.b16 %v358
    %v1622 = vunpack.c.l.b16 %v359
    %v1623 = vunpack.c.l.b16 %v360
    %v1624 = vunpack.c.l.b16 %v361
    %v1625 = vunpack.c.l.b16 %v362
    %v1626 = vunpack.c.l.b16 %v363
    %v1627 = vunpack.c.l.b16 %v364
    %v1628 = vunpack.c.l.b16 %v365
    %v1629 = vunpack.c.l.b16 %v366
    %v1630 = vunpack.c.l.b16 %v367
    %v1631 = vunpack.c.l.b16 %v368
    %v1632 = vunpack.c.l.b16 %v369
    %v1633 = vunpack.c.l.b16 %v370
    %v1634 = vunpack.c.l.b16 %v371
    %v1635 = vunpack.c.l.b16 %v372
    %v1636 = vunpack.c.l.b16 %v373
    %v1637 = vunpack.c.l.b16 %v374
    %v1638 = vunpack.c.l.b16 %v375
    %v1639 = vunpack.c.l.b16 %v376
    %v1640 = vunpack.c.l.b16 %v377
    %v1641 = vunpack.c.l.b16 %v378
    %v1642 = vunpack.c.l.b16 %v379
    %v1643 = vunpack.c.l.b16 %v380
    %v1644 = vunpack.c.l.b16 %v381
    %v1645 = vunpack.c.l.b16 %v382
    %v1646 = vunpack.c.l.b16 %v383
    %v1647 = vunpack.c.l.b16 %v384
    %v1648 = vunpack.c.l.b16 %v385
    %v1649 = vunpack.c.l.b16 %v386
    %v1650 = vunpack.c.l.b16 %v387
    %v1651 = vunpack.c.l.b16 %v388
    %v1652 = vunpack.c.l.b16 %v389
    %v1653 = vunpack.c.l.b16 %v390
    %v1654 = vunpack.c.l.b16 %v391
    %v1655 = vunpack.c.l.b16 %v392
    %v1656 = vunpack.c.l.b16 %v393
    %v1657 = vunpack.c.l.b16 %v394
    %v1658 = vunpack.c.l.b16 %v395
    %v1659 = vunpack.c.l.b16 %v396
    %v1660 = vunpack.c.l.b16 %v397
    %v1661 = vunpack.c.l.b16 %v398
    %v1662 = vunpack.c.l.b16 %v399
    %v1663 = vunpack.c.l.b16 %v400
    %v1664 = vunpack.c.l.b16 %v401
    %v1665 = vunpack.c.l.b16 %v402
    %v1666 = vunpack.c.l.b16 %v403
    %v1667 = vunpack.c.l.b16 %v404
    %v1668 = vunpack.c.l.b16 %v405
    %v1669 = vunpack.c.l.b16 %v406
    %v1670 = vunpack.c.l.b16 %v407
    %v1671 = vunpack.c.l.b16 %v408
    %v1672 = vunpack.c.l.b16 %v409
    %v1673 = vunpack.c.l.b16 %v410
    %v1674 = vunpack.c.l.b16 %v411
    %v1675 = vunpack.c.l.b16 %v412
    %v1676 = vunpack.c.l.b16 %v413
    %v1677 = vunpack.c.l.b16 %v414
    %v1678 = vunpack.c.l.b16 %v415
    %v1679 = vunpack.c.l.b16 %v416
    %v1680 = vunpack.c.l.b16 %v417
    %v1681 = vunpack.c.l.b16 %v418
    %v1682 = vunpack.c.l.b16 %v419
    %v1683 = vunpack.c.l.b16 %v420
    %v1684 = vunpack.c.l.b16 %v421
    %v1685 = vunpack.c.l.b16 %v422
    %v1686 = vunpack.c.l.b16 %v423
    %v1687 = vunpack.c.l.b16 %v424
    %v1688 = vunpack.c.l.b16 %v425
    %v1689 = vunpack.c.l.b16 %v426
    %v1690 = vunpack.c.l.b16 %v427
    %v1691 = vunpack.c.l.b16 %v428
    %v1692 = vunpack.c.l.b16 %v429
    %v1693 = vunpack.c.l.b16 %v430
    %v1694 = vunpack.c.l.b16 %v431
    %v1695 = vunpack.c.l.b16 %v432
    %v1696 = vunpack.c.l.b16 %v433
    %v1697 = vunpack.c.l.b16 %v434
    %v1698 = vunpack.c.l.b16 %v435
    %v1699 = vunpack.c.l.b16 %v436
    %v1700 = vunpack.c.l.b16 %v437
    %v1701 = vunpack.c.l.b16 %v438
    %v1702 = vunpack.c.l.b16 %v439
    %v1703 = vunpack.c.l.b16 %v440
    %v1704 = vunpack.c.l.b16 %v441
    %v1705 = vunpack.c.l.b16 %v442
    %v1706 = vunpack.c.l.b16 %v443
    %v1707 = vunpack.c.l.b16 %v444
    %v1708 = vunpack.c.l.b16 %v445
    %v1709 = vunpack.c.l.b16 %v446
    %v1710 = vunpack.c.l.b16 %v447
    %v1711 = vunpack.c.l.b16 %v448
    %v1712 = vunpack.c.l.b16 %v449
    %v1713 = vunpack.c.l.b16 %v450
    %v1714 = vunpack.c.l.b16 %v451
    %v1715 = vunpack.c.l.b16 %v452
    %v1716 = vunpack.c.l.b16 %v453
    %v1717 = vunpack.c.l.b16 %v454
    %v1718 = vunpack.c.l.b16 %v455
    %v1719 = vunpack.c.l.b16 %v456
    %v1720 = vunpack.c.l.b16 %v457
    %v1721 = vunpack.c.l.b16 %v458
    %v1722 = vunpack.c.l.b16 %v459
    %v1723 = vunpack.c.l.b16 %v460
    %v1724 = vunpack.c.l.b16 %v461
    %v1725 = vunpack.c.l.b16 %v462
    %v1726 = vunpack.c.l.b16 %v463
    %v1727 = vunpack.c.l.b16 %v464
    %v1728 = vunpack.c.l.b16 %v465
    %v1729 = vunpack.c.l.b16 %v466
    %v1730 = vunpack.c.l.b16 %v467
    %v1731 = vunpack.c.l.b16 %v468
    %v1732 = vunpack.c.l.b16 %v469
    %v1733 = vunpack.c.l.b16 %v470
    %v1734 = vunpack.c.l.b16 %v471
    %v1735 = vunpack.c.l.b16 %v472
    %v1736 = vunpack.c.l.b16 %v473
    %v1737 = vunpack.c.l.b16 %v474
    %v1738 = vunpack.c.l.b16 %v475
    %v1739 = vunpack.c.l.b16 %v476
    %v1740 = vunpack.c.l.b16 %v477
    %v1741 = vunpack.c.l.b16 %v478
    %v1742 = vunpack.c.l.b16 %v479
    %v1743 = vunpack.c.l.b16 %v480
    %v1744 = vunpack.c.l.b16 %v481
    %v1745 = vunpack.c.l.b16 %v482
    %v1746 = vunpack.c.l.b16 %v483
    %v1747 = vunpack.c.l.b16 %v484
    %v1748 = vunpack.c.l.b16 %v485
    %v1749 = vunpack.c.l.b16 %v486
    %v1750 = vunpack.c.l.b16 %v487
    %v1751 = vunpack.c.l.b16 %v488
    %v1752 = vunpack.c.l.b16 %v489
    %v1753 = vunpack.c.l.b16 %v490
    %v1754 = vunpack.c.l.b16 %v491
    %v1755 = vunpack.c.l.b16 %v492
    %v1756 = vunpack.c.l.b16 %v493
    %v1757 = vunpack.c.l.b16 %v494
    %v1758 = vunpack.c.l.b16 %v495
    %v1759 = vunpack.c.l.b16 %v496
    %v1760 = vunpack.c.l.b16 %v497
    %v1761 = vunpack.c.l.b16 %v498
    %v1762 = vunpack.c.l.b16 %v499
    %v1763 = vunpack.c.l.b16 %v500
    %v1764 = vunpack.c.l.b16 %v501
    %v1765 = vunpack.c.l.b16 %v502
    %v1766 = vunpack.c.l.b16 %v503
    %v1767 = vunpack.c.l.b16 %v504
    %v1768 = vunpack.c.l.b16 %v505
    %v1769 = vunpack.c.l.b16 %v506
    %v1770 = vunpack.c.l.b16 %v507
    %v1771 = vunpack.c.l.b16 %v508
    %v1772 = vunpack.c.l.b16 %v509
    %v1773 = vunpack.c.l.b16 %v510
    %v1774 = vunpack.c.l.b16 %v511
    %v1775 = vunpack.c.l.b16 %v512
    %v1776 = vunpack.c.l.b16 %v513
    %v1777 = vunpack.c.l.b16 %v514
    %v1778 = vunpack.c.l.b16 %v515
    %v1779 = vunpack.c.l.b16 %v516
    %v1780 = vunpack.c.l.b16 %v517
    %v1781 = vunpack.c.l.b16 %v518
    %v1782 = vunpack.c.l.b16 %v519
    %v1783 = vunpack.c.l.b16 %v520
    %v1784 = vunpack.c.l.b16 %v521
    %v1785 = vunpack.c.l.b16 %v522
    %v1786 = vunpack.c.l.b16 %v523
    %v1787 = vunpack.c.l.b16 %v524
    %v1788 = vunpack.c.l.b16 %v525
    %v1789 = vunpack.c.l.b16 %v526
    %v1790 = vunpack.c.l.b16 %v527
    %v1791 = vunpack.c.l.b16 %v528
    %v1792 = vunpack.c.l.b16 %v529
    %v1793 = vunpack.c.l.b16 %v530
    %v1794 = vunpack.c.l.b16 %v531
    %v1795 = vunpack.c.l.b16 %v532
    %v1796 = vunpack.c.l.b16 %v533
    %v1797 = vunpack.c.l.b16 %v534
    %v1798 = vunpack.c.l.b16 %v535
    %v1799 = vunpack.c.l.b16 %v536
    %v1800 = vunpack.c.l.b16 %v537
    %v1801 = vunpack.c.l.b16 %v538
    %v1802 = vunpack.c.l.b16 %v539
    %v1803 = vunpack.c.l.b16 %v540
    %v1804 = vunpack.c.l.b16 %v541
    %v1805 = vunpack.c.l.b16 %v542
    %v1806 = vunpack.c.l.b16 %v543
    %v1807 = vunpack.c.l.b16 %v544
    %v1808 = vunpack.c.l.b16 %v545
    %v1809 = vunpack.c.l.b16 %v546
    %v1810 = vunpack.c.l.b16 %v547
    %v1811 = vunpack.c.l.b16 %v548
    %v1812 = vunpack.c.l.b16 %v549
    %v1813 = vunpack.c.l.b16 %v550
    %v1814 = vunpack.c.l.b16 %v551
    %v1815 = vunpack.c.l.b16 %v552
    %v1816 = vunpack.c.l.b16 %v553
    %v1817 = vunpack.c.l.b16 %v554
    %v1818 = vunpack.c.l.b16 %v555
    %v1819 = vunpack.c.l.b16 %v556
    %v1820 = vunpack.c.l.b16 %v557
    %v1821 = vunpack.c.l.b16 %v558
    %v1822 = vpack.c.b16 %v1311, %v1310
    %v1823 = vpack.c.b16 %v1313, %v1312
    %v1824 = vpack.c.b16 %v1315, %v1314
    %v1825 = vpack.c.b16 %v1317, %v1316
    %v1826 = vpack.c.b16 %v1319, %v1318
    %v1827 = vpack.c.b16 %v1321, %v1320
    %v1828 = vpack.c.b16 %v1323, %v1322
    %v1829 = vpack.c.b16 %v1325, %v1324
    %v1830 = vpack.c.b16 %v1327, %v1326
    %v1831 = vpack.c.b16 %v1329, %v1328
    %v1832 = vpack.c.b16 %v1331, %v1330
    %v1833 = vpack.c.b16 %v1333, %v1332
    %v1834 = vpack.c.b16 %v1335, %v1334
    %v1835 = vpack.c.b16 %v1337, %v1336
    %v1836 = vpack.c.b16 %v1339, %v1338
    %v1837 = vpack.c.b16 %v1341, %v1340
    %v1838 = vpack.c.b16 %v1343, %v1342
    %v1839 = vpack.c.b16 %v1345, %v1344
    %v1840 = vpack.c.b16 %v1347, %v1346
    %v1841 = vpack.c.b16 %v1349, %v1348
    %v1842 = vpack.c.b16 %v1351, %v1350
    %v1843 = vpack.c.b16 %v1353, %v1352
    %v1844 = vpack.c.b16 %v1355, %v1354
    %v1845 = vpack.c.b16 %v1357, %v1356
    %v1846 = vpack.c.b16 %v1359, %v1358
    %v1847 = vpack.c.b16 %v1361, %v1360
    %v1848 = vpack.c.b16 %v1363, %v1362
    %v1849 = vpack.c.b16 %v1365, %v1364
    %v1850 = vpack.c.b16 %v1367, %v1366
    %v1851 = vpack.c.b16 %v1369, %v1368
    %v1852 = vpack.c.b16 %v1371, %v1370
    %v1853 = vpack.c.b16 %v1373, %v1372
    %v1854 = vpack.c.b16 %v1375, %v1374
    %v1855 = vpack.c.b16 %v1377, %v1376
    %v1856 = vpack.c.b16 %v1379, %v1378
    %v1857 = vpack.c.b16 %v1381, %v1380
    %v1858 = vpack.c.b16 %v1383, %v1382
    %v1859 = vpack.c.b16 %v1385, %v1384
    %v1860 = vpack.c.b16 %v1387, %v1386
    %v1861 = vpack.c.b16 %v1389, %v1388
    %v1862 = vpack.c.b16 %v1391, %v1390
    %v1863 = vpack.c.b16 %v1393, %v1392
    %v1864 = vpack.c.b16 %v1395, %v1394
    %v1865 = vpack.c.b16 %v1397, %v1396
    %v1866 = vpack.c.b16 %v1399, %v1398
    %v1867 = vpack.c.b16 %v1401, %v1400
    %v1868 = vpack.c.b16 %v1403, %v1402
    %v1869 = vpack.c.b16 %v1405, %v1404
    %v1870 = vpack.c.b16 %v1407, %v1406
    %v1871 = vpack.c.b16 %v1409, %v1408
    %v1872 = vpack.c.b16 %v1411, %v1410
    %v1873 = vpack.c.b16 %v1413, %v1412
    %v1874 = vpack.c.b16 %v1415, %v1414
    %v1875 = vpack.c.b16 %v1417, %v1416
    %v1876 = vpack.c.b16 %v1419, %v1418
    %v1877 = vpack.c.b16 %v1421, %v1420
    %v1878 = vpack.c.b16 %v1423, %v1422
    %v1879 = vpack.c.b16 %v1425, %v1424
    %v1880 = vpack.c.b16 %v1427, %v1426
    %v1881 = vpack.c.b16 %v1429, %v1428
    %v1882 = vpack.c.b16 %v1431, %v1430
    %v1883 = vpack.c.b16 %v1433, %v1432
    %v1884 = vpack.c.b16 %v1435, %v1434
    %v1885 = vpack.c.b16 %v1437, %v1436
    %v1886 = vpack.c.b16 %v1439, %v1438
    %v1887 = vpack.c.b16 %v1441, %v1440
    %v1888 = vpack.c.b16 %v1443, %v1442
    %v1889 = vpack.c.b16 %v1445, %v1444
    %v1890 = vpack.c.b16 %v1447, %v1446
    %v1891 = vpack.c.b16 %v1449, %v1448
    %v1892 = vpack.c.b16 %v1451, %v1450
    %v1893 = vpack.c.b16 %v1453, %v1452
    %v1894 = vpack.c.b16 %v1455, %v1454
    %v1895 = vpack.c.b16 %v1457, %v1456
    %v1896 = vpack.c.b16 %v1459, %v1458
    %v1897 = vpack.c.b16 %v1461, %v1460
    %v1898 = vpack.c.b16 %v1463, %v1462
    %v1899 = vpack.c.b16 %v1465, %v1464
    %v1900 = vpack.c.b16 %v1467, %v1466
    %v1901 = vpack.c.b16 %v1469, %v1468
    %v1902 = vpack.c.b16 %v1471, %v1470
    %v1903 = vpack.c.b16 %v1473, %v1472
    %v1904 = vpack.c.b16 %v1475, %v1474
    %v1905 = vpack.c.b16 %v1477, %v1476
    %v1906 = vpack.c.b16 %v1479, %v1478
    %v1907 = vpack.c.b16 %v1481, %v1480
    %v1908 = vpack.c.b16 %v1483, %v1482
    %v1909 = vpack.c.b16 %v1485, %v1484
    %v1910 = vpack.c.b16 %v1487, %v1486
    %v1911 = vpack.c.b16 %v1489, %v1488
    %v1912 = vpack.c.b16 %v1491, %v1490
    %v1913 = vpack.c.b16 %v1493, %v1492
    %v1914 = vpack.c.b16 %v1495, %v1494
    %v1915 = vpack.c.b16 %v1497, %v1496
    %v1916 = vpack.c.b16 %v1499, %v1498
    %v1917 = vpack.c.b16 %v1501, %v1500
    %v1918 = vpack.c.b16 %v1503, %v1502
    %v1919 = vpack.c.b16 %v1505, %v1504
    %v1920 = vpack.c.b16 %v1507, %v1506
    %v1921 = vpack.c.b16 %v1509, %v1508
    %v1922 = vpack.c.b16 %v1511, %v1510
    %v1923 = vpack.c.b16 %v1513, %v1512
    %v1924 = vpack.c.b16 %v1515, %v1514
    %v1925 = vpack.c.b16 %v1517, %v1516
    %v1926 = vpack.c.b16 %v1519, %v1518
    %v1927 = vpack.c.b16 %v1521, %v1520
    %v1928 = vpack.c.b16 %v1523, %v1522
    %v1929 = vpack.c.b16 %v1525, %v1524
    %v1930 = vpack.c.b16 %v1527, %v1526
    %v1931 = vpack.c.b16 %v1529, %v1528
    %v1932 = vpack.c.b16 %v1531, %v1530
    %v1933 = vpack.c.b16 %v1533, %v1532
    %v1934 = vpack.c.b16 %v1535, %v1534
    %v1935 = vpack.c.b16 %v1537, %v1536
    %v1936 = vpack.c.b16 %v1539, %v1538
    %v1937 = vpack.c.b16 %v1541, %v1540
    %v1938 = vpack.c.b16 %v1543, %v1542
    %v1939 = vpack.c.b16 %v1545, %v1544
    %v1940 = vpack.c.b16 %v1547, %v1546
    %v1941 = vpack.c.b16 %v1549, %v1548
    %v1942 = vpack.c.b16 %v1551, %v1550
    %v1943 = vpack.c.b16 %v1553, %v1552
    %v1944 = vpack.c.b16 %v1555, %v1554
    %v1945 = vpack.c.b16 %v1557, %v1556
    %v1946 = vpack.c.b16 %v1559, %v1558
    %v1947 = vpack.c.b16 %v1561, %v1560
    %v1948 = vpack.c.b16 %v1563, %v1562
    %v1949 = vpack.c.b16 %v1565, %v1564
    %v1950 = vpack.c.b16 %v1567, %v1566
    %v1951 = vpack.c.b16 %v1569, %v1568
    %v1952 = vpack.c.b16 %v1571, %v1570
    %v1953 = vpack.c.b16 %v1573, %v1572
    %v1954 = vpack.c.b16 %v1575, %v1574
    %v1955 = vpack.c.b16 %v1577, %v1576
    %v1956 = vpack.c.b16 %v1579, %v1578
    %v1957 = vpack.c.b16 %v1581, %v1580
    %v1958 = vpack.c.b16 %v1583, %v1582
    %v1959 = vpack.c.b16 %v1585, %v1584
    %v1960 = vpack.c.b16 %v1587, %v1586
    %v1961 = vpack.c.b16 %v1589, %v1588
    %v1962 = vpack.c.b16 %v1591, %v1590
    %v1963 = vpack.c.b16 %v1593, %v1592
    %v1964 = vpack.c.b16 %v1595, %v1594
    %v1965 = vpack.c.b16 %v1597, %v1596
    %v1966 = vpack.c.b16 %v1599, %v1598
    %v1967 = vpack.c.b16 %v1601, %v1600
    %v1968 = vpack.c.b16 %v1603, %v1602
    %v1969 = vpack.c.b16 %v1605, %v1604
    %v1970 = vpack.c.b16 %v1607, %v1606
    %v1971 = vpack.c.b16 %v1609, %v1608
    %v1972 = vpack.c.b16 %v1611, %v1610
    %v1973 = vpack.c.b16 %v1613, %v1612
    %v1974 = vpack.c.b16 %v1615, %v1614
    %v1975 = vpack.c.b16 %v1617, %v1616
    %v1976 = vpack.c.b16 %v1619, %v1618
    %v1977 = vpack.c.b16 %v1621, %v1620
    %v1978 = vpack.c.b16 %v1623, %v1622
    %v1979 = vpack.c.b16 %v1625, %v1624
    %v1980 = vpack.c.b16 %v1627, %v1626
    %v1981 = vpack.c.b16 %v1629, %v1628
    %v1982 = vpack.c.b16 %v1631, %v1630
    %v1983 = vpack.c.b16 %v1633, %v1632
    %v1984 = vpack.c.b16 %v1635, %v1634
    %v1985 = vpack.c.b16 %v1637, %v1636
    %v1986 = vpack.c.b16 %v1639, %v1638
    %v1987 = vpack.c.b16 %v1641, %v1640
    %v1988 = vpack.c.b16 %v1643, %v1642
    %v1989 = vpack.c.b16 %v1645, %v1644
    %v1990 = vpack.c.b16 %v1647, %v1646
    %v1991 = vpack.c.b16 %v1649, %v1648
    %v1992 = vpack.c.b16 %v1651, %v1650
    %v1993 = vpack.c.b16 %v1653, %v1652
    %v1994 = vpack.c.b16 %v1655, %v1654
    %v1995 = vpack.c.b16 %v1657, %v1656
    %v1996 = vpack.c.b16 %v1659, %v1658
    %v1997 = vpack.c.b16 %v1661, %v1660
    %v1998 = vpack.c.b16 %v1663, %v1662
    %v1999 = vpack.c.b16 %v1665, %v1664
    %v2000 = vpack.c.b16 %v1667, %v1666
    %v2001 = vpack.c.b16 %v1669, %v1668
    %v2002 = vpack.c.b16 %v1671, %v1670
    %v2003 = vpack.c.b16 %v1673, %v1672
    %v2004 = vpack.c.b16 %v1675, %v1674
    %v2005 = vpack.c.b16 %v1677, %v1676
    %v2006 = vpack.c.b16 %v1679, %v1678
    %v2007 = vpack.c.b16 %v1681, %v1680
    %v2008 = vpack.c.b16 %v1683, %v1682
    %v2009 = vpack.c.b16 %v1685, %v1684
    %v2010 = vpack.c.b16 %v1687, %v1686
    %v2011 = vpack.c.b16 %v1689, %v1688
    %v2012 = vpack.c.b16 %v1691, %v1690
    %v2013 = vpack.c.b16 %v1693, %v1692
    %v2014 = vpack.c.b16 %v1695, %v1694
    %v2015 = vpack.c.b16 %v1697, %v1696
    %v2016 = vpack.c.b16 %v1699, %v1698
    %v2017 = vpack.c.b16 %v1701, %v1700
    %v2018 = vpack.c.b16 %v1703, %v1702
    %v2019 = vpack.c.b16 %v1705, %v1704
    %v2020 = vpack.c.b16 %v1707, %v1706
    %v2021 = vpack.c.b16 %v1709, %v1708
    %v2022 = vpack.c.b16 %v1711, %v1710
    %v2023 = vpack.c.b16 %v1713, %v1712
    %v2024 = vpack.c.b16 %v1715, %v1714
    %v2025 = vpack.c.b16 %v1717, %v1716
    %v2026 = vpack.c.b16 %v1719, %v1718
    %v2027 = vpack.c.b16 %v1721, %v1720
    %v2028 = vpack.c.b16 %v1723, %v1722
    %v2029 = vpack.c.b16 %v1725, %v1724
    %v2030 = vpack.c.b16 %v1727, %v1726
    %v2031 = vpack.c.b16 %v1729, %v1728
    %v2032 = vpack.c.b16 %v1731, %v1730
    %v2033 = vpack.c.b16 %v1733, %v1732
    %v2034 = vpack.c.b16 %v1735, %v1734
    %v2035 = vpack.c.b16 %v1737, %v1736
    %v2036 = vpack.c.b16 %v1739, %v1738
    %v2037 = vpack.c.b16 %v1741, %v1740
    %v2038 = vpack.c.b16 %v1743, %v1742
    %v2039 = vpack.c.b16 %v1745, %v1744
    %v2040 = vpack.c.b16 %v1747, %v1746
    %v2041 = vpack.c.b16 %v1749, %v1748
    %v2042 = vpack.c.b16 %v1751, %v1750
    %v2043 = vpack.c.b16 %v1753, %v1752
    %v2044 = vpack.c.b16 %v1755, %v1754
    %v2045 = vpack.c.b16 %v1757, %v1756
    %v2046 = vpack.c.b16 %v1759, %v1758
    %v2047 = vpack.c.b16 %v1761, %v1760
    %v2048 = vpack.c.b16 %v1763, %v1762
    %v2049 = vpack.c.b16 %v1765, %v1764
    %v2050 = vpack.c.b16 %v1767, %v1766
    %v2051 = vpack.c.b16 %v1769, %v1768
    %v2052 = vpack.c.b16 %v1771, %v1770
    %v2053 = vpack.c.b16 %v1773, %v1772
    %v2054 = vpack.c.b16 %v1775, %v1774
    %v2055 = vpack.c.b16 %v1777, %v1776
    %v2056 = vpack.c.b16 %v1779, %v1778
    %v2057 = vpack.c.b16 %v1781, %v1780
    %v2058 = vpack.c.b16 %v1783, %v1782
    %v2059 = vpack.c.b16 %v1785, %v1784
    %v2060 = vpack.c.b16 %v1787, %v1786
    %v2061 = vpack.c.b16 %v1789, %v1788
    %v2062 = vpack.c.b16 %v1791, %v1790
    %v2063 = vpack.c.b16 %v1793, %v1792
    %v2064 = vpack.c.b16 %v1795, %v1794
    %v2065 = vpack.c.b16 %v1797, %v1796
    %v2066 = vpack.c.b16 %v1799, %v1798
    %v2067 = vpack.c.b16 %v1801, %v1800
    %v2068 = vpack.c.b16 %v1803, %v1802
    %v2069 = vpack.c.b16 %v1805, %v1804
    %v2070 = vpack.c.b16 %v1807, %v1806
    %v2071 = vpack.c.b16 %v1809, %v1808
    %v2072 = vpack.c.b16 %v1811, %v1810
    %v2073 = vpack.c.b16 %v1813, %v1812
    %v2074 = vpack.c.b16 %v1815, %v1814
    %v2075 = vpack.c.b16 %v1817, %v1816
    %v2076 = vpack.c.b16 %v1819, %v1818
    %v2077 = vpack.c.b16 %v1821, %v1820
    %2334 = vmatprep.subr.bf16.mxu0 0
    %2335 = vmatpush1.bf16.msra.mxu0 %v1822
    %2336 = vmatprep.subr.bf16.mxu0 0
    %2337 = vmatpush1.bf16.msra.mxu0 %v1823
    %2338 = vmatprep.subr.bf16.mxu0 0
    %2339 = vmatpush1.bf16.msra.mxu0 %v1824
    %2340 = vmatprep.subr.bf16.mxu0 0
    %2341 = vmatpush1.bf16.msra.mxu0 %v1825
    %2342 = vmatprep.subr.bf16.mxu0 0
    %2343 = vmatpush1.bf16.msra.mxu0 %v1826
    %2344 = vmatprep.subr.bf16.mxu0 0
    %2345 = vmatpush1.bf16.msra.mxu0 %v1827
    %2346 = vmatprep.subr.bf16.mxu0 0
    %2347 = vmatpush1.bf16.msra.mxu0 %v1828
    %2348 = vmatprep.subr.bf16.mxu0 0
    %2349 = vmatpush1.bf16.msra.mxu0 %v1829
    %2350 = vmatprep.subr.bf16.mxu0 0
    %2351 = vmatpush1.bf16.msra.mxu0 %v1830
    %2352 = vmatprep.subr.bf16.mxu0 0
    %2353 = vmatpush1.bf16.msra.mxu0 %v1831
    %2354 = vmatprep.subr.bf16.mxu0 0
    %2355 = vmatpush1.bf16.msra.mxu0 %v1832
    %2356 = vmatprep.subr.bf16.mxu0 0
    %2357 = vmatpush1.bf16.msra.mxu0 %v1833
    %2358 = vmatprep.subr.bf16.mxu0 0
    %2359 = vmatpush1.bf16.msra.mxu0 %v1834
    %2360 = vmatprep.subr.bf16.mxu0 0
    %2361 = vmatpush1.bf16.msra.mxu0 %v1835
    %2362 = vmatprep.subr.bf16.mxu0 0
    %2363 = vmatpush1.bf16.msra.mxu0 %v1836
    %2364 = vmatprep.subr.bf16.mxu0 0
    %2365 = vmatpush1.bf16.msra.mxu0 %v1837
    %2366 = vmatprep.mubr.bf16.mxu0 %v607
    %2367 = vmatmul.mubr.bf16.gmra.mrb[0].mxu0 %v593
    %v2368 = vpop.f32.mrb[0].mxu0
    %v2369 = vadd.f32 %v564, %v2368
    %v2370 = vpop.f32.mrb[0].mxu0
    %v2371 = vpop.f32.mrb[0].mxu0
    %v2372 = vpop.f32.mrb[0].mxu0
    %2373 = vdwg.mxu0
    %2374 = vmatprep.subr.bf16.mxu0 0
    %2375 = vmatpush1.bf16.msra.mxu0 %v1838
    %2376 = vmatprep.subr.bf16.mxu0 0
    %2377 = vmatpush1.bf16.msra.mxu0 %v1839
    %2378 = vmatprep.subr.bf16.mxu0 0
    %2379 = vmatpush1.bf16.msra.mxu0 %v1840
    %2380 = vmatprep.subr.bf16.mxu0 0
    %2381 = vmatpush1.bf16.msra.mxu0 %v1841
    %2382 = vmatprep.subr.bf16.mxu0 0
    %2383 = vmatpush1.bf16.msra.mxu0 %v1842
    %2384 = vmatprep.subr.bf16.mxu0 0
    %2385 = vmatpush1.bf16.msra.mxu0 %v1843
    %2386 = vmatprep.subr.bf16.mxu0 0
    %2387 = vmatpush1.bf16.msra.mxu0 %v1844
    %2388 = vmatprep.subr.bf16.mxu0 0
    %2389 = vmatpush1.bf16.msra.mxu0 %v1845
    %2390 = vmatprep.subr.bf16.mxu0 0
    %2391 = vmatpush1.bf16.msra.mxu0 %v1846
    %2392 = vmatprep.subr.bf16.mxu0 0
    %2393 = vmatpush1.bf16.msra.mxu0 %v1847
    %2394 = vmatprep.subr.bf16.mxu0 0
    %2395 = vmatpush1.bf16.msra.mxu0 %v1848
    %2396 = vmatprep.subr.bf16.mxu0 0
    %2397 = vmatpush1.bf16.msra.mxu0 %v1849
    %2398 = vmatprep.subr.bf16.mxu0 0
    %2399 = vmatpush1.bf16.msra.mxu0 %v1850
    %2400 = vmatprep.subr.bf16.mxu0 0
    %2401 = vmatpush1.bf16.msra.mxu0 %v1851
    %2402 = vmatprep.subr.bf16.mxu0 0
    %2403 = vmatpush1.bf16.msra.mxu0 %v1852
    %2404 = vmatprep.subr.bf16.mxu0 0
    %2405 = vmatpush1.bf16.msra.mxu0 %v1853
    %2406 = vmatprep.mubr.bf16.mxu0 %v617
    %2407 = vmatmul.mubr.bf16.gmra.mrb[0].mxu0 %v615
    %v2408 = vpop.f32.mrb[0].mxu0
    %v2409 = vadd.f32 %v2369, %v2408
    %v2410 = vpop.f32.mrb[0].mxu0
    %v2411 = vpop.f32.mrb[0].mxu0
    %v2412 = vpop.f32.mrb[0].mxu0
    %2413 = vdwg.mxu0
    %2414 = vmatprep.subr.bf16.mxu0 0
    %2415 = vmatpush1.bf16.msra.mxu0 %v1854
    %2416 = vmatprep.subr.bf16.mxu0 0
    %2417 = vmatpush1.bf16.msra.mxu0 %v1855
    %2418 = vmatprep.subr.bf16.mxu0 0
    %2419 = vmatpush1.bf16.msra.mxu0 %v1856
    %2420 = vmatprep.subr.bf16.mxu0 0
    %2421 = vmatpush1.bf16.msra.mxu0 %v1857
    %2422 = vmatprep.subr.bf16.mxu0 0
    %2423 = vmatpush1.bf16.msra.mxu0 %v1858
    %2424 = vmatprep.subr.bf16.mxu0 0
    %2425 = vmatpush1.bf16.msra.mxu0 %v1859
    %2426 = vmatprep.subr.bf16.mxu0 0
    %2427 = vmatpush1.bf16.msra.mxu0 %v1860
    %2428 = vmatprep.subr.bf16.mxu0 0
    %2429 = vmatpush1.bf16.msra.mxu0 %v1861
    %2430 = vmatprep.subr.bf16.mxu0 0
    %2431 = vmatpush1.bf16.msra.mxu0 %v1862
    %2432 = vmatprep.subr.bf16.mxu0 0
    %2433 = vmatpush1.bf16.msra.mxu0 %v1863
    %2434 = vmatprep.subr.bf16.mxu0 0
    %2435 = vmatpush1.bf16.msra.mxu0 %v1864
    %2436 = vmatprep.subr.bf16.mxu0 0
    %2437 = vmatpush1.bf16.msra.mxu0 %v1865
    %2438 = vmatprep.subr.bf16.mxu0 0
    %2439 = vmatpush1.bf16.msra.mxu0 %v1866
    %2440 = vmatprep.subr.bf16.mxu0 0
    %2441 = vmatpush1.bf16.msra.mxu0 %v1867
    %2442 = vmatprep.subr.bf16.mxu0 0
    %2443 = vmatpush1.bf16.msra.mxu0 %v1868
    %2444 = vmatprep.subr.bf16.mxu0 0
    %2445 = vmatpush1.bf16.msra.mxu0 %v1869
    %2446 = vmatprep.mubr.bf16.mxu0 %v614
    %2447 = vmatmul.mubr.bf16.gmra.mrb[0].mxu0 %v600
    %v2448 = vpop.f32.mrb[0].mxu0
    %v2449 = vadd.f32 %v2409, %v2448
    %v2450 = vpop.f32.mrb[0].mxu0
    %v2451 = vpop.f32.mrb[0].mxu0
    %v2452 = vpop.f32.mrb[0].mxu0
    %2453 = vdwg.mxu0
    %2454 = vmatprep.subr.bf16.mxu0 0
    %2455 = vmatpush1.bf16.msra.mxu0 %v1870
    %2456 = vmatprep.subr.bf16.mxu0 0
    %2457 = vmatpush1.bf16.msra.mxu0 %v1871
    %2458 = vmatprep.subr.bf16.mxu0 0
    %2459 = vmatpush1.bf16.msra.mxu0 %v1872
    %2460 = vmatprep.subr.bf16.mxu0 0
    %2461 = vmatpush1.bf16.msra.mxu0 %v1873
    %2462 = vmatprep.subr.bf16.mxu0 0
    %2463 = vmatpush1.bf16.msra.mxu0 %v1874
    %2464 = vmatprep.subr.bf16.mxu0 0
    %2465 = vmatpush1.bf16.msra.mxu0 %v1875
    %2466 = vmatprep.subr.bf16.mxu0 0
    %2467 = vmatpush1.bf16.msra.mxu0 %v1876
    %2468 = vmatprep.subr.bf16.mxu0 0
    %2469 = vmatpush1.bf16.msra.mxu0 %v1877
    %2470 = vmatprep.subr.bf16.mxu0 0
    %2471 = vmatpush1.bf16.msra.mxu0 %v1878
    %2472 = vmatprep.subr.bf16.mxu0 0
    %2473 = vmatpush1.bf16.msra.mxu0 %v1879
    %2474 = vmatprep.subr.bf16.mxu0 0
    %2475 = vmatpush1.bf16.msra.mxu0 %v1880
    %2476 = vmatprep.subr.bf16.mxu0 0
    %2477 = vmatpush1.bf16.msra.mxu0 %v1881
    %2478 = vmatprep.subr.bf16.mxu0 0
    %2479 = vmatpush1.bf16.msra.mxu0 %v1882
    %2480 = vmatprep.subr.bf16.mxu0 0
    %2481 = vmatpush1.bf16.msra.mxu0 %v1883
    %2482 = vmatprep.subr.bf16.mxu0 0
    %2483 = vmatpush1.bf16.msra.mxu0 %v1884
    %2484 = vmatprep.subr.bf16.mxu0 0
    %2485 = vmatpush1.bf16.msra.mxu0 %v1885
    %2486 = vmatprep.mubr.bf16.mxu0 %v618
    %2487 = vmatmul.mubr.bf16.gmra.mrb[0].mxu0 %v616
    %v2488 = vpop.f32.mrb[0].mxu0
    %v2489 = vadd.f32 %v2449, %v2488
    %v2490 = vpop.f32.mrb[0].mxu0
    %v2491 = vpop.f32.mrb[0].mxu0
    %v2492 = vpop.f32.mrb[0].mxu0
    %2493 = vdwg.mxu0
    %2494 = vmatprep.subr.bf16.mxu0 0
    %2495 = vmatpush1.bf16.msra.mxu0 %v1886
    %2496 = vmatprep.subr.bf16.mxu0 0
    %2497 = vmatpush1.bf16.msra.mxu0 %v1887
    %2498 = vmatprep.subr.bf16.mxu0 0
    %2499 = vmatpush1.bf16.msra.mxu0 %v1888
    %2500 = vmatprep.subr.bf16.mxu0 0
    %2501 = vmatpush1.bf16.msra.mxu0 %v1889
    %2502 = vmatprep.subr.bf16.mxu0 0
    %2503 = vmatpush1.bf16.msra.mxu0 %v1890
    %2504 = vmatprep.subr.bf16.mxu0 0
    %2505 = vmatpush1.bf16.msra.mxu0 %v1891
    %2506 = vmatprep.subr.bf16.mxu0 0
    %2507 = vmatpush1.bf16.msra.mxu0 %v1892
    %2508 = vmatprep.subr.bf16.mxu0 0
    %2509 = vmatpush1.bf16.msra.mxu0 %v1893
    %2510 = vmatprep.subr.bf16.mxu0 0
    %2511 = vmatpush1.bf16.msra.mxu0 %v1894
    %2512 = vmatprep.subr.bf16.mxu0 0
    %2513 = vmatpush1.bf16.msra.mxu0 %v1895
    %2514 = vmatprep.subr.bf16.mxu0 0
    %2515 = vmatpush1.bf16.msra.mxu0 %v1896
    %2516 = vmatprep.subr.bf16.mxu0 0
    %2517 = vmatpush1.bf16.msra.mxu0 %v1897
    %2518 = vmatprep.subr.bf16.mxu0 0
    %2519 = vmatpush1.bf16.msra.mxu0 %v1898
    %2520 = vmatprep.subr.bf16.mxu0 0
    %2521 = vmatpush1.bf16.msra.mxu0 %v1899
    %2522 = vmatprep.subr.bf16.mxu0 0
    %2523 = vmatpush1.bf16.msra.mxu0 %v1900
    %2524 = vmatprep.subr.bf16.mxu0 0
    %2525 = vmatpush1.bf16.msra.mxu0 %v1901
    %2526 = vmatprep.mubr.bf16.mxu0 %v656
    %2527 = vmatmul.mubr.bf16.gmra.mrb[0].mxu0 %v642
    %v2528 = vpop.f32.mrb[0].mxu0
    %v2529 = vadd.f32 %v2489, %v2528
    %v2530 = vpop.f32.mrb[0].mxu0
    %v2531 = vpop.f32.mrb[0].mxu0
    %v2532 = vpop.f32.mrb[0].mxu0
    %2533 = vdwg.mxu0
    %2534 = vmatprep.subr.bf16.mxu0 0
    %2535 = vmatpush1.bf16.msra.mxu0 %v1902
    %2536 = vmatprep.subr.bf16.mxu0 0
    %2537 = vmatpush1.bf16.msra.mxu0 %v1903
    %2538 = vmatprep.subr.bf16.mxu0 0
    %2539 = vmatpush1.bf16.msra.mxu0 %v1904
    %2540 = vmatprep.subr.bf16.mxu0 0
    %2541 = vmatpush1.bf16.msra.mxu0 %v1905
    %2542 = vmatprep.subr.bf16.mxu0 0
    %2543 = vmatpush1.bf16.msra.mxu0 %v1906
    %2544 = vmatprep.subr.bf16.mxu0 0
    %2545 = vmatpush1.bf16.msra.mxu0 %v1907
    %2546 = vmatprep.subr.bf16.mxu0 0
    %2547 = vmatpush1.bf16.msra.mxu0 %v1908
    %2548 = vmatprep.subr.bf16.mxu0 0
    %2549 = vmatpush1.bf16.msra.mxu0 %v1909
    %2550 = vmatprep.subr.bf16.mxu0 0
    %2551 = vmatpush1.bf16.msra.mxu0 %v1910
    %2552 = vmatprep.subr.bf16.mxu0 0
    %2553 = vmatpush1.bf16.msra.mxu0 %v1911
    %2554 = vmatprep.subr.bf16.mxu0 0
    %2555 = vmatpush1.bf16.msra.mxu0 %v1912
    %2556 = vmatprep.subr.bf16.mxu0 0
    %2557 = vmatpush1.bf16.msra.mxu0 %v1913
    %2558 = vmatprep.subr.bf16.mxu0 0
    %2559 = vmatpush1.bf16.msra.mxu0 %v1914
    %2560 = vmatprep.subr.bf16.mxu0 0
    %2561 = vmatpush1.bf16.msra.mxu0 %v1915
    %2562 = vmatprep.subr.bf16.mxu0 0
    %2563 = vmatpush1.bf16.msra.mxu0 %v1916
    %2564 = vmatprep.subr.bf16.mxu0 0
    %2565 = vmatpush1.bf16.msra.mxu0 %v1917
    %2566 = vmatprep.mubr.bf16.mxu0 %v666
    %2567 = vmatmul.mubr.bf16.gmra.mrb[0].mxu0 %v664
    %v2568 = vpop.f32.mrb[0].mxu0
    %v2569 = vadd.f32 %v2529, %v2568
    %v2570 = vpop.f32.mrb[0].mxu0
    %v2571 = vpop.f32.mrb[0].mxu0
    %v2572 = vpop.f32.mrb[0].mxu0
    %2573 = vdwg.mxu0
    %2574 = vmatprep.subr.bf16.mxu0 0
    %2575 = vmatpush1.bf16.msra.mxu0 %v1918
    %2576 = vmatprep.subr.bf16.mxu0 0
    %2577 = vmatpush1.bf16.msra.mxu0 %v1919
    %2578 = vmatprep.subr.bf16.mxu0 0
    %2579 = vmatpush1.bf16.msra.mxu0 %v1920
    %2580 = vmatprep.subr.bf16.mxu0 0
    %2581 = vmatpush1.bf16.msra.mxu0 %v1921
    %2582 = vmatprep.subr.bf16.mxu0 0
    %2583 = vmatpush1.bf16.msra.mxu0 %v1922
    %2584 = vmatprep.subr.bf16.mxu0 0
    %2585 = vmatpush1.bf16.msra.mxu0 %v1923
    %2586 = vmatprep.subr.bf16.mxu0 0
    %2587 = vmatpush1.bf16.msra.mxu0 %v1924
    %2588 = vmatprep.subr.bf16.mxu0 0
    %2589 = vmatpush1.bf16.msra.mxu0 %v1925
    %2590 = vmatprep.subr.bf16.mxu0 0
    %2591 = vmatpush1.bf16.msra.mxu0 %v1926
    %2592 = vmatprep.subr.bf16.mxu0 0
    %2593 = vmatpush1.bf16.msra.mxu0 %v1927
    %2594 = vmatprep.subr.bf16.mxu0 0
    %2595 = vmatpush1.bf16.msra.mxu0 %v1928
    %2596 = vmatprep.subr.bf16.mxu0 0
    %2597 = vmatpush1.bf16.msra.mxu0 %v1929
    %2598 = vmatprep.subr.bf16.mxu0 0
    %2599 = vmatpush1.bf16.msra.mxu0 %v1930
    %2600 = vmatprep.subr.bf16.mxu0 0
    %2601 = vmatpush1.bf16.msra.mxu0 %v1931
    %2602 = vmatprep.subr.bf16.mxu0 0
    %2603 = vmatpush1.bf16.msra.mxu0 %v1932
    %2604 = vmatprep.subr.bf16.mxu0 0
    %2605 = vmatpush1.bf16.msra.mxu0 %v1933
    %2606 = vmatprep.mubr.bf16.mxu0 %v663
    %2607 = vmatmul.mubr.bf16.gmra.mrb[0].mxu0 %v649
    %v2608 = vpop.f32.mrb[0].mxu0
    %v2609 = vadd.f32 %v2569, %v2608
    %v2610 = vpop.f32.mrb[0].mxu0
    %v2611 = vpop.f32.mrb[0].mxu0
    %v2612 = vpop.f32.mrb[0].mxu0
    %2613 = vdwg.mxu0
    %2614 = vmatprep.subr.bf16.mxu0 0
    %2615 = vmatpush1.bf16.msra.mxu0 %v1934
    %2616 = vmatprep.subr.bf16.mxu0 0
    %2617 = vmatpush1.bf16.msra.mxu0 %v1935
    %2618 = vmatprep.subr.bf16.mxu0 0
    %2619 = vmatpush1.bf16.msra.mxu0 %v1936
    %2620 = vmatprep.subr.bf16.mxu0 0
    %2621 = vmatpush1.bf16.msra.mxu0 %v1937
    %2622 = vmatprep.subr.bf16.mxu0 0
    %2623 = vmatpush1.bf16.msra.mxu0 %v1938
    %2624 = vmatprep.subr.bf16.mxu0 0
    %2625 = vmatpush1.bf16.msra.mxu0 %v1939
    %2626 = vmatprep.subr.bf16.mxu0 0
    %2627 = vmatpush1.bf16.msra.mxu0 %v1940
    %2628 = vmatprep.subr.bf16.mxu0 0
    %2629 = vmatpush1.bf16.msra.mxu0 %v1941
    %2630 = vmatprep.subr.bf16.mxu0 0
    %2631 = vmatpush1.bf16.msra.mxu0 %v1942
    %2632 = vmatprep.subr.bf16.mxu0 0
    %2633 = vmatpush1.bf16.msra.mxu0 %v1943
    %2634 = vmatprep.subr.bf16.mxu0 0
    %2635 = vmatpush1.bf16.msra.mxu0 %v1944
    %2636 = vmatprep.subr.bf16.mxu0 0
    %2637 = vmatpush1.bf16.msra.mxu0 %v1945
    %2638 = vmatprep.subr.bf16.mxu0 0
    %2639 = vmatpush1.bf16.msra.mxu0 %v1946
    %2640 = vmatprep.subr.bf16.mxu0 0
    %2641 = vmatpush1.bf16.msra.mxu0 %v1947
    %2642 = vmatprep.subr.bf16.mxu0 0
    %2643 = vmatpush1.bf16.msra.mxu0 %v1948
    %2644 = vmatprep.subr.bf16.mxu0 0
    %2645 = vmatpush1.bf16.msra.mxu0 %v1949
    %2646 = vmatprep.mubr.bf16.mxu0 %v667
    %2647 = vmatmul.mubr.bf16.gmra.mrb[0].mxu0 %v665
    %v2648 = vpop.f32.mrb[0].mxu0
    %v2649 = vadd.f32 %v2609, %v2648
    %v2650 = vpop.f32.mrb[0].mxu0
    %v2651 = vpop.f32.mrb[0].mxu0
    %v2652 = vpop.f32.mrb[0].mxu0
    %2653 = vdwg.mxu0
    %2654 = vmatprep.subr.bf16.mxu0 0
    %2655 = vmatpush1.bf16.msra.mxu0 %v1950
    %2656 = vmatprep.subr.bf16.mxu0 0
    %2657 = vmatpush1.bf16.msra.mxu0 %v1951
    %2658 = vmatprep.subr.bf16.mxu0 0
    %2659 = vmatpush1.bf16.msra.mxu0 %v1952
    %2660 = vmatprep.subr.bf16.mxu0 0
    %2661 = vmatpush1.bf16.msra.mxu0 %v1953
    %2662 = vmatprep.subr.bf16.mxu0 0
    %2663 = vmatpush1.bf16.msra.mxu0 %v1954
    %2664 = vmatprep.subr.bf16.mxu0 0
    %2665 = vmatpush1.bf16.msra.mxu0 %v1955
    %2666 = vmatprep.subr.bf16.mxu0 0
    %2667 = vmatpush1.bf16.msra.mxu0 %v1956
    %2668 = vmatprep.subr.bf16.mxu0 0
    %2669 = vmatpush1.bf16.msra.mxu0 %v1957
    %2670 = vmatprep.subr.bf16.mxu0 0
    %2671 = vmatpush1.bf16.msra.mxu0 %v1958
    %2672 = vmatprep.subr.bf16.mxu0 0
    %2673 = vmatpush1.bf16.msra.mxu0 %v1959
    %2674 = vmatprep.subr.bf16.mxu0 0
    %2675 = vmatpush1.bf16.msra.mxu0 %v1960
    %2676 = vmatprep.subr.bf16.mxu0 0
    %2677 = vmatpush1.bf16.msra.mxu0 %v1961
    %2678 = vmatprep.subr.bf16.mxu0 0
    %2679 = vmatpush1.bf16.msra.mxu0 %v1962
    %2680 = vmatprep.subr.bf16.mxu0 0
    %2681 = vmatpush1.bf16.msra.mxu0 %v1963
    %2682 = vmatprep.subr.bf16.mxu0 0
    %2683 = vmatpush1.bf16.msra.mxu0 %v1964
    %2684 = vmatprep.subr.bf16.mxu0 0
    %2685 = vmatpush1.bf16.msra.mxu0 %v1965
    %2686 = vmatprep.mubr.bf16.mxu0 %v705
    %2687 = vmatmul.mubr.bf16.gmra.mrb[0].mxu0 %v691
    %v2688 = vpop.f32.mrb[0].mxu0
    %v2689 = vadd.f32 %v2649, %v2688
    %v2690 = vpop.f32.mrb[0].mxu0
    %v2691 = vpop.f32.mrb[0].mxu0
    %v2692 = vpop.f32.mrb[0].mxu0
    %2693 = vdwg.mxu0
    %2694 = vmatprep.subr.bf16.mxu0 0
    %2695 = vmatpush1.bf16.msra.mxu0 %v1966
    %2696 = vmatprep.subr.bf16.mxu0 0
    %2697 = vmatpush1.bf16.msra.mxu0 %v1967
    %2698 = vmatprep.subr.bf16.mxu0 0
    %2699 = vmatpush1.bf16.msra.mxu0 %v1968
    %2700 = vmatprep.subr.bf16.mxu0 0
    %2701 = vmatpush1.bf16.msra.mxu0 %v1969
    %2702 = vmatprep.subr.bf16.mxu0 0
    %2703 = vmatpush1.bf16.msra.mxu0 %v1970
    %2704 = vmatprep.subr.bf16.mxu0 0
    %2705 = vmatpush1.bf16.msra.mxu0 %v1971
    %2706 = vmatprep.subr.bf16.mxu0 0
    %2707 = vmatpush1.bf16.msra.mxu0 %v1972
    %2708 = vmatprep.subr.bf16.mxu0 0
    %2709 = vmatpush1.bf16.msra.mxu0 %v1973
    %2710 = vmatprep.subr.bf16.mxu0 0
    %2711 = vmatpush1.bf16.msra.mxu0 %v1974
    %2712 = vmatprep.subr.bf16.mxu0 0
    %2713 = vmatpush1.bf16.msra.mxu0 %v1975
    %2714 = vmatprep.subr.bf16.mxu0 0
    %2715 = vmatpush1.bf16.msra.mxu0 %v1976
    %2716 = vmatprep.subr.bf16.mxu0 0
    %2717 = vmatpush1.bf16.msra.mxu0 %v1977
    %2718 = vmatprep.subr.bf16.mxu0 0
    %2719 = vmatpush1.bf16.msra.mxu0 %v1978
    %2720 = vmatprep.subr.bf16.mxu0 0
    %2721 = vmatpush1.bf16.msra.mxu0 %v1979
    %2722 = vmatprep.subr.bf16.mxu0 0
    %2723 = vmatpush1.bf16.msra.mxu0 %v1980
    %2724 = vmatprep.subr.bf16.mxu0 0
    %2725 = vmatpush1.bf16.msra.mxu0 %v1981
    %2726 = vmatprep.mubr.bf16.mxu0 %v715
    %2727 = vmatmul.mubr.bf16.gmra.mrb[0].mxu0 %v713
    %v2728 = vpop.f32.mrb[0].mxu0
    %v2729 = vadd.f32 %v2689, %v2728
    %v2730 = vpop.f32.mrb[0].mxu0
    %v2731 = vpop.f32.mrb[0].mxu0
    %v2732 = vpop.f32.mrb[0].mxu0
    %2733 = vdwg.mxu0
    %2734 = vmatprep.subr.bf16.mxu0 0
    %2735 = vmatpush1.bf16.msra.mxu0 %v1982
    %2736 = vmatprep.subr.bf16.mxu0 0
    %2737 = vmatpush1.bf16.msra.mxu0 %v1983
    %2738 = vmatprep.subr.bf16.mxu0 0
    %2739 = vmatpush1.bf16.msra.mxu0 %v1984
    %2740 = vmatprep.subr.bf16.mxu0 0
    %2741 = vmatpush1.bf16.msra.mxu0 %v1985
    %2742 = vmatprep.subr.bf16.mxu0 0
    %2743 = vmatpush1.bf16.msra.mxu0 %v1986
    %2744 = vmatprep.subr.bf16.mxu0 0
    %2745 = vmatpush1.bf16.msra.mxu0 %v1987
    %2746 = vmatprep.subr.bf16.mxu0 0
    %2747 = vmatpush1.bf16.msra.mxu0 %v1988
    %2748 = vmatprep.subr.bf16.mxu0 0
    %2749 = vmatpush1.bf16.msra.mxu0 %v1989
    %2750 = vmatprep.subr.bf16.mxu0 0
    %2751 = vmatpush1.bf16.msra.mxu0 %v1990
    %2752 = vmatprep.subr.bf16.mxu0 0
    %2753 = vmatpush1.bf16.msra.mxu0 %v1991
    %2754 = vmatprep.subr.bf16.mxu0 0
    %2755 = vmatpush1.bf16.msra.mxu0 %v1992
    %2756 = vmatprep.subr.bf16.mxu0 0
    %2757 = vmatpush1.bf16.msra.mxu0 %v1993
    %2758 = vmatprep.subr.bf16.mxu0 0
    %2759 = vmatpush1.bf16.msra.mxu0 %v1994
    %2760 = vmatprep.subr.bf16.mxu0 0
    %2761 = vmatpush1.bf16.msra.mxu0 %v1995
    %2762 = vmatprep.subr.bf16.mxu0 0
    %2763 = vmatpush1.bf16.msra.mxu0 %v1996
    %2764 = vmatprep.subr.bf16.mxu0 0
    %2765 = vmatpush1.bf16.msra.mxu0 %v1997
    %2766 = vmatprep.mubr.bf16.mxu0 %v712
    %2767 = vmatmul.mubr.bf16.gmra.mrb[0].mxu0 %v698
    %v2768 = vpop.f32.mrb[0].mxu0
    %v2769 = vadd.f32 %v2729, %v2768
    %v2770 = vpop.f32.mrb[0].mxu0
    %v2771 = vpop.f32.mrb[0].mxu0
    %v2772 = vpop.f32.mrb[0].mxu0
    %2773 = vdwg.mxu0
    %2774 = vmatprep.subr.bf16.mxu0 0
    %2775 = vmatpush1.bf16.msra.mxu0 %v1998
    %2776 = vmatprep.subr.bf16.mxu0 0
    %2777 = vmatpush1.bf16.msra.mxu0 %v1999
    %2778 = vmatprep.subr.bf16.mxu0 0
    %2779 = vmatpush1.bf16.msra.mxu0 %v2000
    %2780 = vmatprep.subr.bf16.mxu0 0
    %2781 = vmatpush1.bf16.msra.mxu0 %v2001
    %2782 = vmatprep.subr.bf16.mxu0 0
    %2783 = vmatpush1.bf16.msra.mxu0 %v2002
    %2784 = vmatprep.subr.bf16.mxu0 0
    %2785 = vmatpush1.bf16.msra.mxu0 %v2003
    %2786 = vmatprep.subr.bf16.mxu0 0
    %2787 = vmatpush1.bf16.msra.mxu0 %v2004
    %2788 = vmatprep.subr.bf16.mxu0 0
    %2789 = vmatpush1.bf16.msra.mxu0 %v2005
    %2790 = vmatprep.subr.bf16.mxu0 0
    %2791 = vmatpush1.bf16.msra.mxu0 %v2006
    %2792 = vmatprep.subr.bf16.mxu0 0
    %2793 = vmatpush1.bf16.msra.mxu0 %v2007
    %2794 = vmatprep.subr.bf16.mxu0 0
    %2795 = vmatpush1.bf16.msra.mxu0 %v2008
    %2796 = vmatprep.subr.bf16.mxu0 0
    %2797 = vmatpush1.bf16.msra.mxu0 %v2009
    %2798 = vmatprep.subr.bf16.mxu0 0
    %2799 = vmatpush1.bf16.msra.mxu0 %v2010
    %2800 = vmatprep.subr.bf16.mxu0 0
    %2801 = vmatpush1.bf16.msra.mxu0 %v2011
    %2802 = vmatprep.subr.bf16.mxu0 0
    %2803 = vmatpush1.bf16.msra.mxu0 %v2012
    %2804 = vmatprep.subr.bf16.mxu0 0
    %2805 = vmatpush1.bf16.msra.mxu0 %v2013
    %2806 = vmatprep.mubr.bf16.mxu0 %v716
    %2807 = vmatmul.mubr.bf16.gmra.mrb[0].mxu0 %v714
    %v2808 = vpop.f32.mrb[0].mxu0
    %v2809 = vadd.f32 %v2769, %v2808
    %v2810 = vpop.f32.mrb[0].mxu0
    %v2811 = vpop.f32.mrb[0].mxu0
    %v2812 = vpop.f32.mrb[0].mxu0
    %2813 = vdwg.mxu0
    %2814 = vmatprep.subr.bf16.mxu0 0
    %2815 = vmatpush1.bf16.msra.mxu0 %v2014
    %2816 = vmatprep.subr.bf16.mxu0 0
    %2817 = vmatpush1.bf16.msra.mxu0 %v2015
    %2818 = vmatprep.subr.bf16.mxu0 0
    %2819 = vmatpush1.bf16.msra.mxu0 %v2016
    %2820 = vmatprep.subr.bf16.mxu0 0
    %2821 = vmatpush1.bf16.msra.mxu0 %v2017
    %2822 = vmatprep.subr.bf16.mxu0 0
    %2823 = vmatpush1.bf16.msra.mxu0 %v2018
    %2824 = vmatprep.subr.bf16.mxu0 0
    %2825 = vmatpush1.bf16.msra.mxu0 %v2019
    %2826 = vmatprep.subr.bf16.mxu0 0
    %2827 = vmatpush1.bf16.msra.mxu0 %v2020
    %2828 = vmatprep.subr.bf16.mxu0 0
    %2829 = vmatpush1.bf16.msra.mxu0 %v2021
    %2830 = vmatprep.subr.bf16.mxu0 0
    %2831 = vmatpush1.bf16.msra.mxu0 %v2022
    %2832 = vmatprep.subr.bf16.mxu0 0
    %2833 = vmatpush1.bf16.msra.mxu0 %v2023
    %2834 = vmatprep.subr.bf16.mxu0 0
    %2835 = vmatpush1.bf16.msra.mxu0 %v2024
    %2836 = vmatprep.subr.bf16.mxu0 0
    %2837 = vmatpush1.bf16.msra.mxu0 %v2025
    %2838 = vmatprep.subr.bf16.mxu0 0
    %2839 = vmatpush1.bf16.msra.mxu0 %v2026
    %2840 = vmatprep.subr.bf16.mxu0 0
    %2841 = vmatpush1.bf16.msra.mxu0 %v2027
    %2842 = vmatprep.subr.bf16.mxu0 0
    %2843 = vmatpush1.bf16.msra.mxu0 %v2028
    %2844 = vmatprep.subr.bf16.mxu0 0
    %2845 = vmatpush1.bf16.msra.mxu0 %v2029
    %2846 = vmatprep.mubr.bf16.mxu0 %v754
    %2847 = vmatmul.mubr.bf16.gmra.mrb[0].mxu0 %v740
    %v2848 = vpop.f32.mrb[0].mxu0
    %v2849 = vadd.f32 %v2809, %v2848
    %v2850 = vpop.f32.mrb[0].mxu0
    %v2851 = vpop.f32.mrb[0].mxu0
    %v2852 = vpop.f32.mrb[0].mxu0
    %2853 = vdwg.mxu0
    %2854 = vmatprep.subr.bf16.mxu0 0
    %2855 = vmatpush1.bf16.msra.mxu0 %v2030
    %2856 = vmatprep.subr.bf16.mxu0 0
    %2857 = vmatpush1.bf16.msra.mxu0 %v2031
    %2858 = vmatprep.subr.bf16.mxu0 0
    %2859 = vmatpush1.bf16.msra.mxu0 %v2032
    %2860 = vmatprep.subr.bf16.mxu0 0
    %2861 = vmatpush1.bf16.msra.mxu0 %v2033
    %2862 = vmatprep.subr.bf16.mxu0 0
    %2863 = vmatpush1.bf16.msra.mxu0 %v2034
    %2864 = vmatprep.subr.bf16.mxu0 0
    %2865 = vmatpush1.bf16.msra.mxu0 %v2035
    %2866 = vmatprep.subr.bf16.mxu0 0
    %2867 = vmatpush1.bf16.msra.mxu0 %v2036
    %2868 = vmatprep.subr.bf16.mxu0 0
    %2869 = vmatpush1.bf16.msra.mxu0 %v2037
    %2870 = vmatprep.subr.bf16.mxu0 0
    %2871 = vmatpush1.bf16.msra.mxu0 %v2038
    %2872 = vmatprep.subr.bf16.mxu0 0
    %2873 = vmatpush1.bf16.msra.mxu0 %v2039
    %2874 = vmatprep.subr.bf16.mxu0 0
    %2875 = vmatpush1.bf16.msra.mxu0 %v2040
    %2876 = vmatprep.subr.bf16.mxu0 0
    %2877 = vmatpush1.bf16.msra.mxu0 %v2041
    %2878 = vmatprep.subr.bf16.mxu0 0
    %2879 = vmatpush1.bf16.msra.mxu0 %v2042
    %2880 = vmatprep.subr.bf16.mxu0 0
    %2881 = vmatpush1.bf16.msra.mxu0 %v2043
    %2882 = vmatprep.subr.bf16.mxu0 0
    %2883 = vmatpush1.bf16.msra.mxu0 %v2044
    %2884 = vmatprep.subr.bf16.mxu0 0
    %2885 = vmatpush1.bf16.msra.mxu0 %v2045
    %2886 = vmatprep.mubr.bf16.mxu0 %v764
    %2887 = vmatmul.mubr.bf16.gmra.mrb[0].mxu0 %v762
    %v2888 = vpop.f32.mrb[0].mxu0
    %v2889 = vadd.f32 %v2849, %v2888
    %v2890 = vpop.f32.mrb[0].mxu0
    %v2891 = vpop.f32.mrb[0].mxu0
    %v2892 = vpop.f32.mrb[0].mxu0
    %2893 = vdwg.mxu0
    %2894 = vmatprep.subr.bf16.mxu0 0
    %2895 = vmatpush1.bf16.msra.mxu0 %v2046
    %2896 = vmatprep.subr.bf16.mxu0 0
    %2897 = vmatpush1.bf16.msra.mxu0 %v2047
    %2898 = vmatprep.subr.bf16.mxu0 0
    %2899 = vmatpush1.bf16.msra.mxu0 %v2048
    %2900 = vmatprep.subr.bf16.mxu0 0
    %2901 = vmatpush1.bf16.msra.mxu0 %v2049
    %2902 = vmatprep.subr.bf16.mxu0 0
    %2903 = vmatpush1.bf16.msra.mxu0 %v2050
    %2904 = vmatprep.subr.bf16.mxu0 0
    %2905 = vmatpush1.bf16.msra.mxu0 %v2051
    %2906 = vmatprep.subr.bf16.mxu0 0
    %2907 = vmatpush1.bf16.msra.mxu0 %v2052
    %2908 = vmatprep.subr.bf16.mxu0 0
    %2909 = vmatpush1.bf16.msra.mxu0 %v2053
    %2910 = vmatprep.subr.bf16.mxu0 0
    %2911 = vmatpush1.bf16.msra.mxu0 %v2054
    %2912 = vmatprep.subr.bf16.mxu0 0
    %2913 = vmatpush1.bf16.msra.mxu0 %v2055
    %2914 = vmatprep.subr.bf16.mxu0 0
    %2915 = vmatpush1.bf16.msra.mxu0 %v2056
    %2916 = vmatprep.subr.bf16.mxu0 0
    %2917 = vmatpush1.bf16.msra.mxu0 %v2057
    %2918 = vmatprep.subr.bf16.mxu0 0
    %2919 = vmatpush1.bf16.msra.mxu0 %v2058
    %2920 = vmatprep.subr.bf16.mxu0 0
    %2921 = vmatpush1.bf16.msra.mxu0 %v2059
    %2922 = vmatprep.subr.bf16.mxu0 0
    %2923 = vmatpush1.bf16.msra.mxu0 %v2060
    %2924 = vmatprep.subr.bf16.mxu0 0
    %2925 = vmatpush1.bf16.msra.mxu0 %v2061
    %2926 = vmatprep.mubr.bf16.mxu0 %v761
    %2927 = vmatmul.mubr.bf16.gmra.mrb[0].mxu0 %v747
    %v2928 = vpop.f32.mrb[0].mxu0
    %v2929 = vadd.f32 %v2889, %v2928
    %v2930 = vpop.f32.mrb[0].mxu0
    %v2931 = vpop.f32.mrb[0].mxu0
    %v2932 = vpop.f32.mrb[0].mxu0
    %2933 = vdwg.mxu0
    %2934 = vmatprep.subr.bf16.mxu0 0
    %2935 = vmatpush1.bf16.msra.mxu0 %v2062
    %2936 = vmatprep.subr.bf16.mxu0 0
    %2937 = vmatpush1.bf16.msra.mxu0 %v2063
    %2938 = vmatprep.subr.bf16.mxu0 0
    %2939 = vmatpush1.bf16.msra.mxu0 %v2064
    %2940 = vmatprep.subr.bf16.mxu0 0
    %2941 = vmatpush1.bf16.msra.mxu0 %v2065
    %2942 = vmatprep.subr.bf16.mxu0 0
    %2943 = vmatpush1.bf16.msra.mxu0 %v2066
    %2944 = vmatprep.subr.bf16.mxu0 0
    %2945 = vmatpush1.bf16.msra.mxu0 %v2067
    %2946 = vmatprep.subr.bf16.mxu0 0
    %2947 = vmatpush1.bf16.msra.mxu0 %v2068
    %2948 = vmatprep.subr.bf16.mxu0 0
    %2949 = vmatpush1.bf16.msra.mxu0 %v2069
    %2950 = vmatprep.subr.bf16.mxu0 0
    %2951 = vmatpush1.bf16.msra.mxu0 %v2070
    %2952 = vmatprep.subr.bf16.mxu0 0
    %2953 = vmatpush1.bf16.msra.mxu0 %v2071
    %2954 = vmatprep.subr.bf16.mxu0 0
    %2955 = vmatpush1.bf16.msra.mxu0 %v2072
    %2956 = vmatprep.subr.bf16.mxu0 0
    %2957 = vmatpush1.bf16.msra.mxu0 %v2073
    %2958 = vmatprep.subr.bf16.mxu0 0
    %2959 = vmatpush1.bf16.msra.mxu0 %v2074
    %2960 = vmatprep.subr.bf16.mxu0 0
    %2961 = vmatpush1.bf16.msra.mxu0 %v2075
    %2962 = vmatprep.subr.bf16.mxu0 0
    %2963 = vmatpush1.bf16.msra.mxu0 %v2076
    %2964 = vmatprep.subr.bf16.mxu0 0
    %2965 = vmatpush1.bf16.msra.mxu0 %v2077
    %2966 = vmatprep.mubr.bf16.mxu0 %v765
    %2967 = vmatmul.mubr.bf16.gmra.mrb[0].mxu0 %v763
    %v2968 = vpop.f32.mrb[0].mxu0
    %v2969 = vadd.f32 %v2929, %v2968
    %v2970 = vpop.f32.mrb[0].mxu0
    %v2971 = vpop.f32.mrb[0].mxu0
    %v2972 = vpop.f32.mrb[0].mxu0
    %2973 = vdwg.mxu0
    %v2974 = vmax.f32 %v2969, 0.0
    %v2975 = vpack.c.bf16 %v2974, %v2974
    %v2976 = vld [vmem:[%s3] sm:$0xf]
    %v2977 = vld [vmem:[%s3 + $0x4] sm:$0xf]
    %v2978 = vld [vmem:[%s3 + $0x8] sm:$0xf]
    %v2979 = vld [vmem:[%s3 + $0xc] sm:$0xf]
    %v2980 = vld [vmem:[%s3 + $0x10] sm:$0xf]
    %v2981 = vld [vmem:[%s3 + $0x14] sm:$0xf]
    %v2982 = vld [vmem:[%s3 + $0x18] sm:$0xf]
    %v2983 = vld [vmem:[%s3 + $0x1c] sm:$0xf]
    %v2984 = vld [vmem:[%s3 + $0x20] sm:$0xf]
    %v2985 = vld [vmem:[%s3 + $0x24] sm:$0xf]
    %v2986 = vld [vmem:[%s3 + $0x28] sm:$0xf]
    %v2987 = vld [vmem:[%s3 + $0x2c] sm:$0xf]
    %v2988 = vld [vmem:[%s3 + $0x30] sm:$0xf]
    %v2989 = vld [vmem:[%s3 + $0x34] sm:$0xf]
    %v2990 = vld [vmem:[%s3 + $0x38] sm:$0xf]
    %v2991 = vld [vmem:[%s3 + $0x3c] sm:$0xf]
    %v2992 = vld [vmem:[%s4] sm:$0x1]
    %v2994 = vlaneseq
    %v2995 = vshrl.u32 %v2994, 7
    %v2996 = vsub.s32 0, %v2995
    %v2997 = vrot.slane %v2992, %v2996
    %v3015 = vunpack.c.l.b16 %v2976
    %v3016 = vunpack.c.l.b16 %v2977
    %v3017 = vunpack.c.l.b16 %v2978
    %v3018 = vunpack.c.l.b16 %v2979
    %v3019 = vunpack.c.l.b16 %v2980
    %v3020 = vunpack.c.l.b16 %v2981
    %v3021 = vunpack.c.l.b16 %v2982
    %v3022 = vunpack.c.l.b16 %v2983
    %v3023 = vunpack.c.l.b16 %v2984
    %v3024 = vunpack.c.l.b16 %v2985
    %v3025 = vunpack.c.l.b16 %v2986
    %v3026 = vunpack.c.l.b16 %v2987
    %v3027 = vunpack.c.l.b16 %v2988
    %v3028 = vunpack.c.l.b16 %v2989
    %v3029 = vunpack.c.l.b16 %v2990
    %v3030 = vunpack.c.l.b16 %v2991
    %v3031 = vpack.c.b16 %v3016, %v3015
    %v3032 = vpack.c.b16 %v3018, %v3017
    %v3033 = vpack.c.b16 %v3020, %v3019
    %v3034 = vpack.c.b16 %v3022, %v3021
    %v3035 = vpack.c.b16 %v3024, %v3023
    %v3036 = vpack.c.b16 %v3026, %v3025
    %v3037 = vpack.c.b16 %v3028, %v3027
    %v3038 = vpack.c.b16 %v3030, %v3029
    %3047 = vmatprep.subr.bf16.mxu0 0
    %3048 = vmatpush1.bf16.msra.mxu0 %v3031
    %3049 = vmatprep.subr.bf16.mxu0 0
    %3050 = vmatpush1.bf16.msra.mxu0 %v3032
    %3051 = vmatprep.subr.bf16.mxu0 0
    %3052 = vmatpush1.bf16.msra.mxu0 %v3033
    %3053 = vmatprep.subr.bf16.mxu0 0
    %3054 = vmatpush1.bf16.msra.mxu0 %v3034
    %3055 = vmatprep.subr.bf16.mxu0 0
    %3056 = vmatpush1.bf16.msra.mxu0 %v3035
    %3057 = vmatprep.subr.bf16.mxu0 0
    %3058 = vmatpush1.bf16.msra.mxu0 %v3036
    %3059 = vmatprep.subr.bf16.mxu0 0
    %3060 = vmatpush1.bf16.msra.mxu0 %v3037
    %3061 = vmatprep.subr.bf16.mxu0 0
    %3062 = vmatpush1.bf16.msra.mxu0 %v3038
    %3063 = vmatprep.subr.bf16.mxu0 0
    %3064 = vmatpush1.bf16.msra.mxu0 0
    %3065 = vmatprep.subr.bf16.mxu0 0
    %3066 = vmatpush1.bf16.msra.mxu0 0
    %3067 = vmatprep.subr.bf16.mxu0 0
    %3068 = vmatpush1.bf16.msra.mxu0 0
    %3069 = vmatprep.subr.bf16.mxu0 0
    %3070 = vmatpush1.bf16.msra.mxu0 0
    %3071 = vmatprep.subr.bf16.mxu0 0
    %3072 = vmatpush1.bf16.msra.mxu0 0
    %3073 = vmatprep.subr.bf16.mxu0 0
    %3074 = vmatpush1.bf16.msra.mxu0 0
    %3075 = vmatprep.subr.bf16.mxu0 0
    %3076 = vmatpush1.bf16.msra.mxu0 0
    %3077 = vmatprep.subr.bf16.mxu0 0
    %3078 = vmatpush1.bf16.msra.mxu0 0
    %3079 = vmatprep.mubr.bf16.mxu0 0
    %3080 = vmatmul.mubr.bf16.gmra.mrb[0].mxu0 %v2975
    %v3081 = vpop.f32.mrb[0].mxu0
    %v3082 = vadd.f32 %v2997, %v3081
    %v3083 = vpop.f32.mrb[0].mxu0
    %v3084 = vpop.f32.mrb[0].mxu0
    %v3085 = vpop.f32.mrb[0].mxu0
    %3086 = vdwg.mxu0
    %v3087 = vmax.f32 %v3082, 0.0
    %v3088 = vld [vmem:[%s5] sm:$0x1]
    %v3090 = vlaneseq
    %v3091 = vshrl.u32 %v3090, 7
    %v3092 = vsub.s32 0, %v3091
    %v3093 = vrot.slane %v3088, %v3092
    %v3095 = vmul.f32 %v3087, %v3093
    %vm3096 = vcmask 517120
    %v3097 = vsel %vm3096, %v3095, 0.0
    %3098 = vadd.xlane.f32.xlu0 %v3097
    %v3099 = vpop.xlane.xlu0 %3098
    %v3100 = vld [vmem:[#allocation2] sm:$0x1]
    %v3102 = vlaneseq
    %v3103 = vshrl.u32 %v3102, 7
    %v3104 = vsub.s32 0, %v3103
    %v3105 = vrot.slane %v3100, %v3104
    %v3107 = vadd.f32 %v3099, %v3105
    %v3108 = vtanh.pop %v3107
    %vm3109 = vcmask 1024
    %3110 = vst.msk [vmem:[%s7] sm:$0x3] %vm3109, %v3108
    // Predicated region
    $region34: #{chess_value_forward.3} parent=1 // pred_check
      _
    $region35: #{chess_value_forward.3} parent=1 // pred_check_branch
      %3112 = sbr.rel (0) target = $region37
    $region36: #{chess_value_forward.3} parent=1 // pred_region
      _
    $region37: #{chess_value_forward.3} parent=1 // pred_fallthru
      _
    // Predicated region
    $region38: #{chess_value_forward.3} parent=1 // pred_check
      _
    $region39: #{chess_value_forward.3} parent=1 // pred_check_branch
      %3114 = sbr.rel (0) target = $region41
    $region40: #{chess_value_forward.3} parent=1 // pred_region
      _
    $region41: #{chess_value_forward.3} parent=1 // pred_fallthru
      _
    %3115 = vsyncpa [#allocation4], 1

// kernel: chess_value_forward.2
$region0: #{chess_value_forward.2}
  #allocation0 [shape = 'u32[]', space=smem, size = 0x4, offset = 0x4, fixed_abs, tag = 'smem constant byte address 0x4 - core index']
  #allocation1 [shape = 'u32[144,128]{1,0:T(1,128)}', space=vmem, size = 0x12000, scoped, tag = 'internal scratch']
  #allocation2 [shape = 'f32[2,10,10,64]{3,2,1,0:T(8,128)}', space=vmem, size = 0x28000, scoped, tag = 'scratch operand']
  %s0 = inlined_call_operand.vmem [shape: f32[2,8,8,64], index: 0, kind: input, shape index: {}]
  %s1 = inlined_call_operand.hbm [shape: bf16[27,64,64], index: 1, kind: input, shape index: {}]
  %s2 = inlined_call_operand.vmem [shape: f32[3,1,64], index: 2, kind: input, shape index: {}]
  %s3 = inlined_call_operand.vmem [shape: bf16[2,64,64], index: 3, kind: output, shape index: {}]
  %s4 = sld [smem:[#allocation0]]
  $region26: #{chess_value_forward.2} parent=0
    _
  %s6 = ssub.s32 1, %s4
  %s7 = scalar_select 0, %s6, %s4
  $region1: #{chess_value_forward.2} parent=0
    #allocation3 [shape = 'u8[442368]{0}', space=vmem, size = 0x6c000, scoped, tag = 'input window, operand 1, single buffered']
    #allocation4 [shape = 's32[1]{0}', space=sflag, size = 0x4, scoped, tag = 'scoped memory for chess_value_forward.2']
    %8 = vsyncpa [#allocation4], 0
    // Predicated region
    $region2: #{chess_value_forward.2} parent=1 // pred_check
      _
    $region3: #{chess_value_forward.2} parent=1 // pred_check_branch
      %10 = sbr.rel (0) target = $region5
    $region4: #{chess_value_forward.2} parent=1 // pred_region
      _
    $region5: #{chess_value_forward.2} parent=1 // pred_fallthru
      _
    // Predicated region
    $region6: #{chess_value_forward.2} parent=1 // pred_check
      _
    $region7: #{chess_value_forward.2} parent=1 // pred_check_branch
      %12 = sbr.rel (0) target = $region9
    $region8: #{chess_value_forward.2} parent=1 // pred_region
      %s14 = ssub.s32 13824, 13824
      %15 = vsyncadd [#allocation4], %s14
      %s16 = sshll.u32 [#allocation3], 4
      %s17 = int_to_ptr.vmem [resolvable:$true] %s16
      %22 = dma.hbm_to_vmem [thread:$0]  %s1, 13824, %s17, [#allocation4], 64, 64, 4
    $region9: #{chess_value_forward.2} parent=1 // pred_fallthru
      _
    // Predicated region
    $region10: #{chess_value_forward.2} parent=1 // pred_check
      _
    $region11: #{chess_value_forward.2} parent=1 // pred_check_branch
      %24 = sbr.rel (0) target = $region13
    $region12: #{chess_value_forward.2} parent=1 // pred_region
      _
    $region13: #{chess_value_forward.2} parent=1 // pred_fallthru
      _
    // Predicated region
    $region14: #{chess_value_forward.2} parent=1 // pred_check
      _
    $region15: #{chess_value_forward.2} parent=1 // pred_check_branch
      %26 = sbr.rel (0) target = $region17
    $region16: #{chess_value_forward.2} parent=1 // pred_region
      %27 = dma.done [#allocation4], 13824
    $region17: #{chess_value_forward.2} parent=1 // pred_fallthru
      _
    %vm29 = vcmask 523264
    %30 = vst.msk [vmem:[#allocation2] sm:$0xff] %vm29, 0.0
    %vm31 = vcmask 517120
    %32 = vst.msk [vmem:[#allocation2 + $0x8] sm:$0x3] %vm31, 0.0
    %33 = vst.msk [vmem:[#allocation2 + $0x10] sm:$0xff] %vm29, 0.0
    %34 = vst.msk [vmem:[#allocation2 + $0x18] sm:$0x3] %vm31, 0.0
    %35 = vst.msk [vmem:[#allocation2 + $0x20] sm:$0xff] %vm29, 0.0
    %36 = vst.msk [vmem:[#allocation2 + $0x28] sm:$0x3] %vm31, 0.0
    %37 = vst.msk [vmem:[#allocation2 + $0x30] sm:$0xff] %vm29, 0.0
    %38 = vst.msk [vmem:[#allocation2 + $0x38] sm:$0x3] %vm31, 0.0
    %39 = vst.msk [vmem:[#allocation2 + $0x40] sm:$0xff] %vm29, 0.0
    %40 = vst.msk [vmem:[#allocation2 + $0x48] sm:$0x3] %vm31, 0.0
    %41 = vst.msk [vmem:[#allocation2 + $0x50] sm:$0xff] %vm29, 0.0
    %42 = vst.msk [vmem:[#allocation2 + $0x58] sm:$0x3] %vm31, 0.0
    %43 = vst.msk [vmem:[#allocation2 + $0x60] sm:$0xff] %vm29, 0.0
    %44 = vst.msk [vmem:[#allocation2 + $0x68] sm:$0x3] %vm31, 0.0
    %45 = vst.msk [vmem:[#allocation2 + $0x70] sm:$0xff] %vm29, 0.0
    %46 = vst.msk [vmem:[#allocation2 + $0x78] sm:$0x3] %vm31, 0.0
    %47 = vst.msk [vmem:[#allocation2 + $0x80] sm:$0xff] %vm29, 0.0
    %48 = vst.msk [vmem:[#allocation2 + $0x88] sm:$0x3] %vm31, 0.0
    %49 = vst.msk [vmem:[#allocation2 + $0x90] sm:$0xff] %vm29, 0.0
    %50 = vst.msk [vmem:[#allocation2 + $0x98] sm:$0x3] %vm31, 0.0
    %51 = vst.msk [vmem:[#allocation2 + $0xa0] sm:$0xff] %vm29, 0.0
    %52 = vst.msk [vmem:[#allocation2 + $0xa8] sm:$0x3] %vm31, 0.0
    %53 = vst.msk [vmem:[#allocation2 + $0xb0] sm:$0xff] %vm29, 0.0
    %54 = vst.msk [vmem:[#allocation2 + $0xb8] sm:$0x3] %vm31, 0.0
    %55 = vst.msk [vmem:[#allocation2 + $0xc0] sm:$0xff] %vm29, 0.0
    %56 = vst.msk [vmem:[#allocation2 + $0xc8] sm:$0x3] %vm31, 0.0
    %57 = vst.msk [vmem:[#allocation2 + $0xd0] sm:$0xff] %vm29, 0.0
    %58 = vst.msk [vmem:[#allocation2 + $0xd8] sm:$0x3] %vm31, 0.0
    %59 = vst.msk [vmem:[#allocation2 + $0xe0] sm:$0xff] %vm29, 0.0
    %60 = vst.msk [vmem:[#allocation2 + $0xe8] sm:$0x3] %vm31, 0.0
    %61 = vst.msk [vmem:[#allocation2 + $0xf0] sm:$0xff] %vm29, 0.0
    %62 = vst.msk [vmem:[#allocation2 + $0xf8] sm:$0x3] %vm31, 0.0
    %63 = vst.msk [vmem:[#allocation2 + $0x100] sm:$0xff] %vm29, 0.0
    %64 = vst.msk [vmem:[#allocation2 + $0x108] sm:$0x3] %vm31, 0.0
    %65 = vst.msk [vmem:[#allocation2 + $0x110] sm:$0xff] %vm29, 0.0
    %66 = vst.msk [vmem:[#allocation2 + $0x118] sm:$0x3] %vm31, 0.0
    %67 = vst.msk [vmem:[#allocation2 + $0x120] sm:$0xff] %vm29, 0.0
    %68 = vst.msk [vmem:[#allocation2 + $0x128] sm:$0x3] %vm31, 0.0
    %69 = vst.msk [vmem:[#allocation2 + $0x130] sm:$0xff] %vm29, 0.0
    %70 = vst.msk [vmem:[#allocation2 + $0x138] sm:$0x3] %vm31, 0.0
    %v71 = vld [vmem:[%s0] sm:$0xff]
    %v72 = vld [vmem:[%s0 + $0x8] sm:$0xff]
    %v73 = vld [vmem:[%s0 + $0x10] sm:$0xff]
    %v74 = vld [vmem:[%s0 + $0x18] sm:$0xff]
    %v75 = vld [vmem:[%s0 + $0x20] sm:$0xff]
    %v76 = vld [vmem:[%s0 + $0x28] sm:$0xff]
    %v77 = vld [vmem:[%s0 + $0x30] sm:$0xff]
    %v78 = vld [vmem:[%s0 + $0x38] sm:$0xff]
    %v79 = vld [vmem:[%s0 + $0x40] sm:$0xff]
    %v80 = vld [vmem:[%s0 + $0x48] sm:$0xff]
    %v81 = vld [vmem:[%s0 + $0x50] sm:$0xff]
    %v82 = vld [vmem:[%s0 + $0x58] sm:$0xff]
    %v83 = vld [vmem:[%s0 + $0x60] sm:$0xff]
    %v84 = vld [vmem:[%s0 + $0x68] sm:$0xff]
    %v85 = vld [vmem:[%s0 + $0x70] sm:$0xff]
    %v86 = vld [vmem:[%s0 + $0x78] sm:$0xff]
    %s87 = scalar_lea.vmem [#allocation2], 16
    %88 = vst.msk [vmem:[%s87 + $0x1] sm:$0xff] %vm29, %v71
    %89 = vst.msk [vmem:[%s87 + $0x11] sm:$0xff] %vm29, %v72
    %90 = vst.msk [vmem:[%s87 + $0x21] sm:$0xff] %vm29, %v73
    %91 = vst.msk [vmem:[%s87 + $0x31] sm:$0xff] %vm29, %v74
    %92 = vst.msk [vmem:[%s87 + $0x41] sm:$0xff] %vm29, %v75
    %93 = vst.msk [vmem:[%s87 + $0x51] sm:$0xff] %vm29, %v76
    %94 = vst.msk [vmem:[%s87 + $0x61] sm:$0xff] %vm29, %v77
    %95 = vst.msk [vmem:[%s87 + $0x71] sm:$0xff] %vm29, %v78
    %96 = vst.msk [vmem:[%s87 + $0xa1] sm:$0xff] %vm29, %v79
    %97 = vst.msk [vmem:[%s87 + $0xb1] sm:$0xff] %vm29, %v80
    %98 = vst.msk [vmem:[%s87 + $0xc1] sm:$0xff] %vm29, %v81
    %99 = vst.msk [vmem:[%s87 + $0xd1] sm:$0xff] %vm29, %v82
    %100 = vst.msk [vmem:[%s87 + $0xe1] sm:$0xff] %vm29, %v83
    %101 = vst.msk [vmem:[%s87 + $0xf1] sm:$0xff] %vm29, %v84
    %102 = vst.msk [vmem:[%s87 + $0x101] sm:$0xff] %vm29, %v85
    %103 = vst.msk [vmem:[%s87 + $0x111] sm:$0xff] %vm29, %v86
    %v104 = vld [vmem:[#allocation2] sm:$0xff]
    %v105 = vld [vmem:[#allocation2 + $0x10] sm:$0xff]
    %v106 = vld [vmem:[#allocation2 + $0x20] sm:$0xff]
    %v107 = vld [vmem:[#allocation2 + $0x30] sm:$0xff]
    %v108 = vld [vmem:[#allocation2 + $0x40] sm:$0xff]
    %v109 = vld [vmem:[#allocation2 + $0x50] sm:$0xff]
    %v110 = vld [vmem:[#allocation2 + $0x60] sm:$0xff]
    %v111 = vld [vmem:[#allocation2 + $0x70] sm:$0xff]
    %v112 = vld [vmem:[#allocation2 + $0xa0] sm:$0xff]
    %v113 = vld [vmem:[#allocation2 + $0xb0] sm:$0xff]
    %v114 = vld [vmem:[#allocation2 + $0xc0] sm:$0xff]
    %v115 = vld [vmem:[#allocation2 + $0xd0] sm:$0xff]
    %v116 = vld [vmem:[#allocation2 + $0xe0] sm:$0xff]
    %v117 = vld [vmem:[#allocation2 + $0xf0] sm:$0xff]
    %v118 = vld [vmem:[#allocation2 + $0x100] sm:$0xff]
    %v119 = vld [vmem:[#allocation2 + $0x110] sm:$0xff]
    %v120 = vpack.c.bf16 %v105, %v104
    %v121 = vpack.c.bf16 %v107, %v106
    %v122 = vpack.c.bf16 %v109, %v108
    %v123 = vpack.c.bf16 %v111, %v110
    %v124 = vpack.c.bf16 %v113, %v112
    %v125 = vpack.c.bf16 %v115, %v114
    %v126 = vpack.c.bf16 %v117, %v116
    %v127 = vpack.c.bf16 %v119, %v118
    %v128 = vld [vmem:[#allocation3] sm:$0xf]
    %v129 = vld [vmem:[#allocation3 + $0x4] sm:$0xf]
    %v130 = vld [vmem:[#allocation3 + $0x8] sm:$0xf]
    %v131 = vld [vmem:[#allocation3 + $0xc] sm:$0xf]
    %v132 = vld [vmem:[#allocation3 + $0x10] sm:$0xf]
    %v133 = vld [vmem:[#allocation3 + $0x14] sm:$0xf]
    %v134 = vld [vmem:[#allocation3 + $0x18] sm:$0xf]
    %v135 = vld [vmem:[#allocation3 + $0x1c] sm:$0xf]
    %v136 = vld [vmem:[#allocation2 + $0x1] sm:$0xff]
    %v137 = vld [vmem:[#allocation2 + $0x11] sm:$0xff]
    %v138 = vld [vmem:[#allocation2 + $0x21] sm:$0xff]
    %v139 = vld [vmem:[#allocation2 + $0x31] sm:$0xff]
    %v140 = vld [vmem:[#allocation2 + $0x41] sm:$0xff]
    %v141 = vld [vmem:[#allocation2 + $0x51] sm:$0xff]
    %v142 = vld [vmem:[#allocation2 + $0x61] sm:$0xff]
    %v143 = vld [vmem:[#allocation2 + $0x71] sm:$0xff]
    %v144 = vld [vmem:[#allocation2 + $0xa1] sm:$0xff]
    %v145 = vld [vmem:[#allocation2 + $0xb1] sm:$0xff]
    %v146 = vld [vmem:[#allocation2 + $0xc1] sm:$0xff]
    %v147 = vld [vmem:[#allocation2 + $0xd1] sm:$0xff]
    %v148 = vld [vmem:[#allocation2 + $0xe1] sm:$0xff]
    %v149 = vld [vmem:[#allocation2 + $0xf1] sm:$0xff]
    %v150 = vld [vmem:[#allocation2 + $0x101] sm:$0xff]
    %v151 = vld [vmem:[#allocation2 + $0x111] sm:$0xff]
    %v152 = vpack.c.bf16 %v137, %v136
    %v153 = vpack.c.bf16 %v139, %v138
    %v154 = vpack.c.bf16 %v141, %v140
    %v155 = vpack.c.bf16 %v143, %v142
    %v156 = vpack.c.bf16 %v145, %v144
    %v157 = vpack.c.bf16 %v147, %v146
    %v158 = vpack.c.bf16 %v149, %v148
    %v159 = vpack.c.bf16 %v151, %v150
    %s160 = scalar_lea.vmem [#allocation3], 32
    %v161 = vld [vmem:[%s160] sm:$0xf]
    %v162 = vld [vmem:[%s160 + $0x4] sm:$0xf]
    %v163 = vld [vmem:[%s160 + $0x8] sm:$0xf]
    %v164 = vld [vmem:[%s160 + $0xc] sm:$0xf]
    %v165 = vld [vmem:[%s160 + $0x10] sm:$0xf]
    %v166 = vld [vmem:[%s160 + $0x14] sm:$0xf]
    %v167 = vld [vmem:[%s160 + $0x18] sm:$0xf]
    %v168 = vld [vmem:[%s160 + $0x1c] sm:$0xf]
    %v177 = vunpack.c.l.b16 %v161
    %v178 = vunpack.c.l.b16 %v162
    %v179 = vunpack.c.l.b16 %v163
    %v180 = vunpack.c.l.b16 %v164
    %v181 = vunpack.c.l.b16 %v165
    %v182 = vunpack.c.l.b16 %v166
    %v183 = vunpack.c.l.b16 %v167
    %v184 = vunpack.c.l.b16 %v168
    %v185 = vpack.c.b16 %v178, %v177
    %v186 = vpack.c.b16 %v180, %v179
    %v187 = vpack.c.b16 %v182, %v181
    %v188 = vpack.c.b16 %v184, %v183
    %v194 = vsel %vm29, %v152, 0
    %v197 = vsel %vm29, %v153, 0
    %v200 = vsel %vm29, %v154, 0
    %v203 = vsel %vm29, %v155, 0
    %v206 = vsel %vm29, %v156, 0
    %v209 = vsel %vm29, %v157, 0
    %v212 = vsel %vm29, %v158, 0
    %v215 = vsel %vm29, %v159, 0
    %217 = vmatprep.subr.bf16.mxu0 0
    %218 = vmatpush1.bf16.msra.mxu0 %v185
    %219 = vmatprep.subr.bf16.mxu0 0
    %220 = vmatpush1.bf16.msra.mxu0 %v186
    %221 = vmatprep.subr.bf16.mxu0 0
    %222 = vmatpush1.bf16.msra.mxu0 %v187
    %223 = vmatprep.subr.bf16.mxu0 0
    %224 = vmatpush1.bf16.msra.mxu0 %v188
    %225 = vmatprep.subr.bf16.mxu0 0
    %226 = vmatpush1.bf16.msra.mxu0 0
    %227 = vmatprep.subr.bf16.mxu0 0
    %228 = vmatpush1.bf16.msra.mxu0 0
    %229 = vmatprep.subr.bf16.mxu0 0
    %230 = vmatpush1.bf16.msra.mxu0 0
    %231 = vmatprep.subr.bf16.mxu0 0
    %232 = vmatpush1.bf16.msra.mxu0 0
    %233 = vmatprep.subr.bf16.mxu0 0
    %234 = vmatpush1.bf16.msra.mxu0 0
    %235 = vmatprep.subr.bf16.mxu0 0
    %236 = vmatpush1.bf16.msra.mxu0 0
    %237 = vmatprep.subr.bf16.mxu0 0
    %238 = vmatpush1.bf16.msra.mxu0 0
    %239 = vmatprep.subr.bf16.mxu0 0
    %240 = vmatpush1.bf16.msra.mxu0 0
    %241 = vmatprep.subr.bf16.mxu0 0
    %242 = vmatpush1.bf16.msra.mxu0 0
    %243 = vmatprep.subr.bf16.mxu0 0
    %244 = vmatpush1.bf16.msra.mxu0 0
    %245 = vmatprep.subr.bf16.mxu0 0
    %246 = vmatpush1.bf16.msra.mxu0 0
    %247 = vmatprep.subr.bf16.mxu0 0
    %248 = vmatpush1.bf16.msra.mxu0 0
    %249 = vmatprep.mubr.bf16.mxu0 0
    %250 = vmatmul.mubr.bf16.gmra.mrb[0].mxu0 %v194
    %v251 = vpop.f32.mrb[0].mxu0
    %v252 = vadd.f32 0.0, %v251
    %v253 = vpop.f32.mrb[0].mxu0
    %v254 = vpop.f32.mrb[0].mxu0
    %v255 = vadd.f32 0.0, %v254
    %v256 = vpop.f32.mrb[0].mxu0
    %257 = vmatprep.mubr.bf16.mxu0 0
    %258 = vmatmul.mubr.bf16.gmra.mrb[0].mxu0 %v197
    %v259 = vpop.f32.mrb[0].mxu0
    %v260 = vadd.f32 0.0, %v259
    %v261 = vpop.f32.mrb[0].mxu0
    %v262 = vpop.f32.mrb[0].mxu0
    %v263 = vadd.f32 0.0, %v262
    %v264 = vpop.f32.mrb[0].mxu0
    %265 = vmatprep.mubr.bf16.mxu0 0
    %266 = vmatmul.mubr.bf16.gmra.mrb[0].mxu0 %v200
    %v267 = vpop.f32.mrb[0].mxu0
    %v268 = vadd.f32 0.0, %v267
    %v269 = vpop.f32.mrb[0].mxu0
    %v270 = vpop.f32.mrb[0].mxu0
    %v271 = vadd.f32 0.0, %v270
    %v272 = vpop.f32.mrb[0].mxu0
    %273 = vmatprep.mubr.bf16.mxu0 0
    %274 = vmatmul.mubr.bf16.gmra.mrb[0].mxu0 %v203
    %v275 = vpop.f32.mrb[0].mxu0
    %v276 = vadd.f32 0.0, %v275
    %v277 = vpop.f32.mrb[0].mxu0
    %v278 = vpop.f32.mrb[0].mxu0
    %v279 = vadd.f32 0.0, %v278
    %v280 = vpop.f32.mrb[0].mxu0
    %281 = vmatprep.mubr.bf16.mxu0 0
    %282 = vmatmul.mubr.bf16.gmra.mrb[0].mxu0 %v206
    %v283 = vpop.f32.mrb[0].mxu0
    %v284 = vadd.f32 0.0, %v283
    %v285 = vpop.f32.mrb[0].mxu0
    %v286 = vpop.f32.mrb[0].mxu0
    %v287 = vadd.f32 0.0, %v286
    %v288 = vpop.f32.mrb[0].mxu0
    %289 = vmatprep.mubr.bf16.mxu0 0
    %290 = vmatmul.mubr.bf16.gmra.mrb[0].mxu0 %v209
    %v291 = vpop.f32.mrb[0].mxu0
    %v292 = vadd.f32 0.0, %v291
    %v293 = vpop.f32.mrb[0].mxu0
    %v294 = vpop.f32.mrb[0].mxu0
    %v295 = vadd.f32 0.0, %v294
    %v296 = vpop.f32.mrb[0].mxu0
    %297 = vmatprep.mubr.bf16.mxu0 0
    %298 = vmatmul.mubr.bf16.gmra.mrb[0].mxu0 %v212
    %v299 = vpop.f32.mrb[0].mxu0
    %v300 = vadd.f32 0.0, %v299
    %v301 = vpop.f32.mrb[0].mxu0
    %v302 = vpop.f32.mrb[0].mxu0
    %v303 = vadd.f32 0.0, %v302
    %v304 = vpop.f32.mrb[0].mxu0
    %305 = vmatprep.mubr.bf16.mxu0 0
    %306 = vmatmul.mubr.bf16.gmra.mrb[0].mxu0 %v215
    %v307 = vpop.f32.mrb[0].mxu0
    %v308 = vadd.f32 0.0, %v307
    %v309 = vpop.f32.mrb[0].mxu0
    %v310 = vpop.f32.mrb[0].mxu0
    %v311 = vadd.f32 0.0, %v310
    %v312 = vpop.f32.mrb[0].mxu0
    %313 = vdwg.mxu0
    %v322 = vunpack.c.l.b16 %v128
    %v323 = vunpack.c.l.b16 %v129
    %v324 = vunpack.c.l.b16 %v130
    %v325 = vunpack.c.l.b16 %v131
    %v326 = vunpack.c.l.b16 %v132
    %v327 = vunpack.c.l.b16 %v133
    %v328 = vunpack.c.l.b16 %v134
    %v329 = vunpack.c.l.b16 %v135
    %v330 = vpack.c.b16 %v323, %v322
    %v331 = vpack.c.b16 %v325, %v324
    %v332 = vpack.c.b16 %v327, %v326
    %v333 = vpack.c.b16 %v329, %v328
    %v339 = vsel %vm29, %v120, 0
    %v342 = vsel %vm29, %v121, 0
    %v345 = vsel %vm29, %v122, 0
    %v348 = vsel %vm29, %v123, 0
    %v351 = vsel %vm29, %v124, 0
    %v354 = vsel %vm29, %v125, 0
    %v357 = vsel %vm29, %v126, 0
    %v360 = vsel %vm29, %v127, 0
    %362 = vmatprep.subr.bf16.mxu0 0
    %363 = vmatpush1.bf16.msra.mxu0 %v330
    %364 = vmatprep.subr.bf16.mxu0 0
    %365 = vmatpush1.bf16.msra.mxu0 %v331
    %366 = vmatprep.subr.bf16.mxu0 0
    %367 = vmatpush1.bf16.msra.mxu0 %v332
    %368 = vmatprep.subr.bf16.mxu0 0
    %369 = vmatpush1.bf16.msra.mxu0 %v333
    %370 = vmatprep.subr.bf16.mxu0 0
    %371 = vmatpush1.bf16.msra.mxu0 0
    %372 = vmatprep.subr.bf16.mxu0 0
    %373 = vmatpush1.bf16.msra.mxu0 0
    %374 = vmatprep.subr.bf16.mxu0 0
    %375 = vmatpush1.bf16.msra.mxu0 0
    %376 = vmatprep.subr.bf16.mxu0 0
    %377 = vmatpush1.bf16.msra.mxu0 0
    %378 = vmatprep.subr.bf16.mxu0 0
    %379 = vmatpush1.bf16.msra.mxu0 0
    %380 = vmatprep.subr.bf16.mxu0 0
    %381 = vmatpush1.bf16.msra.mxu0 0
    %382 = vmatprep.subr.bf16.mxu0 0
    %383 = vmatpush1.bf16.msra.mxu0 0
    %384 = vmatprep.subr.bf16.mxu0 0
    %385 = vmatpush1.bf16.msra.mxu0 0
    %386 = vmatprep.subr.bf16.mxu0 0
    %387 = vmatpush1.bf16.msra.mxu0 0
    %388 = vmatprep.subr.bf16.mxu0 0
    %389 = vmatpush1.bf16.msra.mxu0 0
    %390 = vmatprep.subr.bf16.mxu0 0
    %391 = vmatpush1.bf16.msra.mxu0 0
    %392 = vmatprep.subr.bf16.mxu0 0
    %393 = vmatpush1.bf16.msra.mxu0 0
    %394 = vmatprep.mubr.bf16.mxu0 0
    %395 = vmatmul.mubr.bf16.gmra.mrb[0].mxu0 %v339
    %v396 = vpop.f32.mrb[0].mxu0
    %v397 = vadd.f32 %v252, %v396
    %v398 = vpop.f32.mrb[0].mxu0
    %v399 = vpop.f32.mrb[0].mxu0
    %v400 = vadd.f32 %v255, %v399
    %v401 = vpop.f32.mrb[0].mxu0
    %402 = vmatprep.mubr.bf16.mxu0 0
    %403 = vmatmul.mubr.bf16.gmra.mrb[0].mxu0 %v342
    %v404 = vpop.f32.mrb[0].mxu0
    %v405 = vadd.f32 %v260, %v404
    %v406 = vpop.f32.mrb[0].mxu0
    %v407 = vpop.f32.mrb[0].mxu0
    %v408 = vadd.f32 %v263, %v407
    %v409 = vpop.f32.mrb[0].mxu0
    %410 = vmatprep.mubr.bf16.mxu0 0
    %411 = vmatmul.mubr.bf16.gmra.mrb[0].mxu0 %v345
    %v412 = vpop.f32.mrb[0].mxu0
    %v413 = vadd.f32 %v268, %v412
    %v414 = vpop.f32.mrb[0].mxu0
    %v415 = vpop.f32.mrb[0].mxu0
    %v416 = vadd.f32 %v271, %v415
    %v417 = vpop.f32.mrb[0].mxu0
    %418 = vmatprep.mubr.bf16.mxu0 0
    %419 = vmatmul.mubr.bf16.gmra.mrb[0].mxu0 %v348
    %v420 = vpop.f32.mrb[0].mxu0
    %v421 = vadd.f32 %v276, %v420
    %v422 = vpop.f32.mrb[0].mxu0
    %v423 = vpop.f32.mrb[0].mxu0
    %v424 = vadd.f32 %v279, %v423
    %v425 = vpop.f32.mrb[0].mxu0
    %426 = vmatprep.mubr.bf16.mxu0 0
    %427 = vmatmul.mubr.bf16.gmra.mrb[0].mxu0 %v351
    %v428 = vpop.f32.mrb[0].mxu0
    %v429 = vadd.f32 %v284, %v428
    %v430 = vpop.f32.mrb[0].mxu0
    %v431 = vpop.f32.mrb[0].mxu0
    %v432 = vadd.f32 %v287, %v431
    %v433 = vpop.f32.mrb[0].mxu0
    %434 = vmatprep.mubr.bf16.mxu0 0
    %435 = vmatmul.mubr.bf16.gmra.mrb[0].mxu0 %v354
    %v436 = vpop.f32.mrb[0].mxu0
    %v437 = vadd.f32 %v292, %v436
    %v438 = vpop.f32.mrb[0].mxu0
    %v439 = vpop.f32.mrb[0].mxu0
    %v440 = vadd.f32 %v295, %v439
    %v441 = vpop.f32.mrb[0].mxu0
    %442 = vmatprep.mubr.bf16.mxu0 0
    %443 = vmatmul.mubr.bf16.gmra.mrb[0].mxu0 %v357
    %v444 = vpop.f32.mrb[0].mxu0
    %v445 = vadd.f32 %v300, %v444
    %v446 = vpop.f32.mrb[0].mxu0
    %v447 = vpop.f32.mrb[0].mxu0
    %v448 = vadd.f32 %v303, %v447
    %v449 = vpop.f32.mrb[0].mxu0
    %450 = vmatprep.mubr.bf16.mxu0 0
    %451 = vmatmul.mubr.bf16.gmra.mrb[0].mxu0 %v360
    %v452 = vpop.f32.mrb[0].mxu0
    %v453 = vadd.f32 %v308, %v452
    %v454 = vpop.f32.mrb[0].mxu0
    %v455 = vpop.f32.mrb[0].mxu0
    %v456 = vadd.f32 %v311, %v455
    %v457 = vpop.f32.mrb[0].mxu0
    %458 = vdwg.mxu0
    %v459 = vld [vmem:[#allocation2 + $0x2] sm:$0xff]
    %v460 = vld [vmem:[#allocation2 + $0x12] sm:$0xff]
    %v461 = vld [vmem:[#allocation2 + $0x22] sm:$0xff]
    %v462 = vld [vmem:[#allocation2 + $0x32] sm:$0xff]
    %v463 = vld [vmem:[#allocation2 + $0x42] sm:$0xff]
    %v464 = vld [vmem:[#allocation2 + $0x52] sm:$0xff]
    %v465 = vld [vmem:[#allocation2 + $0x62] sm:$0xff]
    %v466 = vld [vmem:[#allocation2 + $0x72] sm:$0xff]
    %v467 = vld [vmem:[#allocation2 + $0xa2] sm:$0xff]
    %v468 = vld [vmem:[#allocation2 + $0xb2] sm:$0xff]
    %v469 = vld [vmem:[#allocation2 + $0xc2] sm:$0xff]
    %v470 = vld [vmem:[#allocation2 + $0xd2] sm:$0xff]
    %v471 = vld [vmem:[#allocation2 + $0xe2] sm:$0xff]
    %v472 = vld [vmem:[#allocation2 + $0xf2] sm:$0xff]
    %v473 = vld [vmem:[#allocation2 + $0x102] sm:$0xff]
    %v474 = vld [vmem:[#allocation2 + $0x112] sm:$0xff]
    %v475 = vpack.c.bf16 %v460, %v459
    %v476 = vpack.c.bf16 %v462, %v461
    %v477 = vpack.c.bf16 %v464, %v463
    %v478 = vpack.c.bf16 %v466, %v465
    %v479 = vpack.c.bf16 %v468, %v467
    %v480 = vpack.c.bf16 %v470, %v469
    %v481 = vpack.c.bf16 %v472, %v471
    %v482 = vpack.c.bf16 %v474, %v473
    %s483 = scalar_lea.vmem [#allocation3], 64
    %v484 = vld [vmem:[%s483] sm:$0xf]
    %v485 = vld [vmem:[%s483 + $0x4] sm:$0xf]
    %v486 = vld [vmem:[%s483 + $0x8] sm:$0xf]
    %v487 = vld [vmem:[%s483 + $0xc] sm:$0xf]
    %v488 = vld [vmem:[%s483 + $0x10] sm:$0xf]
    %v489 = vld [vmem:[%s483 + $0x14] sm:$0xf]
    %v490 = vld [vmem:[%s483 + $0x18] sm:$0xf]
    %v491 = vld [vmem:[%s483 + $0x1c] sm:$0xf]
    %v500 = vunpack.c.l.b16 %v484
    %v501 = vunpack.c.l.b16 %v485
    %v502 = vunpack.c.l.b16 %v486
    %v503 = vunpack.c.l.b16 %v487
    %v504 = vunpack.c.l.b16 %v488
    %v505 = vunpack.c.l.b16 %v489
    %v506 = vunpack.c.l.b16 %v490
    %v507 = vunpack.c.l.b16 %v491
    %v508 = vpack.c.b16 %v501, %v500
    %v509 = vpack.c.b16 %v503, %v502
    %v510 = vpack.c.b16 %v505, %v504
    %v511 = vpack.c.b16 %v507, %v506
    %v517 = vsel %vm29, %v475, 0
    %v520 = vsel %vm29, %v476, 0
    %v523 = vsel %vm29, %v477, 0
    %v526 = vsel %vm29, %v478, 0
    %v529 = vsel %vm29, %v479, 0
    %v532 = vsel %vm29, %v480, 0
    %v535 = vsel %vm29, %v481, 0
    %v538 = vsel %vm29, %v482, 0
    %540 = vmatprep.subr.bf16.mxu0 0
    %541 = vmatpush1.bf16.msra.mxu0 %v508
    %542 = vmatprep.subr.bf16.mxu0 0
    %543 = vmatpush1.bf16.msra.mxu0 %v509
    %544 = vmatprep.subr.bf16.mxu0 0
    %545 = vmatpush1.bf16.msra.mxu0 %v510
    %546 = vmatprep.subr.bf16.mxu0 0
    %547 = vmatpush1.bf16.msra.mxu0 %v511
    %548 = vmatprep.subr.bf16.mxu0 0
    %549 = vmatpush1.bf16.msra.mxu0 0
    %550 = vmatprep.subr.bf16.mxu0 0
    %551 = vmatpush1.bf16.msra.mxu0 0
    %552 = vmatprep.subr.bf16.mxu0 0
    %553 = vmatpush1.bf16.msra.mxu0 0
    %554 = vmatprep.subr.bf16.mxu0 0
    %555 = vmatpush1.bf16.msra.mxu0 0
    %556 = vmatprep.subr.bf16.mxu0 0
    %557 = vmatpush1.bf16.msra.mxu0 0
    %558 = vmatprep.subr.bf16.mxu0 0
    %559 = vmatpush1.bf16.msra.mxu0 0
    %560 = vmatprep.subr.bf16.mxu0 0
    %561 = vmatpush1.bf16.msra.mxu0 0
    %562 = vmatprep.subr.bf16.mxu0 0
    %563 = vmatpush1.bf16.msra.mxu0 0
    %564 = vmatprep.subr.bf16.mxu0 0
    %565 = vmatpush1.bf16.msra.mxu0 0
    %566 = vmatprep.subr.bf16.mxu0 0
    %567 = vmatpush1.bf16.msra.mxu0 0
    %568 = vmatprep.subr.bf16.mxu0 0
    %569 = vmatpush1.bf16.msra.mxu0 0
    %570 = vmatprep.subr.bf16.mxu0 0
    %571 = vmatpush1.bf16.msra.mxu0 0
    %572 = vmatprep.mubr.bf16.mxu0 0
    %573 = vmatmul.mubr.bf16.gmra.mrb[0].mxu0 %v517
    %v574 = vpop.f32.mrb[0].mxu0
    %v575 = vadd.f32 0.0, %v574
    %v576 = vpop.f32.mrb[0].mxu0
    %v577 = vpop.f32.mrb[0].mxu0
    %v578 = vadd.f32 0.0, %v577
    %v579 = vpop.f32.mrb[0].mxu0
    %580 = vmatprep.mubr.bf16.mxu0 0
    %581 = vmatmul.mubr.bf16.gmra.mrb[0].mxu0 %v520
    %v582 = vpop.f32.mrb[0].mxu0
    %v583 = vadd.f32 0.0, %v582
    %v584 = vpop.f32.mrb[0].mxu0
    %v585 = vpop.f32.mrb[0].mxu0
    %v586 = vadd.f32 0.0, %v585
    %v587 = vpop.f32.mrb[0].mxu0
    %588 = vmatprep.mubr.bf16.mxu0 0
    %589 = vmatmul.mubr.bf16.gmra.mrb[0].mxu0 %v523
    %v590 = vpop.f32.mrb[0].mxu0
    %v591 = vadd.f32 0.0, %v590
    %v592 = vpop.f32.mrb[0].mxu0
    %v593 = vpop.f32.mrb[0].mxu0
    %v594 = vadd.f32 0.0, %v593
    %v595 = vpop.f32.mrb[0].mxu0
    %596 = vmatprep.mubr.bf16.mxu0 0
    %597 = vmatmul.mubr.bf16.gmra.mrb[0].mxu0 %v526
    %v598 = vpop.f32.mrb[0].mxu0
    %v599 = vadd.f32 0.0, %v598
    %v600 = vpop.f32.mrb[0].mxu0
    %v601 = vpop.f32.mrb[0].mxu0
    %v602 = vadd.f32 0.0, %v601
    %v603 = vpop.f32.mrb[0].mxu0
    %604 = vmatprep.mubr.bf16.mxu0 0
    %605 = vmatmul.mubr.bf16.gmra.mrb[0].mxu0 %v529
    %v606 = vpop.f32.mrb[0].mxu0
    %v607 = vadd.f32 0.0, %v606
    %v608 = vpop.f32.mrb[0].mxu0
    %v609 = vpop.f32.mrb[0].mxu0
    %v610 = vadd.f32 0.0, %v609
    %v611 = vpop.f32.mrb[0].mxu0
    %612 = vmatprep.mubr.bf16.mxu0 0
    %613 = vmatmul.mubr.bf16.gmra.mrb[0].mxu0 %v532
    %v614 = vpop.f32.mrb[0].mxu0
    %v615 = vadd.f32 0.0, %v614
    %v616 = vpop.f32.mrb[0].mxu0
    %v617 = vpop.f32.mrb[0].mxu0
    %v618 = vadd.f32 0.0, %v617
    %v619 = vpop.f32.mrb[0].mxu0
    %620 = vmatprep.mubr.bf16.mxu0 0
    %621 = vmatmul.mubr.bf16.gmra.mrb[0].mxu0 %v535
    %v622 = vpop.f32.mrb[0].mxu0
    %v623 = vadd.f32 0.0, %v622
    %v624 = vpop.f32.mrb[0].mxu0
    %v625 = vpop.f32.mrb[0].mxu0
    %v626 = vadd.f32 0.0, %v625
    %v627 = vpop.f32.mrb[0].mxu0
    %628 = vmatprep.mubr.bf16.mxu0 0
    %629 = vmatmul.mubr.bf16.gmra.mrb[0].mxu0 %v538
    %v630 = vpop.f32.mrb[0].mxu0
    %v631 = vadd.f32 0.0, %v630
    %v632 = vpop.f32.mrb[0].mxu0
    %v633 = vpop.f32.mrb[0].mxu0
    %v634 = vadd.f32 0.0, %v633
    %v635 = vpop.f32.mrb[0].mxu0
    %636 = vdwg.mxu0
    %v637 = vadd.f32 %v397, %v575
    %v638 = vadd.f32 %v400, %v578
    %v639 = vadd.f32 %v405, %v583
    %v640 = vadd.f32 %v408, %v586
    %v641 = vadd.f32 %v413, %v591
    %v642 = vadd.f32 %v416, %v594
    %v643 = vadd.f32 %v421, %v599
    %v644 = vadd.f32 %v424, %v602
    %v645 = vadd.f32 %v429, %v607
    %v646 = vadd.f32 %v432, %v610
    %v647 = vadd.f32 %v437, %v615
    %v648 = vadd.f32 %v440, %v618
    %v649 = vadd.f32 %v445, %v623
    %v650 = vadd.f32 %v448, %v626
    %v651 = vadd.f32 %v453, %v631
    %v652 = vadd.f32 %v456, %v634
    %v653 = vld [vmem:[%s87] sm:$0xff]
    %v654 = vld [vmem:[%s87 + $0x10] sm:$0xff]
    %v655 = vld [vmem:[%s87 + $0x20] sm:$0xff]
    %v656 = vld [vmem:[%s87 + $0x30] sm:$0xff]
    %v657 = vld [vmem:[%s87 + $0x40] sm:$0xff]
    %v658 = vld [vmem:[%s87 + $0x50] sm:$0xff]
    %v659 = vld [vmem:[%s87 + $0x60] sm:$0xff]
    %v660 = vld [vmem:[%s87 + $0x70] sm:$0xff]
    %v661 = vld [vmem:[%s87 + $0xa0] sm:$0xff]
    %v662 = vld [vmem:[%s87 + $0xb0] sm:$0xff]
    %v663 = vld [vmem:[%s87 + $0xc0] sm:$0xff]
    %v664 = vld [vmem:[%s87 + $0xd0] sm:$0xff]
    %v665 = vld [vmem:[%s87 + $0xe0] sm:$0xff]
    %v666 = vld [vmem:[%s87 + $0xf0] sm:$0xff]
    %v667 = vld [vmem:[%s87 + $0x100] sm:$0xff]
    %v668 = vld [vmem:[%s87 + $0x110] sm:$0xff]
    %v669 = vpack.c.bf16 %v654, %v653
    %v670 = vpack.c.bf16 %v656, %v655
    %v671 = vpack.c.bf16 %v658, %v657
    %v672 = vpack.c.bf16 %v660, %v659
    %v673 = vpack.c.bf16 %v662, %v661
    %v674 = vpack.c.bf16 %v664, %v663
    %v675 = vpack.c.bf16 %v666, %v665
    %v676 = vpack.c.bf16 %v668, %v667
    %s677 = scalar_lea.vmem [#allocation3], 96
    %v678 = vld [vmem:[%s677] sm:$0xf]
    %v679 = vld [vmem:[%s677 + $0x4] sm:$0xf]
    %v680 = vld [vmem:[%s677 + $0x8] sm:$0xf]
    %v681 = vld [vmem:[%s677 + $0xc] sm:$0xf]
    %v682 = vld [vmem:[%s677 + $0x10] sm:$0xf]
    %v683 = vld [vmem:[%s677 + $0x14] sm:$0xf]
    %v684 = vld [vmem:[%s677 + $0x18] sm:$0xf]
    %v685 = vld [vmem:[%s677 + $0x1c] sm:$0xf]
    %v694 = vunpack.c.l.b16 %v678
    %v695 = vunpack.c.l.b16 %v679
    %v696 = vunpack.c.l.b16 %v680
    %v697 = vunpack.c.l.b16 %v681
    %v698 = vunpack.c.l.b16 %v682
    %v699 = vunpack.c.l.b16 %v683
    %v700 = vunpack.c.l.b16 %v684
    %v701 = vunpack.c.l.b16 %v685
    %v702 = vpack.c.b16 %v695, %v694
    %v703 = vpack.c.b16 %v697, %v696
    %v704 = vpack.c.b16 %v699, %v698
    %v705 = vpack.c.b16 %v701, %v700
    %v711 = vsel %vm29, %v669, 0
    %v714 = vsel %vm29, %v670, 0
    %v717 = vsel %vm29, %v671, 0
    %v720 = vsel %vm29, %v672, 0
    %v723 = vsel %vm29, %v673, 0
    %v726 = vsel %vm29, %v674, 0
    %v729 = vsel %vm29, %v675, 0
    %v732 = vsel %vm29, %v676, 0
    %734 = vmatprep.subr.bf16.mxu0 0
    %735 = vmatpush1.bf16.msra.mxu0 %v702
    %736 = vmatprep.subr.bf16.mxu0 0
    %737 = vmatpush1.bf16.msra.mxu0 %v703
    %738 = vmatprep.subr.bf16.mxu0 0
    %739 = vmatpush1.bf16.msra.mxu0 %v704
    %740 = vmatprep.subr.bf16.mxu0 0
    %741 = vmatpush1.bf16.msra.mxu0 %v705
    %742 = vmatprep.subr.bf16.mxu0 0
    %743 = vmatpush1.bf16.msra.mxu0 0
    %744 = vmatprep.subr.bf16.mxu0 0
    %745 = vmatpush1.bf16.msra.mxu0 0
    %746 = vmatprep.subr.bf16.mxu0 0
    %747 = vmatpush1.bf16.msra.mxu0 0
    %748 = vmatprep.subr.bf16.mxu0 0
    %749 = vmatpush1.bf16.msra.mxu0 0
    %750 = vmatprep.subr.bf16.mxu0 0
    %751 = vmatpush1.bf16.msra.mxu0 0
    %752 = vmatprep.subr.bf16.mxu0 0
    %753 = vmatpush1.bf16.msra.mxu0 0
    %754 = vmatprep.subr.bf16.mxu0 0
    %755 = vmatpush1.bf16.msra.mxu0 0
    %756 = vmatprep.subr.bf16.mxu0 0
    %757 = vmatpush1.bf16.msra.mxu0 0
    %758 = vmatprep.subr.bf16.mxu0 0
    %759 = vmatpush1.bf16.msra.mxu0 0
    %760 = vmatprep.subr.bf16.mxu0 0
    %761 = vmatpush1.bf16.msra.mxu0 0
    %762 = vmatprep.subr.bf16.mxu0 0
    %763 = vmatpush1.bf16.msra.mxu0 0
    %764 = vmatprep.subr.bf16.mxu0 0
    %765 = vmatpush1.bf16.msra.mxu0 0
    %766 = vmatprep.mubr.bf16.mxu0 0
    %767 = vmatmul.mubr.bf16.gmra.mrb[0].mxu0 %v711
    %v768 = vpop.f32.mrb[0].mxu0
    %v769 = vadd.f32 0.0, %v768
    %v770 = vpop.f32.mrb[0].mxu0
    %v771 = vpop.f32.mrb[0].mxu0
    %v772 = vadd.f32 0.0, %v771
    %v773 = vpop.f32.mrb[0].mxu0
    %774 = vmatprep.mubr.bf16.mxu0 0
    %775 = vmatmul.mubr.bf16.gmra.mrb[0].mxu0 %v714
    %v776 = vpop.f32.mrb[0].mxu0
    %v777 = vadd.f32 0.0, %v776
    %v778 = vpop.f32.mrb[0].mxu0
    %v779 = vpop.f32.mrb[0].mxu0
    %v780 = vadd.f32 0.0, %v779
    %v781 = vpop.f32.mrb[0].mxu0
    %782 = vmatprep.mubr.bf16.mxu0 0
    %783 = vmatmul.mubr.bf16.gmra.mrb[0].mxu0 %v717
    %v784 = vpop.f32.mrb[0].mxu0
    %v785 = vadd.f32 0.0, %v784
    %v786 = vpop.f32.mrb[0].mxu0
    %v787 = vpop.f32.mrb[0].mxu0
    %v788 = vadd.f32 0.0, %v787
    %v789 = vpop.f32.mrb[0].mxu0
    %790 = vmatprep.mubr.bf16.mxu0 0
    %791 = vmatmul.mubr.bf16.gmra.mrb[0].mxu0 %v720
    %v792 = vpop.f32.mrb[0].mxu0
    %v793 = vadd.f32 0.0, %v792
    %v794 = vpop.f32.mrb[0].mxu0
    %v795 = vpop.f32.mrb[0].mxu0
    %v796 = vadd.f32 0.0, %v795
    %v797 = vpop.f32.mrb[0].mxu0
    %798 = vmatprep.mubr.bf16.mxu0 0
    %799 = vmatmul.mubr.bf16.gmra.mrb[0].mxu0 %v723
    %v800 = vpop.f32.mrb[0].mxu0
    %v801 = vadd.f32 0.0, %v800
    %v802 = vpop.f32.mrb[0].mxu0
    %v803 = vpop.f32.mrb[0].mxu0
    %v804 = vadd.f32 0.0, %v803
    %v805 = vpop.f32.mrb[0].mxu0
    %806 = vmatprep.mubr.bf16.mxu0 0
    %807 = vmatmul.mubr.bf16.gmra.mrb[0].mxu0 %v726
    %v808 = vpop.f32.mrb[0].mxu0
    %v809 = vadd.f32 0.0, %v808
    %v810 = vpop.f32.mrb[0].mxu0
    %v811 = vpop.f32.mrb[0].mxu0
    %v812 = vadd.f32 0.0, %v811
    %v813 = vpop.f32.mrb[0].mxu0
    %814 = vmatprep.mubr.bf16.mxu0 0
    %815 = vmatmul.mubr.bf16.gmra.mrb[0].mxu0 %v729
    %v816 = vpop.f32.mrb[0].mxu0
    %v817 = vadd.f32 0.0, %v816
    %v818 = vpop.f32.mrb[0].mxu0
    %v819 = vpop.f32.mrb[0].mxu0
    %v820 = vadd.f32 0.0, %v819
    %v821 = vpop.f32.mrb[0].mxu0
    %822 = vmatprep.mubr.bf16.mxu0 0
    %823 = vmatmul.mubr.bf16.gmra.mrb[0].mxu0 %v732
    %v824 = vpop.f32.mrb[0].mxu0
    %v825 = vadd.f32 0.0, %v824
    %v826 = vpop.f32.mrb[0].mxu0
    %v827 = vpop.f32.mrb[0].mxu0
    %v828 = vadd.f32 0.0, %v827
    %v829 = vpop.f32.mrb[0].mxu0
    %830 = vdwg.mxu0
    %v831 = vadd.f32 %v637, %v769
    %v832 = vadd.f32 %v638, %v772
    %v833 = vadd.f32 %v639, %v777
    %v834 = vadd.f32 %v640, %v780
    %v835 = vadd.f32 %v641, %v785
    %v836 = vadd.f32 %v642, %v788
    %v837 = vadd.f32 %v643, %v793
    %v838 = vadd.f32 %v644, %v796
    %v839 = vadd.f32 %v645, %v801
    %v840 = vadd.f32 %v646, %v804
    %v841 = vadd.f32 %v647, %v809
    %v842 = vadd.f32 %v648, %v812
    %v843 = vadd.f32 %v649, %v817
    %v844 = vadd.f32 %v650, %v820
    %v845 = vadd.f32 %v651, %v825
    %v846 = vadd.f32 %v652, %v828
    %v847 = vld [vmem:[%s87 + $0x1] sm:$0xff]
    %v848 = vld [vmem:[%s87 + $0x11] sm:$0xff]
    %v849 = vld [vmem:[%s87 + $0x21] sm:$0xff]
    %v850 = vld [vmem:[%s87 + $0x31] sm:$0xff]
    %v851 = vld [vmem:[%s87 + $0x41] sm:$0xff]
    %v852 = vld [vmem:[%s87 + $0x51] sm:$0xff]
    %v853 = vld [vmem:[%s87 + $0x61] sm:$0xff]
    %v854 = vld [vmem:[%s87 + $0x71] sm:$0xff]
    %v855 = vld [vmem:[%s87 + $0xa1] sm:$0xff]
    %v856 = vld [vmem:[%s87 + $0xb1] sm:$0xff]
    %v857 = vld [vmem:[%s87 + $0xc1] sm:$0xff]
    %v858 = vld [vmem:[%s87 + $0xd1] sm:$0xff]
    %v859 = vld [vmem:[%s87 + $0xe1] sm:$0xff]
    %v860 = vld [vmem:[%s87 + $0xf1] sm:$0xff]
    %v861 = vld [vmem:[%s87 + $0x101] sm:$0xff]
    %v862 = vld [vmem:[%s87 + $0x111] sm:$0xff]
    %v863 = vpack.c.bf16 %v848, %v847
    %v864 = vpack.c.bf16 %v850, %v849
    %v865 = vpack.c.bf16 %v852, %v851
    %v866 = vpack.c.bf16 %v854, %v853
    %v867 = vpack.c.bf16 %v856, %v855
    %v868 = vpack.c.bf16 %v858, %v857
    %v869 = vpack.c.bf16 %v860, %v859
    %v870 = vpack.c.bf16 %v862, %v861
    %s871 = scalar_lea.vmem [#allocation3], 128
    %v872 = vld [vmem:[%s871] sm:$0xf]
    %v873 = vld [vmem:[%s871 + $0x4] sm:$0xf]
    %v874 = vld [vmem:[%s871 + $0x8] sm:$0xf]
    %v875 = vld [vmem:[%s871 + $0xc] sm:$0xf]
    %v876 = vld [vmem:[%s871 + $0x10] sm:$0xf]
    %v877 = vld [vmem:[%s871 + $0x14] sm:$0xf]
    %v878 = vld [vmem:[%s871 + $0x18] sm:$0xf]
    %v879 = vld [vmem:[%s871 + $0x1c] sm:$0xf]
    %v888 = vunpack.c.l.b16 %v872
    %v889 = vunpack.c.l.b16 %v873
    %v890 = vunpack.c.l.b16 %v874
    %v891 = vunpack.c.l.b16 %v875
    %v892 = vunpack.c.l.b16 %v876
    %v893 = vunpack.c.l.b16 %v877
    %v894 = vunpack.c.l.b16 %v878
    %v895 = vunpack.c.l.b16 %v879
    %v896 = vpack.c.b16 %v889, %v888
    %v897 = vpack.c.b16 %v891, %v890
    %v898 = vpack.c.b16 %v893, %v892
    %v899 = vpack.c.b16 %v895, %v894
    %v905 = vsel %vm29, %v863, 0
    %v908 = vsel %vm29, %v864, 0
    %v911 = vsel %vm29, %v865, 0
    %v914 = vsel %vm29, %v866, 0
    %v917 = vsel %vm29, %v867, 0
    %v920 = vsel %vm29, %v868, 0
    %v923 = vsel %vm29, %v869, 0
    %v926 = vsel %vm29, %v870, 0
    %928 = vmatprep.subr.bf16.mxu0 0
    %929 = vmatpush1.bf16.msra.mxu0 %v896
    %930 = vmatprep.subr.bf16.mxu0 0
    %931 = vmatpush1.bf16.msra.mxu0 %v897
    %932 = vmatprep.subr.bf16.mxu0 0
    %933 = vmatpush1.bf16.msra.mxu0 %v898
    %934 = vmatprep.subr.bf16.mxu0 0
    %935 = vmatpush1.bf16.msra.mxu0 %v899
    %936 = vmatprep.subr.bf16.mxu0 0
    %937 = vmatpush1.bf16.msra.mxu0 0
    %938 = vmatprep.subr.bf16.mxu0 0
    %939 = vmatpush1.bf16.msra.mxu0 0
    %940 = vmatprep.subr.bf16.mxu0 0
    %941 = vmatpush1.bf16.msra.mxu0 0
    %942 = vmatprep.subr.bf16.mxu0 0
    %943 = vmatpush1.bf16.msra.mxu0 0
    %944 = vmatprep.subr.bf16.mxu0 0
    %945 = vmatpush1.bf16.msra.mxu0 0
    %946 = vmatprep.subr.bf16.mxu0 0
    %947 = vmatpush1.bf16.msra.mxu0 0
    %948 = vmatprep.subr.bf16.mxu0 0
    %949 = vmatpush1.bf16.msra.mxu0 0
    %950 = vmatprep.subr.bf16.mxu0 0
    %951 = vmatpush1.bf16.msra.mxu0 0
    %952 = vmatprep.subr.bf16.mxu0 0
    %953 = vmatpush1.bf16.msra.mxu0 0
    %954 = vmatprep.subr.bf16.mxu0 0
    %955 = vmatpush1.bf16.msra.mxu0 0
    %956 = vmatprep.subr.bf16.mxu0 0
    %957 = vmatpush1.bf16.msra.mxu0 0
    %958 = vmatprep.subr.bf16.mxu0 0
    %959 = vmatpush1.bf16.msra.mxu0 0
    %960 = vmatprep.mubr.bf16.mxu0 0
    %961 = vmatmul.mubr.bf16.gmra.mrb[0].mxu0 %v905
    %v962 = vpop.f32.mrb[0].mxu0
    %v963 = vadd.f32 0.0, %v962
    %v964 = vpop.f32.mrb[0].mxu0
    %v965 = vpop.f32.mrb[0].mxu0
    %v966 = vadd.f32 0.0, %v965
    %v967 = vpop.f32.mrb[0].mxu0
    %968 = vmatprep.mubr.bf16.mxu0 0
    %969 = vmatmul.mubr.bf16.gmra.mrb[0].mxu0 %v908
    %v970 = vpop.f32.mrb[0].mxu0
    %v971 = vadd.f32 0.0, %v970
    %v972 = vpop.f32.mrb[0].mxu0
    %v973 = vpop.f32.mrb[0].mxu0
    %v974 = vadd.f32 0.0, %v973
    %v975 = vpop.f32.mrb[0].mxu0
    %976 = vmatprep.mubr.bf16.mxu0 0
    %977 = vmatmul.mubr.bf16.gmra.mrb[0].mxu0 %v911
    %v978 = vpop.f32.mrb[0].mxu0
    %v979 = vadd.f32 0.0, %v978
    %v980 = vpop.f32.mrb[0].mxu0
    %v981 = vpop.f32.mrb[0].mxu0
    %v982 = vadd.f32 0.0, %v981
    %v983 = vpop.f32.mrb[0].mxu0
    %984 = vmatprep.mubr.bf16.mxu0 0
    %985 = vmatmul.mubr.bf16.gmra.mrb[0].mxu0 %v914
    %v986 = vpop.f32.mrb[0].mxu0
    %v987 = vadd.f32 0.0, %v986
    %v988 = vpop.f32.mrb[0].mxu0
    %v989 = vpop.f32.mrb[0].mxu0
    %v990 = vadd.f32 0.0, %v989
    %v991 = vpop.f32.mrb[0].mxu0
    %992 = vmatprep.mubr.bf16.mxu0 0
    %993 = vmatmul.mubr.bf16.gmra.mrb[0].mxu0 %v917
    %v994 = vpop.f32.mrb[0].mxu0
    %v995 = vadd.f32 0.0, %v994
    %v996 = vpop.f32.mrb[0].mxu0
    %v997 = vpop.f32.mrb[0].mxu0
    %v998 = vadd.f32 0.0, %v997
    %v999 = vpop.f32.mrb[0].mxu0
    %1000 = vmatprep.mubr.bf16.mxu0 0
    %1001 = vmatmul.mubr.bf16.gmra.mrb[0].mxu0 %v920
    %v1002 = vpop.f32.mrb[0].mxu0
    %v1003 = vadd.f32 0.0, %v1002
    %v1004 = vpop.f32.mrb[0].mxu0
    %v1005 = vpop.f32.mrb[0].mxu0
    %v1006 = vadd.f32 0.0, %v1005
    %v1007 = vpop.f32.mrb[0].mxu0
    %1008 = vmatprep.mubr.bf16.mxu0 0
    %1009 = vmatmul.mubr.bf16.gmra.mrb[0].mxu0 %v923
    %v1010 = vpop.f32.mrb[0].mxu0
    %v1011 = vadd.f32 0.0, %v1010
    %v1012 = vpop.f32.mrb[0].mxu0
    %v1013 = vpop.f32.mrb[0].mxu0
    %v1014 = vadd.f32 0.0, %v1013
    %v1015 = vpop.f32.mrb[0].mxu0
    %1016 = vmatprep.mubr.bf16.mxu0 0
    %1017 = vmatmul.mubr.bf16.gmra.mrb[0].mxu0 %v926
    %v1018 = vpop.f32.mrb[0].mxu0
    %v1019 = vadd.f32 0.0, %v1018
    %v1020 = vpop.f32.mrb[0].mxu0
    %v1021 = vpop.f32.mrb[0].mxu0
    %v1022 = vadd.f32 0.0, %v1021
    %v1023 = vpop.f32.mrb[0].mxu0
    %1024 = vdwg.mxu0
    %v1025 = vadd.f32 %v831, %v963
    %v1026 = vadd.f32 %v832, %v966
    %v1027 = vadd.f32 %v833, %v971
    %v1028 = vadd.f32 %v834, %v974
    %v1029 = vadd.f32 %v835, %v979
    %v1030 = vadd.f32 %v836, %v982
    %v1031 = vadd.f32 %v837, %v987
    %v1032 = vadd.f32 %v838, %v990
    %v1033 = vadd.f32 %v839, %v995
    %v1034 = vadd.f32 %v840, %v998
    %v1035 = vadd.f32 %v841, %v1003
    %v1036 = vadd.f32 %v842, %v1006
    %v1037 = vadd.f32 %v843, %v1011
    %v1038 = vadd.f32 %v844, %v1014
    %v1039 = vadd.f32 %v845, %v1019
    %v1040 = vadd.f32 %v846, %v1022
    %v1041 = vld [vmem:[%s87 + $0x2] sm:$0xff]
    %v1042 = vld [vmem:[%s87 + $0x12] sm:$0xff]
    %v1043 = vld [vmem:[%s87 + $0x22] sm:$0xff]
    %v1044 = vld [vmem:[%s87 + $0x32] sm:$0xff]
    %v1045 = vld [vmem:[%s87 + $0x42] sm:$0xff]
    %v1046 = vld [vmem:[%s87 + $0x52] sm:$0xff]
    %v1047 = vld [vmem:[%s87 + $0x62] sm:$0xff]
    %v1048 = vld [vmem:[%s87 + $0x72] sm:$0xff]
    %v1049 = vld [vmem:[%s87 + $0xa2] sm:$0xff]
    %v1050 = vld [vmem:[%s87 + $0xb2] sm:$0xff]
    %v1051 = vld [vmem:[%s87 + $0xc2] sm:$0xff]
    %v1052 = vld [vmem:[%s87 + $0xd2] sm:$0xff]
    %v1053 = vld [vmem:[%s87 + $0xe2] sm:$0xff]
    %v1054 = vld [vmem:[%s87 + $0xf2] sm:$0xff]
    %v1055 = vld [vmem:[%s87 + $0x102] sm:$0xff]
    %v1056 = vld [vmem:[%s87 + $0x112] sm:$0xff]
    %v1057 = vpack.c.bf16 %v1042, %v1041
    %v1058 = vpack.c.bf16 %v1044, %v1043
    %v1059 = vpack.c.bf16 %v1046, %v1045
    %v1060 = vpack.c.bf16 %v1048, %v1047
    %v1061 = vpack.c.bf16 %v1050, %v1049
    %v1062 = vpack.c.bf16 %v1052, %v1051
    %v1063 = vpack.c.bf16 %v1054, %v1053
    %v1064 = vpack.c.bf16 %v1056, %v1055
    %s1065 = scalar_lea.vmem [#allocation3], 160
    %v1066 = vld [vmem:[%s1065] sm:$0xf]
    %v1067 = vld [vmem:[%s1065 + $0x4] sm:$0xf]
    %v1068 = vld [vmem:[%s1065 + $0x8] sm:$0xf]
    %v1069 = vld [vmem:[%s1065 + $0xc] sm:$0xf]
    %v1070 = vld [vmem:[%s1065 + $0x10] sm:$0xf]
    %v1071 = vld [vmem:[%s1065 + $0x14] sm:$0xf]
    %v1072 = vld [vmem:[%s1065 + $0x18] sm:$0xf]
    %v1073 = vld [vmem:[%s1065 + $0x1c] sm:$0xf]
    %v1082 = vunpack.c.l.b16 %v1066
    %v1083 = vunpack.c.l.b16 %v1067
    %v1084 = vunpack.c.l.b16 %v1068
    %v1085 = vunpack.c.l.b16 %v1069
    %v1086 = vunpack.c.l.b16 %v1070
    %v1087 = vunpack.c.l.b16 %v1071
    %v1088 = vunpack.c.l.b16 %v1072
    %v1089 = vunpack.c.l.b16 %v1073
    %v1090 = vpack.c.b16 %v1083, %v1082
    %v1091 = vpack.c.b16 %v1085, %v1084
    %v1092 = vpack.c.b16 %v1087, %v1086
    %v1093 = vpack.c.b16 %v1089, %v1088
    %v1099 = vsel %vm29, %v1057, 0
    %v1102 = vsel %vm29, %v1058, 0
    %v1105 = vsel %vm29, %v1059, 0
    %v1108 = vsel %vm29, %v1060, 0
    %v1111 = vsel %vm29, %v1061, 0
    %v1114 = vsel %vm29, %v1062, 0
    %v1117 = vsel %vm29, %v1063, 0
    %v1120 = vsel %vm29, %v1064, 0
    %1122 = vmatprep.subr.bf16.mxu0 0
    %1123 = vmatpush1.bf16.msra.mxu0 %v1090
    %1124 = vmatprep.subr.bf16.mxu0 0
    %1125 = vmatpush1.bf16.msra.mxu0 %v1091
    %1126 = vmatprep.subr.bf16.mxu0 0
    %1127 = vmatpush1.bf16.msra.mxu0 %v1092
    %1128 = vmatprep.subr.bf16.mxu0 0
    %1129 = vmatpush1.bf16.msra.mxu0 %v1093
    %1130 = vmatprep.subr.bf16.mxu0 0
    %1131 = vmatpush1.bf16.msra.mxu0 0
    %1132 = vmatprep.subr.bf16.mxu0 0
    %1133 = vmatpush1.bf16.msra.mxu0 0
    %1134 = vmatprep.subr.bf16.mxu0 0
    %1135 = vmatpush1.bf16.msra.mxu0 0
    %1136 = vmatprep.subr.bf16.mxu0 0
    %1137 = vmatpush1.bf16.msra.mxu0 0
    %1138 = vmatprep.subr.bf16.mxu0 0
    %1139 = vmatpush1.bf16.msra.mxu0 0
    %1140 = vmatprep.subr.bf16.mxu0 0
    %1141 = vmatpush1.bf16.msra.mxu0 0
    %1142 = vmatprep.subr.bf16.mxu0 0
    %1143 = vmatpush1.bf16.msra.mxu0 0
    %1144 = vmatprep.subr.bf16.mxu0 0
    %1145 = vmatpush1.bf16.msra.mxu0 0
    %1146 = vmatprep.subr.bf16.mxu0 0
    %1147 = vmatpush1.bf16.msra.mxu0 0
    %1148 = vmatprep.subr.bf16.mxu0 0
    %1149 = vmatpush1.bf16.msra.mxu0 0
    %1150 = vmatprep.subr.bf16.mxu0 0
    %1151 = vmatpush1.bf16.msra.mxu0 0
    %1152 = vmatprep.subr.bf16.mxu0 0
    %1153 = vmatpush1.bf16.msra.mxu0 0
    %1154 = vmatprep.mubr.bf16.mxu0 0
    %1155 = vmatmul.mubr.bf16.gmra.mrb[0].mxu0 %v1099
    %v1156 = vpop.f32.mrb[0].mxu0
    %v1157 = vadd.f32 0.0, %v1156
    %v1158 = vpop.f32.mrb[0].mxu0
    %v1159 = vpop.f32.mrb[0].mxu0
    %v1160 = vadd.f32 0.0, %v1159
    %v1161 = vpop.f32.mrb[0].mxu0
    %1162 = vmatprep.mubr.bf16.mxu0 0
    %1163 = vmatmul.mubr.bf16.gmra.mrb[0].mxu0 %v1102
    %v1164 = vpop.f32.mrb[0].mxu0
    %v1165 = vadd.f32 0.0, %v1164
    %v1166 = vpop.f32.mrb[0].mxu0
    %v1167 = vpop.f32.mrb[0].mxu0
    %v1168 = vadd.f32 0.0, %v1167
    %v1169 = vpop.f32.mrb[0].mxu0
    %1170 = vmatprep.mubr.bf16.mxu0 0
    %1171 = vmatmul.mubr.bf16.gmra.mrb[0].mxu0 %v1105
    %v1172 = vpop.f32.mrb[0].mxu0
    %v1173 = vadd.f32 0.0, %v1172
    %v1174 = vpop.f32.mrb[0].mxu0
    %v1175 = vpop.f32.mrb[0].mxu0
    %v1176 = vadd.f32 0.0, %v1175
    %v1177 = vpop.f32.mrb[0].mxu0
    %1178 = vmatprep.mubr.bf16.mxu0 0
    %1179 = vmatmul.mubr.bf16.gmra.mrb[0].mxu0 %v1108
    %v1180 = vpop.f32.mrb[0].mxu0
    %v1181 = vadd.f32 0.0, %v1180
    %v1182 = vpop.f32.mrb[0].mxu0
    %v1183 = vpop.f32.mrb[0].mxu0
    %v1184 = vadd.f32 0.0, %v1183
    %v1185 = vpop.f32.mrb[0].mxu0
    %1186 = vmatprep.mubr.bf16.mxu0 0
    %1187 = vmatmul.mubr.bf16.gmra.mrb[0].mxu0 %v1111
    %v1188 = vpop.f32.mrb[0].mxu0
    %v1189 = vadd.f32 0.0, %v1188
    %v1190 = vpop.f32.mrb[0].mxu0
    %v1191 = vpop.f32.mrb[0].mxu0
    %v1192 = vadd.f32 0.0, %v1191
    %v1193 = vpop.f32.mrb[0].mxu0
    %1194 = vmatprep.mubr.bf16.mxu0 0
    %1195 = vmatmul.mubr.bf16.gmra.mrb[0].mxu0 %v1114
    %v1196 = vpop.f32.mrb[0].mxu0
    %v1197 = vadd.f32 0.0, %v1196
    %v1198 = vpop.f32.mrb[0].mxu0
    %v1199 = vpop.f32.mrb[0].mxu0
    %v1200 = vadd.f32 0.0, %v1199
    %v1201 = vpop.f32.mrb[0].mxu0
    %1202 = vmatprep.mubr.bf16.mxu0 0
    %1203 = vmatmul.mubr.bf16.gmra.mrb[0].mxu0 %v1117
    %v1204 = vpop.f32.mrb[0].mxu0
    %v1205 = vadd.f32 0.0, %v1204
    %v1206 = vpop.f32.mrb[0].mxu0
    %v1207 = vpop.f32.mrb[0].mxu0
    %v1208 = vadd.f32 0.0, %v1207
    %v1209 = vpop.f32.mrb[0].mxu0
    %1210 = vmatprep.mubr.bf16.mxu0 0
    %1211 = vmatmul.mubr.bf16.gmra.mrb[0].mxu0 %v1120
    %v1212 = vpop.f32.mrb[0].mxu0
    %v1213 = vadd.f32 0.0, %v1212
    %v1214 = vpop.f32.mrb[0].mxu0
    %v1215 = vpop.f32.mrb[0].mxu0
    %v1216 = vadd.f32 0.0, %v1215
    %v1217 = vpop.f32.mrb[0].mxu0
    %1218 = vdwg.mxu0
    %v1219 = vadd.f32 %v1025, %v1157
    %v1220 = vadd.f32 %v1026, %v1160
    %v1221 = vadd.f32 %v1027, %v1165
    %v1222 = vadd.f32 %v1028, %v1168
    %v1223 = vadd.f32 %v1029, %v1173
    %v1224 = vadd.f32 %v1030, %v1176
    %v1225 = vadd.f32 %v1031, %v1181
    %v1226 = vadd.f32 %v1032, %v1184
    %v1227 = vadd.f32 %v1033, %v1189
    %v1228 = vadd.f32 %v1034, %v1192
    %v1229 = vadd.f32 %v1035, %v1197
    %v1230 = vadd.f32 %v1036, %v1200
    %v1231 = vadd.f32 %v1037, %v1205
    %v1232 = vadd.f32 %v1038, %v1208
    %v1233 = vadd.f32 %v1039, %v1213
    %v1234 = vadd.f32 %v1040, %v1216
    %s1235 = scalar_lea.vmem [#allocation2], 32
    %v1236 = vld [vmem:[%s1235] sm:$0xff]
    %v1237 = vld [vmem:[%s1235 + $0x10] sm:$0xff]
    %v1238 = vld [vmem:[%s1235 + $0x20] sm:$0xff]
    %v1239 = vld [vmem:[%s1235 + $0x30] sm:$0xff]
    %v1240 = vld [vmem:[%s1235 + $0x40] sm:$0xff]
    %v1241 = vld [vmem:[%s1235 + $0x50] sm:$0xff]
    %v1242 = vld [vmem:[%s1235 + $0x60] sm:$0xff]
    %v1243 = vld [vmem:[%s1235 + $0x70] sm:$0xff]
    %v1244 = vld [vmem:[%s1235 + $0xa0] sm:$0xff]
    %v1245 = vld [vmem:[%s1235 + $0xb0] sm:$0xff]
    %v1246 = vld [vmem:[%s1235 + $0xc0] sm:$0xff]
    %v1247 = vld [vmem:[%s1235 + $0xd0] sm:$0xff]
    %v1248 = vld [vmem:[%s1235 + $0xe0] sm:$0xff]
    %v1249 = vld [vmem:[%s1235 + $0xf0] sm:$0xff]
    %v1250 = vld [vmem:[%s1235 + $0x100] sm:$0xff]
    %v1251 = vld [vmem:[%s1235 + $0x110] sm:$0xff]
    %v1252 = vpack.c.bf16 %v1237, %v1236
    %v1253 = vpack.c.bf16 %v1239, %v1238
    %v1254 = vpack.c.bf16 %v1241, %v1240
    %v1255 = vpack.c.bf16 %v1243, %v1242
    %v1256 = vpack.c.bf16 %v1245, %v1244
    %v1257 = vpack.c.bf16 %v1247, %v1246
    %v1258 = vpack.c.bf16 %v1249, %v1248
    %v1259 = vpack.c.bf16 %v1251, %v1250
    %s1260 = scalar_lea.vmem [#allocation3], 192
    %v1261 = vld [vmem:[%s1260] sm:$0xf]
    %v1262 = vld [vmem:[%s1260 + $0x4] sm:$0xf]
    %v1263 = vld [vmem:[%s1260 + $0x8] sm:$0xf]
    %v1264 = vld [vmem:[%s1260 + $0xc] sm:$0xf]
    %v1265 = vld [vmem:[%s1260 + $0x10] sm:$0xf]
    %v1266 = vld [vmem:[%s1260 + $0x14] sm:$0xf]
    %v1267 = vld [vmem:[%s1260 + $0x18] sm:$0xf]
    %v1268 = vld [vmem:[%s1260 + $0x1c] sm:$0xf]
    %v1277 = vunpack.c.l.b16 %v1261
    %v1278 = vunpack.c.l.b16 %v1262
    %v1279 = vunpack.c.l.b16 %v1263
    %v1280 = vunpack.c.l.b16 %v1264
    %v1281 = vunpack.c.l.b16 %v1265
    %v1282 = vunpack.c.l.b16 %v1266
    %v1283 = vunpack.c.l.b16 %v1267
    %v1284 = vunpack.c.l.b16 %v1268
    %v1285 = vpack.c.b16 %v1278, %v1277
    %v1286 = vpack.c.b16 %v1280, %v1279
    %v1287 = vpack.c.b16 %v1282, %v1281
    %v1288 = vpack.c.b16 %v1284, %v1283
    %v1294 = vsel %vm29, %v1252, 0
    %v1297 = vsel %vm29, %v1253, 0
    %v1300 = vsel %vm29, %v1254, 0
    %v1303 = vsel %vm29, %v1255, 0
    %v1306 = vsel %vm29, %v1256, 0
    %v1309 = vsel %vm29, %v1257, 0
    %v1312 = vsel %vm29, %v1258, 0
    %v1315 = vsel %vm29, %v1259, 0
    %1317 = vmatprep.subr.bf16.mxu0 0
    %1318 = vmatpush1.bf16.msra.mxu0 %v1285
    %1319 = vmatprep.subr.bf16.mxu0 0
    %1320 = vmatpush1.bf16.msra.mxu0 %v1286
    %1321 = vmatprep.subr.bf16.mxu0 0
    %1322 = vmatpush1.bf16.msra.mxu0 %v1287
    %1323 = vmatprep.subr.bf16.mxu0 0
    %1324 = vmatpush1.bf16.msra.mxu0 %v1288
    %1325 = vmatprep.subr.bf16.mxu0 0
    %1326 = vmatpush1.bf16.msra.mxu0 0
    %1327 = vmatprep.subr.bf16.mxu0 0
    %1328 = vmatpush1.bf16.msra.mxu0 0
    %1329 = vmatprep.subr.bf16.mxu0 0
    %1330 = vmatpush1.bf16.msra.mxu0 0
    %1331 = vmatprep.subr.bf16.mxu0 0
    %1332 = vmatpush1.bf16.msra.mxu0 0
    %1333 = vmatprep.subr.bf16.mxu0 0
    %1334 = vmatpush1.bf16.msra.mxu0 0
    %1335 = vmatprep.subr.bf16.mxu0 0
    %1336 = vmatpush1.bf16.msra.mxu0 0
    %1337 = vmatprep.subr.bf16.mxu0 0
    %1338 = vmatpush1.bf16.msra.mxu0 0
    %1339 = vmatprep.subr.bf16.mxu0 0
    %1340 = vmatpush1.bf16.msra.mxu0 0
    %1341 = vmatprep.subr.bf16.mxu0 0
    %1342 = vmatpush1.bf16.msra.mxu0 0
    %1343 = vmatprep.subr.bf16.mxu0 0
    %1344 = vmatpush1.bf16.msra.mxu0 0
    %1345 = vmatprep.subr.bf16.mxu0 0
    %1346 = vmatpush1.bf16.msra.mxu0 0
    %1347 = vmatprep.subr.bf16.mxu0 0
    %1348 = vmatpush1.bf16.msra.mxu0 0
    %1349 = vmatprep.mubr.bf16.mxu0 0
    %1350 = vmatmul.mubr.bf16.gmra.mrb[0].mxu0 %v1294
    %v1351 = vpop.f32.mrb[0].mxu0
    %v1352 = vadd.f32 0.0, %v1351
    %v1353 = vpop.f32.mrb[0].mxu0
    %v1354 = vpop.f32.mrb[0].mxu0
    %v1355 = vadd.f32 0.0, %v1354
    %v1356 = vpop.f32.mrb[0].mxu0
    %1357 = vmatprep.mubr.bf16.mxu0 0
    %1358 = vmatmul.mubr.bf16.gmra.mrb[0].mxu0 %v1297
    %v1359 = vpop.f32.mrb[0].mxu0
    %v1360 = vadd.f32 0.0, %v1359
    %v1361 = vpop.f32.mrb[0].mxu0
    %v1362 = vpop.f32.mrb[0].mxu0
    %v1363 = vadd.f32 0.0, %v1362
    %v1364 = vpop.f32.mrb[0].mxu0
    %1365 = vmatprep.mubr.bf16.mxu0 0
    %1366 = vmatmul.mubr.bf16.gmra.mrb[0].mxu0 %v1300
    %v1367 = vpop.f32.mrb[0].mxu0
    %v1368 = vadd.f32 0.0, %v1367
    %v1369 = vpop.f32.mrb[0].mxu0
    %v1370 = vpop.f32.mrb[0].mxu0
    %v1371 = vadd.f32 0.0, %v1370
    %v1372 = vpop.f32.mrb[0].mxu0
    %1373 = vmatprep.mubr.bf16.mxu0 0
    %1374 = vmatmul.mubr.bf16.gmra.mrb[0].mxu0 %v1303
    %v1375 = vpop.f32.mrb[0].mxu0
    %v1376 = vadd.f32 0.0, %v1375
    %v1377 = vpop.f32.mrb[0].mxu0
    %v1378 = vpop.f32.mrb[0].mxu0
    %v1379 = vadd.f32 0.0, %v1378
    %v1380 = vpop.f32.mrb[0].mxu0
    %1381 = vmatprep.mubr.bf16.mxu0 0
    %1382 = vmatmul.mubr.bf16.gmra.mrb[0].mxu0 %v1306
    %v1383 = vpop.f32.mrb[0].mxu0
    %v1384 = vadd.f32 0.0, %v1383
    %v1385 = vpop.f32.mrb[0].mxu0
    %v1386 = vpop.f32.mrb[0].mxu0
    %v1387 = vadd.f32 0.0, %v1386
    %v1388 = vpop.f32.mrb[0].mxu0
    %1389 = vmatprep.mubr.bf16.mxu0 0
    %1390 = vmatmul.mubr.bf16.gmra.mrb[0].mxu0 %v1309
    %v1391 = vpop.f32.mrb[0].mxu0
    %v1392 = vadd.f32 0.0, %v1391
    %v1393 = vpop.f32.mrb[0].mxu0
    %v1394 = vpop.f32.mrb[0].mxu0
    %v1395 = vadd.f32 0.0, %v1394
    %v1396 = vpop.f32.mrb[0].mxu0
    %1397 = vmatprep.mubr.bf16.mxu0 0
    %1398 = vmatmul.mubr.bf16.gmra.mrb[0].mxu0 %v1312
    %v1399 = vpop.f32.mrb[0].mxu0
    %v1400 = vadd.f32 0.0, %v1399
    %v1401 = vpop.f32.mrb[0].mxu0
    %v1402 = vpop.f32.mrb[0].mxu0
    %v1403 = vadd.f32 0.0, %v1402
    %v1404 = vpop.f32.mrb[0].mxu0
    %1405 = vmatprep.mubr.bf16.mxu0 0
    %1406 = vmatmul.mubr.bf16.gmra.mrb[0].mxu0 %v1315
    %v1407 = vpop.f32.mrb[0].mxu0
    %v1408 = vadd.f32 0.0, %v1407
    %v1409 = vpop.f32.mrb[0].mxu0
    %v1410 = vpop.f32.mrb[0].mxu0
    %v1411 = vadd.f32 0.0, %v1410
    %v1412 = vpop.f32.mrb[0].mxu0
    %1413 = vdwg.mxu0
    %v1414 = vadd.f32 %v1219, %v1352
    %v1415 = vadd.f32 %v1220, %v1355
    %v1416 = vadd.f32 %v1221, %v1360
    %v1417 = vadd.f32 %v1222, %v1363
    %v1418 = vadd.f32 %v1223, %v1368
    %v1419 = vadd.f32 %v1224, %v1371
    %v1420 = vadd.f32 %v1225, %v1376
    %v1421 = vadd.f32 %v1226, %v1379
    %v1422 = vadd.f32 %v1227, %v1384
    %v1423 = vadd.f32 %v1228, %v1387
    %v1424 = vadd.f32 %v1229, %v1392
    %v1425 = vadd.f32 %v1230, %v1395
    %v1426 = vadd.f32 %v1231, %v1400
    %v1427 = vadd.f32 %v1232, %v1403
    %v1428 = vadd.f32 %v1233, %v1408
    %v1429 = vadd.f32 %v1234, %v1411
    %v1430 = vld [vmem:[%s1235 + $0x1] sm:$0xff]
    %v1431 = vld [vmem:[%s1235 + $0x11] sm:$0xff]
    %v1432 = vld [vmem:[%s1235 + $0x21] sm:$0xff]
    %v1433 = vld [vmem:[%s1235 + $0x31] sm:$0xff]
    %v1434 = vld [vmem:[%s1235 + $0x41] sm:$0xff]
    %v1435 = vld [vmem:[%s1235 + $0x51] sm:$0xff]
    %v1436 = vld [vmem:[%s1235 + $0x61] sm:$0xff]
    %v1437 = vld [vmem:[%s1235 + $0x71] sm:$0xff]
    %v1438 = vld [vmem:[%s1235 + $0xa1] sm:$0xff]
    %v1439 = vld [vmem:[%s1235 + $0xb1] sm:$0xff]
    %v1440 = vld [vmem:[%s1235 + $0xc1] sm:$0xff]
    %v1441 = vld [vmem:[%s1235 + $0xd1] sm:$0xff]
    %v1442 = vld [vmem:[%s1235 + $0xe1] sm:$0xff]
    %v1443 = vld [vmem:[%s1235 + $0xf1] sm:$0xff]
    %v1444 = vld [vmem:[%s1235 + $0x101] sm:$0xff]
    %v1445 = vld [vmem:[%s1235 + $0x111] sm:$0xff]
    %v1446 = vpack.c.bf16 %v1431, %v1430
    %v1447 = vpack.c.bf16 %v1433, %v1432
    %v1448 = vpack.c.bf16 %v1435, %v1434
    %v1449 = vpack.c.bf16 %v1437, %v1436
    %v1450 = vpack.c.bf16 %v1439, %v1438
    %v1451 = vpack.c.bf16 %v1441, %v1440
    %v1452 = vpack.c.bf16 %v1443, %v1442
    %v1453 = vpack.c.bf16 %v1445, %v1444
    %s1454 = scalar_lea.vmem [#allocation3], 224
    %v1455 = vld [vmem:[%s1454] sm:$0xf]
    %v1456 = vld [vmem:[%s1454 + $0x4] sm:$0xf]
    %v1457 = vld [vmem:[%s1454 + $0x8] sm:$0xf]
    %v1458 = vld [vmem:[%s1454 + $0xc] sm:$0xf]
    %v1459 = vld [vmem:[%s1454 + $0x10] sm:$0xf]
    %v1460 = vld [vmem:[%s1454 + $0x14] sm:$0xf]
    %v1461 = vld [vmem:[%s1454 + $0x18] sm:$0xf]
    %v1462 = vld [vmem:[%s1454 + $0x1c] sm:$0xf]
    %v1471 = vunpack.c.l.b16 %v1455
    %v1472 = vunpack.c.l.b16 %v1456
    %v1473 = vunpack.c.l.b16 %v1457
    %v1474 = vunpack.c.l.b16 %v1458
    %v1475 = vunpack.c.l.b16 %v1459
    %v1476 = vunpack.c.l.b16 %v1460
    %v1477 = vunpack.c.l.b16 %v1461
    %v1478 = vunpack.c.l.b16 %v1462
    %v1479 = vpack.c.b16 %v1472, %v1471
    %v1480 = vpack.c.b16 %v1474, %v1473
    %v1481 = vpack.c.b16 %v1476, %v1475
    %v1482 = vpack.c.b16 %v1478, %v1477
    %v1488 = vsel %vm29, %v1446, 0
    %v1491 = vsel %vm29, %v1447, 0
    %v1494 = vsel %vm29, %v1448, 0
    %v1497 = vsel %vm29, %v1449, 0
    %v1500 = vsel %vm29, %v1450, 0
    %v1503 = vsel %vm29, %v1451, 0
    %v1506 = vsel %vm29, %v1452, 0
    %v1509 = vsel %vm29, %v1453, 0
    %1511 = vmatprep.subr.bf16.mxu0 0
    %1512 = vmatpush1.bf16.msra.mxu0 %v1479
    %1513 = vmatprep.subr.bf16.mxu0 0
    %1514 = vmatpush1.bf16.msra.mxu0 %v1480
    %1515 = vmatprep.subr.bf16.mxu0 0
    %1516 = vmatpush1.bf16.msra.mxu0 %v1481
    %1517 = vmatprep.subr.bf16.mxu0 0
    %1518 = vmatpush1.bf16.msra.mxu0 %v1482
    %1519 = vmatprep.subr.bf16.mxu0 0
    %1520 = vmatpush1.bf16.msra.mxu0 0
    %1521 = vmatprep.subr.bf16.mxu0 0
    %1522 = vmatpush1.bf16.msra.mxu0 0
    %1523 = vmatprep.subr.bf16.mxu0 0
    %1524 = vmatpush1.bf16.msra.mxu0 0
    %1525 = vmatprep.subr.bf16.mxu0 0
    %1526 = vmatpush1.bf16.msra.mxu0 0
    %1527 = vmatprep.subr.bf16.mxu0 0
    %1528 = vmatpush1.bf16.msra.mxu0 0
    %1529 = vmatprep.subr.bf16.mxu0 0
    %1530 = vmatpush1.bf16.msra.mxu0 0
    %1531 = vmatprep.subr.bf16.mxu0 0
    %1532 = vmatpush1.bf16.msra.mxu0 0
    %1533 = vmatprep.subr.bf16.mxu0 0
    %1534 = vmatpush1.bf16.msra.mxu0 0
    %1535 = vmatprep.subr.bf16.mxu0 0
    %1536 = vmatpush1.bf16.msra.mxu0 0
    %1537 = vmatprep.subr.bf16.mxu0 0
    %1538 = vmatpush1.bf16.msra.mxu0 0
    %1539 = vmatprep.subr.bf16.mxu0 0
    %1540 = vmatpush1.bf16.msra.mxu0 0
    %1541 = vmatprep.subr.bf16.mxu0 0
    %1542 = vmatpush1.bf16.msra.mxu0 0
    %1543 = vmatprep.mubr.bf16.mxu0 0
    %1544 = vmatmul.mubr.bf16.gmra.mrb[0].mxu0 %v1488
    %v1545 = vpop.f32.mrb[0].mxu0
    %v1546 = vadd.f32 0.0, %v1545
    %v1547 = vpop.f32.mrb[0].mxu0
    %v1548 = vpop.f32.mrb[0].mxu0
    %v1549 = vadd.f32 0.0, %v1548
    %v1550 = vpop.f32.mrb[0].mxu0
    %1551 = vmatprep.mubr.bf16.mxu0 0
    %1552 = vmatmul.mubr.bf16.gmra.mrb[0].mxu0 %v1491
    %v1553 = vpop.f32.mrb[0].mxu0
    %v1554 = vadd.f32 0.0, %v1553
    %v1555 = vpop.f32.mrb[0].mxu0
    %v1556 = vpop.f32.mrb[0].mxu0
    %v1557 = vadd.f32 0.0, %v1556
    %v1558 = vpop.f32.mrb[0].mxu0
    %1559 = vmatprep.mubr.bf16.mxu0 0
    %1560 = vmatmul.mubr.bf16.gmra.mrb[0].mxu0 %v1494
    %v1561 = vpop.f32.mrb[0].mxu0
    %v1562 = vadd.f32 0.0, %v1561
    %v1563 = vpop.f32.mrb[0].mxu0
    %v1564 = vpop.f32.mrb[0].mxu0
    %v1565 = vadd.f32 0.0, %v1564
    %v1566 = vpop.f32.mrb[0].mxu0
    %1567 = vmatprep.mubr.bf16.mxu0 0
    %1568 = vmatmul.mubr.bf16.gmra.mrb[0].mxu0 %v1497
    %v1569 = vpop.f32.mrb[0].mxu0
    %v1570 = vadd.f32 0.0, %v1569
    %v1571 = vpop.f32.mrb[0].mxu0
    %v1572 = vpop.f32.mrb[0].mxu0
    %v1573 = vadd.f32 0.0, %v1572
    %v1574 = vpop.f32.mrb[0].mxu0
    %1575 = vmatprep.mubr.bf16.mxu0 0
    %1576 = vmatmul.mubr.bf16.gmra.mrb[0].mxu0 %v1500
    %v1577 = vpop.f32.mrb[0].mxu0
    %v1578 = vadd.f32 0.0, %v1577
    %v1579 = vpop.f32.mrb[0].mxu0
    %v1580 = vpop.f32.mrb[0].mxu0
    %v1581 = vadd.f32 0.0, %v1580
    %v1582 = vpop.f32.mrb[0].mxu0
    %1583 = vmatprep.mubr.bf16.mxu0 0
    %1584 = vmatmul.mubr.bf16.gmra.mrb[0].mxu0 %v1503
    %v1585 = vpop.f32.mrb[0].mxu0
    %v1586 = vadd.f32 0.0, %v1585
    %v1587 = vpop.f32.mrb[0].mxu0
    %v1588 = vpop.f32.mrb[0].mxu0
    %v1589 = vadd.f32 0.0, %v1588
    %v1590 = vpop.f32.mrb[0].mxu0
    %1591 = vmatprep.mubr.bf16.mxu0 0
    %1592 = vmatmul.mubr.bf16.gmra.mrb[0].mxu0 %v1506
    %v1593 = vpop.f32.mrb[0].mxu0
    %v1594 = vadd.f32 0.0, %v1593
    %v1595 = vpop.f32.mrb[0].mxu0
    %v1596 = vpop.f32.mrb[0].mxu0
    %v1597 = vadd.f32 0.0, %v1596
    %v1598 = vpop.f32.mrb[0].mxu0
    %1599 = vmatprep.mubr.bf16.mxu0 0
    %1600 = vmatmul.mubr.bf16.gmra.mrb[0].mxu0 %v1509
    %v1601 = vpop.f32.mrb[0].mxu0
    %v1602 = vadd.f32 0.0, %v1601
    %v1603 = vpop.f32.mrb[0].mxu0
    %v1604 = vpop.f32.mrb[0].mxu0
    %v1605 = vadd.f32 0.0, %v1604
    %v1606 = vpop.f32.mrb[0].mxu0
    %1607 = vdwg.mxu0
    %v1608 = vadd.f32 %v1414, %v1546
    %v1609 = vadd.f32 %v1415, %v1549
    %v1610 = vadd.f32 %v1416, %v1554
    %v1611 = vadd.f32 %v1417, %v1557
    %v1612 = vadd.f32 %v1418, %v1562
    %v1613 = vadd.f32 %v1419, %v1565
    %v1614 = vadd.f32 %v1420, %v1570
    %v1615 = vadd.f32 %v1421, %v1573
    %v1616 = vadd.f32 %v1422, %v1578
    %v1617 = vadd.f32 %v1423, %v1581
    %v1618 = vadd.f32 %v1424, %v1586
    %v1619 = vadd.f32 %v1425, %v1589
    %v1620 = vadd.f32 %v1426, %v1594
    %v1621 = vadd.f32 %v1427, %v1597
    %v1622 = vadd.f32 %v1428, %v1602
    %v1623 = vadd.f32 %v1429, %v1605
    %v1624 = vld [vmem:[%s1235 + $0x2] sm:$0xff]
    %v1625 = vld [vmem:[%s1235 + $0x12] sm:$0xff]
    %v1626 = vld [vmem:[%s1235 + $0x22] sm:$0xff]
    %v1627 = vld [vmem:[%s1235 + $0x32] sm:$0xff]
    %v1628 = vld [vmem:[%s1235 + $0x42] sm:$0xff]
    %v1629 = vld [vmem:[%s1235 + $0x52] sm:$0xff]
    %v1630 = vld [vmem:[%s1235 + $0x62] sm:$0xff]
    %v1631 = vld [vmem:[%s1235 + $0x72] sm:$0xff]
    %v1632 = vld [vmem:[%s1235 + $0xa2] sm:$0xff]
    %v1633 = vld [vmem:[%s1235 + $0xb2] sm:$0xff]
    %v1634 = vld [vmem:[%s1235 + $0xc2] sm:$0xff]
    %v1635 = vld [vmem:[%s1235 + $0xd2] sm:$0xff]
    %v1636 = vld [vmem:[%s1235 + $0xe2] sm:$0xff]
    %v1637 = vld [vmem:[%s1235 + $0xf2] sm:$0xff]
    %v1638 = vld [vmem:[%s1235 + $0x102] sm:$0xff]
    %v1639 = vld [vmem:[%s1235 + $0x112] sm:$0xff]
    %v1640 = vpack.c.bf16 %v1625, %v1624
    %v1641 = vpack.c.bf16 %v1627, %v1626
    %v1642 = vpack.c.bf16 %v1629, %v1628
    %v1643 = vpack.c.bf16 %v1631, %v1630
    %v1644 = vpack.c.bf16 %v1633, %v1632
    %v1645 = vpack.c.bf16 %v1635, %v1634
    %v1646 = vpack.c.bf16 %v1637, %v1636
    %v1647 = vpack.c.bf16 %v1639, %v1638
    %s1648 = scalar_lea.vmem [#allocation3], 256
    %v1649 = vld [vmem:[%s1648] sm:$0xf]
    %v1650 = vld [vmem:[%s1648 + $0x4] sm:$0xf]
    %v1651 = vld [vmem:[%s1648 + $0x8] sm:$0xf]
    %v1652 = vld [vmem:[%s1648 + $0xc] sm:$0xf]
    %v1653 = vld [vmem:[%s1648 + $0x10] sm:$0xf]
    %v1654 = vld [vmem:[%s1648 + $0x14] sm:$0xf]
    %v1655 = vld [vmem:[%s1648 + $0x18] sm:$0xf]
    %v1656 = vld [vmem:[%s1648 + $0x1c] sm:$0xf]
    %v1665 = vunpack.c.l.b16 %v1649
    %v1666 = vunpack.c.l.b16 %v1650
    %v1667 = vunpack.c.l.b16 %v1651
    %v1668 = vunpack.c.l.b16 %v1652
    %v1669 = vunpack.c.l.b16 %v1653
    %v1670 = vunpack.c.l.b16 %v1654
    %v1671 = vunpack.c.l.b16 %v1655
    %v1672 = vunpack.c.l.b16 %v1656
    %v1673 = vpack.c.b16 %v1666, %v1665
    %v1674 = vpack.c.b16 %v1668, %v1667
    %v1675 = vpack.c.b16 %v1670, %v1669
    %v1676 = vpack.c.b16 %v1672, %v1671
    %v1682 = vsel %vm29, %v1640, 0
    %v1685 = vsel %vm29, %v1641, 0
    %v1688 = vsel %vm29, %v1642, 0
    %v1691 = vsel %vm29, %v1643, 0
    %v1694 = vsel %vm29, %v1644, 0
    %v1697 = vsel %vm29, %v1645, 0
    %v1700 = vsel %vm29, %v1646, 0
    %v1703 = vsel %vm29, %v1647, 0
    %1705 = vmatprep.subr.bf16.mxu0 0
    %1706 = vmatpush1.bf16.msra.mxu0 %v1673
    %1707 = vmatprep.subr.bf16.mxu0 0
    %1708 = vmatpush1.bf16.msra.mxu0 %v1674
    %1709 = vmatprep.subr.bf16.mxu0 0
    %1710 = vmatpush1.bf16.msra.mxu0 %v1675
    %1711 = vmatprep.subr.bf16.mxu0 0
    %1712 = vmatpush1.bf16.msra.mxu0 %v1676
    %1713 = vmatprep.subr.bf16.mxu0 0
    %1714 = vmatpush1.bf16.msra.mxu0 0
    %1715 = vmatprep.subr.bf16.mxu0 0
    %1716 = vmatpush1.bf16.msra.mxu0 0
    %1717 = vmatprep.subr.bf16.mxu0 0
    %1718 = vmatpush1.bf16.msra.mxu0 0
    %1719 = vmatprep.subr.bf16.mxu0 0
    %1720 = vmatpush1.bf16.msra.mxu0 0
    %1721 = vmatprep.subr.bf16.mxu0 0
    %1722 = vmatpush1.bf16.msra.mxu0 0
    %1723 = vmatprep.subr.bf16.mxu0 0
    %1724 = vmatpush1.bf16.msra.mxu0 0
    %1725 = vmatprep.subr.bf16.mxu0 0
    %1726 = vmatpush1.bf16.msra.mxu0 0
    %1727 = vmatprep.subr.bf16.mxu0 0
    %1728 = vmatpush1.bf16.msra.mxu0 0
    %1729 = vmatprep.subr.bf16.mxu0 0
    %1730 = vmatpush1.bf16.msra.mxu0 0
    %1731 = vmatprep.subr.bf16.mxu0 0
    %1732 = vmatpush1.bf16.msra.mxu0 0
    %1733 = vmatprep.subr.bf16.mxu0 0
    %1734 = vmatpush1.bf16.msra.mxu0 0
    %1735 = vmatprep.subr.bf16.mxu0 0
    %1736 = vmatpush1.bf16.msra.mxu0 0
    %1737 = vmatprep.mubr.bf16.mxu0 0
    %1738 = vmatmul.mubr.bf16.gmra.mrb[0].mxu0 %v1682
    %v1739 = vpop.f32.mrb[0].mxu0
    %v1740 = vadd.f32 0.0, %v1739
    %v1741 = vpop.f32.mrb[0].mxu0
    %v1742 = vpop.f32.mrb[0].mxu0
    %v1743 = vadd.f32 0.0, %v1742
    %v1744 = vpop.f32.mrb[0].mxu0
    %1745 = vmatprep.mubr.bf16.mxu0 0
    %1746 = vmatmul.mubr.bf16.gmra.mrb[0].mxu0 %v1685
    %v1747 = vpop.f32.mrb[0].mxu0
    %v1748 = vadd.f32 0.0, %v1747
    %v1749 = vpop.f32.mrb[0].mxu0
    %v1750 = vpop.f32.mrb[0].mxu0
    %v1751 = vadd.f32 0.0, %v1750
    %v1752 = vpop.f32.mrb[0].mxu0
    %1753 = vmatprep.mubr.bf16.mxu0 0
    %1754 = vmatmul.mubr.bf16.gmra.mrb[0].mxu0 %v1688
    %v1755 = vpop.f32.mrb[0].mxu0
    %v1756 = vadd.f32 0.0, %v1755
    %v1757 = vpop.f32.mrb[0].mxu0
    %v1758 = vpop.f32.mrb[0].mxu0
    %v1759 = vadd.f32 0.0, %v1758
    %v1760 = vpop.f32.mrb[0].mxu0
    %1761 = vmatprep.mubr.bf16.mxu0 0
    %1762 = vmatmul.mubr.bf16.gmra.mrb[0].mxu0 %v1691
    %v1763 = vpop.f32.mrb[0].mxu0
    %v1764 = vadd.f32 0.0, %v1763
    %v1765 = vpop.f32.mrb[0].mxu0
    %v1766 = vpop.f32.mrb[0].mxu0
    %v1767 = vadd.f32 0.0, %v1766
    %v1768 = vpop.f32.mrb[0].mxu0
    %1769 = vmatprep.mubr.bf16.mxu0 0
    %1770 = vmatmul.mubr.bf16.gmra.mrb[0].mxu0 %v1694
    %v1771 = vpop.f32.mrb[0].mxu0
    %v1772 = vadd.f32 0.0, %v1771
    %v1773 = vpop.f32.mrb[0].mxu0
    %v1774 = vpop.f32.mrb[0].mxu0
    %v1775 = vadd.f32 0.0, %v1774
    %v1776 = vpop.f32.mrb[0].mxu0
    %1777 = vmatprep.mubr.bf16.mxu0 0
    %1778 = vmatmul.mubr.bf16.gmra.mrb[0].mxu0 %v1697
    %v1779 = vpop.f32.mrb[0].mxu0
    %v1780 = vadd.f32 0.0, %v1779
    %v1781 = vpop.f32.mrb[0].mxu0
    %v1782 = vpop.f32.mrb[0].mxu0
    %v1783 = vadd.f32 0.0, %v1782
    %v1784 = vpop.f32.mrb[0].mxu0
    %1785 = vmatprep.mubr.bf16.mxu0 0
    %1786 = vmatmul.mubr.bf16.gmra.mrb[0].mxu0 %v1700
    %v1787 = vpop.f32.mrb[0].mxu0
    %v1788 = vadd.f32 0.0, %v1787
    %v1789 = vpop.f32.mrb[0].mxu0
    %v1790 = vpop.f32.mrb[0].mxu0
    %v1791 = vadd.f32 0.0, %v1790
    %v1792 = vpop.f32.mrb[0].mxu0
    %1793 = vmatprep.mubr.bf16.mxu0 0
    %1794 = vmatmul.mubr.bf16.gmra.mrb[0].mxu0 %v1703
    %v1795 = vpop.f32.mrb[0].mxu0
    %v1796 = vadd.f32 0.0, %v1795
    %v1797 = vpop.f32.mrb[0].mxu0
    %v1798 = vpop.f32.mrb[0].mxu0
    %v1799 = vadd.f32 0.0, %v1798
    %v1800 = vpop.f32.mrb[0].mxu0
    %1801 = vdwg.mxu0
    %v1802 = vadd.f32 %v1608, %v1740
    %v1803 = vadd.f32 %v1609, %v1743
    %v1804 = vadd.f32 %v1610, %v1748
    %v1805 = vadd.f32 %v1611, %v1751
    %v1806 = vadd.f32 %v1612, %v1756
    %v1807 = vadd.f32 %v1613, %v1759
    %v1808 = vadd.f32 %v1614, %v1764
    %v1809 = vadd.f32 %v1615, %v1767
    %v1810 = vadd.f32 %v1616, %v1772
    %v1811 = vadd.f32 %v1617, %v1775
    %v1812 = vadd.f32 %v1618, %v1780
    %v1813 = vadd.f32 %v1619, %v1783
    %v1814 = vadd.f32 %v1620, %v1788
    %v1815 = vadd.f32 %v1621, %v1791
    %v1816 = vadd.f32 %v1622, %v1796
    %v1817 = vadd.f32 %v1623, %v1799
    %v1818 = vld [vmem:[%s2] sm:$0x1]
    %v1820 = vlaneseq
    %v1821 = vshrl.u32 %v1820, 7
    %v1822 = vsub.s32 0, %v1821
    %v1823 = vrot.slane %v1818, %v1822
    %v1825 = vadd.f32 %v1802, %v1823
    %v1826 = vadd.f32 %v1803, %v1823
    %v1827 = vadd.f32 %v1804, %v1823
    %v1828 = vadd.f32 %v1805, %v1823
    %v1829 = vadd.f32 %v1806, %v1823
    %v1830 = vadd.f32 %v1807, %v1823
    %v1831 = vadd.f32 %v1808, %v1823
    %v1832 = vadd.f32 %v1809, %v1823
    %v1833 = vadd.f32 %v1810, %v1823
    %v1834 = vadd.f32 %v1811, %v1823
    %v1835 = vadd.f32 %v1812, %v1823
    %v1836 = vadd.f32 %v1813, %v1823
    %v1837 = vadd.f32 %v1814, %v1823
    %v1838 = vadd.f32 %v1815, %v1823
    %v1839 = vadd.f32 %v1816, %v1823
    %v1840 = vadd.f32 %v1817, %v1823
    %v1841 = vmax.f32 %v1825, 0.0
    %v1842 = vmax.f32 %v1826, 0.0
    %v1843 = vmax.f32 %v1827, 0.0
    %v1844 = vmax.f32 %v1828, 0.0
    %v1845 = vmax.f32 %v1829, 0.0
    %v1846 = vmax.f32 %v1830, 0.0
    %v1847 = vmax.f32 %v1831, 0.0
    %v1848 = vmax.f32 %v1832, 0.0
    %v1849 = vmax.f32 %v1833, 0.0
    %v1850 = vmax.f32 %v1834, 0.0
    %v1851 = vmax.f32 %v1835, 0.0
    %v1852 = vmax.f32 %v1836, 0.0
    %v1853 = vmax.f32 %v1837, 0.0
    %v1854 = vmax.f32 %v1838, 0.0
    %v1855 = vmax.f32 %v1839, 0.0
    %v1856 = vmax.f32 %v1840, 0.0
    %1857 = vst.msk [vmem:[%s87 + $0x1] sm:$0xff] %vm29, %v1841
    %1858 = vst.msk [vmem:[%s87 + $0x11] sm:$0xff] %vm29, %v1842
    %1859 = vst.msk [vmem:[%s87 + $0x21] sm:$0xff] %vm29, %v1843
    %1860 = vst.msk [vmem:[%s87 + $0x31] sm:$0xff] %vm29, %v1844
    %1861 = vst.msk [vmem:[%s87 + $0x41] sm:$0xff] %vm29, %v1845
    %1862 = vst.msk [vmem:[%s87 + $0x51] sm:$0xff] %vm29, %v1846
    %1863 = vst.msk [vmem:[%s87 + $0x61] sm:$0xff] %vm29, %v1847
    %1864 = vst.msk [vmem:[%s87 + $0x71] sm:$0xff] %vm29, %v1848
    %1865 = vst.msk [vmem:[%s87 + $0xa1] sm:$0xff] %vm29, %v1849
    %1866 = vst.msk [vmem:[%s87 + $0xb1] sm:$0xff] %vm29, %v1850
    %1867 = vst.msk [vmem:[%s87 + $0xc1] sm:$0xff] %vm29, %v1851
    %1868 = vst.msk [vmem:[%s87 + $0xd1] sm:$0xff] %vm29, %v1852
    %1869 = vst.msk [vmem:[%s87 + $0xe1] sm:$0xff] %vm29, %v1853
    %1870 = vst.msk [vmem:[%s87 + $0xf1] sm:$0xff] %vm29, %v1854
    %1871 = vst.msk [vmem:[%s87 + $0x101] sm:$0xff] %vm29, %v1855
    %1872 = vst.msk [vmem:[%s87 + $0x111] sm:$0xff] %vm29, %v1856
    %v1873 = vld [vmem:[#allocation2] sm:$0xff]
    %v1874 = vld [vmem:[#allocation2 + $0x10] sm:$0xff]
    %v1875 = vld [vmem:[#allocation2 + $0x20] sm:$0xff]
    %v1876 = vld [vmem:[#allocation2 + $0x30] sm:$0xff]
    %v1877 = vld [vmem:[#allocation2 + $0x40] sm:$0xff]
    %v1878 = vld [vmem:[#allocation2 + $0x50] sm:$0xff]
    %v1879 = vld [vmem:[#allocation2 + $0x60] sm:$0xff]
    %v1880 = vld [vmem:[#allocation2 + $0x70] sm:$0xff]
    %v1881 = vld [vmem:[#allocation2 + $0xa0] sm:$0xff]
    %v1882 = vld [vmem:[#allocation2 + $0xb0] sm:$0xff]
    %v1883 = vld [vmem:[#allocation2 + $0xc0] sm:$0xff]
    %v1884 = vld [vmem:[#allocation2 + $0xd0] sm:$0xff]
    %v1885 = vld [vmem:[#allocation2 + $0xe0] sm:$0xff]
    %v1886 = vld [vmem:[#allocation2 + $0xf0] sm:$0xff]
    %v1887 = vld [vmem:[#allocation2 + $0x100] sm:$0xff]
    %v1888 = vld [vmem:[#allocation2 + $0x110] sm:$0xff]
    %v1889 = vpack.c.bf16 %v1874, %v1873
    %v1890 = vpack.c.bf16 %v1876, %v1875
    %v1891 = vpack.c.bf16 %v1878, %v1877
    %v1892 = vpack.c.bf16 %v1880, %v1879
    %v1893 = vpack.c.bf16 %v1882, %v1881
    %v1894 = vpack.c.bf16 %v1884, %v1883
    %v1895 = vpack.c.bf16 %v1886, %v1885
    %v1896 = vpack.c.bf16 %v1888, %v1887
    %s1897 = scalar_lea.vmem [#allocation3], 288
    %v1898 = vld [vmem:[%s1897] sm:$0xf]
    %v1899 = vld [vmem:[%s1897 + $0x4] sm:$0xf]
    %v1900 = vld [vmem:[%s1897 + $0x8] sm:$0xf]
    %v1901 = vld [vmem:[%s1897 + $0xc] sm:$0xf]
    %v1902 = vld [vmem:[%s1897 + $0x10] sm:$0xf]
    %v1903 = vld [vmem:[%s1897 + $0x14] sm:$0xf]
    %v1904 = vld [vmem:[%s1897 + $0x18] sm:$0xf]
    %v1905 = vld [vmem:[%s1897 + $0x1c] sm:$0xf]
    %v1906 = vld [vmem:[#allocation2 + $0x1] sm:$0xff]
    %v1907 = vld [vmem:[#allocation2 + $0x11] sm:$0xff]
    %v1908 = vld [vmem:[#allocation2 + $0x21] sm:$0xff]
    %v1909 = vld [vmem:[#allocation2 + $0x31] sm:$0xff]
    %v1910 = vld [vmem:[#allocation2 + $0x41] sm:$0xff]
    %v1911 = vld [vmem:[#allocation2 + $0x51] sm:$0xff]
    %v1912 = vld [vmem:[#allocation2 + $0x61] sm:$0xff]
    %v1913 = vld [vmem:[#allocation2 + $0x71] sm:$0xff]
    %v1914 = vld [vmem:[#allocation2 + $0xa1] sm:$0xff]
    %v1915 = vld [vmem:[#allocation2 + $0xb1] sm:$0xff]
    %v1916 = vld [vmem:[#allocation2 + $0xc1] sm:$0xff]
    %v1917 = vld [vmem:[#allocation2 + $0xd1] sm:$0xff]
    %v1918 = vld [vmem:[#allocation2 + $0xe1] sm:$0xff]
    %v1919 = vld [vmem:[#allocation2 + $0xf1] sm:$0xff]
    %v1920 = vld [vmem:[#allocation2 + $0x101] sm:$0xff]
    %v1921 = vld [vmem:[#allocation2 + $0x111] sm:$0xff]
    %v1922 = vpack.c.bf16 %v1907, %v1906
    %v1923 = vpack.c.bf16 %v1909, %v1908
    %v1924 = vpack.c.bf16 %v1911, %v1910
    %v1925 = vpack.c.bf16 %v1913, %v1912
    %v1926 = vpack.c.bf16 %v1915, %v1914
    %v1927 = vpack.c.bf16 %v1917, %v1916
    %v1928 = vpack.c.bf16 %v1919, %v1918
    %v1929 = vpack.c.bf16 %v1921, %v1920
    %s1930 = scalar_lea.vmem [#allocation3], 320
    %v1931 = vld [vmem:[%s1930] sm:$0xf]
    %v1932 = vld [vmem:[%s1930 + $0x4] sm:$0xf]
    %v1933 = vld [vmem:[%s1930 + $0x8] sm:$0xf]
    %v1934 = vld [vmem:[%s1930 + $0xc] sm:$0xf]
    %v1935 = vld [vmem:[%s1930 + $0x10] sm:$0xf]
    %v1936 = vld [vmem:[%s1930 + $0x14] sm:$0xf]
    %v1937 = vld [vmem:[%s1930 + $0x18] sm:$0xf]
    %v1938 = vld [vmem:[%s1930 + $0x1c] sm:$0xf]
    %v1947 = vunpack.c.l.b16 %v1931
    %v1948 = vunpack.c.l.b16 %v1932
    %v1949 = vunpack.c.l.b16 %v1933
    %v1950 = vunpack.c.l.b16 %v1934
    %v1951 = vunpack.c.l.b16 %v1935
    %v1952 = vunpack.c.l.b16 %v1936
    %v1953 = vunpack.c.l.b16 %v1937
    %v1954 = vunpack.c.l.b16 %v1938
    %v1955 = vpack.c.b16 %v1948, %v1947
    %v1956 = vpack.c.b16 %v1950, %v1949
    %v1957 = vpack.c.b16 %v1952, %v1951
    %v1958 = vpack.c.b16 %v1954, %v1953
    %v1964 = vsel %vm29, %v1922, 0
    %v1967 = vsel %vm29, %v1923, 0
    %v1970 = vsel %vm29, %v1924, 0
    %v1973 = vsel %vm29, %v1925, 0
    %v1976 = vsel %vm29, %v1926, 0
    %v1979 = vsel %vm29, %v1927, 0
    %v1982 = vsel %vm29, %v1928, 0
    %v1985 = vsel %vm29, %v1929, 0
    %1987 = vmatprep.subr.bf16.mxu0 0
    %1988 = vmatpush1.bf16.msra.mxu0 %v1955
    %1989 = vmatprep.subr.bf16.mxu0 0
    %1990 = vmatpush1.bf16.msra.mxu0 %v1956
    %1991 = vmatprep.subr.bf16.mxu0 0
    %1992 = vmatpush1.bf16.msra.mxu0 %v1957
    %1993 = vmatprep.subr.bf16.mxu0 0
    %1994 = vmatpush1.bf16.msra.mxu0 %v1958
    %1995 = vmatprep.subr.bf16.mxu0 0
    %1996 = vmatpush1.bf16.msra.mxu0 0
    %1997 = vmatprep.subr.bf16.mxu0 0
    %1998 = vmatpush1.bf16.msra.mxu0 0
    %1999 = vmatprep.subr.bf16.mxu0 0
    %2000 = vmatpush1.bf16.msra.mxu0 0
    %2001 = vmatprep.subr.bf16.mxu0 0
    %2002 = vmatpush1.bf16.msra.mxu0 0
    %2003 = vmatprep.subr.bf16.mxu0 0
    %2004 = vmatpush1.bf16.msra.mxu0 0
    %2005 = vmatprep.subr.bf16.mxu0 0
    %2006 = vmatpush1.bf16.msra.mxu0 0
    %2007 = vmatprep.subr.bf16.mxu0 0
    %2008 = vmatpush1.bf16.msra.mxu0 0
    %2009 = vmatprep.subr.bf16.mxu0 0
    %2010 = vmatpush1.bf16.msra.mxu0 0
    %2011 = vmatprep.subr.bf16.mxu0 0
    %2012 = vmatpush1.bf16.msra.mxu0 0
    %2013 = vmatprep.subr.bf16.mxu0 0
    %2014 = vmatpush1.bf16.msra.mxu0 0
    %2015 = vmatprep.subr.bf16.mxu0 0
    %2016 = vmatpush1.bf16.msra.mxu0 0
    %2017 = vmatprep.subr.bf16.mxu0 0
    %2018 = vmatpush1.bf16.msra.mxu0 0
    %2019 = vmatprep.mubr.bf16.mxu0 0
    %2020 = vmatmul.mubr.bf16.gmra.mrb[0].mxu0 %v1964
    %v2021 = vpop.f32.mrb[0].mxu0
    %v2022 = vadd.f32 0.0, %v2021
    %v2023 = vpop.f32.mrb[0].mxu0
    %v2024 = vpop.f32.mrb[0].mxu0
    %v2025 = vadd.f32 0.0, %v2024
    %v2026 = vpop.f32.mrb[0].mxu0
    %2027 = vmatprep.mubr.bf16.mxu0 0
    %2028 = vmatmul.mubr.bf16.gmra.mrb[0].mxu0 %v1967
    %v2029 = vpop.f32.mrb[0].mxu0
    %v2030 = vadd.f32 0.0, %v2029
    %v2031 = vpop.f32.mrb[0].mxu0
    %v2032 = vpop.f32.mrb[0].mxu0
    %v2033 = vadd.f32 0.0, %v2032
    %v2034 = vpop.f32.mrb[0].mxu0
    %2035 = vmatprep.mubr.bf16.mxu0 0
    %2036 = vmatmul.mubr.bf16.gmra.mrb[0].mxu0 %v1970
    %v2037 = vpop.f32.mrb[0].mxu0
    %v2038 = vadd.f32 0.0, %v2037
    %v2039 = vpop.f32.mrb[0].mxu0
    %v2040 = vpop.f32.mrb[0].mxu0
    %v2041 = vadd.f32 0.0, %v2040
    %v2042 = vpop.f32.mrb[0].mxu0
    %2043 = vmatprep.mubr.bf16.mxu0 0
    %2044 = vmatmul.mubr.bf16.gmra.mrb[0].mxu0 %v1973
    %v2045 = vpop.f32.mrb[0].mxu0
    %v2046 = vadd.f32 0.0, %v2045
    %v2047 = vpop.f32.mrb[0].mxu0
    %v2048 = vpop.f32.mrb[0].mxu0
    %v2049 = vadd.f32 0.0, %v2048
    %v2050 = vpop.f32.mrb[0].mxu0
    %2051 = vmatprep.mubr.bf16.mxu0 0
    %2052 = vmatmul.mubr.bf16.gmra.mrb[0].mxu0 %v1976
    %v2053 = vpop.f32.mrb[0].mxu0
    %v2054 = vadd.f32 0.0, %v2053
    %v2055 = vpop.f32.mrb[0].mxu0
    %v2056 = vpop.f32.mrb[0].mxu0
    %v2057 = vadd.f32 0.0, %v2056
    %v2058 = vpop.f32.mrb[0].mxu0
    %2059 = vmatprep.mubr.bf16.mxu0 0
    %2060 = vmatmul.mubr.bf16.gmra.mrb[0].mxu0 %v1979
    %v2061 = vpop.f32.mrb[0].mxu0
    %v2062 = vadd.f32 0.0, %v2061
    %v2063 = vpop.f32.mrb[0].mxu0
    %v2064 = vpop.f32.mrb[0].mxu0
    %v2065 = vadd.f32 0.0, %v2064
    %v2066 = vpop.f32.mrb[0].mxu0
    %2067 = vmatprep.mubr.bf16.mxu0 0
    %2068 = vmatmul.mubr.bf16.gmra.mrb[0].mxu0 %v1982
    %v2069 = vpop.f32.mrb[0].mxu0
    %v2070 = vadd.f32 0.0, %v2069
    %v2071 = vpop.f32.mrb[0].mxu0
    %v2072 = vpop.f32.mrb[0].mxu0
    %v2073 = vadd.f32 0.0, %v2072
    %v2074 = vpop.f32.mrb[0].mxu0
    %2075 = vmatprep.mubr.bf16.mxu0 0
    %2076 = vmatmul.mubr.bf16.gmra.mrb[0].mxu0 %v1985
    %v2077 = vpop.f32.mrb[0].mxu0
    %v2078 = vadd.f32 0.0, %v2077
    %v2079 = vpop.f32.mrb[0].mxu0
    %v2080 = vpop.f32.mrb[0].mxu0
    %v2081 = vadd.f32 0.0, %v2080
    %v2082 = vpop.f32.mrb[0].mxu0
    %2083 = vdwg.mxu0
    %v2092 = vunpack.c.l.b16 %v1898
    %v2093 = vunpack.c.l.b16 %v1899
    %v2094 = vunpack.c.l.b16 %v1900
    %v2095 = vunpack.c.l.b16 %v1901
    %v2096 = vunpack.c.l.b16 %v1902
    %v2097 = vunpack.c.l.b16 %v1903
    %v2098 = vunpack.c.l.b16 %v1904
    %v2099 = vunpack.c.l.b16 %v1905
    %v2100 = vpack.c.b16 %v2093, %v2092
    %v2101 = vpack.c.b16 %v2095, %v2094
    %v2102 = vpack.c.b16 %v2097, %v2096
    %v2103 = vpack.c.b16 %v2099, %v2098
    %v2109 = vsel %vm29, %v1889, 0
    %v2112 = vsel %vm29, %v1890, 0
    %v2115 = vsel %vm29, %v1891, 0
    %v2118 = vsel %vm29, %v1892, 0
    %v2121 = vsel %vm29, %v1893, 0
    %v2124 = vsel %vm29, %v1894, 0
    %v2127 = vsel %vm29, %v1895, 0
    %v2130 = vsel %vm29, %v1896, 0
    %2132 = vmatprep.subr.bf16.mxu0 0
    %2133 = vmatpush1.bf16.msra.mxu0 %v2100
    %2134 = vmatprep.subr.bf16.mxu0 0
    %2135 = vmatpush1.bf16.msra.mxu0 %v2101
    %2136 = vmatprep.subr.bf16.mxu0 0
    %2137 = vmatpush1.bf16.msra.mxu0 %v2102
    %2138 = vmatprep.subr.bf16.mxu0 0
    %2139 = vmatpush1.bf16.msra.mxu0 %v2103
    %2140 = vmatprep.subr.bf16.mxu0 0
    %2141 = vmatpush1.bf16.msra.mxu0 0
    %2142 = vmatprep.subr.bf16.mxu0 0
    %2143 = vmatpush1.bf16.msra.mxu0 0
    %2144 = vmatprep.subr.bf16.mxu0 0
    %2145 = vmatpush1.bf16.msra.mxu0 0
    %2146 = vmatprep.subr.bf16.mxu0 0
    %2147 = vmatpush1.bf16.msra.mxu0 0
    %2148 = vmatprep.subr.bf16.mxu0 0
    %2149 = vmatpush1.bf16.msra.mxu0 0
    %2150 = vmatprep.subr.bf16.mxu0 0
    %2151 = vmatpush1.bf16.msra.mxu0 0
    %2152 = vmatprep.subr.bf16.mxu0 0
    %2153 = vmatpush1.bf16.msra.mxu0 0
    %2154 = vmatprep.subr.bf16.mxu0 0
    %2155 = vmatpush1.bf16.msra.mxu0 0
    %2156 = vmatprep.subr.bf16.mxu0 0
    %2157 = vmatpush1.bf16.msra.mxu0 0
    %2158 = vmatprep.subr.bf16.mxu0 0
    %2159 = vmatpush1.bf16.msra.mxu0 0
    %2160 = vmatprep.subr.bf16.mxu0 0
    %2161 = vmatpush1.bf16.msra.mxu0 0
    %2162 = vmatprep.subr.bf16.mxu0 0
    %2163 = vmatpush1.bf16.msra.mxu0 0
    %2164 = vmatprep.mubr.bf16.mxu0 0
    %2165 = vmatmul.mubr.bf16.gmra.mrb[0].mxu0 %v2109
    %v2166 = vpop.f32.mrb[0].mxu0
    %v2167 = vadd.f32 %v2022, %v2166
    %v2168 = vpop.f32.mrb[0].mxu0
    %v2169 = vpop.f32.mrb[0].mxu0
    %v2170 = vadd.f32 %v2025, %v2169
    %v2171 = vpop.f32.mrb[0].mxu0
    %2172 = vmatprep.mubr.bf16.mxu0 0
    %2173 = vmatmul.mubr.bf16.gmra.mrb[0].mxu0 %v2112
    %v2174 = vpop.f32.mrb[0].mxu0
    %v2175 = vadd.f32 %v2030, %v2174
    %v2176 = vpop.f32.mrb[0].mxu0
    %v2177 = vpop.f32.mrb[0].mxu0
    %v2178 = vadd.f32 %v2033, %v2177
    %v2179 = vpop.f32.mrb[0].mxu0
    %2180 = vmatprep.mubr.bf16.mxu0 0
    %2181 = vmatmul.mubr.bf16.gmra.mrb[0].mxu0 %v2115
    %v2182 = vpop.f32.mrb[0].mxu0
    %v2183 = vadd.f32 %v2038, %v2182
    %v2184 = vpop.f32.mrb[0].mxu0
    %v2185 = vpop.f32.mrb[0].mxu0
    %v2186 = vadd.f32 %v2041, %v2185
    %v2187 = vpop.f32.mrb[0].mxu0
    %2188 = vmatprep.mubr.bf16.mxu0 0
    %2189 = vmatmul.mubr.bf16.gmra.mrb[0].mxu0 %v2118
    %v2190 = vpop.f32.mrb[0].mxu0
    %v2191 = vadd.f32 %v2046, %v2190
    %v2192 = vpop.f32.mrb[0].mxu0
    %v2193 = vpop.f32.mrb[0].mxu0
    %v2194 = vadd.f32 %v2049, %v2193
    %v2195 = vpop.f32.mrb[0].mxu0
    %2196 = vmatprep.mubr.bf16.mxu0 0
    %2197 = vmatmul.mubr.bf16.gmra.mrb[0].mxu0 %v2121
    %v2198 = vpop.f32.mrb[0].mxu0
    %v2199 = vadd.f32 %v2054, %v2198
    %v2200 = vpop.f32.mrb[0].mxu0
    %v2201 = vpop.f32.mrb[0].mxu0
    %v2202 = vadd.f32 %v2057, %v2201
    %v2203 = vpop.f32.mrb[0].mxu0
    %2204 = vmatprep.mubr.bf16.mxu0 0
    %2205 = vmatmul.mubr.bf16.gmra.mrb[0].mxu0 %v2124
    %v2206 = vpop.f32.mrb[0].mxu0
    %v2207 = vadd.f32 %v2062, %v2206
    %v2208 = vpop.f32.mrb[0].mxu0
    %v2209 = vpop.f32.mrb[0].mxu0
    %v2210 = vadd.f32 %v2065, %v2209
    %v2211 = vpop.f32.mrb[0].mxu0
    %2212 = vmatprep.mubr.bf16.mxu0 0
    %2213 = vmatmul.mubr.bf16.gmra.mrb[0].mxu0 %v2127
    %v2214 = vpop.f32.mrb[0].mxu0
    %v2215 = vadd.f32 %v2070, %v2214
    %v2216 = vpop.f32.mrb[0].mxu0
    %v2217 = vpop.f32.mrb[0].mxu0
    %v2218 = vadd.f32 %v2073, %v2217
    %v2219 = vpop.f32.mrb[0].mxu0
    %2220 = vmatprep.mubr.bf16.mxu0 0
    %2221 = vmatmul.mubr.bf16.gmra.mrb[0].mxu0 %v2130
    %v2222 = vpop.f32.mrb[0].mxu0
    %v2223 = vadd.f32 %v2078, %v2222
    %v2224 = vpop.f32.mrb[0].mxu0
    %v2225 = vpop.f32.mrb[0].mxu0
    %v2226 = vadd.f32 %v2081, %v2225
    %v2227 = vpop.f32.mrb[0].mxu0
    %2228 = vdwg.mxu0
    %v2229 = vld [vmem:[#allocation2 + $0x2] sm:$0xff]
    %v2230 = vld [vmem:[#allocation2 + $0x12] sm:$0xff]
    %v2231 = vld [vmem:[#allocation2 + $0x22] sm:$0xff]
    %v2232 = vld [vmem:[#allocation2 + $0x32] sm:$0xff]
    %v2233 = vld [vmem:[#allocation2 + $0x42] sm:$0xff]
    %v2234 = vld [vmem:[#allocation2 + $0x52] sm:$0xff]
    %v2235 = vld [vmem:[#allocation2 + $0x62] sm:$0xff]
    %v2236 = vld [vmem:[#allocation2 + $0x72] sm:$0xff]
    %v2237 = vld [vmem:[#allocation2 + $0xa2] sm:$0xff]
    %v2238 = vld [vmem:[#allocation2 + $0xb2] sm:$0xff]
    %v2239 = vld [vmem:[#allocation2 + $0xc2] sm:$0xff]
    %v2240 = vld [vmem:[#allocation2 + $0xd2] sm:$0xff]
    %v2241 = vld [vmem:[#allocation2 + $0xe2] sm:$0xff]
    %v2242 = vld [vmem:[#allocation2 + $0xf2] sm:$0xff]
    %v2243 = vld [vmem:[#allocation2 + $0x102] sm:$0xff]
    %v2244 = vld [vmem:[#allocation2 + $0x112] sm:$0xff]
    %v2245 = vpack.c.bf16 %v2230, %v2229
    %v2246 = vpack.c.bf16 %v2232, %v2231
    %v2247 = vpack.c.bf16 %v2234, %v2233
    %v2248 = vpack.c.bf16 %v2236, %v2235
    %v2249 = vpack.c.bf16 %v2238, %v2237
    %v2250 = vpack.c.bf16 %v2240, %v2239
    %v2251 = vpack.c.bf16 %v2242, %v2241
    %v2252 = vpack.c.bf16 %v2244, %v2243
    %s2253 = scalar_lea.vmem [#allocation3], 352
    %v2254 = vld [vmem:[%s2253] sm:$0xf]
    %v2255 = vld [vmem:[%s2253 + $0x4] sm:$0xf]
    %v2256 = vld [vmem:[%s2253 + $0x8] sm:$0xf]
    %v2257 = vld [vmem:[%s2253 + $0xc] sm:$0xf]
    %v2258 = vld [vmem:[%s2253 + $0x10] sm:$0xf]
    %v2259 = vld [vmem:[%s2253 + $0x14] sm:$0xf]
    %v2260 = vld [vmem:[%s2253 + $0x18] sm:$0xf]
    %v2261 = vld [vmem:[%s2253 + $0x1c] sm:$0xf]
    %v2270 = vunpack.c.l.b16 %v2254
    %v2271 = vunpack.c.l.b16 %v2255
    %v2272 = vunpack.c.l.b16 %v2256
    %v2273 = vunpack.c.l.b16 %v2257
    %v2274 = vunpack.c.l.b16 %v2258
    %v2275 = vunpack.c.l.b16 %v2259
    %v2276 = vunpack.c.l.b16 %v2260
    %v2277 = vunpack.c.l.b16 %v2261
    %v2278 = vpack.c.b16 %v2271, %v2270
    %v2279 = vpack.c.b16 %v2273, %v2272
    %v2280 = vpack.c.b16 %v2275, %v2274
    %v2281 = vpack.c.b16 %v2277, %v2276
    %v2287 = vsel %vm29, %v2245, 0
    %v2290 = vsel %vm29, %v2246, 0
    %v2293 = vsel %vm29, %v2247, 0
    %v2296 = vsel %vm29, %v2248, 0
    %v2299 = vsel %vm29, %v2249, 0
    %v2302 = vsel %vm29, %v2250, 0
    %v2305 = vsel %vm29, %v2251, 0
    %v2308 = vsel %vm29, %v2252, 0
    %2310 = vmatprep.subr.bf16.mxu0 0
    %2311 = vmatpush1.bf16.msra.mxu0 %v2278
    %2312 = vmatprep.subr.bf16.mxu0 0
    %2313 = vmatpush1.bf16.msra.mxu0 %v2279
    %2314 = vmatprep.subr.bf16.mxu0 0
    %2315 = vmatpush1.bf16.msra.mxu0 %v2280
    %2316 = vmatprep.subr.bf16.mxu0 0
    %2317 = vmatpush1.bf16.msra.mxu0 %v2281
    %2318 = vmatprep.subr.bf16.mxu0 0
    %2319 = vmatpush1.bf16.msra.mxu0 0
    %2320 = vmatprep.subr.bf16.mxu0 0
    %2321 = vmatpush1.bf16.msra.mxu0 0
    %2322 = vmatprep.subr.bf16.mxu0 0
    %2323 = vmatpush1.bf16.msra.mxu0 0
    %2324 = vmatprep.subr.bf16.mxu0 0
    %2325 = vmatpush1.bf16.msra.mxu0 0
    %2326 = vmatprep.subr.bf16.mxu0 0
    %2327 = vmatpush1.bf16.msra.mxu0 0
    %2328 = vmatprep.subr.bf16.mxu0 0
    %2329 = vmatpush1.bf16.msra.mxu0 0
    %2330 = vmatprep.subr.bf16.mxu0 0
    %2331 = vmatpush1.bf16.msra.mxu0 0
    %2332 = vmatprep.subr.bf16.mxu0 0
    %2333 = vmatpush1.bf16.msra.mxu0 0
    %2334 = vmatprep.subr.bf16.mxu0 0
    %2335 = vmatpush1.bf16.msra.mxu0 0
    %2336 = vmatprep.subr.bf16.mxu0 0
    %2337 = vmatpush1.bf16.msra.mxu0 0
    %2338 = vmatprep.subr.bf16.mxu0 0
    %2339 = vmatpush1.bf16.msra.mxu0 0
    %2340 = vmatprep.subr.bf16.mxu0 0
    %2341 = vmatpush1.bf16.msra.mxu0 0
    %2342 = vmatprep.mubr.bf16.mxu0 0
    %2343 = vmatmul.mubr.bf16.gmra.mrb[0].mxu0 %v2287
    %v2344 = vpop.f32.mrb[0].mxu0
    %v2345 = vadd.f32 0.0, %v2344
    %v2346 = vpop.f32.mrb[0].mxu0
    %v2347 = vpop.f32.mrb[0].mxu0
    %v2348 = vadd.f32 0.0, %v2347
    %v2349 = vpop.f32.mrb[0].mxu0
    %2350 = vmatprep.mubr.bf16.mxu0 0
    %2351 = vmatmul.mubr.bf16.gmra.mrb[0].mxu0 %v2290
    %v2352 = vpop.f32.mrb[0].mxu0
    %v2353 = vadd.f32 0.0, %v2352
    %v2354 = vpop.f32.mrb[0].mxu0
    %v2355 = vpop.f32.mrb[0].mxu0
    %v2356 = vadd.f32 0.0, %v2355
    %v2357 = vpop.f32.mrb[0].mxu0
    %2358 = vmatprep.mubr.bf16.mxu0 0
    %2359 = vmatmul.mubr.bf16.gmra.mrb[0].mxu0 %v2293
    %v2360 = vpop.f32.mrb[0].mxu0
    %v2361 = vadd.f32 0.0, %v2360
    %v2362 = vpop.f32.mrb[0].mxu0
    %v2363 = vpop.f32.mrb[0].mxu0
    %v2364 = vadd.f32 0.0, %v2363
    %v2365 = vpop.f32.mrb[0].mxu0
    %2366 = vmatprep.mubr.bf16.mxu0 0
    %2367 = vmatmul.mubr.bf16.gmra.mrb[0].mxu0 %v2296
    %v2368 = vpop.f32.mrb[0].mxu0
    %v2369 = vadd.f32 0.0, %v2368
    %v2370 = vpop.f32.mrb[0].mxu0
    %v2371 = vpop.f32.mrb[0].mxu0
    %v2372 = vadd.f32 0.0, %v2371
    %v2373 = vpop.f32.mrb[0].mxu0
    %2374 = vmatprep.mubr.bf16.mxu0 0
    %2375 = vmatmul.mubr.bf16.gmra.mrb[0].mxu0 %v2299
    %v2376 = vpop.f32.mrb[0].mxu0
    %v2377 = vadd.f32 0.0, %v2376
    %v2378 = vpop.f32.mrb[0].mxu0
    %v2379 = vpop.f32.mrb[0].mxu0
    %v2380 = vadd.f32 0.0, %v2379
    %v2381 = vpop.f32.mrb[0].mxu0
    %2382 = vmatprep.mubr.bf16.mxu0 0
    %2383 = vmatmul.mubr.bf16.gmra.mrb[0].mxu0 %v2302
    %v2384 = vpop.f32.mrb[0].mxu0
    %v2385 = vadd.f32 0.0, %v2384
    %v2386 = vpop.f32.mrb[0].mxu0
    %v2387 = vpop.f32.mrb[0].mxu0
    %v2388 = vadd.f32 0.0, %v2387
    %v2389 = vpop.f32.mrb[0].mxu0
    %2390 = vmatprep.mubr.bf16.mxu0 0
    %2391 = vmatmul.mubr.bf16.gmra.mrb[0].mxu0 %v2305
    %v2392 = vpop.f32.mrb[0].mxu0
    %v2393 = vadd.f32 0.0, %v2392
    %v2394 = vpop.f32.mrb[0].mxu0
    %v2395 = vpop.f32.mrb[0].mxu0
    %v2396 = vadd.f32 0.0, %v2395
    %v2397 = vpop.f32.mrb[0].mxu0
    %2398 = vmatprep.mubr.bf16.mxu0 0
    %2399 = vmatmul.mubr.bf16.gmra.mrb[0].mxu0 %v2308
    %v2400 = vpop.f32.mrb[0].mxu0
    %v2401 = vadd.f32 0.0, %v2400
    %v2402 = vpop.f32.mrb[0].mxu0
    %v2403 = vpop.f32.mrb[0].mxu0
    %v2404 = vadd.f32 0.0, %v2403
    %v2405 = vpop.f32.mrb[0].mxu0
    %2406 = vdwg.mxu0
    %v2407 = vadd.f32 %v2167, %v2345
    %v2408 = vadd.f32 %v2170, %v2348
    %v2409 = vadd.f32 %v2175, %v2353
    %v2410 = vadd.f32 %v2178, %v2356
    %v2411 = vadd.f32 %v2183, %v2361
    %v2412 = vadd.f32 %v2186, %v2364
    %v2413 = vadd.f32 %v2191, %v2369
    %v2414 = vadd.f32 %v2194, %v2372
    %v2415 = vadd.f32 %v2199, %v2377
    %v2416 = vadd.f32 %v2202, %v2380
    %v2417 = vadd.f32 %v2207, %v2385
    %v2418 = vadd.f32 %v2210, %v2388
    %v2419 = vadd.f32 %v2215, %v2393
    %v2420 = vadd.f32 %v2218, %v2396
    %v2421 = vadd.f32 %v2223, %v2401
    %v2422 = vadd.f32 %v2226, %v2404
    %v2423 = vld [vmem:[%s87] sm:$0xff]
    %v2424 = vld [vmem:[%s87 + $0x10] sm:$0xff]
    %v2425 = vld [vmem:[%s87 + $0x20] sm:$0xff]
    %v2426 = vld [vmem:[%s87 + $0x30] sm:$0xff]
    %v2427 = vld [vmem:[%s87 + $0x40] sm:$0xff]
    %v2428 = vld [vmem:[%s87 + $0x50] sm:$0xff]
    %v2429 = vld [vmem:[%s87 + $0x60] sm:$0xff]
    %v2430 = vld [vmem:[%s87 + $0x70] sm:$0xff]
    %v2431 = vld [vmem:[%s87 + $0xa0] sm:$0xff]
    %v2432 = vld [vmem:[%s87 + $0xb0] sm:$0xff]
    %v2433 = vld [vmem:[%s87 + $0xc0] sm:$0xff]
    %v2434 = vld [vmem:[%s87 + $0xd0] sm:$0xff]
    %v2435 = vld [vmem:[%s87 + $0xe0] sm:$0xff]
    %v2436 = vld [vmem:[%s87 + $0xf0] sm:$0xff]
    %v2437 = vld [vmem:[%s87 + $0x100] sm:$0xff]
    %v2438 = vld [vmem:[%s87 + $0x110] sm:$0xff]
    %v2439 = vpack.c.bf16 %v2424, %v2423
    %v2440 = vpack.c.bf16 %v2426, %v2425
    %v2441 = vpack.c.bf16 %v2428, %v2427
    %v2442 = vpack.c.bf16 %v2430, %v2429
    %v2443 = vpack.c.bf16 %v2432, %v2431
    %v2444 = vpack.c.bf16 %v2434, %v2433
    %v2445 = vpack.c.bf16 %v2436, %v2435
    %v2446 = vpack.c.bf16 %v2438, %v2437
    %s2447 = scalar_lea.vmem [#allocation3], 384
    %v2448 = vld [vmem:[%s2447] sm:$0xf]
    %v2449 = vld [vmem:[%s2447 + $0x4] sm:$0xf]
    %v2450 = vld [vmem:[%s2447 + $0x8] sm:$0xf]
    %v2451 = vld [vmem:[%s2447 + $0xc] sm:$0xf]
    %v2452 = vld [vmem:[%s2447 + $0x10] sm:$0xf]
    %v2453 = vld [vmem:[%s2447 + $0x14] sm:$0xf]
    %v2454 = vld [vmem:[%s2447 + $0x18] sm:$0xf]
    %v2455 = vld [vmem:[%s2447 + $0x1c] sm:$0xf]
    %v2464 = vunpack.c.l.b16 %v2448
    %v2465 = vunpack.c.l.b16 %v2449
    %v2466 = vunpack.c.l.b16 %v2450
    %v2467 = vunpack.c.l.b16 %v2451
    %v2468 = vunpack.c.l.b16 %v2452
    %v2469 = vunpack.c.l.b16 %v2453
    %v2470 = vunpack.c.l.b16 %v2454
    %v2471 = vunpack.c.l.b16 %v2455
    %v2472 = vpack.c.b16 %v2465, %v2464
    %v2473 = vpack.c.b16 %v2467, %v2466
    %v2474 = vpack.c.b16 %v2469, %v2468
    %v2475 = vpack.c.b16 %v2471, %v2470
    %v2481 = vsel %vm29, %v2439, 0
    %v2484 = vsel %vm29, %v2440, 0
    %v2487 = vsel %vm29, %v2441, 0
    %v2490 = vsel %vm29, %v2442, 0
    %v2493 = vsel %vm29, %v2443, 0
    %v2496 = vsel %vm29, %v2444, 0
    %v2499 = vsel %vm29, %v2445, 0
    %v2502 = vsel %vm29, %v2446, 0
    %2504 = vmatprep.subr.bf16.mxu0 0
    %2505 = vmatpush1.bf16.msra.mxu0 %v2472
    %2506 = vmatprep.subr.bf16.mxu0 0
    %2507 = vmatpush1.bf16.msra.mxu0 %v2473
    %2508 = vmatprep.subr.bf16.mxu0 0
    %2509 = vmatpush1.bf16.msra.mxu0 %v2474
    %2510 = vmatprep.subr.bf16.mxu0 0
    %2511 = vmatpush1.bf16.msra.mxu0 %v2475
    %2512 = vmatprep.subr.bf16.mxu0 0
    %2513 = vmatpush1.bf16.msra.mxu0 0
    %2514 = vmatprep.subr.bf16.mxu0 0
    %2515 = vmatpush1.bf16.msra.mxu0 0
    %2516 = vmatprep.subr.bf16.mxu0 0
    %2517 = vmatpush1.bf16.msra.mxu0 0
    %2518 = vmatprep.subr.bf16.mxu0 0
    %2519 = vmatpush1.bf16.msra.mxu0 0
    %2520 = vmatprep.subr.bf16.mxu0 0
    %2521 = vmatpush1.bf16.msra.mxu0 0
    %2522 = vmatprep.subr.bf16.mxu0 0
    %2523 = vmatpush1.bf16.msra.mxu0 0
    %2524 = vmatprep.subr.bf16.mxu0 0
    %2525 = vmatpush1.bf16.msra.mxu0 0
    %2526 = vmatprep.subr.bf16.mxu0 0
    %2527 = vmatpush1.bf16.msra.mxu0 0
    %2528 = vmatprep.subr.bf16.mxu0 0
    %2529 = vmatpush1.bf16.msra.mxu0 0
    %2530 = vmatprep.subr.bf16.mxu0 0
    %2531 = vmatpush1.bf16.msra.mxu0 0
    %2532 = vmatprep.subr.bf16.mxu0 0
    %2533 = vmatpush1.bf16.msra.mxu0 0
    %2534 = vmatprep.subr.bf16.mxu0 0
    %2535 = vmatpush1.bf16.msra.mxu0 0
    %2536 = vmatprep.mubr.bf16.mxu0 0
    %2537 = vmatmul.mubr.bf16.gmra.mrb[0].mxu0 %v2481
    %v2538 = vpop.f32.mrb[0].mxu0
    %v2539 = vadd.f32 0.0, %v2538
    %v2540 = vpop.f32.mrb[0].mxu0
    %v2541 = vpop.f32.mrb[0].mxu0
    %v2542 = vadd.f32 0.0, %v2541
    %v2543 = vpop.f32.mrb[0].mxu0
    %2544 = vmatprep.mubr.bf16.mxu0 0
    %2545 = vmatmul.mubr.bf16.gmra.mrb[0].mxu0 %v2484
    %v2546 = vpop.f32.mrb[0].mxu0
    %v2547 = vadd.f32 0.0, %v2546
    %v2548 = vpop.f32.mrb[0].mxu0
    %v2549 = vpop.f32.mrb[0].mxu0
    %v2550 = vadd.f32 0.0, %v2549
    %v2551 = vpop.f32.mrb[0].mxu0
    %2552 = vmatprep.mubr.bf16.mxu0 0
    %2553 = vmatmul.mubr.bf16.gmra.mrb[0].mxu0 %v2487
    %v2554 = vpop.f32.mrb[0].mxu0
    %v2555 = vadd.f32 0.0, %v2554
    %v2556 = vpop.f32.mrb[0].mxu0
    %v2557 = vpop.f32.mrb[0].mxu0
    %v2558 = vadd.f32 0.0, %v2557
    %v2559 = vpop.f32.mrb[0].mxu0
    %2560 = vmatprep.mubr.bf16.mxu0 0
    %2561 = vmatmul.mubr.bf16.gmra.mrb[0].mxu0 %v2490
    %v2562 = vpop.f32.mrb[0].mxu0
    %v2563 = vadd.f32 0.0, %v2562
    %v2564 = vpop.f32.mrb[0].mxu0
    %v2565 = vpop.f32.mrb[0].mxu0
    %v2566 = vadd.f32 0.0, %v2565
    %v2567 = vpop.f32.mrb[0].mxu0
    %2568 = vmatprep.mubr.bf16.mxu0 0
    %2569 = vmatmul.mubr.bf16.gmra.mrb[0].mxu0 %v2493
    %v2570 = vpop.f32.mrb[0].mxu0
    %v2571 = vadd.f32 0.0, %v2570
    %v2572 = vpop.f32.mrb[0].mxu0
    %v2573 = vpop.f32.mrb[0].mxu0
    %v2574 = vadd.f32 0.0, %v2573
    %v2575 = vpop.f32.mrb[0].mxu0
    %2576 = vmatprep.mubr.bf16.mxu0 0
    %2577 = vmatmul.mubr.bf16.gmra.mrb[0].mxu0 %v2496
    %v2578 = vpop.f32.mrb[0].mxu0
    %v2579 = vadd.f32 0.0, %v2578
    %v2580 = vpop.f32.mrb[0].mxu0
    %v2581 = vpop.f32.mrb[0].mxu0
    %v2582 = vadd.f32 0.0, %v2581
    %v2583 = vpop.f32.mrb[0].mxu0
    %2584 = vmatprep.mubr.bf16.mxu0 0
    %2585 = vmatmul.mubr.bf16.gmra.mrb[0].mxu0 %v2499
    %v2586 = vpop.f32.mrb[0].mxu0
    %v2587 = vadd.f32 0.0, %v2586
    %v2588 = vpop.f32.mrb[0].mxu0
    %v2589 = vpop.f32.mrb[0].mxu0
    %v2590 = vadd.f32 0.0, %v2589
    %v2591 = vpop.f32.mrb[0].mxu0
    %2592 = vmatprep.mubr.bf16.mxu0 0
    %2593 = vmatmul.mubr.bf16.gmra.mrb[0].mxu0 %v2502
    %v2594 = vpop.f32.mrb[0].mxu0
    %v2595 = vadd.f32 0.0, %v2594
    %v2596 = vpop.f32.mrb[0].mxu0
    %v2597 = vpop.f32.mrb[0].mxu0
    %v2598 = vadd.f32 0.0, %v2597
    %v2599 = vpop.f32.mrb[0].mxu0
    %2600 = vdwg.mxu0
    %v2601 = vadd.f32 %v2407, %v2539
    %v2602 = vadd.f32 %v2408, %v2542
    %v2603 = vadd.f32 %v2409, %v2547
    %v2604 = vadd.f32 %v2410, %v2550
    %v2605 = vadd.f32 %v2411, %v2555
    %v2606 = vadd.f32 %v2412, %v2558
    %v2607 = vadd.f32 %v2413, %v2563
    %v2608 = vadd.f32 %v2414, %v2566
    %v2609 = vadd.f32 %v2415, %v2571
    %v2610 = vadd.f32 %v2416, %v2574
    %v2611 = vadd.f32 %v2417, %v2579
    %v2612 = vadd.f32 %v2418, %v2582
    %v2613 = vadd.f32 %v2419, %v2587
    %v2614 = vadd.f32 %v2420, %v2590
    %v2615 = vadd.f32 %v2421, %v2595
    %v2616 = vadd.f32 %v2422, %v2598
    %v2617 = vld [vmem:[%s87 + $0x1] sm:$0xff]
    %v2618 = vld [vmem:[%s87 + $0x11] sm:$0xff]
    %v2619 = vld [vmem:[%s87 + $0x21] sm:$0xff]
    %v2620 = vld [vmem:[%s87 + $0x31] sm:$0xff]
    %v2621 = vld [vmem:[%s87 + $0x41] sm:$0xff]
    %v2622 = vld [vmem:[%s87 + $0x51] sm:$0xff]
    %v2623 = vld [vmem:[%s87 + $0x61] sm:$0xff]
    %v2624 = vld [vmem:[%s87 + $0x71] sm:$0xff]
    %v2625 = vld [vmem:[%s87 + $0xa1] sm:$0xff]
    %v2626 = vld [vmem:[%s87 + $0xb1] sm:$0xff]
    %v2627 = vld [vmem:[%s87 + $0xc1] sm:$0xff]
    %v2628 = vld [vmem:[%s87 + $0xd1] sm:$0xff]
    %v2629 = vld [vmem:[%s87 + $0xe1] sm:$0xff]
    %v2630 = vld [vmem:[%s87 + $0xf1] sm:$0xff]
    %v2631 = vld [vmem:[%s87 + $0x101] sm:$0xff]
    %v2632 = vld [vmem:[%s87 + $0x111] sm:$0xff]
    %v2633 = vpack.c.bf16 %v2618, %v2617
    %v2634 = vpack.c.bf16 %v2620, %v2619
    %v2635 = vpack.c.bf16 %v2622, %v2621
    %v2636 = vpack.c.bf16 %v2624, %v2623
    %v2637 = vpack.c.bf16 %v2626, %v2625
    %v2638 = vpack.c.bf16 %v2628, %v2627
    %v2639 = vpack.c.bf16 %v2630, %v2629
    %v2640 = vpack.c.bf16 %v2632, %v2631
    %s2641 = scalar_lea.vmem [#allocation3], 416
    %v2642 = vld [vmem:[%s2641] sm:$0xf]
    %v2643 = vld [vmem:[%s2641 + $0x4] sm:$0xf]
    %v2644 = vld [vmem:[%s2641 + $0x8] sm:$0xf]
    %v2645 = vld [vmem:[%s2641 + $0xc] sm:$0xf]
    %v2646 = vld [vmem:[%s2641 + $0x10] sm:$0xf]
    %v2647 = vld [vmem:[%s2641 + $0x14] sm:$0xf]
    %v2648 = vld [vmem:[%s2641 + $0x18] sm:$0xf]
    %v2649 = vld [vmem:[%s2641 + $0x1c] sm:$0xf]
    %v2658 = vunpack.c.l.b16 %v2642
    %v2659 = vunpack.c.l.b16 %v2643
    %v2660 = vunpack.c.l.b16 %v2644
    %v2661 = vunpack.c.l.b16 %v2645
    %v2662 = vunpack.c.l.b16 %v2646
    %v2663 = vunpack.c.l.b16 %v2647
    %v2664 = vunpack.c.l.b16 %v2648
    %v2665 = vunpack.c.l.b16 %v2649
    %v2666 = vpack.c.b16 %v2659, %v2658
    %v2667 = vpack.c.b16 %v2661, %v2660
    %v2668 = vpack.c.b16 %v2663, %v2662
    %v2669 = vpack.c.b16 %v2665, %v2664
    %v2675 = vsel %vm29, %v2633, 0
    %v2678 = vsel %vm29, %v2634, 0
    %v2681 = vsel %vm29, %v2635, 0
    %v2684 = vsel %vm29, %v2636, 0
    %v2687 = vsel %vm29, %v2637, 0
    %v2690 = vsel %vm29, %v2638, 0
    %v2693 = vsel %vm29, %v2639, 0
    %v2696 = vsel %vm29, %v2640, 0
    %2698 = vmatprep.subr.bf16.mxu0 0
    %2699 = vmatpush1.bf16.msra.mxu0 %v2666
    %2700 = vmatprep.subr.bf16.mxu0 0
    %2701 = vmatpush1.bf16.msra.mxu0 %v2667
    %2702 = vmatprep.subr.bf16.mxu0 0
    %2703 = vmatpush1.bf16.msra.mxu0 %v2668
    %2704 = vmatprep.subr.bf16.mxu0 0
    %2705 = vmatpush1.bf16.msra.mxu0 %v2669
    %2706 = vmatprep.subr.bf16.mxu0 0
    %2707 = vmatpush1.bf16.msra.mxu0 0
    %2708 = vmatprep.subr.bf16.mxu0 0
    %2709 = vmatpush1.bf16.msra.mxu0 0
    %2710 = vmatprep.subr.bf16.mxu0 0
    %2711 = vmatpush1.bf16.msra.mxu0 0
    %2712 = vmatprep.subr.bf16.mxu0 0
    %2713 = vmatpush1.bf16.msra.mxu0 0
    %2714 = vmatprep.subr.bf16.mxu0 0
    %2715 = vmatpush1.bf16.msra.mxu0 0
    %2716 = vmatprep.subr.bf16.mxu0 0
    %2717 = vmatpush1.bf16.msra.mxu0 0
    %2718 = vmatprep.subr.bf16.mxu0 0
    %2719 = vmatpush1.bf16.msra.mxu0 0
    %2720 = vmatprep.subr.bf16.mxu0 0
    %2721 = vmatpush1.bf16.msra.mxu0 0
    %2722 = vmatprep.subr.bf16.mxu0 0
    %2723 = vmatpush1.bf16.msra.mxu0 0
    %2724 = vmatprep.subr.bf16.mxu0 0
    %2725 = vmatpush1.bf16.msra.mxu0 0
    %2726 = vmatprep.subr.bf16.mxu0 0
    %2727 = vmatpush1.bf16.msra.mxu0 0
    %2728 = vmatprep.subr.bf16.mxu0 0
    %2729 = vmatpush1.bf16.msra.mxu0 0
    %2730 = vmatprep.mubr.bf16.mxu0 0
    %2731 = vmatmul.mubr.bf16.gmra.mrb[0].mxu0 %v2675
    %v2732 = vpop.f32.mrb[0].mxu0
    %v2733 = vadd.f32 0.0, %v2732
    %v2734 = vpop.f32.mrb[0].mxu0
    %v2735 = vpop.f32.mrb[0].mxu0
    %v2736 = vadd.f32 0.0, %v2735
    %v2737 = vpop.f32.mrb[0].mxu0
    %2738 = vmatprep.mubr.bf16.mxu0 0
    %2739 = vmatmul.mubr.bf16.gmra.mrb[0].mxu0 %v2678
    %v2740 = vpop.f32.mrb[0].mxu0
    %v2741 = vadd.f32 0.0, %v2740
    %v2742 = vpop.f32.mrb[0].mxu0
    %v2743 = vpop.f32.mrb[0].mxu0
    %v2744 = vadd.f32 0.0, %v2743
    %v2745 = vpop.f32.mrb[0].mxu0
    %2746 = vmatprep.mubr.bf16.mxu0 0
    %2747 = vmatmul.mubr.bf16.gmra.mrb[0].mxu0 %v2681
    %v2748 = vpop.f32.mrb[0].mxu0
    %v2749 = vadd.f32 0.0, %v2748
    %v2750 = vpop.f32.mrb[0].mxu0
    %v2751 = vpop.f32.mrb[0].mxu0
    %v2752 = vadd.f32 0.0, %v2751
    %v2753 = vpop.f32.mrb[0].mxu0
    %2754 = vmatprep.mubr.bf16.mxu0 0
    %2755 = vmatmul.mubr.bf16.gmra.mrb[0].mxu0 %v2684
    %v2756 = vpop.f32.mrb[0].mxu0
    %v2757 = vadd.f32 0.0, %v2756
    %v2758 = vpop.f32.mrb[0].mxu0
    %v2759 = vpop.f32.mrb[0].mxu0
    %v2760 = vadd.f32 0.0, %v2759
    %v2761 = vpop.f32.mrb[0].mxu0
    %2762 = vmatprep.mubr.bf16.mxu0 0
    %2763 = vmatmul.mubr.bf16.gmra.mrb[0].mxu0 %v2687
    %v2764 = vpop.f32.mrb[0].mxu0
    %v2765 = vadd.f32 0.0, %v2764
    %v2766 = vpop.f32.mrb[0].mxu0
    %v2767 = vpop.f32.mrb[0].mxu0
    %v2768 = vadd.f32 0.0, %v2767
    %v2769 = vpop.f32.mrb[0].mxu0
    %2770 = vmatprep.mubr.bf16.mxu0 0
    %2771 = vmatmul.mubr.bf16.gmra.mrb[0].mxu0 %v2690
    %v2772 = vpop.f32.mrb[0].mxu0
    %v2773 = vadd.f32 0.0, %v2772
    %v2774 = vpop.f32.mrb[0].mxu0
    %v2775 = vpop.f32.mrb[0].mxu0
    %v2776 = vadd.f32 0.0, %v2775
    %v2777 = vpop.f32.mrb[0].mxu0
    %2778 = vmatprep.mubr.bf16.mxu0 0
    %2779 = vmatmul.mubr.bf16.gmra.mrb[0].mxu0 %v2693
    %v2780 = vpop.f32.mrb[0].mxu0
    %v2781 = vadd.f32 0.0, %v2780
    %v2782 = vpop.f32.mrb[0].mxu0
    %v2783 = vpop.f32.mrb[0].mxu0
    %v2784 = vadd.f32 0.0, %v2783
    %v2785 = vpop.f32.mrb[0].mxu0
    %2786 = vmatprep.mubr.bf16.mxu0 0
    %2787 = vmatmul.mubr.bf16.gmra.mrb[0].mxu0 %v2696
    %v2788 = vpop.f32.mrb[0].mxu0
    %v2789 = vadd.f32 0.0, %v2788
    %v2790 = vpop.f32.mrb[0].mxu0
    %v2791 = vpop.f32.mrb[0].mxu0
    %v2792 = vadd.f32 0.0, %v2791
    %v2793 = vpop.f32.mrb[0].mxu0
    %2794 = vdwg.mxu0
    %v2795 = vadd.f32 %v2601, %v2733
    %v2796 = vadd.f32 %v2602, %v2736
    %v2797 = vadd.f32 %v2603, %v2741
    %v2798 = vadd.f32 %v2604, %v2744
    %v2799 = vadd.f32 %v2605, %v2749
    %v2800 = vadd.f32 %v2606, %v2752
    %v2801 = vadd.f32 %v2607, %v2757
    %v2802 = vadd.f32 %v2608, %v2760
    %v2803 = vadd.f32 %v2609, %v2765
    %v2804 = vadd.f32 %v2610, %v2768
    %v2805 = vadd.f32 %v2611, %v2773
    %v2806 = vadd.f32 %v2612, %v2776
    %v2807 = vadd.f32 %v2613, %v2781
    %v2808 = vadd.f32 %v2614, %v2784
    %v2809 = vadd.f32 %v2615, %v2789
    %v2810 = vadd.f32 %v2616, %v2792
    %v2811 = vld [vmem:[%s87 + $0x2] sm:$0xff]
    %v2812 = vld [vmem:[%s87 + $0x12] sm:$0xff]
    %v2813 = vld [vmem:[%s87 + $0x22] sm:$0xff]
    %v2814 = vld [vmem:[%s87 + $0x32] sm:$0xff]
    %v2815 = vld [vmem:[%s87 + $0x42] sm:$0xff]
    %v2816 = vld [vmem:[%s87 + $0x52] sm:$0xff]
    %v2817 = vld [vmem:[%s87 + $0x62] sm:$0xff]
    %v2818 = vld [vmem:[%s87 + $0x72] sm:$0xff]
    %v2819 = vld [vmem:[%s87 + $0xa2] sm:$0xff]
    %v2820 = vld [vmem:[%s87 + $0xb2] sm:$0xff]
    %v2821 = vld [vmem:[%s87 + $0xc2] sm:$0xff]
    %v2822 = vld [vmem:[%s87 + $0xd2] sm:$0xff]
    %v2823 = vld [vmem:[%s87 + $0xe2] sm:$0xff]
    %v2824 = vld [vmem:[%s87 + $0xf2] sm:$0xff]
    %v2825 = vld [vmem:[%s87 + $0x102] sm:$0xff]
    %v2826 = vld [vmem:[%s87 + $0x112] sm:$0xff]
    %v2827 = vpack.c.bf16 %v2812, %v2811
    %v2828 = vpack.c.bf16 %v2814, %v2813
    %v2829 = vpack.c.bf16 %v2816, %v2815
    %v2830 = vpack.c.bf16 %v2818, %v2817
    %v2831 = vpack.c.bf16 %v2820, %v2819
    %v2832 = vpack.c.bf16 %v2822, %v2821
    %v2833 = vpack.c.bf16 %v2824, %v2823
    %v2834 = vpack.c.bf16 %v2826, %v2825
    %s2835 = scalar_lea.vmem [#allocation3], 448
    %v2836 = vld [vmem:[%s2835] sm:$0xf]
    %v2837 = vld [vmem:[%s2835 + $0x4] sm:$0xf]
    %v2838 = vld [vmem:[%s2835 + $0x8] sm:$0xf]
    %v2839 = vld [vmem:[%s2835 + $0xc] sm:$0xf]
    %v2840 = vld [vmem:[%s2835 + $0x10] sm:$0xf]
    %v2841 = vld [vmem:[%s2835 + $0x14] sm:$0xf]
    %v2842 = vld [vmem:[%s2835 + $0x18] sm:$0xf]
    %v2843 = vld [vmem:[%s2835 + $0x1c] sm:$0xf]
    %v2852 = vunpack.c.l.b16 %v2836
    %v2853 = vunpack.c.l.b16 %v2837
    %v2854 = vunpack.c.l.b16 %v2838
    %v2855 = vunpack.c.l.b16 %v2839
    %v2856 = vunpack.c.l.b16 %v2840
    %v2857 = vunpack.c.l.b16 %v2841
    %v2858 = vunpack.c.l.b16 %v2842
    %v2859 = vunpack.c.l.b16 %v2843
    %v2860 = vpack.c.b16 %v2853, %v2852
    %v2861 = vpack.c.b16 %v2855, %v2854
    %v2862 = vpack.c.b16 %v2857, %v2856
    %v2863 = vpack.c.b16 %v2859, %v2858
    %v2869 = vsel %vm29, %v2827, 0
    %v2872 = vsel %vm29, %v2828, 0
    %v2875 = vsel %vm29, %v2829, 0
    %v2878 = vsel %vm29, %v2830, 0
    %v2881 = vsel %vm29, %v2831, 0
    %v2884 = vsel %vm29, %v2832, 0
    %v2887 = vsel %vm29, %v2833, 0
    %v2890 = vsel %vm29, %v2834, 0
    %2892 = vmatprep.subr.bf16.mxu0 0
    %2893 = vmatpush1.bf16.msra.mxu0 %v2860
    %2894 = vmatprep.subr.bf16.mxu0 0
    %2895 = vmatpush1.bf16.msra.mxu0 %v2861
    %2896 = vmatprep.subr.bf16.mxu0 0
    %2897 = vmatpush1.bf16.msra.mxu0 %v2862
    %2898 = vmatprep.subr.bf16.mxu0 0
    %2899 = vmatpush1.bf16.msra.mxu0 %v2863
    %2900 = vmatprep.subr.bf16.mxu0 0
    %2901 = vmatpush1.bf16.msra.mxu0 0
    %2902 = vmatprep.subr.bf16.mxu0 0
    %2903 = vmatpush1.bf16.msra.mxu0 0
    %2904 = vmatprep.subr.bf16.mxu0 0
    %2905 = vmatpush1.bf16.msra.mxu0 0
    %2906 = vmatprep.subr.bf16.mxu0 0
    %2907 = vmatpush1.bf16.msra.mxu0 0
    %2908 = vmatprep.subr.bf16.mxu0 0
    %2909 = vmatpush1.bf16.msra.mxu0 0
    %2910 = vmatprep.subr.bf16.mxu0 0
    %2911 = vmatpush1.bf16.msra.mxu0 0
    %2912 = vmatprep.subr.bf16.mxu0 0
    %2913 = vmatpush1.bf16.msra.mxu0 0
    %2914 = vmatprep.subr.bf16.mxu0 0
    %2915 = vmatpush1.bf16.msra.mxu0 0
    %2916 = vmatprep.subr.bf16.mxu0 0
    %2917 = vmatpush1.bf16.msra.mxu0 0
    %2918 = vmatprep.subr.bf16.mxu0 0
    %2919 = vmatpush1.bf16.msra.mxu0 0
    %2920 = vmatprep.subr.bf16.mxu0 0
    %2921 = vmatpush1.bf16.msra.mxu0 0
    %2922 = vmatprep.subr.bf16.mxu0 0
    %2923 = vmatpush1.bf16.msra.mxu0 0
    %2924 = vmatprep.mubr.bf16.mxu0 0
    %2925 = vmatmul.mubr.bf16.gmra.mrb[0].mxu0 %v2869
    %v2926 = vpop.f32.mrb[0].mxu0
    %v2927 = vadd.f32 0.0, %v2926
    %v2928 = vpop.f32.mrb[0].mxu0
    %v2929 = vpop.f32.mrb[0].mxu0
    %v2930 = vadd.f32 0.0, %v2929
    %v2931 = vpop.f32.mrb[0].mxu0
    %2932 = vmatprep.mubr.bf16.mxu0 0
    %2933 = vmatmul.mubr.bf16.gmra.mrb[0].mxu0 %v2872
    %v2934 = vpop.f32.mrb[0].mxu0
    %v2935 = vadd.f32 0.0, %v2934
    %v2936 = vpop.f32.mrb[0].mxu0
    %v2937 = vpop.f32.mrb[0].mxu0
    %v2938 = vadd.f32 0.0, %v2937
    %v2939 = vpop.f32.mrb[0].mxu0
    %2940 = vmatprep.mubr.bf16.mxu0 0
    %2941 = vmatmul.mubr.bf16.gmra.mrb[0].mxu0 %v2875
    %v2942 = vpop.f32.mrb[0].mxu0
    %v2943 = vadd.f32 0.0, %v2942
    %v2944 = vpop.f32.mrb[0].mxu0
    %v2945 = vpop.f32.mrb[0].mxu0
    %v2946 = vadd.f32 0.0, %v2945
    %v2947 = vpop.f32.mrb[0].mxu0
    %2948 = vmatprep.mubr.bf16.mxu0 0
    %2949 = vmatmul.mubr.bf16.gmra.mrb[0].mxu0 %v2878
    %v2950 = vpop.f32.mrb[0].mxu0
    %v2951 = vadd.f32 0.0, %v2950
    %v2952 = vpop.f32.mrb[0].mxu0
    %v2953 = vpop.f32.mrb[0].mxu0
    %v2954 = vadd.f32 0.0, %v2953
    %v2955 = vpop.f32.mrb[0].mxu0
    %2956 = vmatprep.mubr.bf16.mxu0 0
    %2957 = vmatmul.mubr.bf16.gmra.mrb[0].mxu0 %v2881
    %v2958 = vpop.f32.mrb[0].mxu0
    %v2959 = vadd.f32 0.0, %v2958
    %v2960 = vpop.f32.mrb[0].mxu0
    %v2961 = vpop.f32.mrb[0].mxu0
    %v2962 = vadd.f32 0.0, %v2961
    %v2963 = vpop.f32.mrb[0].mxu0
    %2964 = vmatprep.mubr.bf16.mxu0 0
    %2965 = vmatmul.mubr.bf16.gmra.mrb[0].mxu0 %v2884
    %v2966 = vpop.f32.mrb[0].mxu0
    %v2967 = vadd.f32 0.0, %v2966
    %v2968 = vpop.f32.mrb[0].mxu0
    %v2969 = vpop.f32.mrb[0].mxu0
    %v2970 = vadd.f32 0.0, %v2969
    %v2971 = vpop.f32.mrb[0].mxu0
    %2972 = vmatprep.mubr.bf16.mxu0 0
    %2973 = vmatmul.mubr.bf16.gmra.mrb[0].mxu0 %v2887
    %v2974 = vpop.f32.mrb[0].mxu0
    %v2975 = vadd.f32 0.0, %v2974
    %v2976 = vpop.f32.mrb[0].mxu0
    %v2977 = vpop.f32.mrb[0].mxu0
    %v2978 = vadd.f32 0.0, %v2977
    %v2979 = vpop.f32.mrb[0].mxu0
    %2980 = vmatprep.mubr.bf16.mxu0 0
    %2981 = vmatmul.mubr.bf16.gmra.mrb[0].mxu0 %v2890
    %v2982 = vpop.f32.mrb[0].mxu0
    %v2983 = vadd.f32 0.0, %v2982
    %v2984 = vpop.f32.mrb[0].mxu0
    %v2985 = vpop.f32.mrb[0].mxu0
    %v2986 = vadd.f32 0.0, %v2985
    %v2987 = vpop.f32.mrb[0].mxu0
    %2988 = vdwg.mxu0
    %v2989 = vadd.f32 %v2795, %v2927
    %v2990 = vadd.f32 %v2796, %v2930
    %v2991 = vadd.f32 %v2797, %v2935
    %v2992 = vadd.f32 %v2798, %v2938
    %v2993 = vadd.f32 %v2799, %v2943
    %v2994 = vadd.f32 %v2800, %v2946
    %v2995 = vadd.f32 %v2801, %v2951
    %v2996 = vadd.f32 %v2802, %v2954
    %v2997 = vadd.f32 %v2803, %v2959
    %v2998 = vadd.f32 %v2804, %v2962
    %v2999 = vadd.f32 %v2805, %v2967
    %v3000 = vadd.f32 %v2806, %v2970
    %v3001 = vadd.f32 %v2807, %v2975
    %v3002 = vadd.f32 %v2808, %v2978
    %v3003 = vadd.f32 %v2809, %v2983
    %v3004 = vadd.f32 %v2810, %v2986
    %v3005 = vld [vmem:[%s1235] sm:$0xff]
    %v3006 = vld [vmem:[%s1235 + $0x10] sm:$0xff]
    %v3007 = vld [vmem:[%s1235 + $0x20] sm:$0xff]
    %v3008 = vld [vmem:[%s1235 + $0x30] sm:$0xff]
    %v3009 = vld [vmem:[%s1235 + $0x40] sm:$0xff]
    %v3010 = vld [vmem:[%s1235 + $0x50] sm:$0xff]
    %v3011 = vld [vmem:[%s1235 + $0x60] sm:$0xff]
    %v3012 = vld [vmem:[%s1235 + $0x70] sm:$0xff]
    %v3013 = vld [vmem:[%s1235 + $0xa0] sm:$0xff]
    %v3014 = vld [vmem:[%s1235 + $0xb0] sm:$0xff]
    %v3015 = vld [vmem:[%s1235 + $0xc0] sm:$0xff]
    %v3016 = vld [vmem:[%s1235 + $0xd0] sm:$0xff]
    %v3017 = vld [vmem:[%s1235 + $0xe0] sm:$0xff]
    %v3018 = vld [vmem:[%s1235 + $0xf0] sm:$0xff]
    %v3019 = vld [vmem:[%s1235 + $0x100] sm:$0xff]
    %v3020 = vld [vmem:[%s1235 + $0x110] sm:$0xff]
    %v3021 = vpack.c.bf16 %v3006, %v3005
    %v3022 = vpack.c.bf16 %v3008, %v3007
    %v3023 = vpack.c.bf16 %v3010, %v3009
    %v3024 = vpack.c.bf16 %v3012, %v3011
    %v3025 = vpack.c.bf16 %v3014, %v3013
    %v3026 = vpack.c.bf16 %v3016, %v3015
    %v3027 = vpack.c.bf16 %v3018, %v3017
    %v3028 = vpack.c.bf16 %v3020, %v3019
    %s3029 = scalar_lea.vmem [#allocation3], 480
    %v3030 = vld [vmem:[%s3029] sm:$0xf]
    %v3031 = vld [vmem:[%s3029 + $0x4] sm:$0xf]
    %v3032 = vld [vmem:[%s3029 + $0x8] sm:$0xf]
    %v3033 = vld [vmem:[%s3029 + $0xc] sm:$0xf]
    %v3034 = vld [vmem:[%s3029 + $0x10] sm:$0xf]
    %v3035 = vld [vmem:[%s3029 + $0x14] sm:$0xf]
    %v3036 = vld [vmem:[%s3029 + $0x18] sm:$0xf]
    %v3037 = vld [vmem:[%s3029 + $0x1c] sm:$0xf]
    %v3046 = vunpack.c.l.b16 %v3030
    %v3047 = vunpack.c.l.b16 %v3031
    %v3048 = vunpack.c.l.b16 %v3032
    %v3049 = vunpack.c.l.b16 %v3033
    %v3050 = vunpack.c.l.b16 %v3034
    %v3051 = vunpack.c.l.b16 %v3035
    %v3052 = vunpack.c.l.b16 %v3036
    %v3053 = vunpack.c.l.b16 %v3037
    %v3054 = vpack.c.b16 %v3047, %v3046
    %v3055 = vpack.c.b16 %v3049, %v3048
    %v3056 = vpack.c.b16 %v3051, %v3050
    %v3057 = vpack.c.b16 %v3053, %v3052
    %v3063 = vsel %vm29, %v3021, 0
    %v3066 = vsel %vm29, %v3022, 0
    %v3069 = vsel %vm29, %v3023, 0
    %v3072 = vsel %vm29, %v3024, 0
    %v3075 = vsel %vm29, %v3025, 0
    %v3078 = vsel %vm29, %v3026, 0
    %v3081 = vsel %vm29, %v3027, 0
    %v3084 = vsel %vm29, %v3028, 0
    %3086 = vmatprep.subr.bf16.mxu0 0
    %3087 = vmatpush1.bf16.msra.mxu0 %v3054
    %3088 = vmatprep.subr.bf16.mxu0 0
    %3089 = vmatpush1.bf16.msra.mxu0 %v3055
    %3090 = vmatprep.subr.bf16.mxu0 0
    %3091 = vmatpush1.bf16.msra.mxu0 %v3056
    %3092 = vmatprep.subr.bf16.mxu0 0
    %3093 = vmatpush1.bf16.msra.mxu0 %v3057
    %3094 = vmatprep.subr.bf16.mxu0 0
    %3095 = vmatpush1.bf16.msra.mxu0 0
    %3096 = vmatprep.subr.bf16.mxu0 0
    %3097 = vmatpush1.bf16.msra.mxu0 0
    %3098 = vmatprep.subr.bf16.mxu0 0
    %3099 = vmatpush1.bf16.msra.mxu0 0
    %3100 = vmatprep.subr.bf16.mxu0 0
    %3101 = vmatpush1.bf16.msra.mxu0 0
    %3102 = vmatprep.subr.bf16.mxu0 0
    %3103 = vmatpush1.bf16.msra.mxu0 0
    %3104 = vmatprep.subr.bf16.mxu0 0
    %3105 = vmatpush1.bf16.msra.mxu0 0
    %3106 = vmatprep.subr.bf16.mxu0 0
    %3107 = vmatpush1.bf16.msra.mxu0 0
    %3108 = vmatprep.subr.bf16.mxu0 0
    %3109 = vmatpush1.bf16.msra.mxu0 0
    %3110 = vmatprep.subr.bf16.mxu0 0
    %3111 = vmatpush1.bf16.msra.mxu0 0
    %3112 = vmatprep.subr.bf16.mxu0 0
    %3113 = vmatpush1.bf16.msra.mxu0 0
    %3114 = vmatprep.subr.bf16.mxu0 0
    %3115 = vmatpush1.bf16.msra.mxu0 0
    %3116 = vmatprep.subr.bf16.mxu0 0
    %3117 = vmatpush1.bf16.msra.mxu0 0
    %3118 = vmatprep.mubr.bf16.mxu0 0
    %3119 = vmatmul.mubr.bf16.gmra.mrb[0].mxu0 %v3063
    %v3120 = vpop.f32.mrb[0].mxu0
    %v3121 = vadd.f32 0.0, %v3120
    %v3122 = vpop.f32.mrb[0].mxu0
    %v3123 = vpop.f32.mrb[0].mxu0
    %v3124 = vadd.f32 0.0, %v3123
    %v3125 = vpop.f32.mrb[0].mxu0
    %3126 = vmatprep.mubr.bf16.mxu0 0
    %3127 = vmatmul.mubr.bf16.gmra.mrb[0].mxu0 %v3066
    %v3128 = vpop.f32.mrb[0].mxu0
    %v3129 = vadd.f32 0.0, %v3128
    %v3130 = vpop.f32.mrb[0].mxu0
    %v3131 = vpop.f32.mrb[0].mxu0
    %v3132 = vadd.f32 0.0, %v3131
    %v3133 = vpop.f32.mrb[0].mxu0
    %3134 = vmatprep.mubr.bf16.mxu0 0
    %3135 = vmatmul.mubr.bf16.gmra.mrb[0].mxu0 %v3069
    %v3136 = vpop.f32.mrb[0].mxu0
    %v3137 = vadd.f32 0.0, %v3136
    %v3138 = vpop.f32.mrb[0].mxu0
    %v3139 = vpop.f32.mrb[0].mxu0
    %v3140 = vadd.f32 0.0, %v3139
    %v3141 = vpop.f32.mrb[0].mxu0
    %3142 = vmatprep.mubr.bf16.mxu0 0
    %3143 = vmatmul.mubr.bf16.gmra.mrb[0].mxu0 %v3072
    %v3144 = vpop.f32.mrb[0].mxu0
    %v3145 = vadd.f32 0.0, %v3144
    %v3146 = vpop.f32.mrb[0].mxu0
    %v3147 = vpop.f32.mrb[0].mxu0
    %v3148 = vadd.f32 0.0, %v3147
    %v3149 = vpop.f32.mrb[0].mxu0
    %3150 = vmatprep.mubr.bf16.mxu0 0
    %3151 = vmatmul.mubr.bf16.gmra.mrb[0].mxu0 %v3075
    %v3152 = vpop.f32.mrb[0].mxu0
    %v3153 = vadd.f32 0.0, %v3152
    %v3154 = vpop.f32.mrb[0].mxu0
    %v3155 = vpop.f32.mrb[0].mxu0
    %v3156 = vadd.f32 0.0, %v3155
    %v3157 = vpop.f32.mrb[0].mxu0
    %3158 = vmatprep.mubr.bf16.mxu0 0
    %3159 = vmatmul.mubr.bf16.gmra.mrb[0].mxu0 %v3078
    %v3160 = vpop.f32.mrb[0].mxu0
    %v3161 = vadd.f32 0.0, %v3160
    %v3162 = vpop.f32.mrb[0].mxu0
    %v3163 = vpop.f32.mrb[0].mxu0
    %v3164 = vadd.f32 0.0, %v3163
    %v3165 = vpop.f32.mrb[0].mxu0
    %3166 = vmatprep.mubr.bf16.mxu0 0
    %3167 = vmatmul.mubr.bf16.gmra.mrb[0].mxu0 %v3081
    %v3168 = vpop.f32.mrb[0].mxu0
    %v3169 = vadd.f32 0.0, %v3168
    %v3170 = vpop.f32.mrb[0].mxu0
    %v3171 = vpop.f32.mrb[0].mxu0
    %v3172 = vadd.f32 0.0, %v3171
    %v3173 = vpop.f32.mrb[0].mxu0
    %3174 = vmatprep.mubr.bf16.mxu0 0
    %3175 = vmatmul.mubr.bf16.gmra.mrb[0].mxu0 %v3084
    %v3176 = vpop.f32.mrb[0].mxu0
    %v3177 = vadd.f32 0.0, %v3176
    %v3178 = vpop.f32.mrb[0].mxu0
    %v3179 = vpop.f32.mrb[0].mxu0
    %v3180 = vadd.f32 0.0, %v3179
    %v3181 = vpop.f32.mrb[0].mxu0
    %3182 = vdwg.mxu0
    %v3183 = vadd.f32 %v2989, %v3121
    %v3184 = vadd.f32 %v2990, %v3124
    %v3185 = vadd.f32 %v2991, %v3129
    %v3186 = vadd.f32 %v2992, %v3132
    %v3187 = vadd.f32 %v2993, %v3137
    %v3188 = vadd.f32 %v2994, %v3140
    %v3189 = vadd.f32 %v2995, %v3145
    %v3190 = vadd.f32 %v2996, %v3148
    %v3191 = vadd.f32 %v2997, %v3153
    %v3192 = vadd.f32 %v2998, %v3156
    %v3193 = vadd.f32 %v2999, %v3161
    %v3194 = vadd.f32 %v3000, %v3164
    %v3195 = vadd.f32 %v3001, %v3169
    %v3196 = vadd.f32 %v3002, %v3172
    %v3197 = vadd.f32 %v3003, %v3177
    %v3198 = vadd.f32 %v3004, %v3180
    %v3199 = vld [vmem:[%s1235 + $0x1] sm:$0xff]
    %v3200 = vld [vmem:[%s1235 + $0x11] sm:$0xff]
    %v3201 = vld [vmem:[%s1235 + $0x21] sm:$0xff]
    %v3202 = vld [vmem:[%s1235 + $0x31] sm:$0xff]
    %v3203 = vld [vmem:[%s1235 + $0x41] sm:$0xff]
    %v3204 = vld [vmem:[%s1235 + $0x51] sm:$0xff]
    %v3205 = vld [vmem:[%s1235 + $0x61] sm:$0xff]
    %v3206 = vld [vmem:[%s1235 + $0x71] sm:$0xff]
    %v3207 = vld [vmem:[%s1235 + $0xa1] sm:$0xff]
    %v3208 = vld [vmem:[%s1235 + $0xb1] sm:$0xff]
    %v3209 = vld [vmem:[%s1235 + $0xc1] sm:$0xff]
    %v3210 = vld [vmem:[%s1235 + $0xd1] sm:$0xff]
    %v3211 = vld [vmem:[%s1235 + $0xe1] sm:$0xff]
    %v3212 = vld [vmem:[%s1235 + $0xf1] sm:$0xff]
    %v3213 = vld [vmem:[%s1235 + $0x101] sm:$0xff]
    %v3214 = vld [vmem:[%s1235 + $0x111] sm:$0xff]
    %v3215 = vpack.c.bf16 %v3200, %v3199
    %v3216 = vpack.c.bf16 %v3202, %v3201
    %v3217 = vpack.c.bf16 %v3204, %v3203
    %v3218 = vpack.c.bf16 %v3206, %v3205
    %v3219 = vpack.c.bf16 %v3208, %v3207
    %v3220 = vpack.c.bf16 %v3210, %v3209
    %v3221 = vpack.c.bf16 %v3212, %v3211
    %v3222 = vpack.c.bf16 %v3214, %v3213
    %s3223 = scalar_lea.vmem [#allocation3], 512
    %v3224 = vld [vmem:[%s3223] sm:$0xf]
    %v3225 = vld [vmem:[%s3223 + $0x4] sm:$0xf]
    %v3226 = vld [vmem:[%s3223 + $0x8] sm:$0xf]
    %v3227 = vld [vmem:[%s3223 + $0xc] sm:$0xf]
    %v3228 = vld [vmem:[%s3223 + $0x10] sm:$0xf]
    %v3229 = vld [vmem:[%s3223 + $0x14] sm:$0xf]
    %v3230 = vld [vmem:[%s3223 + $0x18] sm:$0xf]
    %v3231 = vld [vmem:[%s3223 + $0x1c] sm:$0xf]
    %v3240 = vunpack.c.l.b16 %v3224
    %v3241 = vunpack.c.l.b16 %v3225
    %v3242 = vunpack.c.l.b16 %v3226
    %v3243 = vunpack.c.l.b16 %v3227
    %v3244 = vunpack.c.l.b16 %v3228
    %v3245 = vunpack.c.l.b16 %v3229
    %v3246 = vunpack.c.l.b16 %v3230
    %v3247 = vunpack.c.l.b16 %v3231
    %v3248 = vpack.c.b16 %v3241, %v3240
    %v3249 = vpack.c.b16 %v3243, %v3242
    %v3250 = vpack.c.b16 %v3245, %v3244
    %v3251 = vpack.c.b16 %v3247, %v3246
    %v3257 = vsel %vm29, %v3215, 0
    %v3260 = vsel %vm29, %v3216, 0
    %v3263 = vsel %vm29, %v3217, 0
    %v3266 = vsel %vm29, %v3218, 0
    %v3269 = vsel %vm29, %v3219, 0
    %v3272 = vsel %vm29, %v3220, 0
    %v3275 = vsel %vm29, %v3221, 0
    %v3278 = vsel %vm29, %v3222, 0
    %3280 = vmatprep.subr.bf16.mxu0 0
    %3281 = vmatpush1.bf16.msra.mxu0 %v3248
    %3282 = vmatprep.subr.bf16.mxu0 0
    %3283 = vmatpush1.bf16.msra.mxu0 %v3249
    %3284 = vmatprep.subr.bf16.mxu0 0
    %3285 = vmatpush1.bf16.msra.mxu0 %v3250
    %3286 = vmatprep.subr.bf16.mxu0 0
    %3287 = vmatpush1.bf16.msra.mxu0 %v3251
    %3288 = vmatprep.subr.bf16.mxu0 0
    %3289 = vmatpush1.bf16.msra.mxu0 0
    %3290 = vmatprep.subr.bf16.mxu0 0
    %3291 = vmatpush1.bf16.msra.mxu0 0
    %3292 = vmatprep.subr.bf16.mxu0 0
    %3293 = vmatpush1.bf16.msra.mxu0 0
    %3294 = vmatprep.subr.bf16.mxu0 0
    %3295 = vmatpush1.bf16.msra.mxu0 0
    %3296 = vmatprep.subr.bf16.mxu0 0
    %3297 = vmatpush1.bf16.msra.mxu0 0
    %3298 = vmatprep.subr.bf16.mxu0 0
    %3299 = vmatpush1.bf16.msra.mxu0 0
    %3300 = vmatprep.subr.bf16.mxu0 0
    %3301 = vmatpush1.bf16.msra.mxu0 0
    %3302 = vmatprep.subr.bf16.mxu0 0
    %3303 = vmatpush1.bf16.msra.mxu0 0
    %3304 = vmatprep.subr.bf16.mxu0 0
    %3305 = vmatpush1.bf16.msra.mxu0 0
    %3306 = vmatprep.subr.bf16.mxu0 0
    %3307 = vmatpush1.bf16.msra.mxu0 0
    %3308 = vmatprep.subr.bf16.mxu0 0
    %3309 = vmatpush1.bf16.msra.mxu0 0
    %3310 = vmatprep.subr.bf16.mxu0 0
    %3311 = vmatpush1.bf16.msra.mxu0 0
    %3312 = vmatprep.mubr.bf16.mxu0 0
    %3313 = vmatmul.mubr.bf16.gmra.mrb[0].mxu0 %v3257
    %v3314 = vpop.f32.mrb[0].mxu0
    %v3315 = vadd.f32 0.0, %v3314
    %v3316 = vpop.f32.mrb[0].mxu0
    %v3317 = vpop.f32.mrb[0].mxu0
    %v3318 = vadd.f32 0.0, %v3317
    %v3319 = vpop.f32.mrb[0].mxu0
    %3320 = vmatprep.mubr.bf16.mxu0 0
    %3321 = vmatmul.mubr.bf16.gmra.mrb[0].mxu0 %v3260
    %v3322 = vpop.f32.mrb[0].mxu0
    %v3323 = vadd.f32 0.0, %v3322
    %v3324 = vpop.f32.mrb[0].mxu0
    %v3325 = vpop.f32.mrb[0].mxu0
    %v3326 = vadd.f32 0.0, %v3325
    %v3327 = vpop.f32.mrb[0].mxu0
    %3328 = vmatprep.mubr.bf16.mxu0 0
    %3329 = vmatmul.mubr.bf16.gmra.mrb[0].mxu0 %v3263
    %v3330 = vpop.f32.mrb[0].mxu0
    %v3331 = vadd.f32 0.0, %v3330
    %v3332 = vpop.f32.mrb[0].mxu0
    %v3333 = vpop.f32.mrb[0].mxu0
    %v3334 = vadd.f32 0.0, %v3333
    %v3335 = vpop.f32.mrb[0].mxu0
    %3336 = vmatprep.mubr.bf16.mxu0 0
    %3337 = vmatmul.mubr.bf16.gmra.mrb[0].mxu0 %v3266
    %v3338 = vpop.f32.mrb[0].mxu0
    %v3339 = vadd.f32 0.0, %v3338
    %v3340 = vpop.f32.mrb[0].mxu0
    %v3341 = vpop.f32.mrb[0].mxu0
    %v3342 = vadd.f32 0.0, %v3341
    %v3343 = vpop.f32.mrb[0].mxu0
    %3344 = vmatprep.mubr.bf16.mxu0 0
    %3345 = vmatmul.mubr.bf16.gmra.mrb[0].mxu0 %v3269
    %v3346 = vpop.f32.mrb[0].mxu0
    %v3347 = vadd.f32 0.0, %v3346
    %v3348 = vpop.f32.mrb[0].mxu0
    %v3349 = vpop.f32.mrb[0].mxu0
    %v3350 = vadd.f32 0.0, %v3349
    %v3351 = vpop.f32.mrb[0].mxu0
    %3352 = vmatprep.mubr.bf16.mxu0 0
    %3353 = vmatmul.mubr.bf16.gmra.mrb[0].mxu0 %v3272
    %v3354 = vpop.f32.mrb[0].mxu0
    %v3355 = vadd.f32 0.0, %v3354
    %v3356 = vpop.f32.mrb[0].mxu0
    %v3357 = vpop.f32.mrb[0].mxu0
    %v3358 = vadd.f32 0.0, %v3357
    %v3359 = vpop.f32.mrb[0].mxu0
    %3360 = vmatprep.mubr.bf16.mxu0 0
    %3361 = vmatmul.mubr.bf16.gmra.mrb[0].mxu0 %v3275
    %v3362 = vpop.f32.mrb[0].mxu0
    %v3363 = vadd.f32 0.0, %v3362
    %v3364 = vpop.f32.mrb[0].mxu0
    %v3365 = vpop.f32.mrb[0].mxu0
    %v3366 = vadd.f32 0.0, %v3365
    %v3367 = vpop.f32.mrb[0].mxu0
    %3368 = vmatprep.mubr.bf16.mxu0 0
    %3369 = vmatmul.mubr.bf16.gmra.mrb[0].mxu0 %v3278
    %v3370 = vpop.f32.mrb[0].mxu0
    %v3371 = vadd.f32 0.0, %v3370
    %v3372 = vpop.f32.mrb[0].mxu0
    %v3373 = vpop.f32.mrb[0].mxu0
    %v3374 = vadd.f32 0.0, %v3373
    %v3375 = vpop.f32.mrb[0].mxu0
    %3376 = vdwg.mxu0
    %v3377 = vadd.f32 %v3183, %v3315
    %v3378 = vadd.f32 %v3184, %v3318
    %v3379 = vadd.f32 %v3185, %v3323
    %v3380 = vadd.f32 %v3186, %v3326
    %v3381 = vadd.f32 %v3187, %v3331
    %v3382 = vadd.f32 %v3188, %v3334
    %v3383 = vadd.f32 %v3189, %v3339
    %v3384 = vadd.f32 %v3190, %v3342
    %v3385 = vadd.f32 %v3191, %v3347
    %v3386 = vadd.f32 %v3192, %v3350
    %v3387 = vadd.f32 %v3193, %v3355
    %v3388 = vadd.f32 %v3194, %v3358
    %v3389 = vadd.f32 %v3195, %v3363
    %v3390 = vadd.f32 %v3196, %v3366
    %v3391 = vadd.f32 %v3197, %v3371
    %v3392 = vadd.f32 %v3198, %v3374
    %v3393 = vld [vmem:[%s1235 + $0x2] sm:$0xff]
    %v3394 = vld [vmem:[%s1235 + $0x12] sm:$0xff]
    %v3395 = vld [vmem:[%s1235 + $0x22] sm:$0xff]
    %v3396 = vld [vmem:[%s1235 + $0x32] sm:$0xff]
    %v3397 = vld [vmem:[%s1235 + $0x42] sm:$0xff]
    %v3398 = vld [vmem:[%s1235 + $0x52] sm:$0xff]
    %v3399 = vld [vmem:[%s1235 + $0x62] sm:$0xff]
    %v3400 = vld [vmem:[%s1235 + $0x72] sm:$0xff]
    %v3401 = vld [vmem:[%s1235 + $0xa2] sm:$0xff]
    %v3402 = vld [vmem:[%s1235 + $0xb2] sm:$0xff]
    %v3403 = vld [vmem:[%s1235 + $0xc2] sm:$0xff]
    %v3404 = vld [vmem:[%s1235 + $0xd2] sm:$0xff]
    %v3405 = vld [vmem:[%s1235 + $0xe2] sm:$0xff]
    %v3406 = vld [vmem:[%s1235 + $0xf2] sm:$0xff]
    %v3407 = vld [vmem:[%s1235 + $0x102] sm:$0xff]
    %v3408 = vld [vmem:[%s1235 + $0x112] sm:$0xff]
    %v3409 = vpack.c.bf16 %v3394, %v3393
    %v3410 = vpack.c.bf16 %v3396, %v3395
    %v3411 = vpack.c.bf16 %v3398, %v3397
    %v3412 = vpack.c.bf16 %v3400, %v3399
    %v3413 = vpack.c.bf16 %v3402, %v3401
    %v3414 = vpack.c.bf16 %v3404, %v3403
    %v3415 = vpack.c.bf16 %v3406, %v3405
    %v3416 = vpack.c.bf16 %v3408, %v3407
    %s3417 = scalar_lea.vmem [#allocation3], 544
    %v3418 = vld [vmem:[%s3417] sm:$0xf]
    %v3419 = vld [vmem:[%s3417 + $0x4] sm:$0xf]
    %v3420 = vld [vmem:[%s3417 + $0x8] sm:$0xf]
    %v3421 = vld [vmem:[%s3417 + $0xc] sm:$0xf]
    %v3422 = vld [vmem:[%s3417 + $0x10] sm:$0xf]
    %v3423 = vld [vmem:[%s3417 + $0x14] sm:$0xf]
    %v3424 = vld [vmem:[%s3417 + $0x18] sm:$0xf]
    %v3425 = vld [vmem:[%s3417 + $0x1c] sm:$0xf]
    %v3434 = vunpack.c.l.b16 %v3418
    %v3435 = vunpack.c.l.b16 %v3419
    %v3436 = vunpack.c.l.b16 %v3420
    %v3437 = vunpack.c.l.b16 %v3421
    %v3438 = vunpack.c.l.b16 %v3422
    %v3439 = vunpack.c.l.b16 %v3423
    %v3440 = vunpack.c.l.b16 %v3424
    %v3441 = vunpack.c.l.b16 %v3425
    %v3442 = vpack.c.b16 %v3435, %v3434
    %v3443 = vpack.c.b16 %v3437, %v3436
    %v3444 = vpack.c.b16 %v3439, %v3438
    %v3445 = vpack.c.b16 %v3441, %v3440
    %v3451 = vsel %vm29, %v3409, 0
    %v3454 = vsel %vm29, %v3410, 0
    %v3457 = vsel %vm29, %v3411, 0
    %v3460 = vsel %vm29, %v3412, 0
    %v3463 = vsel %vm29, %v3413, 0
    %v3466 = vsel %vm29, %v3414, 0
    %v3469 = vsel %vm29, %v3415, 0
    %v3472 = vsel %vm29, %v3416, 0
    %3474 = vmatprep.subr.bf16.mxu0 0
    %3475 = vmatpush1.bf16.msra.mxu0 %v3442
    %3476 = vmatprep.subr.bf16.mxu0 0
    %3477 = vmatpush1.bf16.msra.mxu0 %v3443
    %3478 = vmatprep.subr.bf16.mxu0 0
    %3479 = vmatpush1.bf16.msra.mxu0 %v3444
    %3480 = vmatprep.subr.bf16.mxu0 0
    %3481 = vmatpush1.bf16.msra.mxu0 %v3445
    %3482 = vmatprep.subr.bf16.mxu0 0
    %3483 = vmatpush1.bf16.msra.mxu0 0
    %3484 = vmatprep.subr.bf16.mxu0 0
    %3485 = vmatpush1.bf16.msra.mxu0 0
    %3486 = vmatprep.subr.bf16.mxu0 0
    %3487 = vmatpush1.bf16.msra.mxu0 0
    %3488 = vmatprep.subr.bf16.mxu0 0
    %3489 = vmatpush1.bf16.msra.mxu0 0
    %3490 = vmatprep.subr.bf16.mxu0 0
    %3491 = vmatpush1.bf16.msra.mxu0 0
    %3492 = vmatprep.subr.bf16.mxu0 0
    %3493 = vmatpush1.bf16.msra.mxu0 0
    %3494 = vmatprep.subr.bf16.mxu0 0
    %3495 = vmatpush1.bf16.msra.mxu0 0
    %3496 = vmatprep.subr.bf16.mxu0 0
    %3497 = vmatpush1.bf16.msra.mxu0 0
    %3498 = vmatprep.subr.bf16.mxu0 0
    %3499 = vmatpush1.bf16.msra.mxu0 0
    %3500 = vmatprep.subr.bf16.mxu0 0
    %3501 = vmatpush1.bf16.msra.mxu0 0
    %3502 = vmatprep.subr.bf16.mxu0 0
    %3503 = vmatpush1.bf16.msra.mxu0 0
    %3504 = vmatprep.subr.bf16.mxu0 0
    %3505 = vmatpush1.bf16.msra.mxu0 0
    %3506 = vmatprep.mubr.bf16.mxu0 0
    %3507 = vmatmul.mubr.bf16.gmra.mrb[0].mxu0 %v3451
    %v3508 = vpop.f32.mrb[0].mxu0
    %v3509 = vadd.f32 0.0, %v3508
    %v3510 = vpop.f32.mrb[0].mxu0
    %v3511 = vpop.f32.mrb[0].mxu0
    %v3512 = vadd.f32 0.0, %v3511
    %v3513 = vpop.f32.mrb[0].mxu0
    %3514 = vmatprep.mubr.bf16.mxu0 0
    %3515 = vmatmul.mubr.bf16.gmra.mrb[0].mxu0 %v3454
    %v3516 = vpop.f32.mrb[0].mxu0
    %v3517 = vadd.f32 0.0, %v3516
    %v3518 = vpop.f32.mrb[0].mxu0
    %v3519 = vpop.f32.mrb[0].mxu0
    %v3520 = vadd.f32 0.0, %v3519
    %v3521 = vpop.f32.mrb[0].mxu0
    %3522 = vmatprep.mubr.bf16.mxu0 0
    %3523 = vmatmul.mubr.bf16.gmra.mrb[0].mxu0 %v3457
    %v3524 = vpop.f32.mrb[0].mxu0
    %v3525 = vadd.f32 0.0, %v3524
    %v3526 = vpop.f32.mrb[0].mxu0
    %v3527 = vpop.f32.mrb[0].mxu0
    %v3528 = vadd.f32 0.0, %v3527
    %v3529 = vpop.f32.mrb[0].mxu0
    %3530 = vmatprep.mubr.bf16.mxu0 0
    %3531 = vmatmul.mubr.bf16.gmra.mrb[0].mxu0 %v3460
    %v3532 = vpop.f32.mrb[0].mxu0
    %v3533 = vadd.f32 0.0, %v3532
    %v3534 = vpop.f32.mrb[0].mxu0
    %v3535 = vpop.f32.mrb[0].mxu0
    %v3536 = vadd.f32 0.0, %v3535
    %v3537 = vpop.f32.mrb[0].mxu0
    %3538 = vmatprep.mubr.bf16.mxu0 0
    %3539 = vmatmul.mubr.bf16.gmra.mrb[0].mxu0 %v3463
    %v3540 = vpop.f32.mrb[0].mxu0
    %v3541 = vadd.f32 0.0, %v3540
    %v3542 = vpop.f32.mrb[0].mxu0
    %v3543 = vpop.f32.mrb[0].mxu0
    %v3544 = vadd.f32 0.0, %v3543
    %v3545 = vpop.f32.mrb[0].mxu0
    %3546 = vmatprep.mubr.bf16.mxu0 0
    %3547 = vmatmul.mubr.bf16.gmra.mrb[0].mxu0 %v3466
    %v3548 = vpop.f32.mrb[0].mxu0
    %v3549 = vadd.f32 0.0, %v3548
    %v3550 = vpop.f32.mrb[0].mxu0
    %v3551 = vpop.f32.mrb[0].mxu0
    %v3552 = vadd.f32 0.0, %v3551
    %v3553 = vpop.f32.mrb[0].mxu0
    %3554 = vmatprep.mubr.bf16.mxu0 0
    %3555 = vmatmul.mubr.bf16.gmra.mrb[0].mxu0 %v3469
    %v3556 = vpop.f32.mrb[0].mxu0
    %v3557 = vadd.f32 0.0, %v3556
    %v3558 = vpop.f32.mrb[0].mxu0
    %v3559 = vpop.f32.mrb[0].mxu0
    %v3560 = vadd.f32 0.0, %v3559
    %v3561 = vpop.f32.mrb[0].mxu0
    %3562 = vmatprep.mubr.bf16.mxu0 0
    %3563 = vmatmul.mubr.bf16.gmra.mrb[0].mxu0 %v3472
    %v3564 = vpop.f32.mrb[0].mxu0
    %v3565 = vadd.f32 0.0, %v3564
    %v3566 = vpop.f32.mrb[0].mxu0
    %v3567 = vpop.f32.mrb[0].mxu0
    %v3568 = vadd.f32 0.0, %v3567
    %v3569 = vpop.f32.mrb[0].mxu0
    %3570 = vdwg.mxu0
    %v3571 = vadd.f32 %v3377, %v3509
    %v3572 = vadd.f32 %v3378, %v3512
    %v3573 = vadd.f32 %v3379, %v3517
    %v3574 = vadd.f32 %v3380, %v3520
    %v3575 = vadd.f32 %v3381, %v3525
    %v3576 = vadd.f32 %v3382, %v3528
    %v3577 = vadd.f32 %v3383, %v3533
    %v3578 = vadd.f32 %v3384, %v3536
    %v3579 = vadd.f32 %v3385, %v3541
    %v3580 = vadd.f32 %v3386, %v3544
    %v3581 = vadd.f32 %v3387, %v3549
    %v3582 = vadd.f32 %v3388, %v3552
    %v3583 = vadd.f32 %v3389, %v3557
    %v3584 = vadd.f32 %v3390, %v3560
    %v3585 = vadd.f32 %v3391, %v3565
    %v3586 = vadd.f32 %v3392, %v3568
    %s3587 = scalar_lea.vmem %s2, 1
    %v3588 = vld [vmem:[%s3587] sm:$0x1]
    %v3590 = vlaneseq
    %v3591 = vshrl.u32 %v3590, 7
    %v3592 = vsub.s32 0, %v3591
    %v3593 = vrot.slane %v3588, %v3592
    %v3595 = vadd.f32 %v3571, %v3593
    %v3596 = vadd.f32 %v3572, %v3593
    %v3597 = vadd.f32 %v3573, %v3593
    %v3598 = vadd.f32 %v3574, %v3593
    %v3599 = vadd.f32 %v3575, %v3593
    %v3600 = vadd.f32 %v3576, %v3593
    %v3601 = vadd.f32 %v3577, %v3593
    %v3602 = vadd.f32 %v3578, %v3593
    %v3603 = vadd.f32 %v3579, %v3593
    %v3604 = vadd.f32 %v3580, %v3593
    %v3605 = vadd.f32 %v3581, %v3593
    %v3606 = vadd.f32 %v3582, %v3593
    %v3607 = vadd.f32 %v3583, %v3593
    %v3608 = vadd.f32 %v3584, %v3593
    %v3609 = vadd.f32 %v3585, %v3593
    %v3610 = vadd.f32 %v3586, %v3593
    %v3611 = vmax.f32 %v3595, 0.0
    %v3612 = vmax.f32 %v3596, 0.0
    %v3613 = vmax.f32 %v3597, 0.0
    %v3614 = vmax.f32 %v3598, 0.0
    %v3615 = vmax.f32 %v3599, 0.0
    %v3616 = vmax.f32 %v3600, 0.0
    %v3617 = vmax.f32 %v3601, 0.0
    %v3618 = vmax.f32 %v3602, 0.0
    %v3619 = vmax.f32 %v3603, 0.0
    %v3620 = vmax.f32 %v3604, 0.0
    %v3621 = vmax.f32 %v3605, 0.0
    %v3622 = vmax.f32 %v3606, 0.0
    %v3623 = vmax.f32 %v3607, 0.0
    %v3624 = vmax.f32 %v3608, 0.0
    %v3625 = vmax.f32 %v3609, 0.0
    %v3626 = vmax.f32 %v3610, 0.0
    %3627 = vst.msk [vmem:[%s87 + $0x1] sm:$0xff] %vm29, %v3611
    %3628 = vst.msk [vmem:[%s87 + $0x11] sm:$0xff] %vm29, %v3612
    %3629 = vst.msk [vmem:[%s87 + $0x21] sm:$0xff] %vm29, %v3613
    %3630 = vst.msk [vmem:[%s87 + $0x31] sm:$0xff] %vm29, %v3614
    %3631 = vst.msk [vmem:[%s87 + $0x41] sm:$0xff] %vm29, %v3615
    %3632 = vst.msk [vmem:[%s87 + $0x51] sm:$0xff] %vm29, %v3616
    %3633 = vst.msk [vmem:[%s87 + $0x61] sm:$0xff] %vm29, %v3617
    %3634 = vst.msk [vmem:[%s87 + $0x71] sm:$0xff] %vm29, %v3618
    %3635 = vst.msk [vmem:[%s87 + $0xa1] sm:$0xff] %vm29, %v3619
    %3636 = vst.msk [vmem:[%s87 + $0xb1] sm:$0xff] %vm29, %v3620
    %3637 = vst.msk [vmem:[%s87 + $0xc1] sm:$0xff] %vm29, %v3621
    %3638 = vst.msk [vmem:[%s87 + $0xd1] sm:$0xff] %vm29, %v3622
    %3639 = vst.msk [vmem:[%s87 + $0xe1] sm:$0xff] %vm29, %v3623
    %3640 = vst.msk [vmem:[%s87 + $0xf1] sm:$0xff] %vm29, %v3624
    %3641 = vst.msk [vmem:[%s87 + $0x101] sm:$0xff] %vm29, %v3625
    %3642 = vst.msk [vmem:[%s87 + $0x111] sm:$0xff] %vm29, %v3626
    %v3643 = vld [vmem:[#allocation2] sm:$0xff]
    %v3644 = vld [vmem:[#allocation2 + $0x10] sm:$0xff]
    %v3645 = vld [vmem:[#allocation2 + $0x20] sm:$0xff]
    %v3646 = vld [vmem:[#allocation2 + $0x30] sm:$0xff]
    %v3647 = vld [vmem:[#allocation2 + $0x40] sm:$0xff]
    %v3648 = vld [vmem:[#allocation2 + $0x50] sm:$0xff]
    %v3649 = vld [vmem:[#allocation2 + $0x60] sm:$0xff]
    %v3650 = vld [vmem:[#allocation2 + $0x70] sm:$0xff]
    %v3651 = vld [vmem:[#allocation2 + $0xa0] sm:$0xff]
    %v3652 = vld [vmem:[#allocation2 + $0xb0] sm:$0xff]
    %v3653 = vld [vmem:[#allocation2 + $0xc0] sm:$0xff]
    %v3654 = vld [vmem:[#allocation2 + $0xd0] sm:$0xff]
    %v3655 = vld [vmem:[#allocation2 + $0xe0] sm:$0xff]
    %v3656 = vld [vmem:[#allocation2 + $0xf0] sm:$0xff]
    %v3657 = vld [vmem:[#allocation2 + $0x100] sm:$0xff]
    %v3658 = vld [vmem:[#allocation2 + $0x110] sm:$0xff]
    %v3659 = vpack.c.bf16 %v3644, %v3643
    %v3660 = vpack.c.bf16 %v3646, %v3645
    %v3661 = vpack.c.bf16 %v3648, %v3647
    %v3662 = vpack.c.bf16 %v3650, %v3649
    %v3663 = vpack.c.bf16 %v3652, %v3651
    %v3664 = vpack.c.bf16 %v3654, %v3653
    %v3665 = vpack.c.bf16 %v3656, %v3655
    %v3666 = vpack.c.bf16 %v3658, %v3657
    %s3667 = scalar_lea.vmem [#allocation3], 576
    %v3668 = vld [vmem:[%s3667] sm:$0xf]
    %v3669 = vld [vmem:[%s3667 + $0x4] sm:$0xf]
    %v3670 = vld [vmem:[%s3667 + $0x8] sm:$0xf]
    %v3671 = vld [vmem:[%s3667 + $0xc] sm:$0xf]
    %v3672 = vld [vmem:[%s3667 + $0x10] sm:$0xf]
    %v3673 = vld [vmem:[%s3667 + $0x14] sm:$0xf]
    %v3674 = vld [vmem:[%s3667 + $0x18] sm:$0xf]
    %v3675 = vld [vmem:[%s3667 + $0x1c] sm:$0xf]
    %v3676 = vld [vmem:[#allocation2 + $0x1] sm:$0xff]
    %v3677 = vld [vmem:[#allocation2 + $0x11] sm:$0xff]
    %v3678 = vld [vmem:[#allocation2 + $0x21] sm:$0xff]
    %v3679 = vld [vmem:[#allocation2 + $0x31] sm:$0xff]
    %v3680 = vld [vmem:[#allocation2 + $0x41] sm:$0xff]
    %v3681 = vld [vmem:[#allocation2 + $0x51] sm:$0xff]
    %v3682 = vld [vmem:[#allocation2 + $0x61] sm:$0xff]
    %v3683 = vld [vmem:[#allocation2 + $0x71] sm:$0xff]
    %v3684 = vld [vmem:[#allocation2 + $0xa1] sm:$0xff]
    %v3685 = vld [vmem:[#allocation2 + $0xb1] sm:$0xff]
    %v3686 = vld [vmem:[#allocation2 + $0xc1] sm:$0xff]
    %v3687 = vld [vmem:[#allocation2 + $0xd1] sm:$0xff]
    %v3688 = vld [vmem:[#allocation2 + $0xe1] sm:$0xff]
    %v3689 = vld [vmem:[#allocation2 + $0xf1] sm:$0xff]
    %v3690 = vld [vmem:[#allocation2 + $0x101] sm:$0xff]
    %v3691 = vld [vmem:[#allocation2 + $0x111] sm:$0xff]
    %v3692 = vpack.c.bf16 %v3677, %v3676
    %v3693 = vpack.c.bf16 %v3679, %v3678
    %v3694 = vpack.c.bf16 %v3681, %v3680
    %v3695 = vpack.c.bf16 %v3683, %v3682
    %v3696 = vpack.c.bf16 %v3685, %v3684
    %v3697 = vpack.c.bf16 %v3687, %v3686
    %v3698 = vpack.c.bf16 %v3689, %v3688
    %v3699 = vpack.c.bf16 %v3691, %v3690
    %s3700 = scalar_lea.vmem [#allocation3], 608
    %v3701 = vld [vmem:[%s3700] sm:$0xf]
    %v3702 = vld [vmem:[%s3700 + $0x4] sm:$0xf]
    %v3703 = vld [vmem:[%s3700 + $0x8] sm:$0xf]
    %v3704 = vld [vmem:[%s3700 + $0xc] sm:$0xf]
    %v3705 = vld [vmem:[%s3700 + $0x10] sm:$0xf]
    %v3706 = vld [vmem:[%s3700 + $0x14] sm:$0xf]
    %v3707 = vld [vmem:[%s3700 + $0x18] sm:$0xf]
    %v3708 = vld [vmem:[%s3700 + $0x1c] sm:$0xf]
    %v3717 = vunpack.c.l.b16 %v3701
    %v3718 = vunpack.c.l.b16 %v3702
    %v3719 = vunpack.c.l.b16 %v3703
    %v3720 = vunpack.c.l.b16 %v3704
    %v3721 = vunpack.c.l.b16 %v3705
    %v3722 = vunpack.c.l.b16 %v3706
    %v3723 = vunpack.c.l.b16 %v3707
    %v3724 = vunpack.c.l.b16 %v3708
    %v3725 = vpack.c.b16 %v3718, %v3717
    %v3726 = vpack.c.b16 %v3720, %v3719
    %v3727 = vpack.c.b16 %v3722, %v3721
    %v3728 = vpack.c.b16 %v3724, %v3723
    %v3734 = vsel %vm29, %v3692, 0
    %v3737 = vsel %vm29, %v3693, 0
    %v3740 = vsel %vm29, %v3694, 0
    %v3743 = vsel %vm29, %v3695, 0
    %v3746 = vsel %vm29, %v3696, 0
    %v3749 = vsel %vm29, %v3697, 0
    %v3752 = vsel %vm29, %v3698, 0
    %v3755 = vsel %vm29, %v3699, 0
    %3757 = vmatprep.subr.bf16.mxu0 0
    %3758 = vmatpush1.bf16.msra.mxu0 %v3725
    %3759 = vmatprep.subr.bf16.mxu0 0
    %3760 = vmatpush1.bf16.msra.mxu0 %v3726
    %3761 = vmatprep.subr.bf16.mxu0 0
    %3762 = vmatpush1.bf16.msra.mxu0 %v3727
    %3763 = vmatprep.subr.bf16.mxu0 0
    %3764 = vmatpush1.bf16.msra.mxu0 %v3728
    %3765 = vmatprep.subr.bf16.mxu0 0
    %3766 = vmatpush1.bf16.msra.mxu0 0
    %3767 = vmatprep.subr.bf16.mxu0 0
    %3768 = vmatpush1.bf16.msra.mxu0 0
    %3769 = vmatprep.subr.bf16.mxu0 0
    %3770 = vmatpush1.bf16.msra.mxu0 0
    %3771 = vmatprep.subr.bf16.mxu0 0
    %3772 = vmatpush1.bf16.msra.mxu0 0
    %3773 = vmatprep.subr.bf16.mxu0 0
    %3774 = vmatpush1.bf16.msra.mxu0 0
    %3775 = vmatprep.subr.bf16.mxu0 0
    %3776 = vmatpush1.bf16.msra.mxu0 0
    %3777 = vmatprep.subr.bf16.mxu0 0
    %3778 = vmatpush1.bf16.msra.mxu0 0
    %3779 = vmatprep.subr.bf16.mxu0 0
    %3780 = vmatpush1.bf16.msra.mxu0 0
    %3781 = vmatprep.subr.bf16.mxu0 0
    %3782 = vmatpush1.bf16.msra.mxu0 0
    %3783 = vmatprep.subr.bf16.mxu0 0
    %3784 = vmatpush1.bf16.msra.mxu0 0
    %3785 = vmatprep.subr.bf16.mxu0 0
    %3786 = vmatpush1.bf16.msra.mxu0 0
    %3787 = vmatprep.subr.bf16.mxu0 0
    %3788 = vmatpush1.bf16.msra.mxu0 0
    %3789 = vmatprep.mubr.bf16.mxu0 0
    %3790 = vmatmul.mubr.bf16.gmra.mrb[0].mxu0 %v3734
    %v3791 = vpop.f32.mrb[0].mxu0
    %v3792 = vadd.f32 0.0, %v3791
    %v3793 = vpop.f32.mrb[0].mxu0
    %v3794 = vpop.f32.mrb[0].mxu0
    %v3795 = vadd.f32 0.0, %v3794
    %v3796 = vpop.f32.mrb[0].mxu0
    %3797 = vmatprep.mubr.bf16.mxu0 0
    %3798 = vmatmul.mubr.bf16.gmra.mrb[0].mxu0 %v3737
    %v3799 = vpop.f32.mrb[0].mxu0
    %v3800 = vadd.f32 0.0, %v3799
    %v3801 = vpop.f32.mrb[0].mxu0
    %v3802 = vpop.f32.mrb[0].mxu0
    %v3803 = vadd.f32 0.0, %v3802
    %v3804 = vpop.f32.mrb[0].mxu0
    %3805 = vmatprep.mubr.bf16.mxu0 0
    %3806 = vmatmul.mubr.bf16.gmra.mrb[0].mxu0 %v3740
    %v3807 = vpop.f32.mrb[0].mxu0
    %v3808 = vadd.f32 0.0, %v3807
    %v3809 = vpop.f32.mrb[0].mxu0
    %v3810 = vpop.f32.mrb[0].mxu0
    %v3811 = vadd.f32 0.0, %v3810
    %v3812 = vpop.f32.mrb[0].mxu0
    %3813 = vmatprep.mubr.bf16.mxu0 0
    %3814 = vmatmul.mubr.bf16.gmra.mrb[0].mxu0 %v3743
    %v3815 = vpop.f32.mrb[0].mxu0
    %v3816 = vadd.f32 0.0, %v3815
    %v3817 = vpop.f32.mrb[0].mxu0
    %v3818 = vpop.f32.mrb[0].mxu0
    %v3819 = vadd.f32 0.0, %v3818
    %v3820 = vpop.f32.mrb[0].mxu0
    %3821 = vmatprep.mubr.bf16.mxu0 0
    %3822 = vmatmul.mubr.bf16.gmra.mrb[0].mxu0 %v3746
    %v3823 = vpop.f32.mrb[0].mxu0
    %v3824 = vadd.f32 0.0, %v3823
    %v3825 = vpop.f32.mrb[0].mxu0
    %v3826 = vpop.f32.mrb[0].mxu0
    %v3827 = vadd.f32 0.0, %v3826
    %v3828 = vpop.f32.mrb[0].mxu0
    %3829 = vmatprep.mubr.bf16.mxu0 0
    %3830 = vmatmul.mubr.bf16.gmra.mrb[0].mxu0 %v3749
    %v3831 = vpop.f32.mrb[0].mxu0
    %v3832 = vadd.f32 0.0, %v3831
    %v3833 = vpop.f32.mrb[0].mxu0
    %v3834 = vpop.f32.mrb[0].mxu0
    %v3835 = vadd.f32 0.0, %v3834
    %v3836 = vpop.f32.mrb[0].mxu0
    %3837 = vmatprep.mubr.bf16.mxu0 0
    %3838 = vmatmul.mubr.bf16.gmra.mrb[0].mxu0 %v3752
    %v3839 = vpop.f32.mrb[0].mxu0
    %v3840 = vadd.f32 0.0, %v3839
    %v3841 = vpop.f32.mrb[0].mxu0
    %v3842 = vpop.f32.mrb[0].mxu0
    %v3843 = vadd.f32 0.0, %v3842
    %v3844 = vpop.f32.mrb[0].mxu0
    %3845 = vmatprep.mubr.bf16.mxu0 0
    %3846 = vmatmul.mubr.bf16.gmra.mrb[0].mxu0 %v3755
    %v3847 = vpop.f32.mrb[0].mxu0
    %v3848 = vadd.f32 0.0, %v3847
    %v3849 = vpop.f32.mrb[0].mxu0
    %v3850 = vpop.f32.mrb[0].mxu0
    %v3851 = vadd.f32 0.0, %v3850
    %v3852 = vpop.f32.mrb[0].mxu0
    %3853 = vdwg.mxu0
    %v3862 = vunpack.c.l.b16 %v3668
    %v3863 = vunpack.c.l.b16 %v3669
    %v3864 = vunpack.c.l.b16 %v3670
    %v3865 = vunpack.c.l.b16 %v3671
    %v3866 = vunpack.c.l.b16 %v3672
    %v3867 = vunpack.c.l.b16 %v3673
    %v3868 = vunpack.c.l.b16 %v3674
    %v3869 = vunpack.c.l.b16 %v3675
    %v3870 = vpack.c.b16 %v3863, %v3862
    %v3871 = vpack.c.b16 %v3865, %v3864
    %v3872 = vpack.c.b16 %v3867, %v3866
    %v3873 = vpack.c.b16 %v3869, %v3868
    %v3879 = vsel %vm29, %v3659, 0
    %v3882 = vsel %vm29, %v3660, 0
    %v3885 = vsel %vm29, %v3661, 0
    %v3888 = vsel %vm29, %v3662, 0
    %v3891 = vsel %vm29, %v3663, 0
    %v3894 = vsel %vm29, %v3664, 0
    %v3897 = vsel %vm29, %v3665, 0
    %v3900 = vsel %vm29, %v3666, 0
    %3902 = vmatprep.subr.bf16.mxu0 0
    %3903 = vmatpush1.bf16.msra.mxu0 %v3870
    %3904 = vmatprep.subr.bf16.mxu0 0
    %3905 = vmatpush1.bf16.msra.mxu0 %v3871
    %3906 = vmatprep.subr.bf16.mxu0 0
    %3907 = vmatpush1.bf16.msra.mxu0 %v3872
    %3908 = vmatprep.subr.bf16.mxu0 0
    %3909 = vmatpush1.bf16.msra.mxu0 %v3873
    %3910 = vmatprep.subr.bf16.mxu0 0
    %3911 = vmatpush1.bf16.msra.mxu0 0
    %3912 = vmatprep.subr.bf16.mxu0 0
    %3913 = vmatpush1.bf16.msra.mxu0 0
    %3914 = vmatprep.subr.bf16.mxu0 0
    %3915 = vmatpush1.bf16.msra.mxu0 0
    %3916 = vmatprep.subr.bf16.mxu0 0
    %3917 = vmatpush1.bf16.msra.mxu0 0
    %3918 = vmatprep.subr.bf16.mxu0 0
    %3919 = vmatpush1.bf16.msra.mxu0 0
    %3920 = vmatprep.subr.bf16.mxu0 0
    %3921 = vmatpush1.bf16.msra.mxu0 0
    %3922 = vmatprep.subr.bf16.mxu0 0
    %3923 = vmatpush1.bf16.msra.mxu0 0
    %3924 = vmatprep.subr.bf16.mxu0 0
    %3925 = vmatpush1.bf16.msra.mxu0 0
    %3926 = vmatprep.subr.bf16.mxu0 0
    %3927 = vmatpush1.bf16.msra.mxu0 0
    %3928 = vmatprep.subr.bf16.mxu0 0
    %3929 = vmatpush1.bf16.msra.mxu0 0
    %3930 = vmatprep.subr.bf16.mxu0 0
    %3931 = vmatpush1.bf16.msra.mxu0 0
    %3932 = vmatprep.subr.bf16.mxu0 0
    %3933 = vmatpush1.bf16.msra.mxu0 0
    %3934 = vmatprep.mubr.bf16.mxu0 0
    %3935 = vmatmul.mubr.bf16.gmra.mrb[0].mxu0 %v3879
    %v3936 = vpop.f32.mrb[0].mxu0
    %v3937 = vadd.f32 %v3792, %v3936
    %v3938 = vpop.f32.mrb[0].mxu0
    %v3939 = vpop.f32.mrb[0].mxu0
    %v3940 = vadd.f32 %v3795, %v3939
    %v3941 = vpop.f32.mrb[0].mxu0
    %3942 = vmatprep.mubr.bf16.mxu0 0
    %3943 = vmatmul.mubr.bf16.gmra.mrb[0].mxu0 %v3882
    %v3944 = vpop.f32.mrb[0].mxu0
    %v3945 = vadd.f32 %v3800, %v3944
    %v3946 = vpop.f32.mrb[0].mxu0
    %v3947 = vpop.f32.mrb[0].mxu0
    %v3948 = vadd.f32 %v3803, %v3947
    %v3949 = vpop.f32.mrb[0].mxu0
    %3950 = vmatprep.mubr.bf16.mxu0 0
    %3951 = vmatmul.mubr.bf16.gmra.mrb[0].mxu0 %v3885
    %v3952 = vpop.f32.mrb[0].mxu0
    %v3953 = vadd.f32 %v3808, %v3952
    %v3954 = vpop.f32.mrb[0].mxu0
    %v3955 = vpop.f32.mrb[0].mxu0
    %v3956 = vadd.f32 %v3811, %v3955
    %v3957 = vpop.f32.mrb[0].mxu0
    %3958 = vmatprep.mubr.bf16.mxu0 0
    %3959 = vmatmul.mubr.bf16.gmra.mrb[0].mxu0 %v3888
    %v3960 = vpop.f32.mrb[0].mxu0
    %v3961 = vadd.f32 %v3816, %v3960
    %v3962 = vpop.f32.mrb[0].mxu0
    %v3963 = vpop.f32.mrb[0].mxu0
    %v3964 = vadd.f32 %v3819, %v3963
    %v3965 = vpop.f32.mrb[0].mxu0
    %3966 = vmatprep.mubr.bf16.mxu0 0
    %3967 = vmatmul.mubr.bf16.gmra.mrb[0].mxu0 %v3891
    %v3968 = vpop.f32.mrb[0].mxu0
    %v3969 = vadd.f32 %v3824, %v3968
    %v3970 = vpop.f32.mrb[0].mxu0
    %v3971 = vpop.f32.mrb[0].mxu0
    %v3972 = vadd.f32 %v3827, %v3971
    %v3973 = vpop.f32.mrb[0].mxu0
    %3974 = vmatprep.mubr.bf16.mxu0 0
    %3975 = vmatmul.mubr.bf16.gmra.mrb[0].mxu0 %v3894
    %v3976 = vpop.f32.mrb[0].mxu0
    %v3977 = vadd.f32 %v3832, %v3976
    %v3978 = vpop.f32.mrb[0].mxu0
    %v3979 = vpop.f32.mrb[0].mxu0
    %v3980 = vadd.f32 %v3835, %v3979
    %v3981 = vpop.f32.mrb[0].mxu0
    %3982 = vmatprep.mubr.bf16.mxu0 0
    %3983 = vmatmul.mubr.bf16.gmra.mrb[0].mxu0 %v3897
    %v3984 = vpop.f32.mrb[0].mxu0
    %v3985 = vadd.f32 %v3840, %v3984
    %v3986 = vpop.f32.mrb[0].mxu0
    %v3987 = vpop.f32.mrb[0].mxu0
    %v3988 = vadd.f32 %v3843, %v3987
    %v3989 = vpop.f32.mrb[0].mxu0
    %3990 = vmatprep.mubr.bf16.mxu0 0
    %3991 = vmatmul.mubr.bf16.gmra.mrb[0].mxu0 %v3900
    %v3992 = vpop.f32.mrb[0].mxu0
    %v3993 = vadd.f32 %v3848, %v3992
    %v3994 = vpop.f32.mrb[0].mxu0
    %v3995 = vpop.f32.mrb[0].mxu0
    %v3996 = vadd.f32 %v3851, %v3995
    %v3997 = vpop.f32.mrb[0].mxu0
    %3998 = vdwg.mxu0
    %v3999 = vld [vmem:[#allocation2 + $0x2] sm:$0xff]
    %v4000 = vld [vmem:[#allocation2 + $0x12] sm:$0xff]
    %v4001 = vld [vmem:[#allocation2 + $0x22] sm:$0xff]
    %v4002 = vld [vmem:[#allocation2 + $0x32] sm:$0xff]
    %v4003 = vld [vmem:[#allocation2 + $0x42] sm:$0xff]
    %v4004 = vld [vmem:[#allocation2 + $0x52] sm:$0xff]
    %v4005 = vld [vmem:[#allocation2 + $0x62] sm:$0xff]
    %v4006 = vld [vmem:[#allocation2 + $0x72] sm:$0xff]
    %v4007 = vld [vmem:[#allocation2 + $0xa2] sm:$0xff]
    %v4008 = vld [vmem:[#allocation2 + $0xb2] sm:$0xff]
    %v4009 = vld [vmem:[#allocation2 + $0xc2] sm:$0xff]
    %v4010 = vld [vmem:[#allocation2 + $0xd2] sm:$0xff]
    %v4011 = vld [vmem:[#allocation2 + $0xe2] sm:$0xff]
    %v4012 = vld [vmem:[#allocation2 + $0xf2] sm:$0xff]
    %v4013 = vld [vmem:[#allocation2 + $0x102] sm:$0xff]
    %v4014 = vld [vmem:[#allocation2 + $0x112] sm:$0xff]
    %v4015 = vpack.c.bf16 %v4000, %v3999
    %v4016 = vpack.c.bf16 %v4002, %v4001
    %v4017 = vpack.c.bf16 %v4004, %v4003
    %v4018 = vpack.c.bf16 %v4006, %v4005
    %v4019 = vpack.c.bf16 %v4008, %v4007
    %v4020 = vpack.c.bf16 %v4010, %v4009
    %v4021 = vpack.c.bf16 %v4012, %v4011
    %v4022 = vpack.c.bf16 %v4014, %v4013
    %s4023 = scalar_lea.vmem [#allocation3], 640
    %v4024 = vld [vmem:[%s4023] sm:$0xf]
    %v4025 = vld [vmem:[%s4023 + $0x4] sm:$0xf]
    %v4026 = vld [vmem:[%s4023 + $0x8] sm:$0xf]
    %v4027 = vld [vmem:[%s4023 + $0xc] sm:$0xf]
    %v4028 = vld [vmem:[%s4023 + $0x10] sm:$0xf]
    %v4029 = vld [vmem:[%s4023 + $0x14] sm:$0xf]
    %v4030 = vld [vmem:[%s4023 + $0x18] sm:$0xf]
    %v4031 = vld [vmem:[%s4023 + $0x1c] sm:$0xf]
    %v4040 = vunpack.c.l.b16 %v4024
    %v4041 = vunpack.c.l.b16 %v4025
    %v4042 = vunpack.c.l.b16 %v4026
    %v4043 = vunpack.c.l.b16 %v4027
    %v4044 = vunpack.c.l.b16 %v4028
    %v4045 = vunpack.c.l.b16 %v4029
    %v4046 = vunpack.c.l.b16 %v4030
    %v4047 = vunpack.c.l.b16 %v4031
    %v4048 = vpack.c.b16 %v4041, %v4040
    %v4049 = vpack.c.b16 %v4043, %v4042
    %v4050 = vpack.c.b16 %v4045, %v4044
    %v4051 = vpack.c.b16 %v4047, %v4046
    %v4057 = vsel %vm29, %v4015, 0
    %v4060 = vsel %vm29, %v4016, 0
    %v4063 = vsel %vm29, %v4017, 0
    %v4066 = vsel %vm29, %v4018, 0
    %v4069 = vsel %vm29, %v4019, 0
    %v4072 = vsel %vm29, %v4020, 0
    %v4075 = vsel %vm29, %v4021, 0
    %v4078 = vsel %vm29, %v4022, 0
    %4080 = vmatprep.subr.bf16.mxu0 0
    %4081 = vmatpush1.bf16.msra.mxu0 %v4048
    %4082 = vmatprep.subr.bf16.mxu0 0
    %4083 = vmatpush1.bf16.msra.mxu0 %v4049
    %4084 = vmatprep.subr.bf16.mxu0 0
    %4085 = vmatpush1.bf16.msra.mxu0 %v4050
    %4086 = vmatprep.subr.bf16.mxu0 0
    %4087 = vmatpush1.bf16.msra.mxu0 %v4051
    %4088 = vmatprep.subr.bf16.mxu0 0
    %4089 = vmatpush1.bf16.msra.mxu0 0
    %4090 = vmatprep.subr.bf16.mxu0 0
    %4091 = vmatpush1.bf16.msra.mxu0 0
    %4092 = vmatprep.subr.bf16.mxu0 0
    %4093 = vmatpush1.bf16.msra.mxu0 0
    %4094 = vmatprep.subr.bf16.mxu0 0
    %4095 = vmatpush1.bf16.msra.mxu0 0
    %4096 = vmatprep.subr.bf16.mxu0 0
    %4097 = vmatpush1.bf16.msra.mxu0 0
    %4098 = vmatprep.subr.bf16.mxu0 0
    %4099 = vmatpush1.bf16.msra.mxu0 0
    %4100 = vmatprep.subr.bf16.mxu0 0
    %4101 = vmatpush1.bf16.msra.mxu0 0
    %4102 = vmatprep.subr.bf16.mxu0 0
    %4103 = vmatpush1.bf16.msra.mxu0 0
    %4104 = vmatprep.subr.bf16.mxu0 0
    %4105 = vmatpush1.bf16.msra.mxu0 0
    %4106 = vmatprep.subr.bf16.mxu0 0
    %4107 = vmatpush1.bf16.msra.mxu0 0
    %4108 = vmatprep.subr.bf16.mxu0 0
    %4109 = vmatpush1.bf16.msra.mxu0 0
    %4110 = vmatprep.subr.bf16.mxu0 0
    %4111 = vmatpush1.bf16.msra.mxu0 0
    %4112 = vmatprep.mubr.bf16.mxu0 0
    %4113 = vmatmul.mubr.bf16.gmra.mrb[0].mxu0 %v4057
    %v4114 = vpop.f32.mrb[0].mxu0
    %v4115 = vadd.f32 0.0, %v4114
    %v4116 = vpop.f32.mrb[0].mxu0
    %v4117 = vpop.f32.mrb[0].mxu0
    %v4118 = vadd.f32 0.0, %v4117
    %v4119 = vpop.f32.mrb[0].mxu0
    %4120 = vmatprep.mubr.bf16.mxu0 0
    %4121 = vmatmul.mubr.bf16.gmra.mrb[0].mxu0 %v4060
    %v4122 = vpop.f32.mrb[0].mxu0
    %v4123 = vadd.f32 0.0, %v4122
    %v4124 = vpop.f32.mrb[0].mxu0
    %v4125 = vpop.f32.mrb[0].mxu0
    %v4126 = vadd.f32 0.0, %v4125
    %v4127 = vpop.f32.mrb[0].mxu0
    %4128 = vmatprep.mubr.bf16.mxu0 0
    %4129 = vmatmul.mubr.bf16.gmra.mrb[0].mxu0 %v4063
    %v4130 = vpop.f32.mrb[0].mxu0
    %v4131 = vadd.f32 0.0, %v4130
    %v4132 = vpop.f32.mrb[0].mxu0
    %v4133 = vpop.f32.mrb[0].mxu0
    %v4134 = vadd.f32 0.0, %v4133
    %v4135 = vpop.f32.mrb[0].mxu0
    %4136 = vmatprep.mubr.bf16.mxu0 0
    %4137 = vmatmul.mubr.bf16.gmra.mrb[0].mxu0 %v4066
    %v4138 = vpop.f32.mrb[0].mxu0
    %v4139 = vadd.f32 0.0, %v4138
    %v4140 = vpop.f32.mrb[0].mxu0
    %v4141 = vpop.f32.mrb[0].mxu0
    %v4142 = vadd.f32 0.0, %v4141
    %v4143 = vpop.f32.mrb[0].mxu0
    %4144 = vmatprep.mubr.bf16.mxu0 0
    %4145 = vmatmul.mubr.bf16.gmra.mrb[0].mxu0 %v4069
    %v4146 = vpop.f32.mrb[0].mxu0
    %v4147 = vadd.f32 0.0, %v4146
    %v4148 = vpop.f32.mrb[0].mxu0
    %v4149 = vpop.f32.mrb[0].mxu0
    %v4150 = vadd.f32 0.0, %v4149
    %v4151 = vpop.f32.mrb[0].mxu0
    %4152 = vmatprep.mubr.bf16.mxu0 0
    %4153 = vmatmul.mubr.bf16.gmra.mrb[0].mxu0 %v4072
    %v4154 = vpop.f32.mrb[0].mxu0
    %v4155 = vadd.f32 0.0, %v4154
    %v4156 = vpop.f32.mrb[0].mxu0
    %v4157 = vpop.f32.mrb[0].mxu0
    %v4158 = vadd.f32 0.0, %v4157
    %v4159 = vpop.f32.mrb[0].mxu0
    %4160 = vmatprep.mubr.bf16.mxu0 0
    %4161 = vmatmul.mubr.bf16.gmra.mrb[0].mxu0 %v4075
    %v4162 = vpop.f32.mrb[0].mxu0
    %v4163 = vadd.f32 0.0, %v4162
    %v4164 = vpop.f32.mrb[0].mxu0
    %v4165 = vpop.f32.mrb[0].mxu0
    %v4166 = vadd.f32 0.0, %v4165
    %v4167 = vpop.f32.mrb[0].mxu0
    %4168 = vmatprep.mubr.bf16.mxu0 0
    %4169 = vmatmul.mubr.bf16.gmra.mrb[0].mxu0 %v4078
    %v4170 = vpop.f32.mrb[0].mxu0
    %v4171 = vadd.f32 0.0, %v4170
    %v4172 = vpop.f32.mrb[0].mxu0
    %v4173 = vpop.f32.mrb[0].mxu0
    %v4174 = vadd.f32 0.0, %v4173
    %v4175 = vpop.f32.mrb[0].mxu0
    %4176 = vdwg.mxu0
    %v4177 = vadd.f32 %v3937, %v4115
    %v4178 = vadd.f32 %v3940, %v4118
    %v4179 = vadd.f32 %v3945, %v4123
    %v4180 = vadd.f32 %v3948, %v4126
    %v4181 = vadd.f32 %v3953, %v4131
    %v4182 = vadd.f32 %v3956, %v4134
    %v4183 = vadd.f32 %v3961, %v4139
    %v4184 = vadd.f32 %v3964, %v4142
    %v4185 = vadd.f32 %v3969, %v4147
    %v4186 = vadd.f32 %v3972, %v4150
    %v4187 = vadd.f32 %v3977, %v4155
    %v4188 = vadd.f32 %v3980, %v4158
    %v4189 = vadd.f32 %v3985, %v4163
    %v4190 = vadd.f32 %v3988, %v4166
    %v4191 = vadd.f32 %v3993, %v4171
    %v4192 = vadd.f32 %v3996, %v4174
    %v4193 = vld [vmem:[%s87] sm:$0xff]
    %v4194 = vld [vmem:[%s87 + $0x10] sm:$0xff]
    %v4195 = vld [vmem:[%s87 + $0x20] sm:$0xff]
    %v4196 = vld [vmem:[%s87 + $0x30] sm:$0xff]
    %v4197 = vld [vmem:[%s87 + $0x40] sm:$0xff]
    %v4198 = vld [vmem:[%s87 + $0x50] sm:$0xff]
    %v4199 = vld [vmem:[%s87 + $0x60] sm:$0xff]
    %v4200 = vld [vmem:[%s87 + $0x70] sm:$0xff]
    %v4201 = vld [vmem:[%s87 + $0xa0] sm:$0xff]
    %v4202 = vld [vmem:[%s87 + $0xb0] sm:$0xff]
    %v4203 = vld [vmem:[%s87 + $0xc0] sm:$0xff]
    %v4204 = vld [vmem:[%s87 + $0xd0] sm:$0xff]
    %v4205 = vld [vmem:[%s87 + $0xe0] sm:$0xff]
    %v4206 = vld [vmem:[%s87 + $0xf0] sm:$0xff]
    %v4207 = vld [vmem:[%s87 + $0x100] sm:$0xff]
    %v4208 = vld [vmem:[%s87 + $0x110] sm:$0xff]
    %v4209 = vpack.c.bf16 %v4194, %v4193
    %v4210 = vpack.c.bf16 %v4196, %v4195
    %v4211 = vpack.c.bf16 %v4198, %v4197
    %v4212 = vpack.c.bf16 %v4200, %v4199
    %v4213 = vpack.c.bf16 %v4202, %v4201
    %v4214 = vpack.c.bf16 %v4204, %v4203
    %v4215 = vpack.c.bf16 %v4206, %v4205
    %v4216 = vpack.c.bf16 %v4208, %v4207
    %s4217 = scalar_lea.vmem [#allocation3], 672
    %v4218 = vld [vmem:[%s4217] sm:$0xf]
    %v4219 = vld [vmem:[%s4217 + $0x4] sm:$0xf]
    %v4220 = vld [vmem:[%s4217 + $0x8] sm:$0xf]
    %v4221 = vld [vmem:[%s4217 + $0xc] sm:$0xf]
    %v4222 = vld [vmem:[%s4217 + $0x10] sm:$0xf]
    %v4223 = vld [vmem:[%s4217 + $0x14] sm:$0xf]
    %v4224 = vld [vmem:[%s4217 + $0x18] sm:$0xf]
    %v4225 = vld [vmem:[%s4217 + $0x1c] sm:$0xf]
    %v4234 = vunpack.c.l.b16 %v4218
    %v4235 = vunpack.c.l.b16 %v4219
    %v4236 = vunpack.c.l.b16 %v4220
    %v4237 = vunpack.c.l.b16 %v4221
    %v4238 = vunpack.c.l.b16 %v4222
    %v4239 = vunpack.c.l.b16 %v4223
    %v4240 = vunpack.c.l.b16 %v4224
    %v4241 = vunpack.c.l.b16 %v4225
    %v4242 = vpack.c.b16 %v4235, %v4234
    %v4243 = vpack.c.b16 %v4237, %v4236
    %v4244 = vpack.c.b16 %v4239, %v4238
    %v4245 = vpack.c.b16 %v4241, %v4240
    %v4251 = vsel %vm29, %v4209, 0
    %v4254 = vsel %vm29, %v4210, 0
    %v4257 = vsel %vm29, %v4211, 0
    %v4260 = vsel %vm29, %v4212, 0
    %v4263 = vsel %vm29, %v4213, 0
    %v4266 = vsel %vm29, %v4214, 0
    %v4269 = vsel %vm29, %v4215, 0
    %v4272 = vsel %vm29, %v4216, 0
    %4274 = vmatprep.subr.bf16.mxu0 0
    %4275 = vmatpush1.bf16.msra.mxu0 %v4242
    %4276 = vmatprep.subr.bf16.mxu0 0
    %4277 = vmatpush1.bf16.msra.mxu0 %v4243
    %4278 = vmatprep.subr.bf16.mxu0 0
    %4279 = vmatpush1.bf16.msra.mxu0 %v4244
    %4280 = vmatprep.subr.bf16.mxu0 0
    %4281 = vmatpush1.bf16.msra.mxu0 %v4245
    %4282 = vmatprep.subr.bf16.mxu0 0
    %4283 = vmatpush1.bf16.msra.mxu0 0
    %4284 = vmatprep.subr.bf16.mxu0 0
    %4285 = vmatpush1.bf16.msra.mxu0 0
    %4286 = vmatprep.subr.bf16.mxu0 0
    %4287 = vmatpush1.bf16.msra.mxu0 0
    %4288 = vmatprep.subr.bf16.mxu0 0
    %4289 = vmatpush1.bf16.msra.mxu0 0
    %4290 = vmatprep.subr.bf16.mxu0 0
    %4291 = vmatpush1.bf16.msra.mxu0 0
    %4292 = vmatprep.subr.bf16.mxu0 0
    %4293 = vmatpush1.bf16.msra.mxu0 0
    %4294 = vmatprep.subr.bf16.mxu0 0
    %4295 = vmatpush1.bf16.msra.mxu0 0
    %4296 = vmatprep.subr.bf16.mxu0 0
    %4297 = vmatpush1.bf16.msra.mxu0 0
    %4298 = vmatprep.subr.bf16.mxu0 0
    %4299 = vmatpush1.bf16.msra.mxu0 0
    %4300 = vmatprep.subr.bf16.mxu0 0
    %4301 = vmatpush1.bf16.msra.mxu0 0
    %4302 = vmatprep.subr.bf16.mxu0 0
    %4303 = vmatpush1.bf16.msra.mxu0 0
    %4304 = vmatprep.subr.bf16.mxu0 0
    %4305 = vmatpush1.bf16.msra.mxu0 0
    %4306 = vmatprep.mubr.bf16.mxu0 0
    %4307 = vmatmul.mubr.bf16.gmra.mrb[0].mxu0 %v4251
    %v4308 = vpop.f32.mrb[0].mxu0
    %v4309 = vadd.f32 0.0, %v4308
    %v4310 = vpop.f32.mrb[0].mxu0
    %v4311 = vpop.f32.mrb[0].mxu0
    %v4312 = vadd.f32 0.0, %v4311
    %v4313 = vpop.f32.mrb[0].mxu0
    %4314 = vmatprep.mubr.bf16.mxu0 0
    %4315 = vmatmul.mubr.bf16.gmra.mrb[0].mxu0 %v4254
    %v4316 = vpop.f32.mrb[0].mxu0
    %v4317 = vadd.f32 0.0, %v4316
    %v4318 = vpop.f32.mrb[0].mxu0
    %v4319 = vpop.f32.mrb[0].mxu0
    %v4320 = vadd.f32 0.0, %v4319
    %v4321 = vpop.f32.mrb[0].mxu0
    %4322 = vmatprep.mubr.bf16.mxu0 0
    %4323 = vmatmul.mubr.bf16.gmra.mrb[0].mxu0 %v4257
    %v4324 = vpop.f32.mrb[0].mxu0
    %v4325 = vadd.f32 0.0, %v4324
    %v4326 = vpop.f32.mrb[0].mxu0
    %v4327 = vpop.f32.mrb[0].mxu0
    %v4328 = vadd.f32 0.0, %v4327
    %v4329 = vpop.f32.mrb[0].mxu0
    %4330 = vmatprep.mubr.bf16.mxu0 0
    %4331 = vmatmul.mubr.bf16.gmra.mrb[0].mxu0 %v4260
    %v4332 = vpop.f32.mrb[0].mxu0
    %v4333 = vadd.f32 0.0, %v4332
    %v4334 = vpop.f32.mrb[0].mxu0
    %v4335 = vpop.f32.mrb[0].mxu0
    %v4336 = vadd.f32 0.0, %v4335
    %v4337 = vpop.f32.mrb[0].mxu0
    %4338 = vmatprep.mubr.bf16.mxu0 0
    %4339 = vmatmul.mubr.bf16.gmra.mrb[0].mxu0 %v4263
    %v4340 = vpop.f32.mrb[0].mxu0
    %v4341 = vadd.f32 0.0, %v4340
    %v4342 = vpop.f32.mrb[0].mxu0
    %v4343 = vpop.f32.mrb[0].mxu0
    %v4344 = vadd.f32 0.0, %v4343
    %v4345 = vpop.f32.mrb[0].mxu0
    %4346 = vmatprep.mubr.bf16.mxu0 0
    %4347 = vmatmul.mubr.bf16.gmra.mrb[0].mxu0 %v4266
    %v4348 = vpop.f32.mrb[0].mxu0
    %v4349 = vadd.f32 0.0, %v4348
    %v4350 = vpop.f32.mrb[0].mxu0
    %v4351 = vpop.f32.mrb[0].mxu0
    %v4352 = vadd.f32 0.0, %v4351
    %v4353 = vpop.f32.mrb[0].mxu0
    %4354 = vmatprep.mubr.bf16.mxu0 0
    %4355 = vmatmul.mubr.bf16.gmra.mrb[0].mxu0 %v4269
    %v4356 = vpop.f32.mrb[0].mxu0
    %v4357 = vadd.f32 0.0, %v4356
    %v4358 = vpop.f32.mrb[0].mxu0
    %v4359 = vpop.f32.mrb[0].mxu0
    %v4360 = vadd.f32 0.0, %v4359
    %v4361 = vpop.f32.mrb[0].mxu0
    %4362 = vmatprep.mubr.bf16.mxu0 0
    %4363 = vmatmul.mubr.bf16.gmra.mrb[0].mxu0 %v4272
    %v4364 = vpop.f32.mrb[0].mxu0
    %v4365 = vadd.f32 0.0, %v4364
    %v4366 = vpop.f32.mrb[0].mxu0
    %v4367 = vpop.f32.mrb[0].mxu0
    %v4368 = vadd.f32 0.0, %v4367
    %v4369 = vpop.f32.mrb[0].mxu0
    %4370 = vdwg.mxu0
    %v4371 = vadd.f32 %v4177, %v4309
    %v4372 = vadd.f32 %v4178, %v4312
    %v4373 = vadd.f32 %v4179, %v4317
    %v4374 = vadd.f32 %v4180, %v4320
    %v4375 = vadd.f32 %v4181, %v4325
    %v4376 = vadd.f32 %v4182, %v4328
    %v4377 = vadd.f32 %v4183, %v4333
    %v4378 = vadd.f32 %v4184, %v4336
    %v4379 = vadd.f32 %v4185, %v4341
    %v4380 = vadd.f32 %v4186, %v4344
    %v4381 = vadd.f32 %v4187, %v4349
    %v4382 = vadd.f32 %v4188, %v4352
    %v4383 = vadd.f32 %v4189, %v4357
    %v4384 = vadd.f32 %v4190, %v4360
    %v4385 = vadd.f32 %v4191, %v4365
    %v4386 = vadd.f32 %v4192, %v4368
    %v4387 = vld [vmem:[%s87 + $0x1] sm:$0xff]
    %v4388 = vld [vmem:[%s87 + $0x11] sm:$0xff]
    %v4389 = vld [vmem:[%s87 + $0x21] sm:$0xff]
    %v4390 = vld [vmem:[%s87 + $0x31] sm:$0xff]
    %v4391 = vld [vmem:[%s87 + $0x41] sm:$0xff]
    %v4392 = vld [vmem:[%s87 + $0x51] sm:$0xff]
    %v4393 = vld [vmem:[%s87 + $0x61] sm:$0xff]
    %v4394 = vld [vmem:[%s87 + $0x71] sm:$0xff]
    %v4395 = vld [vmem:[%s87 + $0xa1] sm:$0xff]
    %v4396 = vld [vmem:[%s87 + $0xb1] sm:$0xff]
    %v4397 = vld [vmem:[%s87 + $0xc1] sm:$0xff]
    %v4398 = vld [vmem:[%s87 + $0xd1] sm:$0xff]
    %v4399 = vld [vmem:[%s87 + $0xe1] sm:$0xff]
    %v4400 = vld [vmem:[%s87 + $0xf1] sm:$0xff]
    %v4401 = vld [vmem:[%s87 + $0x101] sm:$0xff]
    %v4402 = vld [vmem:[%s87 + $0x111] sm:$0xff]
    %v4403 = vpack.c.bf16 %v4388, %v4387
    %v4404 = vpack.c.bf16 %v4390, %v4389
    %v4405 = vpack.c.bf16 %v4392, %v4391
    %v4406 = vpack.c.bf16 %v4394, %v4393
    %v4407 = vpack.c.bf16 %v4396, %v4395
    %v4408 = vpack.c.bf16 %v4398, %v4397
    %v4409 = vpack.c.bf16 %v4400, %v4399
    %v4410 = vpack.c.bf16 %v4402, %v4401
    %s4411 = scalar_lea.vmem [#allocation3], 704
    %v4412 = vld [vmem:[%s4411] sm:$0xf]
    %v4413 = vld [vmem:[%s4411 + $0x4] sm:$0xf]
    %v4414 = vld [vmem:[%s4411 + $0x8] sm:$0xf]
    %v4415 = vld [vmem:[%s4411 + $0xc] sm:$0xf]
    %v4416 = vld [vmem:[%s4411 + $0x10] sm:$0xf]
    %v4417 = vld [vmem:[%s4411 + $0x14] sm:$0xf]
    %v4418 = vld [vmem:[%s4411 + $0x18] sm:$0xf]
    %v4419 = vld [vmem:[%s4411 + $0x1c] sm:$0xf]
    %v4428 = vunpack.c.l.b16 %v4412
    %v4429 = vunpack.c.l.b16 %v4413
    %v4430 = vunpack.c.l.b16 %v4414
    %v4431 = vunpack.c.l.b16 %v4415
    %v4432 = vunpack.c.l.b16 %v4416
    %v4433 = vunpack.c.l.b16 %v4417
    %v4434 = vunpack.c.l.b16 %v4418
    %v4435 = vunpack.c.l.b16 %v4419
    %v4436 = vpack.c.b16 %v4429, %v4428
    %v4437 = vpack.c.b16 %v4431, %v4430
    %v4438 = vpack.c.b16 %v4433, %v4432
    %v4439 = vpack.c.b16 %v4435, %v4434
    %v4445 = vsel %vm29, %v4403, 0
    %v4448 = vsel %vm29, %v4404, 0
    %v4451 = vsel %vm29, %v4405, 0
    %v4454 = vsel %vm29, %v4406, 0
    %v4457 = vsel %vm29, %v4407, 0
    %v4460 = vsel %vm29, %v4408, 0
    %v4463 = vsel %vm29, %v4409, 0
    %v4466 = vsel %vm29, %v4410, 0
    %4468 = vmatprep.subr.bf16.mxu0 0
    %4469 = vmatpush1.bf16.msra.mxu0 %v4436
    %4470 = vmatprep.subr.bf16.mxu0 0
    %4471 = vmatpush1.bf16.msra.mxu0 %v4437
    %4472 = vmatprep.subr.bf16.mxu0 0
    %4473 = vmatpush1.bf16.msra.mxu0 %v4438
    %4474 = vmatprep.subr.bf16.mxu0 0
    %4475 = vmatpush1.bf16.msra.mxu0 %v4439
    %4476 = vmatprep.subr.bf16.mxu0 0
    %4477 = vmatpush1.bf16.msra.mxu0 0
    %4478 = vmatprep.subr.bf16.mxu0 0
    %4479 = vmatpush1.bf16.msra.mxu0 0
    %4480 = vmatprep.subr.bf16.mxu0 0
    %4481 = vmatpush1.bf16.msra.mxu0 0
    %4482 = vmatprep.subr.bf16.mxu0 0
    %4483 = vmatpush1.bf16.msra.mxu0 0
    %4484 = vmatprep.subr.bf16.mxu0 0
    %4485 = vmatpush1.bf16.msra.mxu0 0
    %4486 = vmatprep.subr.bf16.mxu0 0
    %4487 = vmatpush1.bf16.msra.mxu0 0
    %4488 = vmatprep.subr.bf16.mxu0 0
    %4489 = vmatpush1.bf16.msra.mxu0 0
    %4490 = vmatprep.subr.bf16.mxu0 0
    %4491 = vmatpush1.bf16.msra.mxu0 0
    %4492 = vmatprep.subr.bf16.mxu0 0
    %4493 = vmatpush1.bf16.msra.mxu0 0
    %4494 = vmatprep.subr.bf16.mxu0 0
    %4495 = vmatpush1.bf16.msra.mxu0 0
    %4496 = vmatprep.subr.bf16.mxu0 0
    %4497 = vmatpush1.bf16.msra.mxu0 0
    %4498 = vmatprep.subr.bf16.mxu0 0
    %4499 = vmatpush1.bf16.msra.mxu0 0
    %4500 = vmatprep.mubr.bf16.mxu0 0
    %4501 = vmatmul.mubr.bf16.gmra.mrb[0].mxu0 %v4445
    %v4502 = vpop.f32.mrb[0].mxu0
    %v4503 = vadd.f32 0.0, %v4502
    %v4504 = vpop.f32.mrb[0].mxu0
    %v4505 = vpop.f32.mrb[0].mxu0
    %v4506 = vadd.f32 0.0, %v4505
    %v4507 = vpop.f32.mrb[0].mxu0
    %4508 = vmatprep.mubr.bf16.mxu0 0
    %4509 = vmatmul.mubr.bf16.gmra.mrb[0].mxu0 %v4448
    %v4510 = vpop.f32.mrb[0].mxu0
    %v4511 = vadd.f32 0.0, %v4510
    %v4512 = vpop.f32.mrb[0].mxu0
    %v4513 = vpop.f32.mrb[0].mxu0
    %v4514 = vadd.f32 0.0, %v4513
    %v4515 = vpop.f32.mrb[0].mxu0
    %4516 = vmatprep.mubr.bf16.mxu0 0
    %4517 = vmatmul.mubr.bf16.gmra.mrb[0].mxu0 %v4451
    %v4518 = vpop.f32.mrb[0].mxu0
    %v4519 = vadd.f32 0.0, %v4518
    %v4520 = vpop.f32.mrb[0].mxu0
    %v4521 = vpop.f32.mrb[0].mxu0
    %v4522 = vadd.f32 0.0, %v4521
    %v4523 = vpop.f32.mrb[0].mxu0
    %4524 = vmatprep.mubr.bf16.mxu0 0
    %4525 = vmatmul.mubr.bf16.gmra.mrb[0].mxu0 %v4454
    %v4526 = vpop.f32.mrb[0].mxu0
    %v4527 = vadd.f32 0.0, %v4526
    %v4528 = vpop.f32.mrb[0].mxu0
    %v4529 = vpop.f32.mrb[0].mxu0
    %v4530 = vadd.f32 0.0, %v4529
    %v4531 = vpop.f32.mrb[0].mxu0
    %4532 = vmatprep.mubr.bf16.mxu0 0
    %4533 = vmatmul.mubr.bf16.gmra.mrb[0].mxu0 %v4457
    %v4534 = vpop.f32.mrb[0].mxu0
    %v4535 = vadd.f32 0.0, %v4534
    %v4536 = vpop.f32.mrb[0].mxu0
    %v4537 = vpop.f32.mrb[0].mxu0
    %v4538 = vadd.f32 0.0, %v4537
    %v4539 = vpop.f32.mrb[0].mxu0
    %4540 = vmatprep.mubr.bf16.mxu0 0
    %4541 = vmatmul.mubr.bf16.gmra.mrb[0].mxu0 %v4460
    %v4542 = vpop.f32.mrb[0].mxu0
    %v4543 = vadd.f32 0.0, %v4542
    %v4544 = vpop.f32.mrb[0].mxu0
    %v4545 = vpop.f32.mrb[0].mxu0
    %v4546 = vadd.f32 0.0, %v4545
    %v4547 = vpop.f32.mrb[0].mxu0
    %4548 = vmatprep.mubr.bf16.mxu0 0
    %4549 = vmatmul.mubr.bf16.gmra.mrb[0].mxu0 %v4463
    %v4550 = vpop.f32.mrb[0].mxu0
    %v4551 = vadd.f32 0.0, %v4550
    %v4552 = vpop.f32.mrb[0].mxu0
    %v4553 = vpop.f32.mrb[0].mxu0
    %v4554 = vadd.f32 0.0, %v4553
    %v4555 = vpop.f32.mrb[0].mxu0
    %4556 = vmatprep.mubr.bf16.mxu0 0
    %4557 = vmatmul.mubr.bf16.gmra.mrb[0].mxu0 %v4466
    %v4558 = vpop.f32.mrb[0].mxu0
    %v4559 = vadd.f32 0.0, %v4558
    %v4560 = vpop.f32.mrb[0].mxu0
    %v4561 = vpop.f32.mrb[0].mxu0
    %v4562 = vadd.f32 0.0, %v4561
    %v4563 = vpop.f32.mrb[0].mxu0
    %4564 = vdwg.mxu0
    %v4565 = vadd.f32 %v4371, %v4503
    %v4566 = vadd.f32 %v4372, %v4506
    %v4567 = vadd.f32 %v4373, %v4511
    %v4568 = vadd.f32 %v4374, %v4514
    %v4569 = vadd.f32 %v4375, %v4519
    %v4570 = vadd.f32 %v4376, %v4522
    %v4571 = vadd.f32 %v4377, %v4527
    %v4572 = vadd.f32 %v4378, %v4530
    %v4573 = vadd.f32 %v4379, %v4535
    %v4574 = vadd.f32 %v4380, %v4538
    %v4575 = vadd.f32 %v4381, %v4543
    %v4576 = vadd.f32 %v4382, %v4546
    %v4577 = vadd.f32 %v4383, %v4551
    %v4578 = vadd.f32 %v4384, %v4554
    %v4579 = vadd.f32 %v4385, %v4559
    %v4580 = vadd.f32 %v4386, %v4562
    %v4581 = vld [vmem:[%s87 + $0x2] sm:$0xff]
    %v4582 = vld [vmem:[%s87 + $0x12] sm:$0xff]
    %v4583 = vld [vmem:[%s87 + $0x22] sm:$0xff]
    %v4584 = vld [vmem:[%s87 + $0x32] sm:$0xff]
    %v4585 = vld [vmem:[%s87 + $0x42] sm:$0xff]
    %v4586 = vld [vmem:[%s87 + $0x52] sm:$0xff]
    %v4587 = vld [vmem:[%s87 + $0x62] sm:$0xff]
    %v4588 = vld [vmem:[%s87 + $0x72] sm:$0xff]
    %v4589 = vld [vmem:[%s87 + $0xa2] sm:$0xff]
    %v4590 = vld [vmem:[%s87 + $0xb2] sm:$0xff]
    %v4591 = vld [vmem:[%s87 + $0xc2] sm:$0xff]
    %v4592 = vld [vmem:[%s87 + $0xd2] sm:$0xff]
    %v4593 = vld [vmem:[%s87 + $0xe2] sm:$0xff]
    %v4594 = vld [vmem:[%s87 + $0xf2] sm:$0xff]
    %v4595 = vld [vmem:[%s87 + $0x102] sm:$0xff]
    %v4596 = vld [vmem:[%s87 + $0x112] sm:$0xff]
    %v4597 = vpack.c.bf16 %v4582, %v4581
    %v4598 = vpack.c.bf16 %v4584, %v4583
    %v4599 = vpack.c.bf16 %v4586, %v4585
    %v4600 = vpack.c.bf16 %v4588, %v4587
    %v4601 = vpack.c.bf16 %v4590, %v4589
    %v4602 = vpack.c.bf16 %v4592, %v4591
    %v4603 = vpack.c.bf16 %v4594, %v4593
    %v4604 = vpack.c.bf16 %v4596, %v4595
    %s4605 = scalar_lea.vmem [#allocation3], 736
    %v4606 = vld [vmem:[%s4605] sm:$0xf]
    %v4607 = vld [vmem:[%s4605 + $0x4] sm:$0xf]
    %v4608 = vld [vmem:[%s4605 + $0x8] sm:$0xf]
    %v4609 = vld [vmem:[%s4605 + $0xc] sm:$0xf]
    %v4610 = vld [vmem:[%s4605 + $0x10] sm:$0xf]
    %v4611 = vld [vmem:[%s4605 + $0x14] sm:$0xf]
    %v4612 = vld [vmem:[%s4605 + $0x18] sm:$0xf]
    %v4613 = vld [vmem:[%s4605 + $0x1c] sm:$0xf]
    %v4622 = vunpack.c.l.b16 %v4606
    %v4623 = vunpack.c.l.b16 %v4607
    %v4624 = vunpack.c.l.b16 %v4608
    %v4625 = vunpack.c.l.b16 %v4609
    %v4626 = vunpack.c.l.b16 %v4610
    %v4627 = vunpack.c.l.b16 %v4611
    %v4628 = vunpack.c.l.b16 %v4612
    %v4629 = vunpack.c.l.b16 %v4613
    %v4630 = vpack.c.b16 %v4623, %v4622
    %v4631 = vpack.c.b16 %v4625, %v4624
    %v4632 = vpack.c.b16 %v4627, %v4626
    %v4633 = vpack.c.b16 %v4629, %v4628
    %v4639 = vsel %vm29, %v4597, 0
    %v4642 = vsel %vm29, %v4598, 0
    %v4645 = vsel %vm29, %v4599, 0
    %v4648 = vsel %vm29, %v4600, 0
    %v4651 = vsel %vm29, %v4601, 0
    %v4654 = vsel %vm29, %v4602, 0
    %v4657 = vsel %vm29, %v4603, 0
    %v4660 = vsel %vm29, %v4604, 0
    %4662 = vmatprep.subr.bf16.mxu0 0
    %4663 = vmatpush1.bf16.msra.mxu0 %v4630
    %4664 = vmatprep.subr.bf16.mxu0 0
    %4665 = vmatpush1.bf16.msra.mxu0 %v4631
    %4666 = vmatprep.subr.bf16.mxu0 0
    %4667 = vmatpush1.bf16.msra.mxu0 %v4632
    %4668 = vmatprep.subr.bf16.mxu0 0
    %4669 = vmatpush1.bf16.msra.mxu0 %v4633
    %4670 = vmatprep.subr.bf16.mxu0 0
    %4671 = vmatpush1.bf16.msra.mxu0 0
    %4672 = vmatprep.subr.bf16.mxu0 0
    %4673 = vmatpush1.bf16.msra.mxu0 0
    %4674 = vmatprep.subr.bf16.mxu0 0
    %4675 = vmatpush1.bf16.msra.mxu0 0
    %4676 = vmatprep.subr.bf16.mxu0 0
    %4677 = vmatpush1.bf16.msra.mxu0 0
    %4678 = vmatprep.subr.bf16.mxu0 0
    %4679 = vmatpush1.bf16.msra.mxu0 0
    %4680 = vmatprep.subr.bf16.mxu0 0
    %4681 = vmatpush1.bf16.msra.mxu0 0
    %4682 = vmatprep.subr.bf16.mxu0 0
    %4683 = vmatpush1.bf16.msra.mxu0 0
    %4684 = vmatprep.subr.bf16.mxu0 0
    %4685 = vmatpush1.bf16.msra.mxu0 0
    %4686 = vmatprep.subr.bf16.mxu0 0
    %4687 = vmatpush1.bf16.msra.mxu0 0
    %4688 = vmatprep.subr.bf16.mxu0 0
    %4689 = vmatpush1.bf16.msra.mxu0 0
    %4690 = vmatprep.subr.bf16.mxu0 0
    %4691 = vmatpush1.bf16.msra.mxu0 0
    %4692 = vmatprep.subr.bf16.mxu0 0
    %4693 = vmatpush1.bf16.msra.mxu0 0
    %4694 = vmatprep.mubr.bf16.mxu0 0
    %4695 = vmatmul.mubr.bf16.gmra.mrb[0].mxu0 %v4639
    %v4696 = vpop.f32.mrb[0].mxu0
    %v4697 = vadd.f32 0.0, %v4696
    %v4698 = vpop.f32.mrb[0].mxu0
    %v4699 = vpop.f32.mrb[0].mxu0
    %v4700 = vadd.f32 0.0, %v4699
    %v4701 = vpop.f32.mrb[0].mxu0
    %4702 = vmatprep.mubr.bf16.mxu0 0
    %4703 = vmatmul.mubr.bf16.gmra.mrb[0].mxu0 %v4642
    %v4704 = vpop.f32.mrb[0].mxu0
    %v4705 = vadd.f32 0.0, %v4704
    %v4706 = vpop.f32.mrb[0].mxu0
    %v4707 = vpop.f32.mrb[0].mxu0
    %v4708 = vadd.f32 0.0, %v4707
    %v4709 = vpop.f32.mrb[0].mxu0
    %4710 = vmatprep.mubr.bf16.mxu0 0
    %4711 = vmatmul.mubr.bf16.gmra.mrb[0].mxu0 %v4645
    %v4712 = vpop.f32.mrb[0].mxu0
    %v4713 = vadd.f32 0.0, %v4712
    %v4714 = vpop.f32.mrb[0].mxu0
    %v4715 = vpop.f32.mrb[0].mxu0
    %v4716 = vadd.f32 0.0, %v4715
    %v4717 = vpop.f32.mrb[0].mxu0
    %4718 = vmatprep.mubr.bf16.mxu0 0
    %4719 = vmatmul.mubr.bf16.gmra.mrb[0].mxu0 %v4648
    %v4720 = vpop.f32.mrb[0].mxu0
    %v4721 = vadd.f32 0.0, %v4720
    %v4722 = vpop.f32.mrb[0].mxu0
    %v4723 = vpop.f32.mrb[0].mxu0
    %v4724 = vadd.f32 0.0, %v4723
    %v4725 = vpop.f32.mrb[0].mxu0
    %4726 = vmatprep.mubr.bf16.mxu0 0
    %4727 = vmatmul.mubr.bf16.gmra.mrb[0].mxu0 %v4651
    %v4728 = vpop.f32.mrb[0].mxu0
    %v4729 = vadd.f32 0.0, %v4728
    %v4730 = vpop.f32.mrb[0].mxu0
    %v4731 = vpop.f32.mrb[0].mxu0
    %v4732 = vadd.f32 0.0, %v4731
    %v4733 = vpop.f32.mrb[0].mxu0
    %4734 = vmatprep.mubr.bf16.mxu0 0
    %4735 = vmatmul.mubr.bf16.gmra.mrb[0].mxu0 %v4654
    %v4736 = vpop.f32.mrb[0].mxu0
    %v4737 = vadd.f32 0.0, %v4736
    %v4738 = vpop.f32.mrb[0].mxu0
    %v4739 = vpop.f32.mrb[0].mxu0
    %v4740 = vadd.f32 0.0, %v4739
    %v4741 = vpop.f32.mrb[0].mxu0
    %4742 = vmatprep.mubr.bf16.mxu0 0
    %4743 = vmatmul.mubr.bf16.gmra.mrb[0].mxu0 %v4657
    %v4744 = vpop.f32.mrb[0].mxu0
    %v4745 = vadd.f32 0.0, %v4744
    %v4746 = vpop.f32.mrb[0].mxu0
    %v4747 = vpop.f32.mrb[0].mxu0
    %v4748 = vadd.f32 0.0, %v4747
    %v4749 = vpop.f32.mrb[0].mxu0
    %4750 = vmatprep.mubr.bf16.mxu0 0
    %4751 = vmatmul.mubr.bf16.gmra.mrb[0].mxu0 %v4660
    %v4752 = vpop.f32.mrb[0].mxu0
    %v4753 = vadd.f32 0.0, %v4752
    %v4754 = vpop.f32.mrb[0].mxu0
    %v4755 = vpop.f32.mrb[0].mxu0
    %v4756 = vadd.f32 0.0, %v4755
    %v4757 = vpop.f32.mrb[0].mxu0
    %4758 = vdwg.mxu0
    %v4759 = vadd.f32 %v4565, %v4697
    %v4760 = vadd.f32 %v4566, %v4700
    %v4761 = vadd.f32 %v4567, %v4705
    %v4762 = vadd.f32 %v4568, %v4708
    %v4763 = vadd.f32 %v4569, %v4713
    %v4764 = vadd.f32 %v4570, %v4716
    %v4765 = vadd.f32 %v4571, %v4721
    %v4766 = vadd.f32 %v4572, %v4724
    %v4767 = vadd.f32 %v4573, %v4729
    %v4768 = vadd.f32 %v4574, %v4732
    %v4769 = vadd.f32 %v4575, %v4737
    %v4770 = vadd.f32 %v4576, %v4740
    %v4771 = vadd.f32 %v4577, %v4745
    %v4772 = vadd.f32 %v4578, %v4748
    %v4773 = vadd.f32 %v4579, %v4753
    %v4774 = vadd.f32 %v4580, %v4756
    %v4775 = vld [vmem:[%s1235] sm:$0xff]
    %v4776 = vld [vmem:[%s1235 + $0x10] sm:$0xff]
    %v4777 = vld [vmem:[%s1235 + $0x20] sm:$0xff]
    %v4778 = vld [vmem:[%s1235 + $0x30] sm:$0xff]
    %v4779 = vld [vmem:[%s1235 + $0x40] sm:$0xff]
    %v4780 = vld [vmem:[%s1235 + $0x50] sm:$0xff]
    %v4781 = vld [vmem:[%s1235 + $0x60] sm:$0xff]
    %v4782 = vld [vmem:[%s1235 + $0x70] sm:$0xff]
    %v4783 = vld [vmem:[%s1235 + $0xa0] sm:$0xff]
    %v4784 = vld [vmem:[%s1235 + $0xb0] sm:$0xff]
    %v4785 = vld [vmem:[%s1235 + $0xc0] sm:$0xff]
    %v4786 = vld [vmem:[%s1235 + $0xd0] sm:$0xff]
    %v4787 = vld [vmem:[%s1235 + $0xe0] sm:$0xff]
    %v4788 = vld [vmem:[%s1235 + $0xf0] sm:$0xff]
    %v4789 = vld [vmem:[%s1235 + $0x100] sm:$0xff]
    %v4790 = vld [vmem:[%s1235 + $0x110] sm:$0xff]
    %v4791 = vpack.c.bf16 %v4776, %v4775
    %v4792 = vpack.c.bf16 %v4778, %v4777
    %v4793 = vpack.c.bf16 %v4780, %v4779
    %v4794 = vpack.c.bf16 %v4782, %v4781
    %v4795 = vpack.c.bf16 %v4784, %v4783
    %v4796 = vpack.c.bf16 %v4786, %v4785
    %v4797 = vpack.c.bf16 %v4788, %v4787
    %v4798 = vpack.c.bf16 %v4790, %v4789
    %s4799 = scalar_lea.vmem [#allocation3], 768
    %v4800 = vld [vmem:[%s4799] sm:$0xf]
    %v4801 = vld [vmem:[%s4799 + $0x4] sm:$0xf]
    %v4802 = vld [vmem:[%s4799 + $0x8] sm:$0xf]
    %v4803 = vld [vmem:[%s4799 + $0xc] sm:$0xf]
    %v4804 = vld [vmem:[%s4799 + $0x10] sm:$0xf]
    %v4805 = vld [vmem:[%s4799 + $0x14] sm:$0xf]
    %v4806 = vld [vmem:[%s4799 + $0x18] sm:$0xf]
    %v4807 = vld [vmem:[%s4799 + $0x1c] sm:$0xf]
    %v4816 = vunpack.c.l.b16 %v4800
    %v4817 = vunpack.c.l.b16 %v4801
    %v4818 = vunpack.c.l.b16 %v4802
    %v4819 = vunpack.c.l.b16 %v4803
    %v4820 = vunpack.c.l.b16 %v4804
    %v4821 = vunpack.c.l.b16 %v4805
    %v4822 = vunpack.c.l.b16 %v4806
    %v4823 = vunpack.c.l.b16 %v4807
    %v4824 = vpack.c.b16 %v4817, %v4816
    %v4825 = vpack.c.b16 %v4819, %v4818
    %v4826 = vpack.c.b16 %v4821, %v4820
    %v4827 = vpack.c.b16 %v4823, %v4822
    %v4833 = vsel %vm29, %v4791, 0
    %v4836 = vsel %vm29, %v4792, 0
    %v4839 = vsel %vm29, %v4793, 0
    %v4842 = vsel %vm29, %v4794, 0
    %v4845 = vsel %vm29, %v4795, 0
    %v4848 = vsel %vm29, %v4796, 0
    %v4851 = vsel %vm29, %v4797, 0
    %v4854 = vsel %vm29, %v4798, 0
    %4856 = vmatprep.subr.bf16.mxu0 0
    %4857 = vmatpush1.bf16.msra.mxu0 %v4824
    %4858 = vmatprep.subr.bf16.mxu0 0
    %4859 = vmatpush1.bf16.msra.mxu0 %v4825
    %4860 = vmatprep.subr.bf16.mxu0 0
    %4861 = vmatpush1.bf16.msra.mxu0 %v4826
    %4862 = vmatprep.subr.bf16.mxu0 0
    %4863 = vmatpush1.bf16.msra.mxu0 %v4827
    %4864 = vmatprep.subr.bf16.mxu0 0
    %4865 = vmatpush1.bf16.msra.mxu0 0
    %4866 = vmatprep.subr.bf16.mxu0 0
    %4867 = vmatpush1.bf16.msra.mxu0 0
    %4868 = vmatprep.subr.bf16.mxu0 0
    %4869 = vmatpush1.bf16.msra.mxu0 0
    %4870 = vmatprep.subr.bf16.mxu0 0
    %4871 = vmatpush1.bf16.msra.mxu0 0
    %4872 = vmatprep.subr.bf16.mxu0 0
    %4873 = vmatpush1.bf16.msra.mxu0 0
    %4874 = vmatprep.subr.bf16.mxu0 0
    %4875 = vmatpush1.bf16.msra.mxu0 0
    %4876 = vmatprep.subr.bf16.mxu0 0
    %4877 = vmatpush1.bf16.msra.mxu0 0
    %4878 = vmatprep.subr.bf16.mxu0 0
    %4879 = vmatpush1.bf16.msra.mxu0 0
    %4880 = vmatprep.subr.bf16.mxu0 0
    %4881 = vmatpush1.bf16.msra.mxu0 0
    %4882 = vmatprep.subr.bf16.mxu0 0
    %4883 = vmatpush1.bf16.msra.mxu0 0
    %4884 = vmatprep.subr.bf16.mxu0 0
    %4885 = vmatpush1.bf16.msra.mxu0 0
    %4886 = vmatprep.subr.bf16.mxu0 0
    %4887 = vmatpush1.bf16.msra.mxu0 0
    %4888 = vmatprep.mubr.bf16.mxu0 0
    %4889 = vmatmul.mubr.bf16.gmra.mrb[0].mxu0 %v4833
    %v4890 = vpop.f32.mrb[0].mxu0
    %v4891 = vadd.f32 0.0, %v4890
    %v4892 = vpop.f32.mrb[0].mxu0
    %v4893 = vpop.f32.mrb[0].mxu0
    %v4894 = vadd.f32 0.0, %v4893
    %v4895 = vpop.f32.mrb[0].mxu0
    %4896 = vmatprep.mubr.bf16.mxu0 0
    %4897 = vmatmul.mubr.bf16.gmra.mrb[0].mxu0 %v4836
    %v4898 = vpop.f32.mrb[0].mxu0
    %v4899 = vadd.f32 0.0, %v4898
    %v4900 = vpop.f32.mrb[0].mxu0
    %v4901 = vpop.f32.mrb[0].mxu0
    %v4902 = vadd.f32 0.0, %v4901
    %v4903 = vpop.f32.mrb[0].mxu0
    %4904 = vmatprep.mubr.bf16.mxu0 0
    %4905 = vmatmul.mubr.bf16.gmra.mrb[0].mxu0 %v4839
    %v4906 = vpop.f32.mrb[0].mxu0
    %v4907 = vadd.f32 0.0, %v4906
    %v4908 = vpop.f32.mrb[0].mxu0
    %v4909 = vpop.f32.mrb[0].mxu0
    %v4910 = vadd.f32 0.0, %v4909
    %v4911 = vpop.f32.mrb[0].mxu0
    %4912 = vmatprep.mubr.bf16.mxu0 0
    %4913 = vmatmul.mubr.bf16.gmra.mrb[0].mxu0 %v4842
    %v4914 = vpop.f32.mrb[0].mxu0
    %v4915 = vadd.f32 0.0, %v4914
    %v4916 = vpop.f32.mrb[0].mxu0
    %v4917 = vpop.f32.mrb[0].mxu0
    %v4918 = vadd.f32 0.0, %v4917
    %v4919 = vpop.f32.mrb[0].mxu0
    %4920 = vmatprep.mubr.bf16.mxu0 0
    %4921 = vmatmul.mubr.bf16.gmra.mrb[0].mxu0 %v4845
    %v4922 = vpop.f32.mrb[0].mxu0
    %v4923 = vadd.f32 0.0, %v4922
    %v4924 = vpop.f32.mrb[0].mxu0
    %v4925 = vpop.f32.mrb[0].mxu0
    %v4926 = vadd.f32 0.0, %v4925
    %v4927 = vpop.f32.mrb[0].mxu0
    %4928 = vmatprep.mubr.bf16.mxu0 0
    %4929 = vmatmul.mubr.bf16.gmra.mrb[0].mxu0 %v4848
    %v4930 = vpop.f32.mrb[0].mxu0
    %v4931 = vadd.f32 0.0, %v4930
    %v4932 = vpop.f32.mrb[0].mxu0
    %v4933 = vpop.f32.mrb[0].mxu0
    %v4934 = vadd.f32 0.0, %v4933
    %v4935 = vpop.f32.mrb[0].mxu0
    %4936 = vmatprep.mubr.bf16.mxu0 0
    %4937 = vmatmul.mubr.bf16.gmra.mrb[0].mxu0 %v4851
    %v4938 = vpop.f32.mrb[0].mxu0
    %v4939 = vadd.f32 0.0, %v4938
    %v4940 = vpop.f32.mrb[0].mxu0
    %v4941 = vpop.f32.mrb[0].mxu0
    %v4942 = vadd.f32 0.0, %v4941
    %v4943 = vpop.f32.mrb[0].mxu0
    %4944 = vmatprep.mubr.bf16.mxu0 0
    %4945 = vmatmul.mubr.bf16.gmra.mrb[0].mxu0 %v4854
    %v4946 = vpop.f32.mrb[0].mxu0
    %v4947 = vadd.f32 0.0, %v4946
    %v4948 = vpop.f32.mrb[0].mxu0
    %v4949 = vpop.f32.mrb[0].mxu0
    %v4950 = vadd.f32 0.0, %v4949
    %v4951 = vpop.f32.mrb[0].mxu0
    %4952 = vdwg.mxu0
    %v4953 = vadd.f32 %v4759, %v4891
    %v4954 = vadd.f32 %v4760, %v4894
    %v4955 = vadd.f32 %v4761, %v4899
    %v4956 = vadd.f32 %v4762, %v4902
    %v4957 = vadd.f32 %v4763, %v4907
    %v4958 = vadd.f32 %v4764, %v4910
    %v4959 = vadd.f32 %v4765, %v4915
    %v4960 = vadd.f32 %v4766, %v4918
    %v4961 = vadd.f32 %v4767, %v4923
    %v4962 = vadd.f32 %v4768, %v4926
    %v4963 = vadd.f32 %v4769, %v4931
    %v4964 = vadd.f32 %v4770, %v4934
    %v4965 = vadd.f32 %v4771, %v4939
    %v4966 = vadd.f32 %v4772, %v4942
    %v4967 = vadd.f32 %v4773, %v4947
    %v4968 = vadd.f32 %v4774, %v4950
    %v4969 = vld [vmem:[%s1235 + $0x1] sm:$0xff]
    %v4970 = vld [vmem:[%s1235 + $0x11] sm:$0xff]
    %v4971 = vld [vmem:[%s1235 + $0x21] sm:$0xff]
    %v4972 = vld [vmem:[%s1235 + $0x31] sm:$0xff]
    %v4973 = vld [vmem:[%s1235 + $0x41] sm:$0xff]
    %v4974 = vld [vmem:[%s1235 + $0x51] sm:$0xff]
    %v4975 = vld [vmem:[%s1235 + $0x61] sm:$0xff]
    %v4976 = vld [vmem:[%s1235 + $0x71] sm:$0xff]
    %v4977 = vld [vmem:[%s1235 + $0xa1] sm:$0xff]
    %v4978 = vld [vmem:[%s1235 + $0xb1] sm:$0xff]
    %v4979 = vld [vmem:[%s1235 + $0xc1] sm:$0xff]
    %v4980 = vld [vmem:[%s1235 + $0xd1] sm:$0xff]
    %v4981 = vld [vmem:[%s1235 + $0xe1] sm:$0xff]
    %v4982 = vld [vmem:[%s1235 + $0xf1] sm:$0xff]
    %v4983 = vld [vmem:[%s1235 + $0x101] sm:$0xff]
    %v4984 = vld [vmem:[%s1235 + $0x111] sm:$0xff]
    %v4985 = vpack.c.bf16 %v4970, %v4969
    %v4986 = vpack.c.bf16 %v4972, %v4971
    %v4987 = vpack.c.bf16 %v4974, %v4973
    %v4988 = vpack.c.bf16 %v4976, %v4975
    %v4989 = vpack.c.bf16 %v4978, %v4977
    %v4990 = vpack.c.bf16 %v4980, %v4979
    %v4991 = vpack.c.bf16 %v4982, %v4981
    %v4992 = vpack.c.bf16 %v4984, %v4983
    %s4993 = scalar_lea.vmem [#allocation3], 800
    %v4994 = vld [vmem:[%s4993] sm:$0xf]
    %v4995 = vld [vmem:[%s4993 + $0x4] sm:$0xf]
    %v4996 = vld [vmem:[%s4993 + $0x8] sm:$0xf]
    %v4997 = vld [vmem:[%s4993 + $0xc] sm:$0xf]
    %v4998 = vld [vmem:[%s4993 + $0x10] sm:$0xf]
    %v4999 = vld [vmem:[%s4993 + $0x14] sm:$0xf]
    %v5000 = vld [vmem:[%s4993 + $0x18] sm:$0xf]
    %v5001 = vld [vmem:[%s4993 + $0x1c] sm:$0xf]
    %v5010 = vunpack.c.l.b16 %v4994
    %v5011 = vunpack.c.l.b16 %v4995
    %v5012 = vunpack.c.l.b16 %v4996
    %v5013 = vunpack.c.l.b16 %v4997
    %v5014 = vunpack.c.l.b16 %v4998
    %v5015 = vunpack.c.l.b16 %v4999
    %v5016 = vunpack.c.l.b16 %v5000
    %v5017 = vunpack.c.l.b16 %v5001
    %v5018 = vpack.c.b16 %v5011, %v5010
    %v5019 = vpack.c.b16 %v5013, %v5012
    %v5020 = vpack.c.b16 %v5015, %v5014
    %v5021 = vpack.c.b16 %v5017, %v5016
    %v5027 = vsel %vm29, %v4985, 0
    %v5030 = vsel %vm29, %v4986, 0
    %v5033 = vsel %vm29, %v4987, 0
    %v5036 = vsel %vm29, %v4988, 0
    %v5039 = vsel %vm29, %v4989, 0
    %v5042 = vsel %vm29, %v4990, 0
    %v5045 = vsel %vm29, %v4991, 0
    %v5048 = vsel %vm29, %v4992, 0
    %5050 = vmatprep.subr.bf16.mxu0 0
    %5051 = vmatpush1.bf16.msra.mxu0 %v5018
    %5052 = vmatprep.subr.bf16.mxu0 0
    %5053 = vmatpush1.bf16.msra.mxu0 %v5019
    %5054 = vmatprep.subr.bf16.mxu0 0
    %5055 = vmatpush1.bf16.msra.mxu0 %v5020
    %5056 = vmatprep.subr.bf16.mxu0 0
    %5057 = vmatpush1.bf16.msra.mxu0 %v5021
    %5058 = vmatprep.subr.bf16.mxu0 0
    %5059 = vmatpush1.bf16.msra.mxu0 0
    %5060 = vmatprep.subr.bf16.mxu0 0
    %5061 = vmatpush1.bf16.msra.mxu0 0
    %5062 = vmatprep.subr.bf16.mxu0 0
    %5063 = vmatpush1.bf16.msra.mxu0 0
    %5064 = vmatprep.subr.bf16.mxu0 0
    %5065 = vmatpush1.bf16.msra.mxu0 0
    %5066 = vmatprep.subr.bf16.mxu0 0
    %5067 = vmatpush1.bf16.msra.mxu0 0
    %5068 = vmatprep.subr.bf16.mxu0 0
    %5069 = vmatpush1.bf16.msra.mxu0 0
    %5070 = vmatprep.subr.bf16.mxu0 0
    %5071 = vmatpush1.bf16.msra.mxu0 0
    %5072 = vmatprep.subr.bf16.mxu0 0
    %5073 = vmatpush1.bf16.msra.mxu0 0
    %5074 = vmatprep.subr.bf16.mxu0 0
    %5075 = vmatpush1.bf16.msra.mxu0 0
    %5076 = vmatprep.subr.bf16.mxu0 0
    %5077 = vmatpush1.bf16.msra.mxu0 0
    %5078 = vmatprep.subr.bf16.mxu0 0
    %5079 = vmatpush1.bf16.msra.mxu0 0
    %5080 = vmatprep.subr.bf16.mxu0 0
    %5081 = vmatpush1.bf16.msra.mxu0 0
    %5082 = vmatprep.mubr.bf16.mxu0 0
    %5083 = vmatmul.mubr.bf16.gmra.mrb[0].mxu0 %v5027
    %v5084 = vpop.f32.mrb[0].mxu0
    %v5085 = vadd.f32 0.0, %v5084
    %v5086 = vpop.f32.mrb[0].mxu0
    %v5087 = vpop.f32.mrb[0].mxu0
    %v5088 = vadd.f32 0.0, %v5087
    %v5089 = vpop.f32.mrb[0].mxu0
    %5090 = vmatprep.mubr.bf16.mxu0 0
    %5091 = vmatmul.mubr.bf16.gmra.mrb[0].mxu0 %v5030
    %v5092 = vpop.f32.mrb[0].mxu0
    %v5093 = vadd.f32 0.0, %v5092
    %v5094 = vpop.f32.mrb[0].mxu0
    %v5095 = vpop.f32.mrb[0].mxu0
    %v5096 = vadd.f32 0.0, %v5095
    %v5097 = vpop.f32.mrb[0].mxu0
    %5098 = vmatprep.mubr.bf16.mxu0 0
    %5099 = vmatmul.mubr.bf16.gmra.mrb[0].mxu0 %v5033
    %v5100 = vpop.f32.mrb[0].mxu0
    %v5101 = vadd.f32 0.0, %v5100
    %v5102 = vpop.f32.mrb[0].mxu0
    %v5103 = vpop.f32.mrb[0].mxu0
    %v5104 = vadd.f32 0.0, %v5103
    %v5105 = vpop.f32.mrb[0].mxu0
    %5106 = vmatprep.mubr.bf16.mxu0 0
    %5107 = vmatmul.mubr.bf16.gmra.mrb[0].mxu0 %v5036
    %v5108 = vpop.f32.mrb[0].mxu0
    %v5109 = vadd.f32 0.0, %v5108
    %v5110 = vpop.f32.mrb[0].mxu0
    %v5111 = vpop.f32.mrb[0].mxu0
    %v5112 = vadd.f32 0.0, %v5111
    %v5113 = vpop.f32.mrb[0].mxu0
    %5114 = vmatprep.mubr.bf16.mxu0 0
    %5115 = vmatmul.mubr.bf16.gmra.mrb[0].mxu0 %v5039
    %v5116 = vpop.f32.mrb[0].mxu0
    %v5117 = vadd.f32 0.0, %v5116
    %v5118 = vpop.f32.mrb[0].mxu0
    %v5119 = vpop.f32.mrb[0].mxu0
    %v5120 = vadd.f32 0.0, %v5119
    %v5121 = vpop.f32.mrb[0].mxu0
    %5122 = vmatprep.mubr.bf16.mxu0 0
    %5123 = vmatmul.mubr.bf16.gmra.mrb[0].mxu0 %v5042
    %v5124 = vpop.f32.mrb[0].mxu0
    %v5125 = vadd.f32 0.0, %v5124
    %v5126 = vpop.f32.mrb[0].mxu0
    %v5127 = vpop.f32.mrb[0].mxu0
    %v5128 = vadd.f32 0.0, %v5127
    %v5129 = vpop.f32.mrb[0].mxu0
    %5130 = vmatprep.mubr.bf16.mxu0 0
    %5131 = vmatmul.mubr.bf16.gmra.mrb[0].mxu0 %v5045
    %v5132 = vpop.f32.mrb[0].mxu0
    %v5133 = vadd.f32 0.0, %v5132
    %v5134 = vpop.f32.mrb[0].mxu0
    %v5135 = vpop.f32.mrb[0].mxu0
    %v5136 = vadd.f32 0.0, %v5135
    %v5137 = vpop.f32.mrb[0].mxu0
    %5138 = vmatprep.mubr.bf16.mxu0 0
    %5139 = vmatmul.mubr.bf16.gmra.mrb[0].mxu0 %v5048
    %v5140 = vpop.f32.mrb[0].mxu0
    %v5141 = vadd.f32 0.0, %v5140
    %v5142 = vpop.f32.mrb[0].mxu0
    %v5143 = vpop.f32.mrb[0].mxu0
    %v5144 = vadd.f32 0.0, %v5143
    %v5145 = vpop.f32.mrb[0].mxu0
    %5146 = vdwg.mxu0
    %v5147 = vadd.f32 %v4953, %v5085
    %v5148 = vadd.f32 %v4954, %v5088
    %v5149 = vadd.f32 %v4955, %v5093
    %v5150 = vadd.f32 %v4956, %v5096
    %v5151 = vadd.f32 %v4957, %v5101
    %v5152 = vadd.f32 %v4958, %v5104
    %v5153 = vadd.f32 %v4959, %v5109
    %v5154 = vadd.f32 %v4960, %v5112
    %v5155 = vadd.f32 %v4961, %v5117
    %v5156 = vadd.f32 %v4962, %v5120
    %v5157 = vadd.f32 %v4963, %v5125
    %v5158 = vadd.f32 %v4964, %v5128
    %v5159 = vadd.f32 %v4965, %v5133
    %v5160 = vadd.f32 %v4966, %v5136
    %v5161 = vadd.f32 %v4967, %v5141
    %v5162 = vadd.f32 %v4968, %v5144
    %v5163 = vld [vmem:[%s1235 + $0x2] sm:$0xff]
    %v5164 = vld [vmem:[%s1235 + $0x12] sm:$0xff]
    %v5165 = vld [vmem:[%s1235 + $0x22] sm:$0xff]
    %v5166 = vld [vmem:[%s1235 + $0x32] sm:$0xff]
    %v5167 = vld [vmem:[%s1235 + $0x42] sm:$0xff]
    %v5168 = vld [vmem:[%s1235 + $0x52] sm:$0xff]
    %v5169 = vld [vmem:[%s1235 + $0x62] sm:$0xff]
    %v5170 = vld [vmem:[%s1235 + $0x72] sm:$0xff]
    %v5171 = vld [vmem:[%s1235 + $0xa2] sm:$0xff]
    %v5172 = vld [vmem:[%s1235 + $0xb2] sm:$0xff]
    %v5173 = vld [vmem:[%s1235 + $0xc2] sm:$0xff]
    %v5174 = vld [vmem:[%s1235 + $0xd2] sm:$0xff]
    %v5175 = vld [vmem:[%s1235 + $0xe2] sm:$0xff]
    %v5176 = vld [vmem:[%s1235 + $0xf2] sm:$0xff]
    %v5177 = vld [vmem:[%s1235 + $0x102] sm:$0xff]
    %v5178 = vld [vmem:[%s1235 + $0x112] sm:$0xff]
    %v5179 = vpack.c.bf16 %v5164, %v5163
    %v5180 = vpack.c.bf16 %v5166, %v5165
    %v5181 = vpack.c.bf16 %v5168, %v5167
    %v5182 = vpack.c.bf16 %v5170, %v5169
    %v5183 = vpack.c.bf16 %v5172, %v5171
    %v5184 = vpack.c.bf16 %v5174, %v5173
    %v5185 = vpack.c.bf16 %v5176, %v5175
    %v5186 = vpack.c.bf16 %v5178, %v5177
    %s5187 = scalar_lea.vmem [#allocation3], 832
    %v5188 = vld [vmem:[%s5187] sm:$0xf]
    %v5189 = vld [vmem:[%s5187 + $0x4] sm:$0xf]
    %v5190 = vld [vmem:[%s5187 + $0x8] sm:$0xf]
    %v5191 = vld [vmem:[%s5187 + $0xc] sm:$0xf]
    %v5192 = vld [vmem:[%s5187 + $0x10] sm:$0xf]
    %v5193 = vld [vmem:[%s5187 + $0x14] sm:$0xf]
    %v5194 = vld [vmem:[%s5187 + $0x18] sm:$0xf]
    %v5195 = vld [vmem:[%s5187 + $0x1c] sm:$0xf]
    %v5204 = vunpack.c.l.b16 %v5188
    %v5205 = vunpack.c.l.b16 %v5189
    %v5206 = vunpack.c.l.b16 %v5190
    %v5207 = vunpack.c.l.b16 %v5191
    %v5208 = vunpack.c.l.b16 %v5192
    %v5209 = vunpack.c.l.b16 %v5193
    %v5210 = vunpack.c.l.b16 %v5194
    %v5211 = vunpack.c.l.b16 %v5195
    %v5212 = vpack.c.b16 %v5205, %v5204
    %v5213 = vpack.c.b16 %v5207, %v5206
    %v5214 = vpack.c.b16 %v5209, %v5208
    %v5215 = vpack.c.b16 %v5211, %v5210
    %v5221 = vsel %vm29, %v5179, 0
    %v5224 = vsel %vm29, %v5180, 0
    %v5227 = vsel %vm29, %v5181, 0
    %v5230 = vsel %vm29, %v5182, 0
    %v5233 = vsel %vm29, %v5183, 0
    %v5236 = vsel %vm29, %v5184, 0
    %v5239 = vsel %vm29, %v5185, 0
    %v5242 = vsel %vm29, %v5186, 0
    %5244 = vmatprep.subr.bf16.mxu0 0
    %5245 = vmatpush1.bf16.msra.mxu0 %v5212
    %5246 = vmatprep.subr.bf16.mxu0 0
    %5247 = vmatpush1.bf16.msra.mxu0 %v5213
    %5248 = vmatprep.subr.bf16.mxu0 0
    %5249 = vmatpush1.bf16.msra.mxu0 %v5214
    %5250 = vmatprep.subr.bf16.mxu0 0
    %5251 = vmatpush1.bf16.msra.mxu0 %v5215
    %5252 = vmatprep.subr.bf16.mxu0 0
    %5253 = vmatpush1.bf16.msra.mxu0 0
    %5254 = vmatprep.subr.bf16.mxu0 0
    %5255 = vmatpush1.bf16.msra.mxu0 0
    %5256 = vmatprep.subr.bf16.mxu0 0
    %5257 = vmatpush1.bf16.msra.mxu0 0
    %5258 = vmatprep.subr.bf16.mxu0 0
    %5259 = vmatpush1.bf16.msra.mxu0 0
    %5260 = vmatprep.subr.bf16.mxu0 0
    %5261 = vmatpush1.bf16.msra.mxu0 0
    %5262 = vmatprep.subr.bf16.mxu0 0
    %5263 = vmatpush1.bf16.msra.mxu0 0
    %5264 = vmatprep.subr.bf16.mxu0 0
    %5265 = vmatpush1.bf16.msra.mxu0 0
    %5266 = vmatprep.subr.bf16.mxu0 0
    %5267 = vmatpush1.bf16.msra.mxu0 0
    %5268 = vmatprep.subr.bf16.mxu0 0
    %5269 = vmatpush1.bf16.msra.mxu0 0
    %5270 = vmatprep.subr.bf16.mxu0 0
    %5271 = vmatpush1.bf16.msra.mxu0 0
    %5272 = vmatprep.subr.bf16.mxu0 0
    %5273 = vmatpush1.bf16.msra.mxu0 0
    %5274 = vmatprep.subr.bf16.mxu0 0
    %5275 = vmatpush1.bf16.msra.mxu0 0
    %5276 = vmatprep.mubr.bf16.mxu0 0
    %5277 = vmatmul.mubr.bf16.gmra.mrb[0].mxu0 %v5221
    %v5278 = vpop.f32.mrb[0].mxu0
    %v5279 = vadd.f32 0.0, %v5278
    %v5280 = vpop.f32.mrb[0].mxu0
    %v5281 = vpop.f32.mrb[0].mxu0
    %v5282 = vadd.f32 0.0, %v5281
    %v5283 = vpop.f32.mrb[0].mxu0
    %5284 = vmatprep.mubr.bf16.mxu0 0
    %5285 = vmatmul.mubr.bf16.gmra.mrb[0].mxu0 %v5224
    %v5286 = vpop.f32.mrb[0].mxu0
    %v5287 = vadd.f32 0.0, %v5286
    %v5288 = vpop.f32.mrb[0].mxu0
    %v5289 = vpop.f32.mrb[0].mxu0
    %v5290 = vadd.f32 0.0, %v5289
    %v5291 = vpop.f32.mrb[0].mxu0
    %5292 = vmatprep.mubr.bf16.mxu0 0
    %5293 = vmatmul.mubr.bf16.gmra.mrb[0].mxu0 %v5227
    %v5294 = vpop.f32.mrb[0].mxu0
    %v5295 = vadd.f32 0.0, %v5294
    %v5296 = vpop.f32.mrb[0].mxu0
    %v5297 = vpop.f32.mrb[0].mxu0
    %v5298 = vadd.f32 0.0, %v5297
    %v5299 = vpop.f32.mrb[0].mxu0
    %5300 = vmatprep.mubr.bf16.mxu0 0
    %5301 = vmatmul.mubr.bf16.gmra.mrb[0].mxu0 %v5230
    %v5302 = vpop.f32.mrb[0].mxu0
    %v5303 = vadd.f32 0.0, %v5302
    %v5304 = vpop.f32.mrb[0].mxu0
    %v5305 = vpop.f32.mrb[0].mxu0
    %v5306 = vadd.f32 0.0, %v5305
    %v5307 = vpop.f32.mrb[0].mxu0
    %5308 = vmatprep.mubr.bf16.mxu0 0
    %5309 = vmatmul.mubr.bf16.gmra.mrb[0].mxu0 %v5233
    %v5310 = vpop.f32.mrb[0].mxu0
    %v5311 = vadd.f32 0.0, %v5310
    %v5312 = vpop.f32.mrb[0].mxu0
    %v5313 = vpop.f32.mrb[0].mxu0
    %v5314 = vadd.f32 0.0, %v5313
    %v5315 = vpop.f32.mrb[0].mxu0
    %5316 = vmatprep.mubr.bf16.mxu0 0
    %5317 = vmatmul.mubr.bf16.gmra.mrb[0].mxu0 %v5236
    %v5318 = vpop.f32.mrb[0].mxu0
    %v5319 = vadd.f32 0.0, %v5318
    %v5320 = vpop.f32.mrb[0].mxu0
    %v5321 = vpop.f32.mrb[0].mxu0
    %v5322 = vadd.f32 0.0, %v5321
    %v5323 = vpop.f32.mrb[0].mxu0
    %5324 = vmatprep.mubr.bf16.mxu0 0
    %5325 = vmatmul.mubr.bf16.gmra.mrb[0].mxu0 %v5239
    %v5326 = vpop.f32.mrb[0].mxu0
    %v5327 = vadd.f32 0.0, %v5326
    %v5328 = vpop.f32.mrb[0].mxu0
    %v5329 = vpop.f32.mrb[0].mxu0
    %v5330 = vadd.f32 0.0, %v5329
    %v5331 = vpop.f32.mrb[0].mxu0
    %5332 = vmatprep.mubr.bf16.mxu0 0
    %5333 = vmatmul.mubr.bf16.gmra.mrb[0].mxu0 %v5242
    %v5334 = vpop.f32.mrb[0].mxu0
    %v5335 = vadd.f32 0.0, %v5334
    %v5336 = vpop.f32.mrb[0].mxu0
    %v5337 = vpop.f32.mrb[0].mxu0
    %v5338 = vadd.f32 0.0, %v5337
    %v5339 = vpop.f32.mrb[0].mxu0
    %5340 = vdwg.mxu0
    %v5341 = vadd.f32 %v5147, %v5279
    %v5342 = vadd.f32 %v5148, %v5282
    %v5343 = vadd.f32 %v5149, %v5287
    %v5344 = vadd.f32 %v5150, %v5290
    %v5345 = vadd.f32 %v5151, %v5295
    %v5346 = vadd.f32 %v5152, %v5298
    %v5347 = vadd.f32 %v5153, %v5303
    %v5348 = vadd.f32 %v5154, %v5306
    %v5349 = vadd.f32 %v5155, %v5311
    %v5350 = vadd.f32 %v5156, %v5314
    %v5351 = vadd.f32 %v5157, %v5319
    %v5352 = vadd.f32 %v5158, %v5322
    %v5353 = vadd.f32 %v5159, %v5327
    %v5354 = vadd.f32 %v5160, %v5330
    %v5355 = vadd.f32 %v5161, %v5335
    %v5356 = vadd.f32 %v5162, %v5338
    %s5357 = scalar_lea.vmem %s2, 2
    %v5358 = vld [vmem:[%s5357] sm:$0x1]
    %v5360 = vlaneseq
    %v5361 = vshrl.u32 %v5360, 7
    %v5362 = vsub.s32 0, %v5361
    %v5363 = vrot.slane %v5358, %v5362
    %v5365 = vadd.f32 %v5341, %v5363
    %v5366 = vadd.f32 %v5342, %v5363
    %v5367 = vadd.f32 %v5343, %v5363
    %v5368 = vadd.f32 %v5344, %v5363
    %v5369 = vadd.f32 %v5345, %v5363
    %v5370 = vadd.f32 %v5346, %v5363
    %v5371 = vadd.f32 %v5347, %v5363
    %v5372 = vadd.f32 %v5348, %v5363
    %v5373 = vadd.f32 %v5349, %v5363
    %v5374 = vadd.f32 %v5350, %v5363
    %v5375 = vadd.f32 %v5351, %v5363
    %v5376 = vadd.f32 %v5352, %v5363
    %v5377 = vadd.f32 %v5353, %v5363
    %v5378 = vadd.f32 %v5354, %v5363
    %v5379 = vadd.f32 %v5355, %v5363
    %v5380 = vadd.f32 %v5356, %v5363
    %v5381 = vmax.f32 %v5365, 0.0
    %v5382 = vmax.f32 %v5366, 0.0
    %v5383 = vmax.f32 %v5367, 0.0
    %v5384 = vmax.f32 %v5368, 0.0
    %v5385 = vmax.f32 %v5369, 0.0
    %v5386 = vmax.f32 %v5370, 0.0
    %v5387 = vmax.f32 %v5371, 0.0
    %v5388 = vmax.f32 %v5372, 0.0
    %v5389 = vmax.f32 %v5373, 0.0
    %v5390 = vmax.f32 %v5374, 0.0
    %v5391 = vmax.f32 %v5375, 0.0
    %v5392 = vmax.f32 %v5376, 0.0
    %v5393 = vmax.f32 %v5377, 0.0
    %v5394 = vmax.f32 %v5378, 0.0
    %v5395 = vmax.f32 %v5379, 0.0
    %v5396 = vmax.f32 %v5380, 0.0
    %v5397 = vpack.c.bf16 %v5382, %v5381
    %v5398 = vpack.c.bf16 %v5384, %v5383
    %v5399 = vpack.c.bf16 %v5386, %v5385
    %v5400 = vpack.c.bf16 %v5388, %v5387
    %v5401 = vpack.c.bf16 %v5390, %v5389
    %v5402 = vpack.c.bf16 %v5392, %v5391
    %v5403 = vpack.c.bf16 %v5394, %v5393
    %v5404 = vpack.c.bf16 %v5396, %v5395
    %v5413 = vunpack.c.l.b16 %v5397
    %v5414 = vunpack.c.h.b16 %v5397
    %v5415 = vunpack.c.l.b16 %v5398
    %v5416 = vunpack.c.h.b16 %v5398
    %v5417 = vunpack.c.l.b16 %v5399
    %v5418 = vunpack.c.h.b16 %v5399
    %v5419 = vunpack.c.l.b16 %v5400
    %v5420 = vunpack.c.h.b16 %v5400
    %v5421 = vunpack.c.l.b16 %v5401
    %v5422 = vunpack.c.h.b16 %v5401
    %v5423 = vunpack.c.l.b16 %v5402
    %v5424 = vunpack.c.h.b16 %v5402
    %v5425 = vunpack.c.l.b16 %v5403
    %v5426 = vunpack.c.h.b16 %v5403
    %v5427 = vunpack.c.l.b16 %v5404
    %v5428 = vunpack.c.h.b16 %v5404
    %v5429 = vpack.c.b16 %v5413, %v5413
    %v5430 = vpack.c.b16 %v5414, %v5414
    %v5431 = vpack.c.b16 %v5415, %v5415
    %v5432 = vpack.c.b16 %v5416, %v5416
    %v5433 = vpack.c.b16 %v5417, %v5417
    %v5434 = vpack.c.b16 %v5418, %v5418
    %v5435 = vpack.c.b16 %v5419, %v5419
    %v5436 = vpack.c.b16 %v5420, %v5420
    %v5437 = vpack.c.b16 %v5421, %v5421
    %v5438 = vpack.c.b16 %v5422, %v5422
    %v5439 = vpack.c.b16 %v5423, %v5423
    %v5440 = vpack.c.b16 %v5424, %v5424
    %v5441 = vpack.c.b16 %v5425, %v5425
    %v5442 = vpack.c.b16 %v5426, %v5426
    %v5443 = vpack.c.b16 %v5427, %v5427
    %v5444 = vpack.c.b16 %v5428, %v5428
    %vm5461 = vcmask 519168
    %5462 = vst.msk [vmem:[%s3] sm:$0xf] %vm5461, %v5429
    %5463 = vst.msk [vmem:[%s3 + $0x4] sm:$0xf] %vm5461, %v5430
    %5464 = vst.msk [vmem:[%s3 + $0x8] sm:$0xf] %vm5461, %v5431
    %5465 = vst.msk [vmem:[%s3 + $0xc] sm:$0xf] %vm5461, %v5432
    %5466 = vst.msk [vmem:[%s3 + $0x10] sm:$0xf] %vm5461, %v5433
    %5467 = vst.msk [vmem:[%s3 + $0x14] sm:$0xf] %vm5461, %v5434
    %5468 = vst.msk [vmem:[%s3 + $0x18] sm:$0xf] %vm5461, %v5435
    %5469 = vst.msk [vmem:[%s3 + $0x1c] sm:$0xf] %vm5461, %v5436
    %5470 = vst.msk [vmem:[%s3 + $0x20] sm:$0xf] %vm5461, %v5437
    %5471 = vst.msk [vmem:[%s3 + $0x24] sm:$0xf] %vm5461, %v5438
    %5472 = vst.msk [vmem:[%s3 + $0x28] sm:$0xf] %vm5461, %v5439
    %5473 = vst.msk [vmem:[%s3 + $0x2c] sm:$0xf] %vm5461, %v5440
    %5474 = vst.msk [vmem:[%s3 + $0x30] sm:$0xf] %vm5461, %v5441
    %5475 = vst.msk [vmem:[%s3 + $0x34] sm:$0xf] %vm5461, %v5442
    %5476 = vst.msk [vmem:[%s3 + $0x38] sm:$0xf] %vm5461, %v5443
    %5477 = vst.msk [vmem:[%s3 + $0x3c] sm:$0xf] %vm5461, %v5444
    // Predicated region
    $region18: #{chess_value_forward.2} parent=1 // pred_check
      _
    $region19: #{chess_value_forward.2} parent=1 // pred_check_branch
      %5479 = sbr.rel (0) target = $region21
    $region20: #{chess_value_forward.2} parent=1 // pred_region
      _
    $region21: #{chess_value_forward.2} parent=1 // pred_fallthru
      _
    // Predicated region
    $region22: #{chess_value_forward.2} parent=1 // pred_check
      _
    $region23: #{chess_value_forward.2} parent=1 // pred_check_branch
      %5481 = sbr.rel (0) target = $region25
    $region24: #{chess_value_forward.2} parent=1 // pred_region
      _
    $region25: #{chess_value_forward.2} parent=1 // pred_fallthru
      _
    %5482 = vsyncpa [#allocation4], 1

</llo_original>
